<compile_context>
chip_gen: v5e
topology: v5e:2x2
jax: 0.10.0
libtpu: 0.0.40
codegen_flags: <defaults>
</compile_context>

<pallas_src>
import numpy as np
import jax
import jax.numpy as jnp
from jax.experimental import pallas as pl
from jax.experimental.pallas import tpu as pltpu


# ----------------------------------------------------------------------------
# small helpers
# ----------------------------------------------------------------------------
def _pick_divisor(n, cap):
    """Largest divisor of n that is <= cap (>= 1)."""
    cap = max(1, min(n, cap))
    for d in range(cap, 0, -1):
        if n % d == 0:
            return d
    return 1


def _pick_cout_tile(cout, pref=128):
    """Lane-dense Cout tile: full Cout when small/odd, else a 128-multiple divisor."""
    if cout <= 128 or cout % 128 != 0:
        return cout
    t = max(128, (pref // 128) * 128)
    while cout % t != 0:
        t -= 128
    return t


def _default_vmem_limit():
    """48 MiB on v7x (64 MiB physical VMEM), 64 MiB on v5e/v6e (128 MiB physical)."""
    try:
        kind = jax.devices()[0].device_kind.lower()
    except Exception:
        kind = ""
    if "v7" in kind or "7x" in kind:
        return 48 * 1024 * 1024
    return 64 * 1024 * 1024


# ----------------------------------------------------------------------------
# Fused conv kernel:
#   [optional BN-apply + ReLU prologue on the input slab]
#   3x3 conv (padding=1, stride via phase-decomposed input), bias-free, bf16 MXU
#   [BN partial-stats epilogue from the f32 accumulator]
#   [optional pre-padded output: zero ring written in-kernel]
# ----------------------------------------------------------------------------
def _make_conv_kernel(*, stride, Ho, Wo, TH, apply_input_bn, emit_padded):
    s = stride
    n_r = Ho // TH

    def kernel(x_ref, w_ref, scale_ref, shift_ref, o_ref, sum_ref, sq_ref):
        # x_ref:     (1, s*s, Hph, Wph, Cin)  zero-padded (phase-decomposed) input, bf16
        # w_ref:     (3, 3, Cin, TC)          bf16 weights (pre-cast at init)
        # scale_ref: (1, Cin) f32, shift_ref: (1, Cin) f32  (BN1 affine; conv2 only)
        # o_ref:     (1, Ho[+2], Wo[+2], TC)  raw (pre-BN) conv output, bf16
        # sum_ref:   (1, 1, TC) f32, sq_ref: (1, 1, TC) f32  partial BN stats
        Cin = x_ref.shape[-1]
        TC = o_ref.shape[-1]
        Wp = x_ref.shape[3]
        cdt = w_ref.dtype

        if emit_padded:
            # Zero the conv-padding ring once per (n, cout-tile) so the next conv
            # needs no pad pass at all.
            zr = jnp.zeros((1, Wo + 2, TC), o_ref.dtype)
            zc = jnp.zeros((Ho + 2, 1, TC), o_ref.dtype)
            o_ref[0, 0:1, :, :] = zr
            o_ref[0, Ho + 1:Ho + 2, :, :] = zr
            o_ref[0, :, 0:1, :] = zc
            o_ref[0, :, Wo + 1:Wo + 2, :] = zc

        if apply_input_bn:
            # Column part of the conv-padding mask: identical for all row chunks.
            ci = jax.lax.broadcasted_iota(jnp.int32, (TH + 2, Wp, 1), 1)
            col_ok = (ci >= 1) & (ci <= Wo)

        tot_sum = jnp.zeros((1, TC), jnp.float32)
        tot_sq = jnp.zeros((1, TC), jnp.float32)

        # Static (unrolled) loop over row chunks: the live f32 accumulator stays
        # <= ~32 vregs while the whole image block remains resident in VMEM.
        for rc in range(n_r):
            row0 = rc * TH
            acc = jnp.zeros((TH * Wo, TC), jnp.float32)

            if apply_input_bn:
                # conv2 path (stride == 1): fused BN1-apply + ReLU prologue, applied
                # once per slab, taps taken from the transformed slab.
                slab = x_ref[0, 0, row0:row0 + TH + 2, :, :].astype(jnp.float32)
                slab = jnp.maximum(slab * scale_ref[0, :] + shift_ref[0, :], 0.0)
                ok = col_ok
                if rc == 0 or rc == n_r - 1:   # only edge chunks touch pad rows
                    ri = jax.lax.broadcasted_iota(jnp.int32, (TH + 2, Wp, 1), 0) + row0
                    ok = ok & (ri >= 1) & (ri <= Ho)
                slab = jnp.where(ok, slab, 0.0).astype(cdt)
                # TODO(synk): fold the 3 kw taps into one K=3*Cin dot per kh once a
                # minor-dim concatenate of small-Cin bf16 tiles is verified to lower.
                for kh in range(3):
                    for kw in range(3):
                        patch = slab[kh:kh + TH, kw:kw + Wo, :]
                        acc = acc + jnp.dot(patch.reshape(TH * Wo, Cin),
                                            w_ref[kh, kw],
                                            preferred_element_type=jnp.float32)
            else:
                # conv1 path: raw (bf16) input; stride handled exactly via the phase
                # layout: tap (kh, kw) reads phase ((kh%s)*s + kw%s) at
                # (ho + kh//s, wo + kw//s).
                for kh in range(3):
                    for kw in range(3):
                        ph = (kh % s) * s + (kw % s)
                        r0 = row0 + kh // s
                        c0 = kw // s
                        patch = x_ref[0, ph, r0:r0 + TH, c0:c0 + Wo, :]
                        if patch.dtype != cdt:
                            patch = patch.astype(cdt)
                        acc = acc + jnp.dot(patch.reshape(TH * Wo, Cin),
                                            w_ref[kh, kw],
                                            preferred_element_type=jnp.float32)

            # BN partial stats from the f32 accumulator (before the bf16 store).
            tot_sum = tot_sum + jnp.sum(acc, axis=0, keepdims=True)
            tot_sq = tot_sq + jnp.sum(acc * acc, axis=0, keepdims=True)

            y_tile = acc.reshape(TH, Wo, TC).astype(o_ref.dtype)
            if emit_padded:
                o_ref[0, 1 + row0:1 + row0 + TH, 1:1 + Wo, :] = y_tile
            else:
                o_ref[0, row0:row0 + TH, :, :] = y_tile

        sum_ref[...] = tot_sum.reshape(sum_ref.shape)
        sq_ref[...] = tot_sq.reshape(sq_ref.shape)

    return kernel


def fused_conv3x3(x, w_hwio, stride, *, in_scale=None, in_shift=None,
                  input_prepadded=False, emit_padded_output=False,
                  cout_tile=128, rows_per_tile=256,
                  compute_dtype=jnp.bfloat16, out_dtype=jnp.bfloat16):
    """3x3 conv, padding=1, bias-free (bias cancelled by the following train-mode BN).

    in_scale/in_shift: apply y = relu(x*scale + shift) to the input inside the kernel
      (fused BN-apply + ReLU prologue; stride must be 1).
    input_prepadded: x already carries the 1-pixel zero ring, shape (N, H+2, W+2, C)
      (as produced by emit_padded_output=True) -> no pad pass in the wrapper.
    emit_padded_output: output is written into (N, Ho+2, Wo+2, Cout) with an
      in-kernel zeroed ring so the next conv can read it directly.

    Returns (conv_out, part_sum, part_sq): raw (pre-BN) conv output plus per-(image,
    cout-tile) partial channel sums / sums-of-squares for the following BN.
    """
    s = int(stride)
    KH, KW, Cin, Cout = w_hwio.shape
    assert (KH, KW) == (3, 3)
    apply_input_bn = in_scale is not None
    assert not (apply_input_bn and s != 1), "fused BN prologue only for stride-1 conv"

    if input_prepadded:
        assert s == 1
        N, Hp, Wp, C = x.shape
        assert C == Cin
        Ho, Wo = Hp - 2, Wp - 2
        P, Hph, Wph = 1, Hp, Wp
        x_ph = x.reshape(N, 1, Hp, Wp, C)
        if not apply_input_bn and x_ph.dtype != compute_dtype:
            x_ph = x_ph.astype(compute_dtype)
    else:
        N, H, W, C = x.shape
        assert C == Cin
        Ho = (H - 1) // s + 1
        Wo = (W - 1) // s + 1
        P = s * s
        Hph = Ho + 2 // s                      # phase-array spatial extents
        Wph = Wo + 2 // s
        Hp_r, Wp_r = s * Hph, s * Wph
        xx = x.astype(compute_dtype)           # bf16 before padding -> half the copy
        x_pad = jnp.pad(xx, ((0, 0), (1, max(0, Hp_r - H - 1)),
                             (1, max(0, Wp_r - W - 1)), (0, 0)))[:, :Hp_r, :Wp_r, :]
        if s == 1:
            x_ph = x_pad[:, None]                                  # (N, 1, H+2, W+2, C)
        else:
            x_ph = x_pad.reshape(N, Hph, s, Wph, s, Cin)
            x_ph = x_ph.transpose(0, 2, 4, 1, 3, 5).reshape(N, P, Hph, Wph, Cin)

    TC = _pick_cout_tile(Cout, cout_tile)
    TH = _pick_divisor(Ho, max(1, rows_per_tile // max(1, Wo)))
    n_c = Cout // TC

    if in_scale is None:
        in_scale = jnp.ones((Cin,), jnp.float32)
        in_shift = jnp.zeros((Cin,), jnp.float32)
    in_scale = jnp.asarray(in_scale, jnp.float32).reshape(1, Cin)
    in_shift = jnp.asarray(in_shift, jnp.float32).reshape(1, Cin)

    w = w_hwio if w_hwio.dtype == compute_dtype else w_hwio.astype(compute_dtype)

    Hob = Ho + 2 if emit_padded_output else Ho
    Wob = Wo + 2 if emit_padded_output else Wo

    kernel = _make_conv_kernel(stride=s, Ho=Ho, Wo=Wo, TH=TH,
                               apply_input_bn=apply_input_bn,
                               emit_padded=emit_padded_output)

    out, part_sum, part_sq = pl.pallas_call(
        kernel,
        out_shape=(
            jax.ShapeDtypeStruct((N, Hob, Wob, Cout), out_dtype),
            jax.ShapeDtypeStruct((N, 1, Cout), jnp.float32),
            jax.ShapeDtypeStruct((N, 1, Cout), jnp.float32),
        ),
        grid=(N, n_c),
        in_specs=[
            # Whole (phase-decomposed) padded image per batch element; resident
            # across the cout-tile axis (index_map depends only on n).
            pl.BlockSpec((1, P, Hph, Wph, Cin), lambda n, c: (n, 0, 0, 0, 0)),
            pl.BlockSpec((3, 3, Cin, TC), lambda n, c: (0, 0, 0, c)),
            pl.BlockSpec((1, Cin), lambda n, c: (0, 0)),
            pl.BlockSpec((1, Cin), lambda n, c: (0, 0)),
        ],
        out_specs=(
            pl.BlockSpec((1, Hob, Wob, TC), lambda n, c: (n, 0, 0, c)),
            pl.BlockSpec((1, 1, TC), lambda n, c: (n, 0, c)),
            pl.BlockSpec((1, 1, TC), lambda n, c: (n, 0, c)),
        ),
        compiler_params=pltpu.CompilerParams(
            dimension_semantics=("parallel", "parallel"),
            vmem_limit_bytes=_default_vmem_limit(),
        ),
    )(x_ph, w, in_scale, in_shift)
    return out, part_sum, part_sq


# ----------------------------------------------------------------------------
# Final elementwise BN-apply + ReLU (for the last BN of the block).
# ----------------------------------------------------------------------------
def _bn_relu_kernel(x_ref, scale_ref, shift_ref, o_ref):
    y = x_ref[...].astype(jnp.float32) * scale_ref[0, :] + shift_ref[0, :]
    o_ref[...] = jnp.maximum(y, 0.0).astype(o_ref.dtype)


def bn_relu_apply(x_nhwc, scale, shift, rows_per_tile=2048, out_dtype=jnp.float32):
    N, H, W, C = x_nhwc.shape
    TH = _pick_divisor(H, max(1, rows_per_tile // max(1, W)))
    return pl.pallas_call(
        _bn_relu_kernel,
        out_shape=jax.ShapeDtypeStruct((N, H, W, C), out_dtype),
        grid=(N, H // TH),
        in_specs=[
            pl.BlockSpec((1, TH, W, C), lambda n, h: (n, h, 0, 0)),
            pl.BlockSpec((1, C), lambda n, h: (0, 0)),
            pl.BlockSpec((1, C), lambda n, h: (0, 0)),
        ],
        out_specs=pl.BlockSpec((1, TH, W, C), lambda n, h: (n, h, 0, 0)),
        compiler_params=pltpu.CompilerParams(
            dimension_semantics=("parallel", "parallel"),
            vmem_limit_bytes=_default_vmem_limit(),
        ),
    )(x_nhwc, jnp.asarray(scale, jnp.float32).reshape(1, C),
      jnp.asarray(shift, jnp.float32).reshape(1, C))


def _bn_scale_shift(part_sum, part_sq, count, gamma, beta, eps=1e-5):
    """Turn partial (sum, sumsq) into the affine (scale, shift) of train-mode BN."""
    s = jnp.sum(part_sum, axis=(0, 1))
    q = jnp.sum(part_sq, axis=(0, 1))
    mean = s / count
    # Biased (train-mode) variance via E[x^2] - mean^2 from f32 partial sums; the
    # clamp guards tiny negatives from cancellation.
    var = jnp.maximum(q / count - mean * mean, 0.0)
    scale = gamma * jax.lax.rsqrt(var + eps)
    shift = beta - mean * scale
    return scale, shift


# ----------------------------------------------------------------------------
# BasicBlock: parameters + forward
# ----------------------------------------------------------------------------
def init_basic_block(key, in_ch, out_ch, compute_dtype=jnp.bfloat16):
    k1, k2, k3, k4 = jax.random.split(key, 4)
    b1lim = 1.0 / np.sqrt(in_ch * 9)
    b2lim = 1.0 / np.sqrt(out_ch * 9)
    w1 = jax.random.uniform(k1, (out_ch, in_ch, 3, 3), jnp.float32, -b1lim, b1lim)
    w2 = jax.random.uniform(k3, (out_ch, out_ch, 3, 3), jnp.float32, -b2lim, b2lim)
    w1_hwio = jnp.transpose(w1, (2, 3, 1, 0))   # OIHW -> HWIO once at init
    w2_hwio = jnp.transpose(w2, (2, 3, 1, 0))
    return dict(
        # f32 HWIO copies for the reference; bf16 copies are what the kernels use
        # (pre-cast once here, never per call / per tap).
        w1=w1_hwio, w2=w2_hwio,
        w1k=w1_hwio.astype(compute_dtype), w2k=w2_hwio.astype(compute_dtype),
        # Conv biases kept only for interface parity / the reference check: they are
        # exactly cancelled by the train-mode BatchNorm that follows each conv, so
        # the Pallas kernels never apply them.
        b1=jax.random.uniform(k2, (out_ch,), jnp.float32, -b1lim, b1lim),
        b2=jax.random.uniform(k4, (out_ch,), jnp.float32, -b2lim, b2lim),
        g1=jnp.ones((out_ch,), jnp.float32), be1=jnp.zeros((out_ch,), jnp.float32),
        g2=jnp.ones((out_ch,), jnp.float32), be2=jnp.zeros((out_ch,), jnp.float32),
    )


def basic_block_forward_nhwc(params, x_nhwc, stride, eps=1e-5):
    """NHWC BasicBlock forward. In a stacked model call this directly so the
    NCHW<->NHWC transposes happen only once at the model boundary."""
    N = x_nhwc.shape[0]
    # conv1 (bias-free, bf16 MXU) + fused BN1-stats epilogue; output pre-padded.
    y1p, s1, q1 = fused_conv3x3(x_nhwc, params["w1k"], stride,
                                emit_padded_output=True)
    Ho1, Wo1 = y1p.shape[1] - 2, y1p.shape[2] - 2
    sc1, sh1 = _bn_scale_shift(s1, q1, N * Ho1 * Wo1,
                               params["g1"], params["be1"], eps)
    # conv2 with fused BN1-apply + ReLU prologue + fused BN2-stats epilogue; it
    # consumes conv1's pre-padded output directly (no pad/copy pass in between).
    y2, s2, q2 = fused_conv3x3(y1p, params["w2k"], 1, in_scale=sc1, in_shift=sh1,
                               input_prepadded=True)
    sc2, sh2 = _bn_scale_shift(s2, q2, N * y2.shape[1] * y2.shape[2],
                               params["g2"], params["be2"], eps)
    # Final BN2-apply + ReLU (block output).  In a stacked model fuse this into the
    # next block's conv1 prologue instead (same pattern as BN1 -> conv2 above).
    return bn_relu_apply(y2, sc2, sh2)


def basic_block_forward(params, x_nchw, stride):
    x = jnp.transpose(x_nchw, (0, 2, 3, 1))      # NCHW -> NHWC (boundary only)
    y = basic_block_forward_nhwc(params, x, stride)
    return jnp.transpose(y, (0, 3, 1, 2))        # NHWC -> NCHW


# ----------------------------------------------------------------------------
# Pure-JAX f32 reference of the same forward (with conv biases, like the PyTorch
# module; BN cancels them, so the kernel output must still match).
# ----------------------------------------------------------------------------
def ref_forward(params, x_nchw, stride):
    w1 = jnp.transpose(params["w1"], (3, 2, 0, 1))   # HWIO -> OIHW
    w2 = jnp.transpose(params["w2"], (3, 2, 0, 1))

    def conv(x, w, b, s):
        y = jax.lax.conv_general_dilated(
            x, w, (s, s), ((1, 1), (1, 1)),
            dimension_numbers=("NCHW", "OIHW", "NCHW"))
        return y + b[None, :, None, None]

    def bn_relu(x, g, be, eps=1e-5):
        mean = x.mean(axis=(0, 2, 3), keepdims=True)
        var = x.var(axis=(0, 2, 3), keepdims=True)
        y = g[None, :, None, None] * (x - mean) * jax.lax.rsqrt(var + eps) \
            + be[None, :, None, None]
        return jnp.maximum(y, 0.0)

    out = conv(x_nchw, w1, params["b1"], stride)
    out = bn_relu(out, params["g1"], params["be1"])
    out = conv(out, w2, params["b2"], 1)
    out = bn_relu(out, params["g2"], params["be2"])
    return out


if __name__ == "__main__":
    root = jax.random.PRNGKey(0)
    fwd = jax.jit(basic_block_forward, static_argnums=2)

    # (N, Cin, Cout, H, W, stride): small main case plus the corner cases flagged in
    # review (odd spatial with stride 2; lane-tiled Cout with more than one tile).
    configs = [
        (2, 4, 8, 16, 16, 1),
        (2, 4, 8, 16, 16, 2),
        (1, 3, 8, 15, 15, 2),
        (1, 16, 256, 8, 8, 1),
    ]
    for (N, Cin, Cout, H, W, stride) in configs:
        root, kx, kp = jax.random.split(root, 3)
        x = jax.random.normal(kx, (N, Cin, H, W), jnp.float32)   # NCHW like PyTorch
        params = init_basic_block(kp, Cin, Cout)
        y = jax.block_until_ready(fwd(params, x, stride))
        y_ref = jax.block_until_ready(ref_forward(params, x, stride))
        # bf16 matmuls / bf16 intermediates vs. the f32 reference -> loose tolerance.
        np.testing.assert_allclose(np.asarray(y), np.asarray(y_ref),
                                   rtol=1e-1, atol=1e-1)
    print("KERNEL_OK")
</pallas_src>

<mosaic_0001>
module attributes {stable_mosaic.version = 11 : i64} {
  func.func @kernel(%arg0: i32, %arg1: i32, %arg2: memref<1x1x18x18x4xbf16, #tpu.memory_space<vmem>>, %arg3: memref<3x3x4x8xbf16, #tpu.memory_space<vmem>>, %arg4: memref<1x4xf32, #tpu.memory_space<vmem>>, %arg5: memref<1x4xf32, #tpu.memory_space<vmem>>, %arg6: memref<1x18x18x8xbf16, #tpu.memory_space<vmem>>, %arg7: memref<1x1x8xf32, #tpu.memory_space<vmem>>, %arg8: memref<1x1x8xf32, #tpu.memory_space<vmem>>) attributes {dimension_semantics = [#tpu.dimension_semantics<parallel>, #tpu.dimension_semantics<parallel>], iteration_bounds = array<i64: 2, 1>, scalar_prefetch = 0 : i64, scratch_operands = 0 : i64, tpu.core_type = #tpu.core_type<tc>, window_params = [{transform_indices = @transform_0, window_bounds = array<i64: 1, 1, 18, 18, 4>}, {transform_indices = @transform_1, window_bounds = array<i64: 3, 3, 4, 8>}, {pipeline_mode = #tpu.pipeline_mode<synchronous>, transform_indices = @transform_2, window_bounds = array<i64: 1, 4>}, {pipeline_mode = #tpu.pipeline_mode<synchronous>, transform_indices = @transform_3, window_bounds = array<i64: 1, 4>}, {transform_indices = @transform_4, window_bounds = array<i64: 1, 18, 18, 8>}, {transform_indices = @transform_5, window_bounds = array<i64: 1, 1, 8>}, {transform_indices = @transform_6, window_bounds = array<i64: 1, 1, 8>}]} {
    %cst = arith.constant 0.000000e+00 : bf16
    %0 = vector.broadcast %cst : bf16 to vector<1x18x8xbf16>
    %cst_0 = arith.constant 0.000000e+00 : bf16
    %1 = vector.broadcast %cst_0 : bf16 to vector<18x1x8xbf16>
    %c0 = arith.constant 0 : index
    %c0_1 = arith.constant 0 : index
    %c0_2 = arith.constant 0 : index
    %c0_3 = arith.constant 0 : index
    %2 = vector.load %arg6[%c0, %c0_1, %c0_2, %c0_3] : memref<1x18x18x8xbf16, #tpu.memory_space<vmem>>, vector<1x1x18x8xbf16>
    %3 = vector.shape_cast %2 : vector<1x1x18x8xbf16> to vector<1x18x8xbf16>
    %4 = vector.shape_cast %0 : vector<1x18x8xbf16> to vector<1x1x18x8xbf16>
    tpu.vector_store %arg6[%c0, %c0_1, %c0_2, %c0_3], %4 {strides = array<i32>} : memref<1x18x18x8xbf16, #tpu.memory_space<vmem>>, vector<1x1x18x8xbf16>,
    %c0_4 = arith.constant 0 : index
    %c17 = arith.constant 17 : index
    %c0_5 = arith.constant 0 : index
    %c0_6 = arith.constant 0 : index
    %5 = vector.load %arg6[%c0_4, %c17, %c0_5, %c0_6] : memref<1x18x18x8xbf16, #tpu.memory_space<vmem>>, vector<1x1x18x8xbf16>
    %6 = vector.shape_cast %5 : vector<1x1x18x8xbf16> to vector<1x18x8xbf16>
    %7 = vector.shape_cast %0 : vector<1x18x8xbf16> to vector<1x1x18x8xbf16>
    tpu.vector_store %arg6[%c0_4, %c17, %c0_5, %c0_6], %7 {strides = array<i32>} : memref<1x18x18x8xbf16, #tpu.memory_space<vmem>>, vector<1x1x18x8xbf16>,
    %c0_7 = arith.constant 0 : index
    %c0_8 = arith.constant 0 : index
    %c0_9 = arith.constant 0 : index
    %c0_10 = arith.constant 0 : index
    %8 = vector.load %arg6[%c0_7, %c0_8, %c0_9, %c0_10] : memref<1x18x18x8xbf16, #tpu.memory_space<vmem>>, vector<1x18x1x8xbf16>
    %9 = vector.shape_cast %8 : vector<1x18x1x8xbf16> to vector<18x1x8xbf16>
    %10 = vector.shape_cast %1 : vector<18x1x8xbf16> to vector<1x18x1x8xbf16>
    tpu.vector_store %arg6[%c0_7, %c0_8, %c0_9, %c0_10], %10 {strides = array<i32>} : memref<1x18x18x8xbf16, #tpu.memory_space<vmem>>, vector<1x18x1x8xbf16>,
    %c0_11 = arith.constant 0 : index
    %c0_12 = arith.constant 0 : index
    %c17_13 = arith.constant 17 : index
    %c0_14 = arith.constant 0 : index
    %11 = vector.load %arg6[%c0_11, %c0_12, %c17_13, %c0_14] : memref<1x18x18x8xbf16, #tpu.memory_space<vmem>>, vector<1x18x1x8xbf16>
    %12 = vector.shape_cast %11 : vector<1x18x1x8xbf16> to vector<18x1x8xbf16>
    %13 = vector.shape_cast %1 : vector<18x1x8xbf16> to vector<1x18x1x8xbf16>
    tpu.vector_store %arg6[%c0_11, %c0_12, %c17_13, %c0_14], %13 {strides = array<i32>} : memref<1x18x18x8xbf16, #tpu.memory_space<vmem>>, vector<1x18x1x8xbf16>,
    %cst_15 = arith.constant 0.000000e+00 : f32
    %14 = vector.broadcast %cst_15 : f32 to vector<1x8xf32>
    %cst_16 = arith.constant 0.000000e+00 : f32
    %15 = vector.broadcast %cst_16 : f32 to vector<1x8xf32>
    %cst_17 = arith.constant 0.000000e+00 : f32
    %16 = vector.broadcast %cst_17 : f32 to vector<256x8xf32>
    %c0_18 = arith.constant 0 : index
    %c0_19 = arith.constant 0 : index
    %c0_20 = arith.constant 0 : index
    %c0_21 = arith.constant 0 : index
    %c0_22 = arith.constant 0 : index
    %17 = vector.load %arg2[%c0_18, %c0_19, %c0_20, %c0_21, %c0_22] : memref<1x1x18x18x4xbf16, #tpu.memory_space<vmem>>, vector<1x1x16x16x4xbf16>
    %18 = vector.shape_cast %17 : vector<1x1x16x16x4xbf16> to vector<16x16x4xbf16>
    %19 = vector.shape_cast %18 : vector<16x16x4xbf16> to vector<256x4xbf16>
    %c0_23 = arith.constant 0 : index
    %c0_24 = arith.constant 0 : index
    %c0_25 = arith.constant 0 : index
    %c0_26 = arith.constant 0 : index
    %20 = vector.load %arg3[%c0_23, %c0_24, %c0_25, %c0_26] : memref<3x3x4x8xbf16, #tpu.memory_space<vmem>>, vector<1x1x4x8xbf16>
    %21 = vector.shape_cast %20 : vector<1x1x4x8xbf16> to vector<4x8xbf16>
    %cst_27 = arith.constant dense<0.000000e+00> : vector<256x8xf32>
    %22 = tpu.matmul %19, %21, %cst_27 {dimension_numbers = #tpu.dot_dimension_numbers<[1], [0], [0], [1], [0, 0, 1, 1], [], []>} : vector<256x4xbf16>, vector<4x8xbf16>, vector<256x8xf32> -> vector<256x8xf32>
    %23 = arith.addf %16, %22 : vector<256x8xf32>
    %c0_28 = arith.constant 0 : index
    %c0_29 = arith.constant 0 : index
    %c0_30 = arith.constant 0 : index
    %c1 = arith.constant 1 : index
    %c0_31 = arith.constant 0 : index
    %24 = vector.load %arg2[%c0_28, %c0_29, %c0_30, %c1, %c0_31] : memref<1x1x18x18x4xbf16, #tpu.memory_space<vmem>>, vector<1x1x16x16x4xbf16>
    %25 = vector.shape_cast %24 : vector<1x1x16x16x4xbf16> to vector<16x16x4xbf16>
    %26 = vector.shape_cast %25 : vector<16x16x4xbf16> to vector<256x4xbf16>
    %c0_32 = arith.constant 0 : index
    %c1_33 = arith.constant 1 : index
    %c0_34 = arith.constant 0 : index
    %c0_35 = arith.constant 0 : index
    %27 = vector.load %arg3[%c0_32, %c1_33, %c0_34, %c0_35] : memref<3x3x4x8xbf16, #tpu.memory_space<vmem>>, vector<1x1x4x8xbf16>
    %28 = vector.shape_cast %27 : vector<1x1x4x8xbf16> to vector<4x8xbf16>
    %cst_36 = arith.constant dense<0.000000e+00> : vector<256x8xf32>
    %29 = tpu.matmul %26, %28, %cst_36 {dimension_numbers = #tpu.dot_dimension_numbers<[1], [0], [0], [1], [0, 0, 1, 1], [], []>} : vector<256x4xbf16>, vector<4x8xbf16>, vector<256x8xf32> -> vector<256x8xf32>
    %30 = arith.addf %23, %29 : vector<256x8xf32>
    %c0_37 = arith.constant 0 : index
    %c0_38 = arith.constant 0 : index
    %c0_39 = arith.constant 0 : index
    %c2 = arith.constant 2 : index
    %c0_40 = arith.constant 0 : index
    %31 = vector.load %arg2[%c0_37, %c0_38, %c0_39, %c2, %c0_40] : memref<1x1x18x18x4xbf16, #tpu.memory_space<vmem>>, vector<1x1x16x16x4xbf16>
    %32 = vector.shape_cast %31 : vector<1x1x16x16x4xbf16> to vector<16x16x4xbf16>
    %33 = vector.shape_cast %32 : vector<16x16x4xbf16> to vector<256x4xbf16>
    %c0_41 = arith.constant 0 : index
    %c2_42 = arith.constant 2 : index
    %c0_43 = arith.constant 0 : index
    %c0_44 = arith.constant 0 : index
    %34 = vector.load %arg3[%c0_41, %c2_42, %c0_43, %c0_44] : memref<3x3x4x8xbf16, #tpu.memory_space<vmem>>, vector<1x1x4x8xbf16>
    %35 = vector.shape_cast %34 : vector<1x1x4x8xbf16> to vector<4x8xbf16>
    %cst_45 = arith.constant dense<0.000000e+00> : vector<256x8xf32>
    %36 = tpu.matmul %33, %35, %cst_45 {dimension_numbers = #tpu.dot_dimension_numbers<[1], [0], [0], [1], [0, 0, 1, 1], [], []>} : vector<256x4xbf16>, vector<4x8xbf16>, vector<256x8xf32> -> vector<256x8xf32>
    %37 = arith.addf %30, %36 : vector<256x8xf32>
    %c0_46 = arith.constant 0 : index
    %c0_47 = arith.constant 0 : index
    %c1_48 = arith.constant 1 : index
    %c0_49 = arith.constant 0 : index
    %c0_50 = arith.constant 0 : index
    %38 = vector.load %arg2[%c0_46, %c0_47, %c1_48, %c0_49, %c0_50] : memref<1x1x18x18x4xbf16, #tpu.memory_space<vmem>>, vector<1x1x16x16x4xbf16>
    %39 = vector.shape_cast %38 : vector<1x1x16x16x4xbf16> to vector<16x16x4xbf16>
    %40 = vector.shape_cast %39 : vector<16x16x4xbf16> to vector<256x4xbf16>
    %c1_51 = arith.constant 1 : index
    %c0_52 = arith.constant 0 : index
    %c0_53 = arith.constant 0 : index
    %c0_54 = arith.constant 0 : index
    %41 = vector.load %arg3[%c1_51, %c0_52, %c0_53, %c0_54] : memref<3x3x4x8xbf16, #tpu.memory_space<vmem>>, vector<1x1x4x8xbf16>
    %42 = vector.shape_cast %41 : vector<1x1x4x8xbf16> to vector<4x8xbf16>
    %cst_55 = arith.constant dense<0.000000e+00> : vector<256x8xf32>
    %43 = tpu.matmul %40, %42, %cst_55 {dimension_numbers = #tpu.dot_dimension_numbers<[1], [0], [0], [1], [0, 0, 1, 1], [], []>} : vector<256x4xbf16>, vector<4x8xbf16>, vector<256x8xf32> -> vector<256x8xf32>
    %44 = arith.addf %37, %43 : vector<256x8xf32>
    %c0_56 = arith.constant 0 : index
    %c0_57 = arith.constant 0 : index
    %c1_58 = arith.constant 1 : index
    %c1_59 = arith.constant 1 : index
    %c0_60 = arith.constant 0 : index
    %45 = vector.load %arg2[%c0_56, %c0_57, %c1_58, %c1_59, %c0_60] : memref<1x1x18x18x4xbf16, #tpu.memory_space<vmem>>, vector<1x1x16x16x4xbf16>
    %46 = vector.shape_cast %45 : vector<1x1x16x16x4xbf16> to vector<16x16x4xbf16>
    %47 = vector.shape_cast %46 : vector<16x16x4xbf16> to vector<256x4xbf16>
    %c1_61 = arith.constant 1 : index
    %c1_62 = arith.constant 1 : index
    %c0_63 = arith.constant 0 : index
    %c0_64 = arith.constant 0 : index
    %48 = vector.load %arg3[%c1_61, %c1_62, %c0_63, %c0_64] : memref<3x3x4x8xbf16, #tpu.memory_space<vmem>>, vector<1x1x4x8xbf16>
    %49 = vector.shape_cast %48 : vector<1x1x4x8xbf16> to vector<4x8xbf16>
    %cst_65 = arith.constant dense<0.000000e+00> : vector<256x8xf32>
    %50 = tpu.matmul %47, %49, %cst_65 {dimension_numbers = #tpu.dot_dimension_numbers<[1], [0], [0], [1], [0, 0, 1, 1], [], []>} : vector<256x4xbf16>, vector<4x8xbf16>, vector<256x8xf32> -> vector<256x8xf32>
    %51 = arith.addf %44, %50 : vector<256x8xf32>
    %c0_66 = arith.constant 0 : index
    %c0_67 = arith.constant 0 : index
    %c1_68 = arith.constant 1 : index
    %c2_69 = arith.constant 2 : index
    %c0_70 = arith.constant 0 : index
    %52 = vector.load %arg2[%c0_66, %c0_67, %c1_68, %c2_69, %c0_70] : memref<1x1x18x18x4xbf16, #tpu.memory_space<vmem>>, vector<1x1x16x16x4xbf16>
    %53 = vector.shape_cast %52 : vector<1x1x16x16x4xbf16> to vector<16x16x4xbf16>
    %54 = vector.shape_cast %53 : vector<16x16x4xbf16> to vector<256x4xbf16>
    %c1_71 = arith.constant 1 : index
    %c2_72 = arith.constant 2 : index
    %c0_73 = arith.constant 0 : index
    %c0_74 = arith.constant 0 : index
    %55 = vector.load %arg3[%c1_71, %c2_72, %c0_73, %c0_74] : memref<3x3x4x8xbf16, #tpu.memory_space<vmem>>, vector<1x1x4x8xbf16>
    %56 = vector.shape_cast %55 : vector<1x1x4x8xbf16> to vector<4x8xbf16>
    %cst_75 = arith.constant dense<0.000000e+00> : vector<256x8xf32>
    %57 = tpu.matmul %54, %56, %cst_75 {dimension_numbers = #tpu.dot_dimension_numbers<[1], [0], [0], [1], [0, 0, 1, 1], [], []>} : vector<256x4xbf16>, vector<4x8xbf16>, vector<256x8xf32> -> vector<256x8xf32>
    %58 = arith.addf %51, %57 : vector<256x8xf32>
    %c0_76 = arith.constant 0 : index
    %c0_77 = arith.constant 0 : index
    %c2_78 = arith.constant 2 : index
    %c0_79 = arith.constant 0 : index
    %c0_80 = arith.constant 0 : index
    %59 = vector.load %arg2[%c0_76, %c0_77, %c2_78, %c0_79, %c0_80] : memref<1x1x18x18x4xbf16, #tpu.memory_space<vmem>>, vector<1x1x16x16x4xbf16>
    %60 = vector.shape_cast %59 : vector<1x1x16x16x4xbf16> to vector<16x16x4xbf16>
    %61 = vector.shape_cast %60 : vector<16x16x4xbf16> to vector<256x4xbf16>
    %c2_81 = arith.constant 2 : index
    %c0_82 = arith.constant 0 : index
    %c0_83 = arith.constant 0 : index
    %c0_84 = arith.constant 0 : index
    %62 = vector.load %arg3[%c2_81, %c0_82, %c0_83, %c0_84] : memref<3x3x4x8xbf16, #tpu.memory_space<vmem>>, vector<1x1x4x8xbf16>
    %63 = vector.shape_cast %62 : vector<1x1x4x8xbf16> to vector<4x8xbf16>
    %cst_85 = arith.constant dense<0.000000e+00> : vector<256x8xf32>
    %64 = tpu.matmul %61, %63, %cst_85 {dimension_numbers = #tpu.dot_dimension_numbers<[1], [0], [0], [1], [0, 0, 1, 1], [], []>} : vector<256x4xbf16>, vector<4x8xbf16>, vector<256x8xf32> -> vector<256x8xf32>
    %65 = arith.addf %58, %64 : vector<256x8xf32>
    %c0_86 = arith.constant 0 : index
    %c0_87 = arith.constant 0 : index
    %c2_88 = arith.constant 2 : index
    %c1_89 = arith.constant 1 : index
    %c0_90 = arith.constant 0 : index
    %66 = vector.load %arg2[%c0_86, %c0_87, %c2_88, %c1_89, %c0_90] : memref<1x1x18x18x4xbf16, #tpu.memory_space<vmem>>, vector<1x1x16x16x4xbf16>
    %67 = vector.shape_cast %66 : vector<1x1x16x16x4xbf16> to vector<16x16x4xbf16>
    %68 = vector.shape_cast %67 : vector<16x16x4xbf16> to vector<256x4xbf16>
    %c2_91 = arith.constant 2 : index
    %c1_92 = arith.constant 1 : index
    %c0_93 = arith.constant 0 : index
    %c0_94 = arith.constant 0 : index
    %69 = vector.load %arg3[%c2_91, %c1_92, %c0_93, %c0_94] : memref<3x3x4x8xbf16, #tpu.memory_space<vmem>>, vector<1x1x4x8xbf16>
    %70 = vector.shape_cast %69 : vector<1x1x4x8xbf16> to vector<4x8xbf16>
    %cst_95 = arith.constant dense<0.000000e+00> : vector<256x8xf32>
    %71 = tpu.matmul %68, %70, %cst_95 {dimension_numbers = #tpu.dot_dimension_numbers<[1], [0], [0], [1], [0, 0, 1, 1], [], []>} : vector<256x4xbf16>, vector<4x8xbf16>, vector<256x8xf32> -> vector<256x8xf32>
    %72 = arith.addf %65, %71 : vector<256x8xf32>
    %c0_96 = arith.constant 0 : index
    %c0_97 = arith.constant 0 : index
    %c2_98 = arith.constant 2 : index
    %c2_99 = arith.constant 2 : index
    %c0_100 = arith.constant 0 : index
    %73 = vector.load %arg2[%c0_96, %c0_97, %c2_98, %c2_99, %c0_100] : memref<1x1x18x18x4xbf16, #tpu.memory_space<vmem>>, vector<1x1x16x16x4xbf16>
    %74 = vector.shape_cast %73 : vector<1x1x16x16x4xbf16> to vector<16x16x4xbf16>
    %75 = vector.shape_cast %74 : vector<16x16x4xbf16> to vector<256x4xbf16>
    %c2_101 = arith.constant 2 : index
    %c2_102 = arith.constant 2 : index
    %c0_103 = arith.constant 0 : index
    %c0_104 = arith.constant 0 : index
    %76 = vector.load %arg3[%c2_101, %c2_102, %c0_103, %c0_104] : memref<3x3x4x8xbf16, #tpu.memory_space<vmem>>, vector<1x1x4x8xbf16>
    %77 = vector.shape_cast %76 : vector<1x1x4x8xbf16> to vector<4x8xbf16>
    %cst_105 = arith.constant dense<0.000000e+00> : vector<256x8xf32>
    %78 = tpu.matmul %75, %77, %cst_105 {dimension_numbers = #tpu.dot_dimension_numbers<[1], [0], [0], [1], [0, 0, 1, 1], [], []>} : vector<256x4xbf16>, vector<4x8xbf16>, vector<256x8xf32> -> vector<256x8xf32>
    %79 = arith.addf %72, %78 : vector<256x8xf32>
    %cst_106 = arith.constant dense<0.000000e+00> : vector<8xf32>
    %80 = vector.multi_reduction <add>, %79, %cst_106 [0] : vector<256x8xf32> to vector<8xf32>
    %81 = vector.shape_cast %80 : vector<8xf32> to vector<1x8xf32>
    %82 = arith.addf %14, %81 : vector<1x8xf32>
    %83 = arith.mulf %79, %79 : vector<256x8xf32>
    %cst_107 = arith.constant dense<0.000000e+00> : vector<8xf32>
    %84 = vector.multi_reduction <add>, %83, %cst_107 [0] : vector<256x8xf32> to vector<8xf32>
    %85 = vector.shape_cast %84 : vector<8xf32> to vector<1x8xf32>
    %86 = arith.addf %15, %85 : vector<1x8xf32>
    %87 = vector.shape_cast %79 : vector<256x8xf32> to vector<16x16x8xf32>
    %88 = arith.truncf %87 : vector<16x16x8xf32> to vector<16x16x8xbf16>
    %c0_108 = arith.constant 0 : index
    %c1_109 = arith.constant 1 : index
    %c1_110 = arith.constant 1 : index
    %c0_111 = arith.constant 0 : index
    %89 = vector.load %arg6[%c0_108, %c1_109, %c1_110, %c0_111] : memref<1x18x18x8xbf16, #tpu.memory_space<vmem>>, vector<1x16x16x8xbf16>
    %90 = vector.shape_cast %89 : vector<1x16x16x8xbf16> to vector<16x16x8xbf16>
    %91 = vector.shape_cast %88 : vector<16x16x8xbf16> to vector<1x16x16x8xbf16>
    tpu.vector_store %arg6[%c0_108, %c1_109, %c1_110, %c0_111], %91 {strides = array<i32>} : memref<1x18x18x8xbf16, #tpu.memory_space<vmem>>, vector<1x16x16x8xbf16>,
    %92 = vector.shape_cast %82 : vector<1x8xf32> to vector<1x1x8xf32>
    %c0_112 = arith.constant 0 : index
    %c0_113 = arith.constant 0 : index
    %c0_114 = arith.constant 0 : index
    %93 = vector.load %arg7[%c0_112, %c0_113, %c0_114] : memref<1x1x8xf32, #tpu.memory_space<vmem>>, vector<1x1x8xf32>
    tpu.vector_store %arg7[%c0_112, %c0_113, %c0_114], %92 {strides = array<i32>} : memref<1x1x8xf32, #tpu.memory_space<vmem>>, vector<1x1x8xf32>,
    %94 = vector.shape_cast %86 : vector<1x8xf32> to vector<1x1x8xf32>
    %c0_115 = arith.constant 0 : index
    %c0_116 = arith.constant 0 : index
    %c0_117 = arith.constant 0 : index
    %95 = vector.load %arg8[%c0_115, %c0_116, %c0_117] : memref<1x1x8xf32, #tpu.memory_space<vmem>>, vector<1x1x8xf32>
    tpu.vector_store %arg8[%c0_115, %c0_116, %c0_117], %94 {strides = array<i32>} : memref<1x1x8xf32, #tpu.memory_space<vmem>>, vector<1x1x8xf32>,
    return
  }
  func.func @transform_0(%arg0: i32, %arg1: i32) -> (i32, i32, i32, i32, i32) {
    %c0_i32 = arith.constant 0 : i32
    %c0_i32_0 = arith.constant 0 : i32
    %c0_i32_1 = arith.constant 0 : i32
    %c0_i32_2 = arith.constant 0 : i32
    %c0_i32_3 = arith.constant 0 : i32
    return %arg0, %c0_i32, %c0_i32_0, %c0_i32_1, %c0_i32_2 : i32, i32, i32, i32, i32
  }
  func.func @transform_1(%arg0: i32, %arg1: i32) -> (i32, i32, i32, i32) {
    %c0_i32 = arith.constant 0 : i32
    %c0_i32_0 = arith.constant 0 : i32
    %c0_i32_1 = arith.constant 0 : i32
    %c0_i32_2 = arith.constant 0 : i32
    return %c0_i32, %c0_i32_0, %c0_i32_1, %arg1 : i32, i32, i32, i32
  }
  func.func @transform_2(%arg0: i32, %arg1: i32) -> (i32, i32) {
    %c0_i32 = arith.constant 0 : i32
    %c0_i32_0 = arith.constant 0 : i32
    %c0_i32_1 = arith.constant 0 : i32
    return %c0_i32, %c0_i32_0 : i32, i32
  }
  func.func @transform_3(%arg0: i32, %arg1: i32) -> (i32, i32) {
    %c0_i32 = arith.constant 0 : i32
    %c0_i32_0 = arith.constant 0 : i32
    %c0_i32_1 = arith.constant 0 : i32
    return %c0_i32, %c0_i32_0 : i32, i32
  }
  func.func @transform_4(%arg0: i32, %arg1: i32) -> (i32, i32, i32, i32) {
    %c0_i32 = arith.constant 0 : i32
    %c0_i32_0 = arith.constant 0 : i32
    %c0_i32_1 = arith.constant 0 : i32
    return %arg0, %c0_i32, %c0_i32_0, %arg1 : i32, i32, i32, i32
  }
  func.func @transform_5(%arg0: i32, %arg1: i32) -> (i32, i32, i32) {
    %c0_i32 = arith.constant 0 : i32
    %c0_i32_0 = arith.constant 0 : i32
    return %arg0, %c0_i32, %arg1 : i32, i32, i32
  }
  func.func @transform_6(%arg0: i32, %arg1: i32) -> (i32, i32, i32) {
    %c0_i32 = arith.constant 0 : i32
    %c0_i32_0 = arith.constant 0 : i32
    return %arg0, %c0_i32, %arg1 : i32, i32, i32
  }
}

module attributes {stable_mosaic.version = 11 : i64} {
  func.func @_bn_relu_kernel(%arg0: i32, %arg1: i32, %arg2: memref<1x16x16x8xbf16, #tpu.memory_space<vmem>>, %arg3: memref<1x8xf32, #tpu.memory_space<vmem>>, %arg4: memref<1x8xf32, #tpu.memory_space<vmem>>, %arg5: memref<1x16x16x8xf32, #tpu.memory_space<vmem>>) attributes {dimension_semantics = [#tpu.dimension_semantics<parallel>, #tpu.dimension_semantics<parallel>], iteration_bounds = array<i64: 2, 1>, scalar_prefetch = 0 : i64, scratch_operands = 0 : i64, tpu.core_type = #tpu.core_type<tc>, window_params = [{transform_indices = @transform_0, window_bounds = array<i64: 1, 16, 16, 8>}, {pipeline_mode = #tpu.pipeline_mode<synchronous>, transform_indices = @transform_1, window_bounds = array<i64: 1, 8>}, {pipeline_mode = #tpu.pipeline_mode<synchronous>, transform_indices = @transform_2, window_bounds = array<i64: 1, 8>}, {transform_indices = @transform_3, window_bounds = array<i64: 1, 16, 16, 8>}]} {
    %c0 = arith.constant 0 : index
    %c0_0 = arith.constant 0 : index
    %c0_1 = arith.constant 0 : index
    %c0_2 = arith.constant 0 : index
    %0 = vector.load %arg2[%c0, %c0_0, %c0_1, %c0_2] : memref<1x16x16x8xbf16, #tpu.memory_space<vmem>>, vector<1x16x16x8xbf16>
    %1 = arith.extf %0 : vector<1x16x16x8xbf16> to vector<1x16x16x8xf32>
    %c0_3 = arith.constant 0 : index
    %c0_4 = arith.constant 0 : index
    %2 = vector.load %arg3[%c0_3, %c0_4] : memref<1x8xf32, #tpu.memory_space<vmem>>, vector<1x8xf32>
    %3 = vector.shape_cast %2 : vector<1x8xf32> to vector<8xf32>
    %4 = vector.shape_cast %3 : vector<8xf32> to vector<1x1x1x8xf32>
    %5 = vector.broadcast %4 : vector<1x1x1x8xf32> to vector<1x16x16x8xf32>
    %6 = arith.mulf %1, %5 : vector<1x16x16x8xf32>
    %c0_5 = arith.constant 0 : index
    %c0_6 = arith.constant 0 : index
    %7 = vector.load %arg4[%c0_5, %c0_6] : memref<1x8xf32, #tpu.memory_space<vmem>>, vector<1x8xf32>
    %8 = vector.shape_cast %7 : vector<1x8xf32> to vector<8xf32>
    %9 = vector.shape_cast %8 : vector<8xf32> to vector<1x1x1x8xf32>
    %10 = vector.broadcast %9 : vector<1x1x1x8xf32> to vector<1x16x16x8xf32>
    %11 = arith.addf %6, %10 : vector<1x16x16x8xf32>
    %cst = arith.constant 0.000000e+00 : f32
    %12 = vector.broadcast %cst : f32 to vector<1x16x16x8xf32>
    %13 = arith.maximumf %11, %12 : vector<1x16x16x8xf32>
    %c0_7 = arith.constant 0 : index
    %c0_8 = arith.constant 0 : index
    %c0_9 = arith.constant 0 : index
    %c0_10 = arith.constant 0 : index
    %14 = vector.load %arg5[%c0_7, %c0_8, %c0_9, %c0_10] : memref<1x16x16x8xf32, #tpu.memory_space<vmem>>, vector<1x16x16x8xf32>
    tpu.vector_store %arg5[%c0_7, %c0_8, %c0_9, %c0_10], %13 {strides = array<i32>} : memref<1x16x16x8xf32, #tpu.memory_space<vmem>>, vector<1x16x16x8xf32>,
    return
  }
  func.func @transform_0(%arg0: i32, %arg1: i32) -> (i32, i32, i32, i32) {
    %c0_i32 = arith.constant 0 : i32
    %c0_i32_0 = arith.constant 0 : i32
    %c0_i32_1 = arith.constant 0 : i32
    return %arg0, %arg1, %c0_i32, %c0_i32_0 : i32, i32, i32, i32
  }
  func.func @transform_1(%arg0: i32, %arg1: i32) -> (i32, i32) {
    %c0_i32 = arith.constant 0 : i32
    %c0_i32_0 = arith.constant 0 : i32
    %c0_i32_1 = arith.constant 0 : i32
    return %c0_i32, %c0_i32_0 : i32, i32
  }
  func.func @transform_2(%arg0: i32, %arg1: i32) -> (i32, i32) {
    %c0_i32 = arith.constant 0 : i32
    %c0_i32_0 = arith.constant 0 : i32
    %c0_i32_1 = arith.constant 0 : i32
    return %c0_i32, %c0_i32_0 : i32, i32
  }
  func.func @transform_3(%arg0: i32, %arg1: i32) -> (i32, i32, i32, i32) {
    %c0_i32 = arith.constant 0 : i32
    %c0_i32_0 = arith.constant 0 : i32
    %c0_i32_1 = arith.constant 0 : i32
    return %arg0, %arg1, %c0_i32, %c0_i32_0 : i32, i32, i32, i32
  }
}

module attributes {stable_mosaic.version = 11 : i64} {
  func.func @kernel(%arg0: i32, %arg1: i32, %arg2: memref<1x1x18x18x8xbf16, #tpu.memory_space<vmem>>, %arg3: memref<3x3x8x8xbf16, #tpu.memory_space<vmem>>, %arg4: memref<1x8xf32, #tpu.memory_space<vmem>>, %arg5: memref<1x8xf32, #tpu.memory_space<vmem>>, %arg6: memref<1x16x16x8xbf16, #tpu.memory_space<vmem>>, %arg7: memref<1x1x8xf32, #tpu.memory_space<vmem>>, %arg8: memref<1x1x8xf32, #tpu.memory_space<vmem>>) attributes {dimension_semantics = [#tpu.dimension_semantics<parallel>, #tpu.dimension_semantics<parallel>], iteration_bounds = array<i64: 2, 1>, scalar_prefetch = 0 : i64, scratch_operands = 0 : i64, tpu.core_type = #tpu.core_type<tc>, window_params = [{transform_indices = @transform_0, window_bounds = array<i64: 1, 1, 18, 18, 8>}, {transform_indices = @transform_1, window_bounds = array<i64: 3, 3, 8, 8>}, {pipeline_mode = #tpu.pipeline_mode<synchronous>, transform_indices = @transform_2, window_bounds = array<i64: 1, 8>}, {pipeline_mode = #tpu.pipeline_mode<synchronous>, transform_indices = @transform_3, window_bounds = array<i64: 1, 8>}, {transform_indices = @transform_4, window_bounds = array<i64: 1, 16, 16, 8>}, {transform_indices = @transform_5, window_bounds = array<i64: 1, 1, 8>}, {transform_indices = @transform_6, window_bounds = array<i64: 1, 1, 8>}]} {
    %0 = tpu.iota {dimensions = array<i32: 1>} : vector<18x18x1xi32>
    %c1_i32 = arith.constant 1 : i32
    %1 = vector.broadcast %c1_i32 : i32 to vector<18x18x1xi32>
    %2 = arith.cmpi sge, %0, %1 : vector<18x18x1xi32>
    %c16_i32 = arith.constant 16 : i32
    %3 = vector.broadcast %c16_i32 : i32 to vector<18x18x1xi32>
    %4 = arith.cmpi sle, %0, %3 : vector<18x18x1xi32>
    %5 = arith.andi %2, %4 : vector<18x18x1xi1>
    %cst = arith.constant 0.000000e+00 : f32
    %6 = vector.broadcast %cst : f32 to vector<1x8xf32>
    %cst_0 = arith.constant 0.000000e+00 : f32
    %7 = vector.broadcast %cst_0 : f32 to vector<1x8xf32>
    %cst_1 = arith.constant 0.000000e+00 : f32
    %8 = vector.broadcast %cst_1 : f32 to vector<256x8xf32>
    %c0 = arith.constant 0 : index
    %c0_2 = arith.constant 0 : index
    %c0_3 = arith.constant 0 : index
    %c0_4 = arith.constant 0 : index
    %c0_5 = arith.constant 0 : index
    %9 = vector.load %arg2[%c0, %c0_2, %c0_3, %c0_4, %c0_5] : memref<1x1x18x18x8xbf16, #tpu.memory_space<vmem>>, vector<1x1x18x18x8xbf16>
    %10 = vector.shape_cast %9 : vector<1x1x18x18x8xbf16> to vector<18x18x8xbf16>
    %11 = arith.extf %10 : vector<18x18x8xbf16> to vector<18x18x8xf32>
    %c0_6 = arith.constant 0 : index
    %c0_7 = arith.constant 0 : index
    %12 = vector.load %arg4[%c0_6, %c0_7] : memref<1x8xf32, #tpu.memory_space<vmem>>, vector<1x8xf32>
    %13 = vector.shape_cast %12 : vector<1x8xf32> to vector<8xf32>
    %14 = vector.shape_cast %13 : vector<8xf32> to vector<1x1x8xf32>
    %15 = vector.broadcast %14 : vector<1x1x8xf32> to vector<18x18x8xf32>
    %16 = arith.mulf %11, %15 : vector<18x18x8xf32>
    %c0_8 = arith.constant 0 : index
    %c0_9 = arith.constant 0 : index
    %17 = vector.load %arg5[%c0_8, %c0_9] : memref<1x8xf32, #tpu.memory_space<vmem>>, vector<1x8xf32>
    %18 = vector.shape_cast %17 : vector<1x8xf32> to vector<8xf32>
    %19 = vector.shape_cast %18 : vector<8xf32> to vector<1x1x8xf32>
    %20 = vector.broadcast %19 : vector<1x1x8xf32> to vector<18x18x8xf32>
    %21 = arith.addf %16, %20 : vector<18x18x8xf32>
    %cst_10 = arith.constant 0.000000e+00 : f32
    %22 = vector.broadcast %cst_10 : f32 to vector<18x18x8xf32>
    %23 = arith.maximumf %21, %22 : vector<18x18x8xf32>
    %24 = tpu.iota {dimensions = array<i32: 0>} : vector<18x18x1xi32>
    %c0_i32 = arith.constant 0 : i32
    %25 = vector.broadcast %c0_i32 : i32 to vector<18x18x1xi32>
    %26 = arith.addi %24, %25 : vector<18x18x1xi32>
    %c1_i32_11 = arith.constant 1 : i32
    %27 = vector.broadcast %c1_i32_11 : i32 to vector<18x18x1xi32>
    %28 = arith.cmpi sge, %26, %27 : vector<18x18x1xi32>
    %29 = arith.andi %5, %28 : vector<18x18x1xi1>
    %c16_i32_12 = arith.constant 16 : i32
    %30 = vector.broadcast %c16_i32_12 : i32 to vector<18x18x1xi32>
    %31 = arith.cmpi sle, %26, %30 : vector<18x18x1xi32>
    %32 = arith.andi %29, %31 : vector<18x18x1xi1>
    %cst_13 = arith.constant 0.000000e+00 : f32
    %33 = vector.shape_cast %32 : vector<18x18x1xi1> to vector<18x18x1xi1>
    %34 = vector.broadcast %33 : vector<18x18x1xi1> to vector<18x18x8xi1>
    %35 = vector.broadcast %cst_13 : f32 to vector<18x18x8xf32>
    %36 = arith.select %34, %23, %35 : vector<18x18x8xi1>, vector<18x18x8xf32>
    %37 = arith.truncf %36 : vector<18x18x8xf32> to vector<18x18x8xbf16>
    %38 = vector.extract_strided_slice %37 {offsets = [0, 0, 0], sizes = [16, 16, 8], strides = [1, 1, 1]} : vector<18x18x8xbf16> to vector<16x16x8xbf16>
    %39 = vector.shape_cast %38 : vector<16x16x8xbf16> to vector<256x8xbf16>
    %c0_14 = arith.constant 0 : index
    %c0_15 = arith.constant 0 : index
    %c0_16 = arith.constant 0 : index
    %c0_17 = arith.constant 0 : index
    %40 = vector.load %arg3[%c0_14, %c0_15, %c0_16, %c0_17] : memref<3x3x8x8xbf16, #tpu.memory_space<vmem>>, vector<1x1x8x8xbf16>
    %41 = vector.shape_cast %40 : vector<1x1x8x8xbf16> to vector<8x8xbf16>
    %cst_18 = arith.constant dense<0.000000e+00> : vector<256x8xf32>
    %42 = tpu.matmul %39, %41, %cst_18 {dimension_numbers = #tpu.dot_dimension_numbers<[1], [0], [0], [1], [0, 0, 1, 1], [], []>} : vector<256x8xbf16>, vector<8x8xbf16>, vector<256x8xf32> -> vector<256x8xf32>
    %43 = arith.addf %8, %42 : vector<256x8xf32>
    %44 = vector.extract_strided_slice %37 {offsets = [0, 1, 0], sizes = [16, 16, 8], strides = [1, 1, 1]} : vector<18x18x8xbf16> to vector<16x16x8xbf16>
    %45 = vector.shape_cast %44 : vector<16x16x8xbf16> to vector<256x8xbf16>
    %c0_19 = arith.constant 0 : index
    %c1 = arith.constant 1 : index
    %c0_20 = arith.constant 0 : index
    %c0_21 = arith.constant 0 : index
    %46 = vector.load %arg3[%c0_19, %c1, %c0_20, %c0_21] : memref<3x3x8x8xbf16, #tpu.memory_space<vmem>>, vector<1x1x8x8xbf16>
    %47 = vector.shape_cast %46 : vector<1x1x8x8xbf16> to vector<8x8xbf16>
    %cst_22 = arith.constant dense<0.000000e+00> : vector<256x8xf32>
    %48 = tpu.matmul %45, %47, %cst_22 {dimension_numbers = #tpu.dot_dimension_numbers<[1], [0], [0], [1], [0, 0, 1, 1], [], []>} : vector<256x8xbf16>, vector<8x8xbf16>, vector<256x8xf32> -> vector<256x8xf32>
    %49 = arith.addf %43, %48 : vector<256x8xf32>
    %50 = vector.extract_strided_slice %37 {offsets = [0, 2, 0], sizes = [16, 16, 8], strides = [1, 1, 1]} : vector<18x18x8xbf16> to vector<16x16x8xbf16>
    %51 = vector.shape_cast %50 : vector<16x16x8xbf16> to vector<256x8xbf16>
    %c0_23 = arith.constant 0 : index
    %c2 = arith.constant 2 : index
    %c0_24 = arith.constant 0 : index
    %c0_25 = arith.constant 0 : index
    %52 = vector.load %arg3[%c0_23, %c2, %c0_24, %c0_25] : memref<3x3x8x8xbf16, #tpu.memory_space<vmem>>, vector<1x1x8x8xbf16>
    %53 = vector.shape_cast %52 : vector<1x1x8x8xbf16> to vector<8x8xbf16>
    %cst_26 = arith.constant dense<0.000000e+00> : vector<256x8xf32>
    %54 = tpu.matmul %51, %53, %cst_26 {dimension_numbers = #tpu.dot_dimension_numbers<[1], [0], [0], [1], [0, 0, 1, 1], [], []>} : vector<256x8xbf16>, vector<8x8xbf16>, vector<256x8xf32> -> vector<256x8xf32>
    %55 = arith.addf %49, %54 : vector<256x8xf32>
    %56 = vector.extract_strided_slice %37 {offsets = [1, 0, 0], sizes = [16, 16, 8], strides = [1, 1, 1]} : vector<18x18x8xbf16> to vector<16x16x8xbf16>
    %57 = vector.shape_cast %56 : vector<16x16x8xbf16> to vector<256x8xbf16>
    %c1_27 = arith.constant 1 : index
    %c0_28 = arith.constant 0 : index
    %c0_29 = arith.constant 0 : index
    %c0_30 = arith.constant 0 : index
    %58 = vector.load %arg3[%c1_27, %c0_28, %c0_29, %c0_30] : memref<3x3x8x8xbf16, #tpu.memory_space<vmem>>, vector<1x1x8x8xbf16>
    %59 = vector.shape_cast %58 : vector<1x1x8x8xbf16> to vector<8x8xbf16>
    %cst_31 = arith.constant dense<0.000000e+00> : vector<256x8xf32>
    %60 = tpu.matmul %57, %59, %cst_31 {dimension_numbers = #tpu.dot_dimension_numbers<[1], [0], [0], [1], [0, 0, 1, 1], [], []>} : vector<256x8xbf16>, vector<8x8xbf16>, vector<256x8xf32> -> vector<256x8xf32>
    %61 = arith.addf %55, %60 : vector<256x8xf32>
    %62 = vector.extract_strided_slice %37 {offsets = [1, 1, 0], sizes = [16, 16, 8], strides = [1, 1, 1]} : vector<18x18x8xbf16> to vector<16x16x8xbf16>
    %63 = vector.shape_cast %62 : vector<16x16x8xbf16> to vector<256x8xbf16>
    %c1_32 = arith.constant 1 : index
    %c1_33 = arith.constant 1 : index
    %c0_34 = arith.constant 0 : index
    %c0_35 = arith.constant 0 : index
    %64 = vector.load %arg3[%c1_32, %c1_33, %c0_34, %c0_35] : memref<3x3x8x8xbf16, #tpu.memory_space<vmem>>, vector<1x1x8x8xbf16>
    %65 = vector.shape_cast %64 : vector<1x1x8x8xbf16> to vector<8x8xbf16>
    %cst_36 = arith.constant dense<0.000000e+00> : vector<256x8xf32>
    %66 = tpu.matmul %63, %65, %cst_36 {dimension_numbers = #tpu.dot_dimension_numbers<[1], [0], [0], [1], [0, 0, 1, 1], [], []>} : vector<256x8xbf16>, vector<8x8xbf16>, vector<256x8xf32> -> vector<256x8xf32>
    %67 = arith.addf %61, %66 : vector<256x8xf32>
    %68 = vector.extract_strided_slice %37 {offsets = [1, 2, 0], sizes = [16, 16, 8], strides = [1, 1, 1]} : vector<18x18x8xbf16> to vector<16x16x8xbf16>
    %69 = vector.shape_cast %68 : vector<16x16x8xbf16> to vector<256x8xbf16>
    %c1_37 = arith.constant 1 : index
    %c2_38 = arith.constant 2 : index
    %c0_39 = arith.constant 0 : index
    %c0_40 = arith.constant 0 : index
    %70 = vector.load %arg3[%c1_37, %c2_38, %c0_39, %c0_40] : memref<3x3x8x8xbf16, #tpu.memory_space<vmem>>, vector<1x1x8x8xbf16>
    %71 = vector.shape_cast %70 : vector<1x1x8x8xbf16> to vector<8x8xbf16>
    %cst_41 = arith.constant dense<0.000000e+00> : vector<256x8xf32>
    %72 = tpu.matmul %69, %71, %cst_41 {dimension_numbers = #tpu.dot_dimension_numbers<[1], [0], [0], [1], [0, 0, 1, 1], [], []>} : vector<256x8xbf16>, vector<8x8xbf16>, vector<256x8xf32> -> vector<256x8xf32>
    %73 = arith.addf %67, %72 : vector<256x8xf32>
    %74 = vector.extract_strided_slice %37 {offsets = [2, 0, 0], sizes = [16, 16, 8], strides = [1, 1, 1]} : vector<18x18x8xbf16> to vector<16x16x8xbf16>
    %75 = vector.shape_cast %74 : vector<16x16x8xbf16> to vector<256x8xbf16>
    %c2_42 = arith.constant 2 : index
    %c0_43 = arith.constant 0 : index
    %c0_44 = arith.constant 0 : index
    %c0_45 = arith.constant 0 : index
    %76 = vector.load %arg3[%c2_42, %c0_43, %c0_44, %c0_45] : memref<3x3x8x8xbf16, #tpu.memory_space<vmem>>, vector<1x1x8x8xbf16>
    %77 = vector.shape_cast %76 : vector<1x1x8x8xbf16> to vector<8x8xbf16>
    %cst_46 = arith.constant dense<0.000000e+00> : vector<256x8xf32>
    %78 = tpu.matmul %75, %77, %cst_46 {dimension_numbers = #tpu.dot_dimension_numbers<[1], [0], [0], [1], [0, 0, 1, 1], [], []>} : vector<256x8xbf16>, vector<8x8xbf16>, vector<256x8xf32> -> vector<256x8xf32>
    %79 = arith.addf %73, %78 : vector<256x8xf32>
    %80 = vector.extract_strided_slice %37 {offsets = [2, 1, 0], sizes = [16, 16, 8], strides = [1, 1, 1]} : vector<18x18x8xbf16> to vector<16x16x8xbf16>
    %81 = vector.shape_cast %80 : vector<16x16x8xbf16> to vector<256x8xbf16>
    %c2_47 = arith.constant 2 : index
    %c1_48 = arith.constant 1 : index
    %c0_49 = arith.constant 0 : index
    %c0_50 = arith.constant 0 : index
    %82 = vector.load %arg3[%c2_47, %c1_48, %c0_49, %c0_50] : memref<3x3x8x8xbf16, #tpu.memory_space<vmem>>, vector<1x1x8x8xbf16>
    %83 = vector.shape_cast %82 : vector<1x1x8x8xbf16> to vector<8x8xbf16>
    %cst_51 = arith.constant dense<0.000000e+00> : vector<256x8xf32>
    %84 = tpu.matmul %81, %83, %cst_51 {dimension_numbers = #tpu.dot_dimension_numbers<[1], [0], [0], [1], [0, 0, 1, 1], [], []>} : vector<256x8xbf16>, vector<8x8xbf16>, vector<256x8xf32> -> vector<256x8xf32>
    %85 = arith.addf %79, %84 : vector<256x8xf32>
    %86 = vector.extract_strided_slice %37 {offsets = [2, 2, 0], sizes = [16, 16, 8], strides = [1, 1, 1]} : vector<18x18x8xbf16> to vector<16x16x8xbf16>
    %87 = vector.shape_cast %86 : vector<16x16x8xbf16> to vector<256x8xbf16>
    %c2_52 = arith.constant 2 : index
    %c2_53 = arith.constant 2 : index
    %c0_54 = arith.constant 0 : index
    %c0_55 = arith.constant 0 : index
    %88 = vector.load %arg3[%c2_52, %c2_53, %c0_54, %c0_55] : memref<3x3x8x8xbf16, #tpu.memory_space<vmem>>, vector<1x1x8x8xbf16>
    %89 = vector.shape_cast %88 : vector<1x1x8x8xbf16> to vector<8x8xbf16>
    %cst_56 = arith.constant dense<0.000000e+00> : vector<256x8xf32>
    %90 = tpu.matmul %87, %89, %cst_56 {dimension_numbers = #tpu.dot_dimension_numbers<[1], [0], [0], [1], [0, 0, 1, 1], [], []>} : vector<256x8xbf16>, vector<8x8xbf16>, vector<256x8xf32> -> vector<256x8xf32>
    %91 = arith.addf %85, %90 : vector<256x8xf32>
    %cst_57 = arith.constant dense<0.000000e+00> : vector<8xf32>
    %92 = vector.multi_reduction <add>, %91, %cst_57 [0] : vector<256x8xf32> to vector<8xf32>
    %93 = vector.shape_cast %92 : vector<8xf32> to vector<1x8xf32>
    %94 = arith.addf %6, %93 : vector<1x8xf32>
    %95 = arith.mulf %91, %91 : vector<256x8xf32>
    %cst_58 = arith.constant dense<0.000000e+00> : vector<8xf32>
    %96 = vector.multi_reduction <add>, %95, %cst_58 [0] : vector<256x8xf32> to vector<8xf32>
    %97 = vector.shape_cast %96 : vector<8xf32> to vector<1x8xf32>
    %98 = arith.addf %7, %97 : vector<1x8xf32>
    %99 = vector.shape_cast %91 : vector<256x8xf32> to vector<16x16x8xf32>
    %100 = arith.truncf %99 : vector<16x16x8xf32> to vector<16x16x8xbf16>
    %c0_59 = arith.constant 0 : index
    %c0_60 = arith.constant 0 : index
    %c0_61 = arith.constant 0 : index
    %c0_62 = arith.constant 0 : index
    %101 = vector.load %arg6[%c0_59, %c0_60, %c0_61, %c0_62] : memref<1x16x16x8xbf16, #tpu.memory_space<vmem>>, vector<1x16x16x8xbf16>
    %102 = vector.shape_cast %101 : vector<1x16x16x8xbf16> to vector<16x16x8xbf16>
    %103 = vector.shape_cast %100 : vector<16x16x8xbf16> to vector<1x16x16x8xbf16>
    tpu.vector_store %arg6[%c0_59, %c0_60, %c0_61, %c0_62], %103 {strides = array<i32>} : memref<1x16x16x8xbf16, #tpu.memory_space<vmem>>, vector<1x16x16x8xbf16>,
    %104 = vector.shape_cast %94 : vector<1x8xf32> to vector<1x1x8xf32>
    %c0_63 = arith.constant 0 : index
    %c0_64 = arith.constant 0 : index
    %c0_65 = arith.constant 0 : index
    %105 = vector.load %arg7[%c0_63, %c0_64, %c0_65] : memref<1x1x8xf32, #tpu.memory_space<vmem>>, vector<1x1x8xf32>
    tpu.vector_store %arg7[%c0_63, %c0_64, %c0_65], %104 {strides = array<i32>} : memref<1x1x8xf32, #tpu.memory_space<vmem>>, vector<1x1x8xf32>,
    %106 = vector.shape_cast %98 : vector<1x8xf32> to vector<1x1x8xf32>
    %c0_66 = arith.constant 0 : index
    %c0_67 = arith.constant 0 : index
    %c0_68 = arith.constant 0 : index
    %107 = vector.load %arg8[%c0_66, %c0_67, %c0_68] : memref<1x1x8xf32, #tpu.memory_space<vmem>>, vector<1x1x8xf32>
    tpu.vector_store %arg8[%c0_66, %c0_67, %c0_68], %106 {strides = array<i32>} : memref<1x1x8xf32, #tpu.memory_space<vmem>>, vector<1x1x8xf32>,
    return
  }
  func.func @transform_0(%arg0: i32, %arg1: i32) -> (i32, i32, i32, i32, i32) {
    %c0_i32 = arith.constant 0 : i32
    %c0_i32_0 = arith.constant 0 : i32
    %c0_i32_1 = arith.constant 0 : i32
    %c0_i32_2 = arith.constant 0 : i32
    %c0_i32_3 = arith.constant 0 : i32
    return %arg0, %c0_i32, %c0_i32_0, %c0_i32_1, %c0_i32_2 : i32, i32, i32, i32, i32
  }
  func.func @transform_1(%arg0: i32, %arg1: i32) -> (i32, i32, i32, i32) {
    %c0_i32 = arith.constant 0 : i32
    %c0_i32_0 = arith.constant 0 : i32
    %c0_i32_1 = arith.constant 0 : i32
    %c0_i32_2 = arith.constant 0 : i32
    return %c0_i32, %c0_i32_0, %c0_i32_1, %arg1 : i32, i32, i32, i32
  }
  func.func @transform_2(%arg0: i32, %arg1: i32) -> (i32, i32) {
    %c0_i32 = arith.constant 0 : i32
    %c0_i32_0 = arith.constant 0 : i32
    %c0_i32_1 = arith.constant 0 : i32
    return %c0_i32, %c0_i32_0 : i32, i32
  }
  func.func @transform_3(%arg0: i32, %arg1: i32) -> (i32, i32) {
    %c0_i32 = arith.constant 0 : i32
    %c0_i32_0 = arith.constant 0 : i32
    %c0_i32_1 = arith.constant 0 : i32
    return %c0_i32, %c0_i32_0 : i32, i32
  }
  func.func @transform_4(%arg0: i32, %arg1: i32) -> (i32, i32, i32, i32) {
    %c0_i32 = arith.constant 0 : i32
    %c0_i32_0 = arith.constant 0 : i32
    %c0_i32_1 = arith.constant 0 : i32
    return %arg0, %c0_i32, %c0_i32_0, %arg1 : i32, i32, i32, i32
  }
  func.func @transform_5(%arg0: i32, %arg1: i32) -> (i32, i32, i32) {
    %c0_i32 = arith.constant 0 : i32
    %c0_i32_0 = arith.constant 0 : i32
    return %arg0, %c0_i32, %arg1 : i32, i32, i32
  }
  func.func @transform_6(%arg0: i32, %arg1: i32) -> (i32, i32, i32) {
    %c0_i32 = arith.constant 0 : i32
    %c0_i32_0 = arith.constant 0 : i32
    return %arg0, %c0_i32, %arg1 : i32, i32, i32
  }
}

</mosaic_0001>

<llo_original>
// kernel: basic_block_forward.5
$region0: #{basic_block_forward.5}
  #allocation0 [shape = 'u32[]', space=smem, size = 0x4, offset = 0x4, fixed_abs, tag = 'smem constant byte address 0x4 - core index']
  #allocation1 [shape = 'u32[72,128]{1,0:T(1,128)}', space=vmem, size = 0x9000, scoped, tag = 'internal scratch']
  %s0 = inlined_call_operand.vmem [shape: bf16[2,16,16,8], index: 0, kind: input, shape index: {}]
  %s1 = inlined_call_operand.vmem [shape: f32[1,8], index: 1, kind: input, shape index: {}]
  %s2 = inlined_call_operand.vmem [shape: f32[1,8], index: 2, kind: input, shape index: {}]
  %s3 = inlined_call_operand.vmem [shape: f32[2,16,16,8], index: 3, kind: output, shape index: {}]
  %s4 = sld [smem:[#allocation0]]
  $region45: #{basic_block_forward.5} parent=0
    _
  %s6 = ssub.s32 1, %s4
  %s7 = scalar_select 0, %s6, %s4
  loop: start=0, step=1, limit=4
  $region2: #{basic_block_forward.5} parent=0 // loop_pre_header
    _
  $region3: #{basic_block_forward.5} parent=0 // loop_header
    %s9 = sphi 0, %s13
    %p10 = scmp.ge.s32.totalorder %s9, 4
    %s16 = sphi 0, %s28
    %s17 = sphi 0, %s24
    %s18 = sphi 0, %s16
    %s19 = sphi 0, %s17
    %s20 = sphi 0, %s18
    %s21 = sphi 0, %s19
    %s33 = sphi 0, %s35
    %s36 = sphi 0, %s33
    %s37 = sphi 0, %s36
    %s53 = sphi 0, %s37
    %s57 = sphi 0, %s57
    %s59 = sphi 0, %s57
    %s60 = sphi 0, %s59
    %s74 = sphi 0, %s60
    %s78 = sphi 0, %s78
    %s80 = sphi 0, %s78
    %s81 = sphi 0, %s80
    %s95 = sphi 0, %s81
    %s103 = sphi 0, %s105
    %s106 = sphi 0, %s103
    %s107 = sphi 0, %s106
    %s123 = sphi 0, %s107
  $region4: #{basic_block_forward.5} parent=0 // loop_header_branch
    %12 = sbr.rel (%p10) target = $region8
  $region5: #{basic_block_forward.5} parent=0 // loop_body
    %s14 = ssub.s32 %s9, 1
    %s15 = ssub.s32 %s9, 2
    %s22 = sadd.s32 1, %s17
    %p23 = scmp.ge.s32.totalorder %s22, 1
    %s24 = scalar_select %p23, 0, %s22
    %s25 = sadd.s32 1, %s16
    %s26 = scalar_select %p23, %s25, %s16
    %p27 = scmp.ge.s32.totalorder %s26, 2
    %s28 = scalar_select %p27, 0, %s26
    %s29 = ssub.s32 %s16, %s28
    %s30 = ssub.s32 %s17, %s24
    %s31 = sor.u32 %s29, %s30
    %p32 = scmp.eq.s32.totalorder %s31, 0
    %s34 = sadd.s32 %s33, 1
    %s35 = scalar_select %p32, %s33, %s34
    %p38 = pneg %p32
    %p39 = scmp.eq.s32.totalorder %s9, 1
    %p40 = por %p38, %p39
    %p41 = scmp.ne.s32.totalorder %s33, %s36
    %p42 = scmp.eq.s32.totalorder %s9, 0
    %p43 = por %p41, %p42
    %p44 = scmp.ne.s32.totalorder %s33, %s36
    %p45 = scmp.eq.s32.totalorder %s14, 1
    %p46 = por %p44, %p45
    %p47 = scmp.ne.s32.totalorder %s36, %s37
    %p48 = scmp.eq.s32.totalorder %s14, 0
    %p49 = por %p47, %p48
    %p50 = scmp.ne.s32.totalorder %s36, %s37
    %p51 = scmp.eq.s32.totalorder %s15, 1
    %p52 = por %p50, %p51
    %p54 = scmp.ne.s32.totalorder %s37, %s53
    %p55 = scmp.eq.s32.totalorder %s15, 0
    %p56 = por %p54, %p55
    %s58 = sadd.s32 %s57, 1
    %p61 = scmp.eq.s32.totalorder %s9, 1
    %p62 = scmp.ne.s32.totalorder %s57, %s59
    %p63 = scmp.eq.s32.totalorder %s9, 0
    %p64 = por %p62, %p63
    %p65 = scmp.ne.s32.totalorder %s57, %s59
    %p66 = scmp.eq.s32.totalorder %s14, 1
    %p67 = por %p65, %p66
    %p68 = scmp.ne.s32.totalorder %s59, %s60
    %p69 = scmp.eq.s32.totalorder %s14, 0
    %p70 = por %p68, %p69
    %p71 = scmp.ne.s32.totalorder %s59, %s60
    %p72 = scmp.eq.s32.totalorder %s15, 1
    %p73 = por %p71, %p72
    %p75 = scmp.ne.s32.totalorder %s60, %s74
    %p76 = scmp.eq.s32.totalorder %s15, 0
    %p77 = por %p75, %p76
    %s79 = sadd.s32 %s78, 1
    %p82 = scmp.eq.s32.totalorder %s9, 1
    %p83 = scmp.ne.s32.totalorder %s78, %s80
    %p84 = scmp.eq.s32.totalorder %s9, 0
    %p85 = por %p83, %p84
    %p86 = scmp.ne.s32.totalorder %s78, %s80
    %p87 = scmp.eq.s32.totalorder %s14, 1
    %p88 = por %p86, %p87
    %p89 = scmp.ne.s32.totalorder %s80, %s81
    %p90 = scmp.eq.s32.totalorder %s14, 0
    %p91 = por %p89, %p90
    %p92 = scmp.ne.s32.totalorder %s80, %s81
    %p93 = scmp.eq.s32.totalorder %s15, 1
    %p94 = por %p92, %p93
    %p96 = scmp.ne.s32.totalorder %s81, %s95
    %p97 = scmp.eq.s32.totalorder %s15, 0
    %p98 = por %p96, %p97
    %s99 = ssub.s32 %s16, %s28
    %s100 = ssub.s32 %s17, %s24
    %s101 = sor.u32 %s99, %s100
    %p102 = scmp.eq.s32.totalorder %s101, 0
    %s104 = sadd.s32 %s103, 1
    %s105 = scalar_select %p102, %s103, %s104
    %p108 = pneg %p102
    %p109 = scmp.eq.s32.totalorder %s9, 1
    %p110 = por %p108, %p109
    %p111 = scmp.ne.s32.totalorder %s103, %s106
    %p112 = scmp.eq.s32.totalorder %s9, 0
    %p113 = por %p111, %p112
    %p114 = scmp.ne.s32.totalorder %s103, %s106
    %p115 = scmp.eq.s32.totalorder %s14, 1
    %p116 = por %p114, %p115
    %p117 = scmp.ne.s32.totalorder %s106, %s107
    %p118 = scmp.eq.s32.totalorder %s14, 0
    %p119 = por %p117, %p118
    %p120 = scmp.ne.s32.totalorder %s106, %s107
    %p121 = scmp.eq.s32.totalorder %s15, 1
    %p122 = por %p120, %p121
    %p124 = scmp.ne.s32.totalorder %s107, %s123
    %p125 = scmp.eq.s32.totalorder %s15, 0
    %p126 = por %p124, %p125
    %p127 = scmp.le.s32.totalorder 1, %s9
    %p128 = scmp.lt.s32.totalorder %s9, 3
    %p129 = pnand %p127, %p128
    %p130 = pneg %p129
    // Predicated region
    $region9: #{basic_block_forward.5} parent=5 // pred_check
      _
    $region10: #{basic_block_forward.5} parent=5 // pred_check_branch
      %132 = sbr.rel (%p129) target = $region12
    $region11: #{basic_block_forward.5} parent=5 // pred_region
      %s133 = ssub.s32 %s9, 1
      // Predicated region
      $region13: #{basic_block_forward.5} parent=11 // pred_check
        %p134 = pneg %p70
      $region14: #{basic_block_forward.5} parent=11 // pred_check_branch
        %136 = sbr.rel (%p134) target = $region16
      $region15: #{basic_block_forward.5} parent=11 // pred_region
        _
      $region16: #{basic_block_forward.5} parent=11 // pred_fallthru
        _
      // Predicated region
      $region17: #{basic_block_forward.5} parent=11 // pred_check
        %p137 = pneg %p91
      $region18: #{basic_block_forward.5} parent=11 // pred_check_branch
        %139 = sbr.rel (%p137) target = $region20
      $region19: #{basic_block_forward.5} parent=11 // pred_region
        _
      $region20: #{basic_block_forward.5} parent=11 // pred_fallthru
        _
    $region12: #{basic_block_forward.5} parent=5 // pred_fallthru
      _
    %p140 = scmp.lt.s32.totalorder %s9, 2
    // Predicated region
    $region21: #{basic_block_forward.5} parent=5 // pred_check
      %p141 = pneg %p140
    $region22: #{basic_block_forward.5} parent=5 // pred_check_branch
      %143 = sbr.rel (%p141) target = $region24
    $region23: #{basic_block_forward.5} parent=5 // pred_region
      // Predicated region
      $region25: #{basic_block_forward.5} parent=23 // pred_check
        %p144 = pneg %p43
      $region26: #{basic_block_forward.5} parent=23 // pred_check_branch
        %146 = sbr.rel (%p144) target = $region28
      $region27: #{basic_block_forward.5} parent=23 // pred_region
        %s147 = smul.u32 16, %s17
        %p148 = scmp.lt.s32.totalorder %s16, 1
        %s149 = scalar_select %p148, %s16, 1
        %p150 = scmp.lt.s32.totalorder %s147, 15
        %s151 = scalar_select %p150, %s147, 15
        %s152 = smul.addr %s151, 2
        %s153 = smul.addr %s149, 32
        %s154 = sadd.s32 %s152, %s153
        %s155 = smul.addr %s154, 4
        %s156 = scalar_lea.vmem %s0, %s155
        %s157 = smul.u32 16, %s17
      $region28: #{basic_block_forward.5} parent=23 // pred_fallthru
        _
    $region24: #{basic_block_forward.5} parent=5 // pred_fallthru
      _
    %p158 = scmp.le.s32.totalorder 1, %s9
    %p159 = scmp.lt.s32.totalorder %s9, 3
    %p160 = pnand %p158, %p159
    %p161 = pneg %p160
    // Predicated region
    $region29: #{basic_block_forward.5} parent=5 // pred_check
      _
    $region30: #{basic_block_forward.5} parent=5 // pred_check_branch
      %163 = sbr.rel (%p160) target = $region32
    $region31: #{basic_block_forward.5} parent=5 // pred_region
      %s164 = ssub.s32 %s9, 1
      %s165 = smul.u32 16, %s19
      %p166 = scmp.lt.s32.totalorder %s18, 1
      %s167 = scalar_select %p166, %s18, 1
      %p168 = scmp.lt.s32.totalorder %s165, 15
      %s169 = scalar_select %p168, %s165, 15
      %s170 = smul.addr %s169, 2
      %s171 = smul.addr %s167, 32
      %s172 = sadd.s32 %s170, %s171
      %s173 = smul.addr %s172, 4
      %s174 = scalar_lea.vmem %s0, %s173
      %p175 = pneg %p49
      %p176 = pneg %p46
      %p177 = pneg %p70
      %p178 = pneg %p67
      %p179 = pneg %p91
      %p180 = pneg %p88
      %p181 = pneg %p119
      %p182 = pneg %p116
      %s183 = smul.u32 16, %s19
      %p184 = scmp.lt.s32.totalorder %s18, 1
      %s185 = scalar_select %p184, %s18, 1
      %p186 = scmp.lt.s32.totalorder %s183, 15
      %s187 = scalar_select %p186, %s183, 15
      %s188 = smul.addr %s187, 2
      %s189 = smul.addr %s185, 32
      %s190 = sadd.s32 %s188, %s189
      %s191 = smul.addr %s190, 8
      %s192 = scalar_lea.vmem %s3, %s191
      %s193 = smul.u32 16, %s19
      %p194 = scmp.lt.s32.totalorder %s18, 1
      %s195 = scalar_select %p194, %s18, 1
      %p196 = scmp.lt.s32.totalorder %s193, 15
      %s197 = scalar_select %p196, %s193, 15
      %s198 = smul.addr %s197, 2
      %s199 = smul.addr %s195, 32
      %s200 = sadd.s32 %s198, %s199
      %s201 = smul.addr %s200, 4
      %s202 = scalar_lea.vmem %s0, %s201
      %s203 = smul.u32 16, %s19
      %s204 = smul.u32 16, %s19
      %p205 = scmp.lt.s32.totalorder %s18, 1
      %s206 = scalar_select %p205, %s18, 1
      %p207 = scmp.lt.s32.totalorder %s204, 15
      %s208 = scalar_select %p207, %s204, 15
      %s209 = smul.addr %s208, 2
      %s210 = smul.addr %s206, 32
      %s211 = sadd.s32 %s209, %s210
      %s212 = smul.addr %s211, 8
      %s213 = scalar_lea.vmem %s3, %s212
      %s214 = smul.u32 16, %s19
      %v215 = vld [vmem:[%s202] sm:$0xf]
      %v216 = vld [vmem:[%s202 + $0x4] sm:$0xf]
      %v217 = vld [vmem:[%s202 + $0x8] sm:$0xf]
      %v218 = vld [vmem:[%s202 + $0xc] sm:$0xf]
      %v219 = vld [vmem:[%s202 + $0x10] sm:$0xf]
      %v220 = vld [vmem:[%s202 + $0x14] sm:$0xf]
      %v221 = vld [vmem:[%s202 + $0x18] sm:$0xf]
      %v222 = vld [vmem:[%s202 + $0x1c] sm:$0xf]
      %v223 = vld [vmem:[%s202 + $0x20] sm:$0xf]
      %v224 = vld [vmem:[%s202 + $0x24] sm:$0xf]
      %v225 = vld [vmem:[%s202 + $0x28] sm:$0xf]
      %v226 = vld [vmem:[%s202 + $0x2c] sm:$0xf]
      %v227 = vld [vmem:[%s202 + $0x30] sm:$0xf]
      %v228 = vld [vmem:[%s202 + $0x34] sm:$0xf]
      %v229 = vld [vmem:[%s202 + $0x38] sm:$0xf]
      %v230 = vld [vmem:[%s202 + $0x3c] sm:$0xf]
      %v231 = vld [vmem:[%s202 + $0x40] sm:$0xf]
      %v232 = vld [vmem:[%s202 + $0x44] sm:$0xf]
      %v233 = vld [vmem:[%s202 + $0x48] sm:$0xf]
      %v234 = vld [vmem:[%s202 + $0x4c] sm:$0xf]
      %v235 = vld [vmem:[%s202 + $0x50] sm:$0xf]
      %v236 = vld [vmem:[%s202 + $0x54] sm:$0xf]
      %v237 = vld [vmem:[%s202 + $0x58] sm:$0xf]
      %v238 = vld [vmem:[%s202 + $0x5c] sm:$0xf]
      %v239 = vld [vmem:[%s202 + $0x60] sm:$0xf]
      %v240 = vld [vmem:[%s202 + $0x64] sm:$0xf]
      %v241 = vld [vmem:[%s202 + $0x68] sm:$0xf]
      %v242 = vld [vmem:[%s202 + $0x6c] sm:$0xf]
      %v243 = vld [vmem:[%s202 + $0x70] sm:$0xf]
      %v244 = vld [vmem:[%s202 + $0x74] sm:$0xf]
      %v245 = vld [vmem:[%s202 + $0x78] sm:$0xf]
      %v246 = vld [vmem:[%s202 + $0x7c] sm:$0xf]
      %v247 = vunpack.c.l.bf16 %v215
      %v248 = vunpack.c.l.bf16 %v216
      %v249 = vunpack.c.l.bf16 %v217
      %v250 = vunpack.c.l.bf16 %v218
      %v251 = vunpack.c.l.bf16 %v219
      %v252 = vunpack.c.l.bf16 %v220
      %v253 = vunpack.c.l.bf16 %v221
      %v254 = vunpack.c.l.bf16 %v222
      %v255 = vunpack.c.l.bf16 %v223
      %v256 = vunpack.c.l.bf16 %v224
      %v257 = vunpack.c.l.bf16 %v225
      %v258 = vunpack.c.l.bf16 %v226
      %v259 = vunpack.c.l.bf16 %v227
      %v260 = vunpack.c.l.bf16 %v228
      %v261 = vunpack.c.l.bf16 %v229
      %v262 = vunpack.c.l.bf16 %v230
      %v263 = vunpack.c.l.bf16 %v231
      %v264 = vunpack.c.l.bf16 %v232
      %v265 = vunpack.c.l.bf16 %v233
      %v266 = vunpack.c.l.bf16 %v234
      %v267 = vunpack.c.l.bf16 %v235
      %v268 = vunpack.c.l.bf16 %v236
      %v269 = vunpack.c.l.bf16 %v237
      %v270 = vunpack.c.l.bf16 %v238
      %v271 = vunpack.c.l.bf16 %v239
      %v272 = vunpack.c.l.bf16 %v240
      %v273 = vunpack.c.l.bf16 %v241
      %v274 = vunpack.c.l.bf16 %v242
      %v275 = vunpack.c.l.bf16 %v243
      %v276 = vunpack.c.l.bf16 %v244
      %v277 = vunpack.c.l.bf16 %v245
      %v278 = vunpack.c.l.bf16 %v246
      %v279 = vld [vmem:[%s1] sm:$0x1]
      %v281 = vperm.slane %v279, 0
      %v283 = vmul.f32 %v247, %v281
      %v284 = vmul.f32 %v248, %v281
      %v285 = vmul.f32 %v249, %v281
      %v286 = vmul.f32 %v250, %v281
      %v287 = vmul.f32 %v251, %v281
      %v288 = vmul.f32 %v252, %v281
      %v289 = vmul.f32 %v253, %v281
      %v290 = vmul.f32 %v254, %v281
      %v291 = vmul.f32 %v255, %v281
      %v292 = vmul.f32 %v256, %v281
      %v293 = vmul.f32 %v257, %v281
      %v294 = vmul.f32 %v258, %v281
      %v295 = vmul.f32 %v259, %v281
      %v296 = vmul.f32 %v260, %v281
      %v297 = vmul.f32 %v261, %v281
      %v298 = vmul.f32 %v262, %v281
      %v299 = vmul.f32 %v263, %v281
      %v300 = vmul.f32 %v264, %v281
      %v301 = vmul.f32 %v265, %v281
      %v302 = vmul.f32 %v266, %v281
      %v303 = vmul.f32 %v267, %v281
      %v304 = vmul.f32 %v268, %v281
      %v305 = vmul.f32 %v269, %v281
      %v306 = vmul.f32 %v270, %v281
      %v307 = vmul.f32 %v271, %v281
      %v308 = vmul.f32 %v272, %v281
      %v309 = vmul.f32 %v273, %v281
      %v310 = vmul.f32 %v274, %v281
      %v311 = vmul.f32 %v275, %v281
      %v312 = vmul.f32 %v276, %v281
      %v313 = vmul.f32 %v277, %v281
      %v314 = vmul.f32 %v278, %v281
      %v315 = vld [vmem:[%s2] sm:$0x1]
      %v317 = vperm.slane %v315, 0
      %v319 = vadd.f32 %v283, %v317
      %v320 = vadd.f32 %v284, %v317
      %v321 = vadd.f32 %v285, %v317
      %v322 = vadd.f32 %v286, %v317
      %v323 = vadd.f32 %v287, %v317
      %v324 = vadd.f32 %v288, %v317
      %v325 = vadd.f32 %v289, %v317
      %v326 = vadd.f32 %v290, %v317
      %v327 = vadd.f32 %v291, %v317
      %v328 = vadd.f32 %v292, %v317
      %v329 = vadd.f32 %v293, %v317
      %v330 = vadd.f32 %v294, %v317
      %v331 = vadd.f32 %v295, %v317
      %v332 = vadd.f32 %v296, %v317
      %v333 = vadd.f32 %v297, %v317
      %v334 = vadd.f32 %v298, %v317
      %v335 = vadd.f32 %v299, %v317
      %v336 = vadd.f32 %v300, %v317
      %v337 = vadd.f32 %v301, %v317
      %v338 = vadd.f32 %v302, %v317
      %v339 = vadd.f32 %v303, %v317
      %v340 = vadd.f32 %v304, %v317
      %v341 = vadd.f32 %v305, %v317
      %v342 = vadd.f32 %v306, %v317
      %v343 = vadd.f32 %v307, %v317
      %v344 = vadd.f32 %v308, %v317
      %v345 = vadd.f32 %v309, %v317
      %v346 = vadd.f32 %v310, %v317
      %v347 = vadd.f32 %v311, %v317
      %v348 = vadd.f32 %v312, %v317
      %v349 = vadd.f32 %v313, %v317
      %v350 = vadd.f32 %v314, %v317
      %v351 = vmax.f32 %v319, 0.0
      %v352 = vmax.f32 %v320, 0.0
      %v353 = vmax.f32 %v321, 0.0
      %v354 = vmax.f32 %v322, 0.0
      %v355 = vmax.f32 %v323, 0.0
      %v356 = vmax.f32 %v324, 0.0
      %v357 = vmax.f32 %v325, 0.0
      %v358 = vmax.f32 %v326, 0.0
      %v359 = vmax.f32 %v327, 0.0
      %v360 = vmax.f32 %v328, 0.0
      %v361 = vmax.f32 %v329, 0.0
      %v362 = vmax.f32 %v330, 0.0
      %v363 = vmax.f32 %v331, 0.0
      %v364 = vmax.f32 %v332, 0.0
      %v365 = vmax.f32 %v333, 0.0
      %v366 = vmax.f32 %v334, 0.0
      %v367 = vmax.f32 %v335, 0.0
      %v368 = vmax.f32 %v336, 0.0
      %v369 = vmax.f32 %v337, 0.0
      %v370 = vmax.f32 %v338, 0.0
      %v371 = vmax.f32 %v339, 0.0
      %v372 = vmax.f32 %v340, 0.0
      %v373 = vmax.f32 %v341, 0.0
      %v374 = vmax.f32 %v342, 0.0
      %v375 = vmax.f32 %v343, 0.0
      %v376 = vmax.f32 %v344, 0.0
      %v377 = vmax.f32 %v345, 0.0
      %v378 = vmax.f32 %v346, 0.0
      %v379 = vmax.f32 %v347, 0.0
      %v380 = vmax.f32 %v348, 0.0
      %v381 = vmax.f32 %v349, 0.0
      %v382 = vmax.f32 %v350, 0.0
      %vm383 = vcmask 64512
      %384 = vst.msk [vmem:[%s213] sm:$0xff] %vm383, %v351
      %385 = vst.msk [vmem:[%s213 + $0x8] sm:$0xff] %vm383, %v352
      %386 = vst.msk [vmem:[%s213 + $0x10] sm:$0xff] %vm383, %v353
      %387 = vst.msk [vmem:[%s213 + $0x18] sm:$0xff] %vm383, %v354
      %388 = vst.msk [vmem:[%s213 + $0x20] sm:$0xff] %vm383, %v355
      %389 = vst.msk [vmem:[%s213 + $0x28] sm:$0xff] %vm383, %v356
      %390 = vst.msk [vmem:[%s213 + $0x30] sm:$0xff] %vm383, %v357
      %391 = vst.msk [vmem:[%s213 + $0x38] sm:$0xff] %vm383, %v358
      %392 = vst.msk [vmem:[%s213 + $0x40] sm:$0xff] %vm383, %v359
      %393 = vst.msk [vmem:[%s213 + $0x48] sm:$0xff] %vm383, %v360
      %394 = vst.msk [vmem:[%s213 + $0x50] sm:$0xff] %vm383, %v361
      %395 = vst.msk [vmem:[%s213 + $0x58] sm:$0xff] %vm383, %v362
      %396 = vst.msk [vmem:[%s213 + $0x60] sm:$0xff] %vm383, %v363
      %397 = vst.msk [vmem:[%s213 + $0x68] sm:$0xff] %vm383, %v364
      %398 = vst.msk [vmem:[%s213 + $0x70] sm:$0xff] %vm383, %v365
      %399 = vst.msk [vmem:[%s213 + $0x78] sm:$0xff] %vm383, %v366
      %400 = vst.msk [vmem:[%s213 + $0x80] sm:$0xff] %vm383, %v367
      %401 = vst.msk [vmem:[%s213 + $0x88] sm:$0xff] %vm383, %v368
      %402 = vst.msk [vmem:[%s213 + $0x90] sm:$0xff] %vm383, %v369
      %403 = vst.msk [vmem:[%s213 + $0x98] sm:$0xff] %vm383, %v370
      %404 = vst.msk [vmem:[%s213 + $0xa0] sm:$0xff] %vm383, %v371
      %405 = vst.msk [vmem:[%s213 + $0xa8] sm:$0xff] %vm383, %v372
      %406 = vst.msk [vmem:[%s213 + $0xb0] sm:$0xff] %vm383, %v373
      %407 = vst.msk [vmem:[%s213 + $0xb8] sm:$0xff] %vm383, %v374
      %408 = vst.msk [vmem:[%s213 + $0xc0] sm:$0xff] %vm383, %v375
      %409 = vst.msk [vmem:[%s213 + $0xc8] sm:$0xff] %vm383, %v376
      %410 = vst.msk [vmem:[%s213 + $0xd0] sm:$0xff] %vm383, %v377
      %411 = vst.msk [vmem:[%s213 + $0xd8] sm:$0xff] %vm383, %v378
      %412 = vst.msk [vmem:[%s213 + $0xe0] sm:$0xff] %vm383, %v379
      %413 = vst.msk [vmem:[%s213 + $0xe8] sm:$0xff] %vm383, %v380
      %414 = vst.msk [vmem:[%s213 + $0xf0] sm:$0xff] %vm383, %v381
      %415 = vst.msk [vmem:[%s213 + $0xf8] sm:$0xff] %vm383, %v382
      %s416 = smul.u32 16, %s19
      %p417 = scmp.lt.s32.totalorder %s18, 1
      %s418 = scalar_select %p417, %s18, 1
      %p419 = scmp.lt.s32.totalorder %s416, 15
      %s420 = scalar_select %p419, %s416, 15
      %s421 = smul.addr %s420, 2
      %s422 = smul.addr %s418, 32
      %s423 = sadd.s32 %s421, %s422
      %s424 = smul.addr %s423, 8
      %s425 = scalar_lea.vmem %s3, %s424
      // Predicated region
      $region33: #{basic_block_forward.5} parent=31 // pred_check
        %p426 = pneg %p116
      $region34: #{basic_block_forward.5} parent=31 // pred_check_branch
        %428 = sbr.rel (%p426) target = $region36
      $region35: #{basic_block_forward.5} parent=31 // pred_region
        %s429 = smul.u32 16, %s19
      $region36: #{basic_block_forward.5} parent=31 // pred_fallthru
        _
    $region32: #{basic_block_forward.5} parent=5 // pred_fallthru
      _
    %p430 = scmp.le.s32.totalorder 2, %s9
    // Predicated region
    $region37: #{basic_block_forward.5} parent=5 // pred_check
      %p431 = pneg %p430
    $region38: #{basic_block_forward.5} parent=5 // pred_check_branch
      %433 = sbr.rel (%p431) target = $region40
    $region39: #{basic_block_forward.5} parent=5 // pred_region
      %s434 = ssub.s32 %s9, 2
      // Predicated region
      $region41: #{basic_block_forward.5} parent=39 // pred_check
        %p435 = pneg %p122
      $region42: #{basic_block_forward.5} parent=39 // pred_check_branch
        %437 = sbr.rel (%p435) target = $region44
      $region43: #{basic_block_forward.5} parent=39 // pred_region
        %s438 = smul.u32 16, %s21
        %p439 = scmp.lt.s32.totalorder %s20, 1
        %s440 = scalar_select %p439, %s20, 1
        %p441 = scmp.lt.s32.totalorder %s438, 15
        %s442 = scalar_select %p441, %s438, 15
        %s443 = smul.addr %s442, 2
        %s444 = smul.addr %s440, 32
        %s445 = sadd.s32 %s443, %s444
        %s446 = smul.addr %s445, 8
        %s447 = scalar_lea.vmem %s3, %s446
      $region44: #{basic_block_forward.5} parent=39 // pred_fallthru
        _
    $region40: #{basic_block_forward.5} parent=5 // pred_fallthru
      _
  $region6: #{basic_block_forward.5} parent=0 // loop_footer
    %s13 = sadd.s32 1, %s9
  $region7: #{basic_block_forward.5} parent=0 // loop_footer_branch
    %8 = sbr.rel target = $region3
  $region8: #{basic_block_forward.5} parent=0 // loop_exit
    _

// kernel: basic_block_forward.4
$region0: #{basic_block_forward.4}
  #allocation0 [shape = 'u32[]', space=smem, size = 0x4, offset = 0x4, fixed_abs, tag = 'smem constant byte address 0x4 - core index']
  #allocation1 [shape = 'u32[72,128]{1,0:T(1,128)}', space=vmem, size = 0x9000, scoped, tag = 'internal scratch']
  %s0 = inlined_call_operand.vmem [shape: bf16[2,1,18,18,8], index: 0, kind: input, shape index: {}]
  %s1 = inlined_call_operand.vmem [shape: bf16[3,3,8,8], index: 1, kind: input, shape index: {}]
  %s2 = inlined_call_operand.vmem [shape: f32[1,8], index: 2, kind: input, shape index: {}]
  %s3 = inlined_call_operand.vmem [shape: f32[1,8], index: 3, kind: input, shape index: {}]
  %s4 = inlined_call_operand.vmem [shape: bf16[2,16,16,8], index: 4, kind: output, shape index: {0}]
  %s5 = inlined_call_operand.vmem [shape: f32[2,1,8], index: 5, kind: output, shape index: {1}]
  %s6 = inlined_call_operand.vmem [shape: f32[2,1,8], index: 6, kind: output, shape index: {2}]
  %7 = xla_tuple %s4, %s5, %s6
  %s8 = sld [smem:[#allocation0]]
  $region65: #{basic_block_forward.4} parent=0
    _
  %s10 = ssub.s32 1, %s8
  %s11 = scalar_select 0, %s10, %s8
  loop: start=0, step=1, limit=4
  $region2: #{basic_block_forward.4} parent=0 // loop_pre_header
    _
  $region3: #{basic_block_forward.4} parent=0 // loop_header
    %s13 = sphi 0, %s17
    %p14 = scmp.ge.s32.totalorder %s13, 4
    %s20 = sphi 0, %s32
    %s21 = sphi 0, %s28
    %s22 = sphi 0, %s20
    %s23 = sphi 0, %s21
    %s24 = sphi 0, %s22
    %s25 = sphi 0, %s23
    %s35 = sphi 0, %s37
    %s38 = sphi 0, %s35
    %s39 = sphi 0, %s38
    %s55 = sphi 0, %s39
    %s61 = sphi 0, %s63
    %s64 = sphi 0, %s61
    %s65 = sphi 0, %s64
    %s81 = sphi 0, %s65
    %s85 = sphi 0, %s85
    %s87 = sphi 0, %s85
    %s88 = sphi 0, %s87
    %s102 = sphi 0, %s88
    %s106 = sphi 0, %s106
    %s108 = sphi 0, %s106
    %s109 = sphi 0, %s108
    %s123 = sphi 0, %s109
    %s131 = sphi 0, %s133
    %s134 = sphi 0, %s131
    %s135 = sphi 0, %s134
    %s151 = sphi 0, %s135
    %s159 = sphi 0, %s161
    %s162 = sphi 0, %s159
    %s163 = sphi 0, %s162
    %s179 = sphi 0, %s163
    %s187 = sphi 0, %s189
    %s190 = sphi 0, %s187
    %s191 = sphi 0, %s190
    %s207 = sphi 0, %s191
  $region4: #{basic_block_forward.4} parent=0 // loop_header_branch
    %16 = sbr.rel (%p14) target = $region8
  $region5: #{basic_block_forward.4} parent=0 // loop_body
    %s18 = ssub.s32 %s13, 1
    %s19 = ssub.s32 %s13, 2
    %s26 = sadd.s32 1, %s21
    %p27 = scmp.ge.s32.totalorder %s26, 1
    %s28 = scalar_select %p27, 0, %s26
    %s29 = sadd.s32 1, %s20
    %s30 = scalar_select %p27, %s29, %s20
    %p31 = scmp.ge.s32.totalorder %s30, 2
    %s32 = scalar_select %p31, 0, %s30
    %s33 = ssub.s32 %s20, %s32
    %p34 = scmp.eq.s32.totalorder %s33, 0
    %s36 = sadd.s32 %s35, 1
    %s37 = scalar_select %p34, %s35, %s36
    %p40 = pneg %p34
    %p41 = scmp.eq.s32.totalorder %s13, 1
    %p42 = por %p40, %p41
    %p43 = scmp.ne.s32.totalorder %s35, %s38
    %p44 = scmp.eq.s32.totalorder %s13, 0
    %p45 = por %p43, %p44
    %p46 = scmp.ne.s32.totalorder %s35, %s38
    %p47 = scmp.eq.s32.totalorder %s18, 1
    %p48 = por %p46, %p47
    %p49 = scmp.ne.s32.totalorder %s38, %s39
    %p50 = scmp.eq.s32.totalorder %s18, 0
    %p51 = por %p49, %p50
    %p52 = scmp.ne.s32.totalorder %s38, %s39
    %p53 = scmp.eq.s32.totalorder %s19, 1
    %p54 = por %p52, %p53
    %p56 = scmp.ne.s32.totalorder %s39, %s55
    %p57 = scmp.eq.s32.totalorder %s19, 0
    %p58 = por %p56, %p57
    %s59 = ssub.s32 %s21, %s28
    %p60 = scmp.eq.s32.totalorder %s59, 0
    %s62 = sadd.s32 %s61, 1
    %s63 = scalar_select %p60, %s61, %s62
    %p66 = pneg %p60
    %p67 = scmp.eq.s32.totalorder %s13, 1
    %p68 = por %p66, %p67
    %p69 = scmp.ne.s32.totalorder %s61, %s64
    %p70 = scmp.eq.s32.totalorder %s13, 0
    %p71 = por %p69, %p70
    %p72 = scmp.ne.s32.totalorder %s61, %s64
    %p73 = scmp.eq.s32.totalorder %s18, 1
    %p74 = por %p72, %p73
    %p75 = scmp.ne.s32.totalorder %s64, %s65
    %p76 = scmp.eq.s32.totalorder %s18, 0
    %p77 = por %p75, %p76
    %p78 = scmp.ne.s32.totalorder %s64, %s65
    %p79 = scmp.eq.s32.totalorder %s19, 1
    %p80 = por %p78, %p79
    %p82 = scmp.ne.s32.totalorder %s65, %s81
    %p83 = scmp.eq.s32.totalorder %s19, 0
    %p84 = por %p82, %p83
    %s86 = sadd.s32 %s85, 1
    %p89 = scmp.eq.s32.totalorder %s13, 1
    %p90 = scmp.ne.s32.totalorder %s85, %s87
    %p91 = scmp.eq.s32.totalorder %s13, 0
    %p92 = por %p90, %p91
    %p93 = scmp.ne.s32.totalorder %s85, %s87
    %p94 = scmp.eq.s32.totalorder %s18, 1
    %p95 = por %p93, %p94
    %p96 = scmp.ne.s32.totalorder %s87, %s88
    %p97 = scmp.eq.s32.totalorder %s18, 0
    %p98 = por %p96, %p97
    %p99 = scmp.ne.s32.totalorder %s87, %s88
    %p100 = scmp.eq.s32.totalorder %s19, 1
    %p101 = por %p99, %p100
    %p103 = scmp.ne.s32.totalorder %s88, %s102
    %p104 = scmp.eq.s32.totalorder %s19, 0
    %p105 = por %p103, %p104
    %s107 = sadd.s32 %s106, 1
    %p110 = scmp.eq.s32.totalorder %s13, 1
    %p111 = scmp.ne.s32.totalorder %s106, %s108
    %p112 = scmp.eq.s32.totalorder %s13, 0
    %p113 = por %p111, %p112
    %p114 = scmp.ne.s32.totalorder %s106, %s108
    %p115 = scmp.eq.s32.totalorder %s18, 1
    %p116 = por %p114, %p115
    %p117 = scmp.ne.s32.totalorder %s108, %s109
    %p118 = scmp.eq.s32.totalorder %s18, 0
    %p119 = por %p117, %p118
    %p120 = scmp.ne.s32.totalorder %s108, %s109
    %p121 = scmp.eq.s32.totalorder %s19, 1
    %p122 = por %p120, %p121
    %p124 = scmp.ne.s32.totalorder %s109, %s123
    %p125 = scmp.eq.s32.totalorder %s19, 0
    %p126 = por %p124, %p125
    %s127 = ssub.s32 %s20, %s32
    %s128 = ssub.s32 %s21, %s28
    %s129 = sor.u32 %s127, %s128
    %p130 = scmp.eq.s32.totalorder %s129, 0
    %s132 = sadd.s32 %s131, 1
    %s133 = scalar_select %p130, %s131, %s132
    %p136 = pneg %p130
    %p137 = scmp.eq.s32.totalorder %s13, 1
    %p138 = por %p136, %p137
    %p139 = scmp.ne.s32.totalorder %s131, %s134
    %p140 = scmp.eq.s32.totalorder %s13, 0
    %p141 = por %p139, %p140
    %p142 = scmp.ne.s32.totalorder %s131, %s134
    %p143 = scmp.eq.s32.totalorder %s18, 1
    %p144 = por %p142, %p143
    %p145 = scmp.ne.s32.totalorder %s134, %s135
    %p146 = scmp.eq.s32.totalorder %s18, 0
    %p147 = por %p145, %p146
    %p148 = scmp.ne.s32.totalorder %s134, %s135
    %p149 = scmp.eq.s32.totalorder %s19, 1
    %p150 = por %p148, %p149
    %p152 = scmp.ne.s32.totalorder %s135, %s151
    %p153 = scmp.eq.s32.totalorder %s19, 0
    %p154 = por %p152, %p153
    %s155 = ssub.s32 %s20, %s32
    %s156 = ssub.s32 %s21, %s28
    %s157 = sor.u32 %s155, %s156
    %p158 = scmp.eq.s32.totalorder %s157, 0
    %s160 = sadd.s32 %s159, 1
    %s161 = scalar_select %p158, %s159, %s160
    %p164 = pneg %p158
    %p165 = scmp.eq.s32.totalorder %s13, 1
    %p166 = por %p164, %p165
    %p167 = scmp.ne.s32.totalorder %s159, %s162
    %p168 = scmp.eq.s32.totalorder %s13, 0
    %p169 = por %p167, %p168
    %p170 = scmp.ne.s32.totalorder %s159, %s162
    %p171 = scmp.eq.s32.totalorder %s18, 1
    %p172 = por %p170, %p171
    %p173 = scmp.ne.s32.totalorder %s162, %s163
    %p174 = scmp.eq.s32.totalorder %s18, 0
    %p175 = por %p173, %p174
    %p176 = scmp.ne.s32.totalorder %s162, %s163
    %p177 = scmp.eq.s32.totalorder %s19, 1
    %p178 = por %p176, %p177
    %p180 = scmp.ne.s32.totalorder %s163, %s179
    %p181 = scmp.eq.s32.totalorder %s19, 0
    %p182 = por %p180, %p181
    %s183 = ssub.s32 %s20, %s32
    %s184 = ssub.s32 %s21, %s28
    %s185 = sor.u32 %s183, %s184
    %p186 = scmp.eq.s32.totalorder %s185, 0
    %s188 = sadd.s32 %s187, 1
    %s189 = scalar_select %p186, %s187, %s188
    %p192 = pneg %p186
    %p193 = scmp.eq.s32.totalorder %s13, 1
    %p194 = por %p192, %p193
    %p195 = scmp.ne.s32.totalorder %s187, %s190
    %p196 = scmp.eq.s32.totalorder %s13, 0
    %p197 = por %p195, %p196
    %p198 = scmp.ne.s32.totalorder %s187, %s190
    %p199 = scmp.eq.s32.totalorder %s18, 1
    %p200 = por %p198, %p199
    %p201 = scmp.ne.s32.totalorder %s190, %s191
    %p202 = scmp.eq.s32.totalorder %s18, 0
    %p203 = por %p201, %p202
    %p204 = scmp.ne.s32.totalorder %s190, %s191
    %p205 = scmp.eq.s32.totalorder %s19, 1
    %p206 = por %p204, %p205
    %p208 = scmp.ne.s32.totalorder %s191, %s207
    %p209 = scmp.eq.s32.totalorder %s19, 0
    %p210 = por %p208, %p209
    %p211 = scmp.le.s32.totalorder 1, %s13
    %p212 = scmp.lt.s32.totalorder %s13, 3
    %p213 = pnand %p211, %p212
    %p214 = pneg %p213
    // Predicated region
    $region9: #{basic_block_forward.4} parent=5 // pred_check
      _
    $region10: #{basic_block_forward.4} parent=5 // pred_check_branch
      %216 = sbr.rel (%p213) target = $region12
    $region11: #{basic_block_forward.4} parent=5 // pred_region
      %s217 = ssub.s32 %s13, 1
      // Predicated region
      $region13: #{basic_block_forward.4} parent=11 // pred_check
        %p218 = pneg %p77
      $region14: #{basic_block_forward.4} parent=11 // pred_check_branch
        %220 = sbr.rel (%p218) target = $region16
      $region15: #{basic_block_forward.4} parent=11 // pred_region
        %p221 = scmp.lt.s32.totalorder %s23, 0
        %s222 = scalar_select %p221, %s23, 0
        %s223 = smul.addr %s222, 4
        %s224 = scalar_lea.vmem %s1, %s223
      $region16: #{basic_block_forward.4} parent=11 // pred_fallthru
        _
      // Predicated region
      $region17: #{basic_block_forward.4} parent=11 // pred_check
        %p225 = pneg %p98
      $region18: #{basic_block_forward.4} parent=11 // pred_check_branch
        %227 = sbr.rel (%p225) target = $region20
      $region19: #{basic_block_forward.4} parent=11 // pred_region
        _
      $region20: #{basic_block_forward.4} parent=11 // pred_fallthru
        _
      // Predicated region
      $region21: #{basic_block_forward.4} parent=11 // pred_check
        %p228 = pneg %p119
      $region22: #{basic_block_forward.4} parent=11 // pred_check_branch
        %230 = sbr.rel (%p228) target = $region24
      $region23: #{basic_block_forward.4} parent=11 // pred_region
        _
      $region24: #{basic_block_forward.4} parent=11 // pred_fallthru
        _
    $region12: #{basic_block_forward.4} parent=5 // pred_fallthru
      _
    %p231 = scmp.lt.s32.totalorder %s13, 2
    // Predicated region
    $region25: #{basic_block_forward.4} parent=5 // pred_check
      %p232 = pneg %p231
    $region26: #{basic_block_forward.4} parent=5 // pred_check_branch
      %234 = sbr.rel (%p232) target = $region28
    $region27: #{basic_block_forward.4} parent=5 // pred_region
      // Predicated region
      $region29: #{basic_block_forward.4} parent=27 // pred_check
        %p235 = pneg %p45
      $region30: #{basic_block_forward.4} parent=27 // pred_check_branch
        %237 = sbr.rel (%p235) target = $region32
      $region31: #{basic_block_forward.4} parent=27 // pred_region
        %p238 = scmp.lt.s32.totalorder %s20, 1
        %s239 = scalar_select %p238, %s20, 1
        %s240 = smul.addr %s239, 54
        %s241 = smul.addr %s240, 4
        %s242 = scalar_lea.vmem %s0, %s241
      $region32: #{basic_block_forward.4} parent=27 // pred_fallthru
        _
    $region28: #{basic_block_forward.4} parent=5 // pred_fallthru
      _
    %p243 = scmp.le.s32.totalorder 1, %s13
    %p244 = scmp.lt.s32.totalorder %s13, 3
    %p245 = pnand %p243, %p244
    %p246 = pneg %p245
    // Predicated region
    $region33: #{basic_block_forward.4} parent=5 // pred_check
      _
    $region34: #{basic_block_forward.4} parent=5 // pred_check_branch
      %248 = sbr.rel (%p245) target = $region36
    $region35: #{basic_block_forward.4} parent=5 // pred_region
      %s249 = ssub.s32 %s13, 1
      %p250 = scmp.lt.s32.totalorder %s22, 1
      %s251 = scalar_select %p250, %s22, 1
      %s252 = smul.addr %s251, 54
      %s253 = smul.addr %s252, 4
      %s254 = scalar_lea.vmem %s0, %s253
      %p255 = pneg %p51
      %p256 = pneg %p48
      %p257 = scmp.lt.s32.totalorder %s23, 0
      %s258 = scalar_select %p257, %s23, 0
      %s259 = smul.addr %s258, 4
      %s260 = scalar_lea.vmem %s1, %s259
      %p261 = pneg %p77
      %p262 = pneg %p74
      %p263 = pneg %p98
      %p264 = pneg %p95
      %p265 = pneg %p119
      %p266 = pneg %p116
      %p267 = pneg %p147
      %p268 = pneg %p144
      %p269 = scmp.lt.s32.totalorder %s22, 1
      %s270 = scalar_select %p269, %s22, 1
      %p271 = scmp.lt.s32.totalorder %s23, 0
      %s272 = scalar_select %p271, %s23, 0
      %s273 = smul.addr %s270, 32
      %s274 = sadd.s32 %s272, %s273
      %s275 = smul.addr %s274, 4
      %s276 = scalar_lea.vmem %s4, %s275
      %p277 = pneg %p175
      %p278 = pneg %p172
      %p279 = scmp.lt.s32.totalorder %s22, 1
      %s280 = scalar_select %p279, %s22, 1
      %p281 = scmp.lt.s32.totalorder %s23, 0
      %s282 = scalar_select %p281, %s23, 0
      %s283 = sadd.s32 %s282, %s280
      %s284 = scalar_lea.vmem %s5, %s283
      %p285 = pneg %p203
      %p286 = pneg %p200
      %p287 = scmp.lt.s32.totalorder %s22, 1
      %s288 = scalar_select %p287, %s22, 1
      %p289 = scmp.lt.s32.totalorder %s23, 0
      %s290 = scalar_select %p289, %s23, 0
      %s291 = sadd.s32 %s290, %s288
      %s292 = scalar_lea.vmem %s6, %s291
      %p293 = scmp.lt.s32.totalorder %s22, 1
      %s294 = scalar_select %p293, %s22, 1
      %s295 = smul.addr %s294, 54
      %s296 = smul.addr %s295, 4
      %s297 = scalar_lea.vmem %s0, %s296
      %p298 = scmp.lt.s32.totalorder %s23, 0
      %s299 = scalar_select %p298, %s23, 0
      %s300 = smul.addr %s299, 4
      %s301 = scalar_lea.vmem %s1, %s300
      %p302 = scmp.lt.s32.totalorder %s22, 1
      %s303 = scalar_select %p302, %s22, 1
      %p304 = scmp.lt.s32.totalorder %s23, 0
      %s305 = scalar_select %p304, %s23, 0
      %s306 = smul.addr %s303, 32
      %s307 = sadd.s32 %s305, %s306
      %s308 = smul.addr %s307, 4
      %s309 = scalar_lea.vmem %s4, %s308
      %p310 = scmp.lt.s32.totalorder %s22, 1
      %s311 = scalar_select %p310, %s22, 1
      %p312 = scmp.lt.s32.totalorder %s23, 0
      %s313 = scalar_select %p312, %s23, 0
      %s314 = sadd.s32 %s313, %s311
      %s315 = scalar_lea.vmem %s5, %s314
      %p316 = scmp.lt.s32.totalorder %s22, 1
      %s317 = scalar_select %p316, %s22, 1
      %p318 = scmp.lt.s32.totalorder %s23, 0
      %s319 = scalar_select %p318, %s23, 0
      %s320 = sadd.s32 %s319, %s317
      %s321 = scalar_lea.vmem %s6, %s320
      %v323 = vlaneseq
      %v324 = vshrl.u32 %v323, 7
      %v325 = vadd.s32 %v324, 8
      %v326 = vadd.s32 %v324, 16
      %vm327 = vcmp.ge.s32.totalorder %v324, 1
      %vm328 = vcmp.ge.s32.totalorder %v325, 1
      %vm329 = vcmp.ge.s32.totalorder %v326, 1
      %vm330 = vcmp.le.s32.totalorder %v324, 16
      %vm331 = vcmp.le.s32.totalorder %v325, 16
      %vm332 = vcmp.le.s32.totalorder %v326, 16
      %vm333 = vmand %vm327, %vm330
      %vm334 = vmand %vm328, %vm331
      %vm335 = vmand %vm329, %vm332
      %v336 = vld [vmem:[%s297] sm:$0xf]
      %v337 = vld [vmem:[%s297 + $0x4] sm:$0xf]
      %v338 = vld [vmem:[%s297 + $0x8] sm:$0x1]
      %v339 = vld [vmem:[%s297 + $0xc] sm:$0xf]
      %v340 = vld [vmem:[%s297 + $0x10] sm:$0xf]
      %v341 = vld [vmem:[%s297 + $0x14] sm:$0x1]
      %v342 = vld [vmem:[%s297 + $0x18] sm:$0xf]
      %v343 = vld [vmem:[%s297 + $0x1c] sm:$0xf]
      %v344 = vld [vmem:[%s297 + $0x20] sm:$0x1]
      %v345 = vld [vmem:[%s297 + $0x24] sm:$0xf]
      %v346 = vld [vmem:[%s297 + $0x28] sm:$0xf]
      %v347 = vld [vmem:[%s297 + $0x2c] sm:$0x1]
      %v348 = vld [vmem:[%s297 + $0x30] sm:$0xf]
      %v349 = vld [vmem:[%s297 + $0x34] sm:$0xf]
      %v350 = vld [vmem:[%s297 + $0x38] sm:$0x1]
      %v351 = vld [vmem:[%s297 + $0x3c] sm:$0xf]
      %v352 = vld [vmem:[%s297 + $0x40] sm:$0xf]
      %v353 = vld [vmem:[%s297 + $0x44] sm:$0x1]
      %v354 = vld [vmem:[%s297 + $0x48] sm:$0xf]
      %v355 = vld [vmem:[%s297 + $0x4c] sm:$0xf]
      %v356 = vld [vmem:[%s297 + $0x50] sm:$0x1]
      %v357 = vld [vmem:[%s297 + $0x54] sm:$0xf]
      %v358 = vld [vmem:[%s297 + $0x58] sm:$0xf]
      %v359 = vld [vmem:[%s297 + $0x5c] sm:$0x1]
      %v360 = vld [vmem:[%s297 + $0x60] sm:$0xf]
      %v361 = vld [vmem:[%s297 + $0x64] sm:$0xf]
      %v362 = vld [vmem:[%s297 + $0x68] sm:$0x1]
      %v363 = vld [vmem:[%s297 + $0x6c] sm:$0xf]
      %v364 = vld [vmem:[%s297 + $0x70] sm:$0xf]
      %v365 = vld [vmem:[%s297 + $0x74] sm:$0x1]
      %v366 = vld [vmem:[%s297 + $0x78] sm:$0xf]
      %v367 = vld [vmem:[%s297 + $0x7c] sm:$0xf]
      %v368 = vld [vmem:[%s297 + $0x80] sm:$0x1]
      %v369 = vld [vmem:[%s297 + $0x84] sm:$0xf]
      %v370 = vld [vmem:[%s297 + $0x88] sm:$0xf]
      %v371 = vld [vmem:[%s297 + $0x8c] sm:$0x1]
      %v372 = vld [vmem:[%s297 + $0x90] sm:$0xf]
      %v373 = vld [vmem:[%s297 + $0x94] sm:$0xf]
      %v374 = vld [vmem:[%s297 + $0x98] sm:$0x1]
      %v375 = vld [vmem:[%s297 + $0x9c] sm:$0xf]
      %v376 = vld [vmem:[%s297 + $0xa0] sm:$0xf]
      %v377 = vld [vmem:[%s297 + $0xa4] sm:$0x1]
      %v378 = vld [vmem:[%s297 + $0xa8] sm:$0xf]
      %v379 = vld [vmem:[%s297 + $0xac] sm:$0xf]
      %v380 = vld [vmem:[%s297 + $0xb0] sm:$0x1]
      %v381 = vld [vmem:[%s297 + $0xb4] sm:$0xf]
      %v382 = vld [vmem:[%s297 + $0xb8] sm:$0xf]
      %v383 = vld [vmem:[%s297 + $0xbc] sm:$0x1]
      %v384 = vld [vmem:[%s297 + $0xc0] sm:$0xf]
      %v385 = vld [vmem:[%s297 + $0xc4] sm:$0xf]
      %v386 = vld [vmem:[%s297 + $0xc8] sm:$0x1]
      %v387 = vld [vmem:[%s297 + $0xcc] sm:$0xf]
      %v388 = vld [vmem:[%s297 + $0xd0] sm:$0xf]
      %v389 = vld [vmem:[%s297 + $0xd4] sm:$0x1]
      %v390 = vunpack.c.l.bf16 %v336
      %v391 = vunpack.c.l.bf16 %v337
      %v392 = vunpack.c.l.bf16 %v338
      %v393 = vunpack.c.l.bf16 %v339
      %v394 = vunpack.c.l.bf16 %v340
      %v395 = vunpack.c.l.bf16 %v341
      %v396 = vunpack.c.l.bf16 %v342
      %v397 = vunpack.c.l.bf16 %v343
      %v398 = vunpack.c.l.bf16 %v344
      %v399 = vunpack.c.l.bf16 %v345
      %v400 = vunpack.c.l.bf16 %v346
      %v401 = vunpack.c.l.bf16 %v347
      %v402 = vunpack.c.l.bf16 %v348
      %v403 = vunpack.c.l.bf16 %v349
      %v404 = vunpack.c.l.bf16 %v350
      %v405 = vunpack.c.l.bf16 %v351
      %v406 = vunpack.c.l.bf16 %v352
      %v407 = vunpack.c.l.bf16 %v353
      %v408 = vunpack.c.l.bf16 %v354
      %v409 = vunpack.c.l.bf16 %v355
      %v410 = vunpack.c.l.bf16 %v356
      %v411 = vunpack.c.l.bf16 %v357
      %v412 = vunpack.c.l.bf16 %v358
      %v413 = vunpack.c.l.bf16 %v359
      %v414 = vunpack.c.l.bf16 %v360
      %v415 = vunpack.c.l.bf16 %v361
      %v416 = vunpack.c.l.bf16 %v362
      %v417 = vunpack.c.l.bf16 %v363
      %v418 = vunpack.c.l.bf16 %v364
      %v419 = vunpack.c.l.bf16 %v365
      %v420 = vunpack.c.l.bf16 %v366
      %v421 = vunpack.c.l.bf16 %v367
      %v422 = vunpack.c.l.bf16 %v368
      %v423 = vunpack.c.l.bf16 %v369
      %v424 = vunpack.c.l.bf16 %v370
      %v425 = vunpack.c.l.bf16 %v371
      %v426 = vunpack.c.l.bf16 %v372
      %v427 = vunpack.c.l.bf16 %v373
      %v428 = vunpack.c.l.bf16 %v374
      %v429 = vunpack.c.l.bf16 %v375
      %v430 = vunpack.c.l.bf16 %v376
      %v431 = vunpack.c.l.bf16 %v377
      %v432 = vunpack.c.l.bf16 %v378
      %v433 = vunpack.c.l.bf16 %v379
      %v434 = vunpack.c.l.bf16 %v380
      %v435 = vunpack.c.l.bf16 %v381
      %v436 = vunpack.c.l.bf16 %v382
      %v437 = vunpack.c.l.bf16 %v383
      %v438 = vunpack.c.l.bf16 %v384
      %v439 = vunpack.c.l.bf16 %v385
      %v440 = vunpack.c.l.bf16 %v386
      %v441 = vunpack.c.l.bf16 %v387
      %v442 = vunpack.c.l.bf16 %v388
      %v443 = vunpack.c.l.bf16 %v389
      %v444 = vld [vmem:[%s2] sm:$0x1]
      %v446 = vperm.slane %v444, 0
      %v448 = vmul.f32 %v390, %v446
      %v449 = vmul.f32 %v391, %v446
      %v450 = vmul.f32 %v392, %v446
      %v451 = vmul.f32 %v393, %v446
      %v452 = vmul.f32 %v394, %v446
      %v453 = vmul.f32 %v395, %v446
      %v454 = vmul.f32 %v396, %v446
      %v455 = vmul.f32 %v397, %v446
      %v456 = vmul.f32 %v398, %v446
      %v457 = vmul.f32 %v399, %v446
      %v458 = vmul.f32 %v400, %v446
      %v459 = vmul.f32 %v401, %v446
      %v460 = vmul.f32 %v402, %v446
      %v461 = vmul.f32 %v403, %v446
      %v462 = vmul.f32 %v404, %v446
      %v463 = vmul.f32 %v405, %v446
      %v464 = vmul.f32 %v406, %v446
      %v465 = vmul.f32 %v407, %v446
      %v466 = vmul.f32 %v408, %v446
      %v467 = vmul.f32 %v409, %v446
      %v468 = vmul.f32 %v410, %v446
      %v469 = vmul.f32 %v411, %v446
      %v470 = vmul.f32 %v412, %v446
      %v471 = vmul.f32 %v413, %v446
      %v472 = vmul.f32 %v414, %v446
      %v473 = vmul.f32 %v415, %v446
      %v474 = vmul.f32 %v416, %v446
      %v475 = vmul.f32 %v417, %v446
      %v476 = vmul.f32 %v418, %v446
      %v477 = vmul.f32 %v419, %v446
      %v478 = vmul.f32 %v420, %v446
      %v479 = vmul.f32 %v421, %v446
      %v480 = vmul.f32 %v422, %v446
      %v481 = vmul.f32 %v423, %v446
      %v482 = vmul.f32 %v424, %v446
      %v483 = vmul.f32 %v425, %v446
      %v484 = vmul.f32 %v426, %v446
      %v485 = vmul.f32 %v427, %v446
      %v486 = vmul.f32 %v428, %v446
      %v487 = vmul.f32 %v429, %v446
      %v488 = vmul.f32 %v430, %v446
      %v489 = vmul.f32 %v431, %v446
      %v490 = vmul.f32 %v432, %v446
      %v491 = vmul.f32 %v433, %v446
      %v492 = vmul.f32 %v434, %v446
      %v493 = vmul.f32 %v435, %v446
      %v494 = vmul.f32 %v436, %v446
      %v495 = vmul.f32 %v437, %v446
      %v496 = vmul.f32 %v438, %v446
      %v497 = vmul.f32 %v439, %v446
      %v498 = vmul.f32 %v440, %v446
      %v499 = vmul.f32 %v441, %v446
      %v500 = vmul.f32 %v442, %v446
      %v501 = vmul.f32 %v443, %v446
      %v502 = vld [vmem:[%s3] sm:$0x1]
      %v504 = vperm.slane %v502, 0
      %v506 = vadd.f32 %v448, %v504
      %v507 = vadd.f32 %v449, %v504
      %v508 = vadd.f32 %v450, %v504
      %v509 = vadd.f32 %v451, %v504
      %v510 = vadd.f32 %v452, %v504
      %v511 = vadd.f32 %v453, %v504
      %v512 = vadd.f32 %v454, %v504
      %v513 = vadd.f32 %v455, %v504
      %v514 = vadd.f32 %v456, %v504
      %v515 = vadd.f32 %v457, %v504
      %v516 = vadd.f32 %v458, %v504
      %v517 = vadd.f32 %v459, %v504
      %v518 = vadd.f32 %v460, %v504
      %v519 = vadd.f32 %v461, %v504
      %v520 = vadd.f32 %v462, %v504
      %v521 = vadd.f32 %v463, %v504
      %v522 = vadd.f32 %v464, %v504
      %v523 = vadd.f32 %v465, %v504
      %v524 = vadd.f32 %v466, %v504
      %v525 = vadd.f32 %v467, %v504
      %v526 = vadd.f32 %v468, %v504
      %v527 = vadd.f32 %v469, %v504
      %v528 = vadd.f32 %v470, %v504
      %v529 = vadd.f32 %v471, %v504
      %v530 = vadd.f32 %v472, %v504
      %v531 = vadd.f32 %v473, %v504
      %v532 = vadd.f32 %v474, %v504
      %v533 = vadd.f32 %v475, %v504
      %v534 = vadd.f32 %v476, %v504
      %v535 = vadd.f32 %v477, %v504
      %v536 = vadd.f32 %v478, %v504
      %v537 = vadd.f32 %v479, %v504
      %v538 = vadd.f32 %v480, %v504
      %v539 = vadd.f32 %v481, %v504
      %v540 = vadd.f32 %v482, %v504
      %v541 = vadd.f32 %v483, %v504
      %v542 = vadd.f32 %v484, %v504
      %v543 = vadd.f32 %v485, %v504
      %v544 = vadd.f32 %v486, %v504
      %v545 = vadd.f32 %v487, %v504
      %v546 = vadd.f32 %v488, %v504
      %v547 = vadd.f32 %v489, %v504
      %v548 = vadd.f32 %v490, %v504
      %v549 = vadd.f32 %v491, %v504
      %v550 = vadd.f32 %v492, %v504
      %v551 = vadd.f32 %v493, %v504
      %v552 = vadd.f32 %v494, %v504
      %v553 = vadd.f32 %v495, %v504
      %v554 = vadd.f32 %v496, %v504
      %v555 = vadd.f32 %v497, %v504
      %v556 = vadd.f32 %v498, %v504
      %v557 = vadd.f32 %v499, %v504
      %v558 = vadd.f32 %v500, %v504
      %v559 = vadd.f32 %v501, %v504
      %v560 = vmax.f32 %v506, 0.0
      %v561 = vmax.f32 %v507, 0.0
      %v562 = vmax.f32 %v508, 0.0
      %v563 = vmax.f32 %v509, 0.0
      %v564 = vmax.f32 %v510, 0.0
      %v565 = vmax.f32 %v511, 0.0
      %v566 = vmax.f32 %v512, 0.0
      %v567 = vmax.f32 %v513, 0.0
      %v568 = vmax.f32 %v514, 0.0
      %v569 = vmax.f32 %v515, 0.0
      %v570 = vmax.f32 %v516, 0.0
      %v571 = vmax.f32 %v517, 0.0
      %v572 = vmax.f32 %v518, 0.0
      %v573 = vmax.f32 %v519, 0.0
      %v574 = vmax.f32 %v520, 0.0
      %v575 = vmax.f32 %v521, 0.0
      %v576 = vmax.f32 %v522, 0.0
      %v577 = vmax.f32 %v523, 0.0
      %v578 = vmax.f32 %v524, 0.0
      %v579 = vmax.f32 %v525, 0.0
      %v580 = vmax.f32 %v526, 0.0
      %v581 = vmax.f32 %v527, 0.0
      %v582 = vmax.f32 %v528, 0.0
      %v583 = vmax.f32 %v529, 0.0
      %v584 = vmax.f32 %v530, 0.0
      %v585 = vmax.f32 %v531, 0.0
      %v586 = vmax.f32 %v532, 0.0
      %v587 = vmax.f32 %v533, 0.0
      %v588 = vmax.f32 %v534, 0.0
      %v589 = vmax.f32 %v535, 0.0
      %v590 = vmax.f32 %v536, 0.0
      %v591 = vmax.f32 %v537, 0.0
      %v592 = vmax.f32 %v538, 0.0
      %v593 = vmax.f32 %v539, 0.0
      %v594 = vmax.f32 %v540, 0.0
      %v595 = vmax.f32 %v541, 0.0
      %v596 = vmax.f32 %v542, 0.0
      %v597 = vmax.f32 %v543, 0.0
      %v598 = vmax.f32 %v544, 0.0
      %v599 = vmax.f32 %v545, 0.0
      %v600 = vmax.f32 %v546, 0.0
      %v601 = vmax.f32 %v547, 0.0
      %v602 = vmax.f32 %v548, 0.0
      %v603 = vmax.f32 %v549, 0.0
      %v604 = vmax.f32 %v550, 0.0
      %v605 = vmax.f32 %v551, 0.0
      %v606 = vmax.f32 %v552, 0.0
      %v607 = vmax.f32 %v553, 0.0
      %v608 = vmax.f32 %v554, 0.0
      %v609 = vmax.f32 %v555, 0.0
      %v610 = vmax.f32 %v556, 0.0
      %v611 = vmax.f32 %v557, 0.0
      %v612 = vmax.f32 %v558, 0.0
      %v613 = vmax.f32 %v559, 0.0
      %vm614 = vmand %vm333, 0
      %vm615 = vmand %vm334, 0
      %vm616 = vmand %vm335, 0
      %vm617 = vmand %vm333, 1
      %vm618 = vmand %vm334, 1
      %vm619 = vmand %vm335, 1
      %vm620 = vmand %vm614, 1
      %vm621 = vmand %vm615, 1
      %vm622 = vmand %vm616, 1
      %vm623 = vmand %vm617, 0
      %vm624 = vmand %vm618, 0
      %vm625 = vmand %vm619, 0
      %v626 = vsel %vm620, 1, 0
      %v627 = vsel %vm621, 1, 0
      %v628 = vsel %vm622, 1, 0
      %v629 = vsel %vm617, 1, 0
      %v630 = vsel %vm618, 1, 0
      %v631 = vsel %vm619, 1, 0
      %v632 = vsel %vm623, 1, 0
      %v633 = vsel %vm624, 1, 0
      %v634 = vsel %vm625, 1, 0
      %vm635 = vcmp.eq.s32.totalorder %v626, 1
      %vm636 = vcmp.eq.s32.totalorder %v627, 1
      %vm637 = vcmp.eq.s32.totalorder %v628, 1
      %vm638 = vcmp.eq.s32.totalorder %v629, 1
      %vm639 = vcmp.eq.s32.totalorder %v630, 1
      %vm640 = vcmp.eq.s32.totalorder %v631, 1
      %vm641 = vcmp.eq.s32.totalorder %v632, 1
      %vm642 = vcmp.eq.s32.totalorder %v633, 1
      %vm643 = vcmp.eq.s32.totalorder %v634, 1
      %v644 = vsel %vm635, %v560, 0.0
      %v645 = vsel %vm636, %v561, 0.0
      %v646 = vsel %vm637, %v562, 0.0
      %v647 = vsel %vm638, %v563, 0.0
      %v648 = vsel %vm639, %v564, 0.0
      %v649 = vsel %vm640, %v565, 0.0
      %v650 = vsel %vm638, %v566, 0.0
      %v651 = vsel %vm639, %v567, 0.0
      %v652 = vsel %vm640, %v568, 0.0
      %v653 = vsel %vm638, %v569, 0.0
      %v654 = vsel %vm639, %v570, 0.0
      %v655 = vsel %vm640, %v571, 0.0
      %v656 = vsel %vm638, %v572, 0.0
      %v657 = vsel %vm639, %v573, 0.0
      %v658 = vsel %vm640, %v574, 0.0
      %v659 = vsel %vm638, %v575, 0.0
      %v660 = vsel %vm639, %v576, 0.0
      %v661 = vsel %vm640, %v577, 0.0
      %v662 = vsel %vm638, %v578, 0.0
      %v663 = vsel %vm639, %v579, 0.0
      %v664 = vsel %vm640, %v580, 0.0
      %v665 = vsel %vm638, %v581, 0.0
      %v666 = vsel %vm639, %v582, 0.0
      %v667 = vsel %vm640, %v583, 0.0
      %v668 = vsel %vm638, %v584, 0.0
      %v669 = vsel %vm639, %v585, 0.0
      %v670 = vsel %vm640, %v586, 0.0
      %v671 = vsel %vm638, %v587, 0.0
      %v672 = vsel %vm639, %v588, 0.0
      %v673 = vsel %vm640, %v589, 0.0
      %v674 = vsel %vm638, %v590, 0.0
      %v675 = vsel %vm639, %v591, 0.0
      %v676 = vsel %vm640, %v592, 0.0
      %v677 = vsel %vm638, %v593, 0.0
      %v678 = vsel %vm639, %v594, 0.0
      %v679 = vsel %vm640, %v595, 0.0
      %v680 = vsel %vm638, %v596, 0.0
      %v681 = vsel %vm639, %v597, 0.0
      %v682 = vsel %vm640, %v598, 0.0
      %v683 = vsel %vm638, %v599, 0.0
      %v684 = vsel %vm639, %v600, 0.0
      %v685 = vsel %vm640, %v601, 0.0
      %v686 = vsel %vm638, %v602, 0.0
      %v687 = vsel %vm639, %v603, 0.0
      %v688 = vsel %vm640, %v604, 0.0
      %v689 = vsel %vm638, %v605, 0.0
      %v690 = vsel %vm639, %v606, 0.0
      %v691 = vsel %vm640, %v607, 0.0
      %v692 = vsel %vm638, %v608, 0.0
      %v693 = vsel %vm639, %v609, 0.0
      %v694 = vsel %vm640, %v610, 0.0
      %v695 = vsel %vm641, %v611, 0.0
      %v696 = vsel %vm642, %v612, 0.0
      %v697 = vsel %vm643, %v613, 0.0
      %v698 = vpack.c.bf16 %v644, %v644
      %v699 = vpack.c.bf16 %v645, %v645
      %v700 = vpack.c.bf16 %v646, %v646
      %v701 = vpack.c.bf16 %v647, %v647
      %v702 = vpack.c.bf16 %v648, %v648
      %v703 = vpack.c.bf16 %v649, %v649
      %v704 = vpack.c.bf16 %v650, %v650
      %v705 = vpack.c.bf16 %v651, %v651
      %v706 = vpack.c.bf16 %v652, %v652
      %v707 = vpack.c.bf16 %v653, %v653
      %v708 = vpack.c.bf16 %v654, %v654
      %v709 = vpack.c.bf16 %v655, %v655
      %v710 = vpack.c.bf16 %v656, %v656
      %v711 = vpack.c.bf16 %v657, %v657
      %v712 = vpack.c.bf16 %v658, %v658
      %v713 = vpack.c.bf16 %v659, %v659
      %v714 = vpack.c.bf16 %v660, %v660
      %v715 = vpack.c.bf16 %v661, %v661
      %v716 = vpack.c.bf16 %v662, %v662
      %v717 = vpack.c.bf16 %v663, %v663
      %v718 = vpack.c.bf16 %v664, %v664
      %v719 = vpack.c.bf16 %v665, %v665
      %v720 = vpack.c.bf16 %v666, %v666
      %v721 = vpack.c.bf16 %v667, %v667
      %v722 = vpack.c.bf16 %v668, %v668
      %v723 = vpack.c.bf16 %v669, %v669
      %v724 = vpack.c.bf16 %v670, %v670
      %v725 = vpack.c.bf16 %v671, %v671
      %v726 = vpack.c.bf16 %v672, %v672
      %v727 = vpack.c.bf16 %v673, %v673
      %v728 = vpack.c.bf16 %v674, %v674
      %v729 = vpack.c.bf16 %v675, %v675
      %v730 = vpack.c.bf16 %v676, %v676
      %v731 = vpack.c.bf16 %v677, %v677
      %v732 = vpack.c.bf16 %v678, %v678
      %v733 = vpack.c.bf16 %v679, %v679
      %v734 = vpack.c.bf16 %v680, %v680
      %v735 = vpack.c.bf16 %v681, %v681
      %v736 = vpack.c.bf16 %v682, %v682
      %v737 = vpack.c.bf16 %v683, %v683
      %v738 = vpack.c.bf16 %v684, %v684
      %v739 = vpack.c.bf16 %v685, %v685
      %v740 = vpack.c.bf16 %v686, %v686
      %v741 = vpack.c.bf16 %v687, %v687
      %v742 = vpack.c.bf16 %v688, %v688
      %v743 = vpack.c.bf16 %v689, %v689
      %v744 = vpack.c.bf16 %v690, %v690
      %v745 = vpack.c.bf16 %v691, %v691
      %v746 = vpack.c.bf16 %v692, %v692
      %v747 = vpack.c.bf16 %v693, %v693
      %v748 = vpack.c.bf16 %v694, %v694
      %v749 = vpack.c.bf16 %v695, %v695
      %v750 = vpack.c.bf16 %v696, %v696
      %v751 = vpack.c.bf16 %v697, %v697
      %v752 = vld [vmem:[%s301] sm:$0xf]
      %vm753 = vsmask.f32 3328
      %vm754 = vsmask.f32 7440
      %vm755 = vmor %vm753, %vm754
      %v757 = vshrl.u32 %v698, 16
      %v759 = vrot.slane %v757, 4
      %v760 = vshll.u32 %v698, 16
      %v762 = vrot.slane %v760, 5
      %v763 = vor.u32 %v759, %v762
      %v764 = vrot.slane %v763, 4
      %v766 = vshll.u32 %v699, 16
      %v768 = vrot.slane %v766, 5
      %v769 = vsel %vm755, %v764, %v768
      %v770 = vshrl.u32 %v699, 16
      %v772 = vrot.slane %v770, 4
      %v773 = vor.u32 %v772, %v768
      %v774 = vrot.slane %v773, 4
      %v776 = vshll.u32 %v700, 16
      %v778 = vrot.slane %v776, 5
      %v779 = vsel %vm755, %v774, %v778
      %v781 = vshrl.u32 %v701, 16
      %v783 = vrot.slane %v781, 4
      %v784 = vshll.u32 %v701, 16
      %v786 = vrot.slane %v784, 5
      %v787 = vor.u32 %v783, %v786
      %v788 = vrot.slane %v787, 4
      %v790 = vshll.u32 %v702, 16
      %v792 = vrot.slane %v790, 5
      %v793 = vsel %vm755, %v788, %v792
      %v794 = vshrl.u32 %v702, 16
      %v796 = vrot.slane %v794, 4
      %v797 = vor.u32 %v796, %v792
      %v798 = vrot.slane %v797, 4
      %v800 = vshll.u32 %v703, 16
      %v802 = vrot.slane %v800, 5
      %v803 = vsel %vm755, %v798, %v802
      %v805 = vshrl.u32 %v704, 16
      %v807 = vrot.slane %v805, 4
      %v808 = vshll.u32 %v704, 16
      %v810 = vrot.slane %v808, 5
      %v811 = vor.u32 %v807, %v810
      %v812 = vrot.slane %v811, 4
      %v814 = vshll.u32 %v705, 16
      %v816 = vrot.slane %v814, 5
      %v817 = vsel %vm755, %v812, %v816
      %v818 = vshrl.u32 %v705, 16
      %v820 = vrot.slane %v818, 4
      %v821 = vor.u32 %v820, %v816
      %v822 = vrot.slane %v821, 4
      %v824 = vshll.u32 %v706, 16
      %v826 = vrot.slane %v824, 5
      %v827 = vsel %vm755, %v822, %v826
      %v829 = vshrl.u32 %v707, 16
      %v831 = vrot.slane %v829, 4
      %v832 = vshll.u32 %v707, 16
      %v834 = vrot.slane %v832, 5
      %v835 = vor.u32 %v831, %v834
      %v836 = vrot.slane %v835, 4
      %v838 = vshll.u32 %v708, 16
      %v840 = vrot.slane %v838, 5
      %v841 = vsel %vm755, %v836, %v840
      %v842 = vshrl.u32 %v708, 16
      %v844 = vrot.slane %v842, 4
      %v845 = vor.u32 %v844, %v840
      %v846 = vrot.slane %v845, 4
      %v848 = vshll.u32 %v709, 16
      %v850 = vrot.slane %v848, 5
      %v851 = vsel %vm755, %v846, %v850
      %v853 = vshrl.u32 %v710, 16
      %v855 = vrot.slane %v853, 4
      %v856 = vshll.u32 %v710, 16
      %v858 = vrot.slane %v856, 5
      %v859 = vor.u32 %v855, %v858
      %v860 = vrot.slane %v859, 4
      %v862 = vshll.u32 %v711, 16
      %v864 = vrot.slane %v862, 5
      %v865 = vsel %vm755, %v860, %v864
      %v866 = vshrl.u32 %v711, 16
      %v868 = vrot.slane %v866, 4
      %v869 = vor.u32 %v868, %v864
      %v870 = vrot.slane %v869, 4
      %v872 = vshll.u32 %v712, 16
      %v874 = vrot.slane %v872, 5
      %v875 = vsel %vm755, %v870, %v874
      %v877 = vshrl.u32 %v713, 16
      %v879 = vrot.slane %v877, 4
      %v880 = vshll.u32 %v713, 16
      %v882 = vrot.slane %v880, 5
      %v883 = vor.u32 %v879, %v882
      %v884 = vrot.slane %v883, 4
      %v886 = vshll.u32 %v714, 16
      %v888 = vrot.slane %v886, 5
      %v889 = vsel %vm755, %v884, %v888
      %v890 = vshrl.u32 %v714, 16
      %v892 = vrot.slane %v890, 4
      %v893 = vor.u32 %v892, %v888
      %v894 = vrot.slane %v893, 4
      %v896 = vshll.u32 %v715, 16
      %v898 = vrot.slane %v896, 5
      %v899 = vsel %vm755, %v894, %v898
      %v901 = vshrl.u32 %v716, 16
      %v903 = vrot.slane %v901, 4
      %v904 = vshll.u32 %v716, 16
      %v906 = vrot.slane %v904, 5
      %v907 = vor.u32 %v903, %v906
      %v908 = vrot.slane %v907, 4
      %v910 = vshll.u32 %v717, 16
      %v912 = vrot.slane %v910, 5
      %v913 = vsel %vm755, %v908, %v912
      %v914 = vshrl.u32 %v717, 16
      %v916 = vrot.slane %v914, 4
      %v917 = vor.u32 %v916, %v912
      %v918 = vrot.slane %v917, 4
      %v920 = vshll.u32 %v718, 16
      %v922 = vrot.slane %v920, 5
      %v923 = vsel %vm755, %v918, %v922
      %v925 = vshrl.u32 %v719, 16
      %v927 = vrot.slane %v925, 4
      %v928 = vshll.u32 %v719, 16
      %v930 = vrot.slane %v928, 5
      %v931 = vor.u32 %v927, %v930
      %v932 = vrot.slane %v931, 4
      %v934 = vshll.u32 %v720, 16
      %v936 = vrot.slane %v934, 5
      %v937 = vsel %vm755, %v932, %v936
      %v938 = vshrl.u32 %v720, 16
      %v940 = vrot.slane %v938, 4
      %v941 = vor.u32 %v940, %v936
      %v942 = vrot.slane %v941, 4
      %v944 = vshll.u32 %v721, 16
      %v946 = vrot.slane %v944, 5
      %v947 = vsel %vm755, %v942, %v946
      %v949 = vshrl.u32 %v722, 16
      %v951 = vrot.slane %v949, 4
      %v952 = vshll.u32 %v722, 16
      %v954 = vrot.slane %v952, 5
      %v955 = vor.u32 %v951, %v954
      %v956 = vrot.slane %v955, 4
      %v958 = vshll.u32 %v723, 16
      %v960 = vrot.slane %v958, 5
      %v961 = vsel %vm755, %v956, %v960
      %v962 = vshrl.u32 %v723, 16
      %v964 = vrot.slane %v962, 4
      %v965 = vor.u32 %v964, %v960
      %v966 = vrot.slane %v965, 4
      %v968 = vshll.u32 %v724, 16
      %v970 = vrot.slane %v968, 5
      %v971 = vsel %vm755, %v966, %v970
      %v973 = vshrl.u32 %v725, 16
      %v975 = vrot.slane %v973, 4
      %v976 = vshll.u32 %v725, 16
      %v978 = vrot.slane %v976, 5
      %v979 = vor.u32 %v975, %v978
      %v980 = vrot.slane %v979, 4
      %v982 = vshll.u32 %v726, 16
      %v984 = vrot.slane %v982, 5
      %v985 = vsel %vm755, %v980, %v984
      %v986 = vshrl.u32 %v726, 16
      %v988 = vrot.slane %v986, 4
      %v989 = vor.u32 %v988, %v984
      %v990 = vrot.slane %v989, 4
      %v992 = vshll.u32 %v727, 16
      %v994 = vrot.slane %v992, 5
      %v995 = vsel %vm755, %v990, %v994
      %v997 = vshrl.u32 %v728, 16
      %v999 = vrot.slane %v997, 4
      %v1000 = vshll.u32 %v728, 16
      %v1002 = vrot.slane %v1000, 5
      %v1003 = vor.u32 %v999, %v1002
      %v1004 = vrot.slane %v1003, 4
      %v1006 = vshll.u32 %v729, 16
      %v1008 = vrot.slane %v1006, 5
      %v1009 = vsel %vm755, %v1004, %v1008
      %v1010 = vshrl.u32 %v729, 16
      %v1012 = vrot.slane %v1010, 4
      %v1013 = vor.u32 %v1012, %v1008
      %v1014 = vrot.slane %v1013, 4
      %v1016 = vshll.u32 %v730, 16
      %v1018 = vrot.slane %v1016, 5
      %v1019 = vsel %vm755, %v1014, %v1018
      %v1021 = vshrl.u32 %v731, 16
      %v1023 = vrot.slane %v1021, 4
      %v1024 = vshll.u32 %v731, 16
      %v1026 = vrot.slane %v1024, 5
      %v1027 = vor.u32 %v1023, %v1026
      %v1028 = vrot.slane %v1027, 4
      %v1030 = vshll.u32 %v732, 16
      %v1032 = vrot.slane %v1030, 5
      %v1033 = vsel %vm755, %v1028, %v1032
      %v1034 = vshrl.u32 %v732, 16
      %v1036 = vrot.slane %v1034, 4
      %v1037 = vor.u32 %v1036, %v1032
      %v1038 = vrot.slane %v1037, 4
      %v1040 = vshll.u32 %v733, 16
      %v1042 = vrot.slane %v1040, 5
      %v1043 = vsel %vm755, %v1038, %v1042
      %v1045 = vshrl.u32 %v734, 16
      %v1047 = vrot.slane %v1045, 4
      %v1048 = vshll.u32 %v734, 16
      %v1050 = vrot.slane %v1048, 5
      %v1051 = vor.u32 %v1047, %v1050
      %v1052 = vrot.slane %v1051, 4
      %v1054 = vshll.u32 %v735, 16
      %v1056 = vrot.slane %v1054, 5
      %v1057 = vsel %vm755, %v1052, %v1056
      %v1058 = vshrl.u32 %v735, 16
      %v1060 = vrot.slane %v1058, 4
      %v1061 = vor.u32 %v1060, %v1056
      %v1062 = vrot.slane %v1061, 4
      %v1064 = vshll.u32 %v736, 16
      %v1066 = vrot.slane %v1064, 5
      %v1067 = vsel %vm755, %v1062, %v1066
      %v1069 = vshrl.u32 %v737, 16
      %v1071 = vrot.slane %v1069, 4
      %v1072 = vshll.u32 %v737, 16
      %v1074 = vrot.slane %v1072, 5
      %v1075 = vor.u32 %v1071, %v1074
      %v1076 = vrot.slane %v1075, 4
      %v1078 = vshll.u32 %v738, 16
      %v1080 = vrot.slane %v1078, 5
      %v1081 = vsel %vm755, %v1076, %v1080
      %v1082 = vshrl.u32 %v738, 16
      %v1084 = vrot.slane %v1082, 4
      %v1085 = vor.u32 %v1084, %v1080
      %v1086 = vrot.slane %v1085, 4
      %v1088 = vshll.u32 %v739, 16
      %v1090 = vrot.slane %v1088, 5
      %v1091 = vsel %vm755, %v1086, %v1090
      %v1093 = vshrl.u32 %v740, 16
      %v1095 = vrot.slane %v1093, 4
      %v1096 = vshll.u32 %v740, 16
      %v1098 = vrot.slane %v1096, 5
      %v1099 = vor.u32 %v1095, %v1098
      %v1100 = vrot.slane %v1099, 4
      %v1102 = vshll.u32 %v741, 16
      %v1104 = vrot.slane %v1102, 5
      %v1105 = vsel %vm755, %v1100, %v1104
      %v1106 = vshrl.u32 %v741, 16
      %v1108 = vrot.slane %v1106, 4
      %v1109 = vor.u32 %v1108, %v1104
      %v1110 = vrot.slane %v1109, 4
      %v1112 = vshll.u32 %v742, 16
      %v1114 = vrot.slane %v1112, 5
      %v1115 = vsel %vm755, %v1110, %v1114
      %v1117 = vshrl.u32 %v743, 16
      %v1119 = vrot.slane %v1117, 4
      %v1120 = vshll.u32 %v743, 16
      %v1122 = vrot.slane %v1120, 5
      %v1123 = vor.u32 %v1119, %v1122
      %v1124 = vrot.slane %v1123, 4
      %v1126 = vshll.u32 %v744, 16
      %v1128 = vrot.slane %v1126, 5
      %v1129 = vsel %vm755, %v1124, %v1128
      %v1130 = vshrl.u32 %v744, 16
      %v1132 = vrot.slane %v1130, 4
      %v1133 = vor.u32 %v1132, %v1128
      %v1134 = vrot.slane %v1133, 4
      %v1136 = vshll.u32 %v745, 16
      %v1138 = vrot.slane %v1136, 5
      %v1139 = vsel %vm755, %v1134, %v1138
      %s1140 = scalar_lea.vmem %s301, 4
      %v1141 = vld [vmem:[%s1140] sm:$0xf]
      %v1142 = vunpack.c.l.b16 %v769
      %v1143 = vunpack.c.l.b16 %v779
      %v1144 = vunpack.c.l.b16 %v793
      %v1145 = vunpack.c.l.b16 %v803
      %v1146 = vunpack.c.l.b16 %v817
      %v1147 = vunpack.c.l.b16 %v827
      %v1148 = vunpack.c.l.b16 %v841
      %v1149 = vunpack.c.l.b16 %v851
      %v1150 = vunpack.c.l.b16 %v865
      %v1151 = vunpack.c.l.b16 %v875
      %v1152 = vunpack.c.l.b16 %v889
      %v1153 = vunpack.c.l.b16 %v899
      %v1154 = vunpack.c.l.b16 %v913
      %v1155 = vunpack.c.l.b16 %v923
      %v1156 = vunpack.c.l.b16 %v937
      %v1157 = vunpack.c.l.b16 %v947
      %v1158 = vunpack.c.l.b16 %v961
      %v1159 = vunpack.c.l.b16 %v971
      %v1160 = vunpack.c.l.b16 %v985
      %v1161 = vunpack.c.l.b16 %v995
      %v1162 = vunpack.c.l.b16 %v1009
      %v1163 = vunpack.c.l.b16 %v1019
      %v1164 = vunpack.c.l.b16 %v1033
      %v1165 = vunpack.c.l.b16 %v1043
      %v1166 = vunpack.c.l.b16 %v1057
      %v1167 = vunpack.c.l.b16 %v1067
      %v1168 = vunpack.c.l.b16 %v1081
      %v1169 = vunpack.c.l.b16 %v1091
      %v1170 = vunpack.c.l.b16 %v1105
      %v1171 = vunpack.c.l.b16 %v1115
      %v1172 = vunpack.c.l.b16 %v1129
      %v1173 = vunpack.c.l.b16 %v1139
      %v1174 = vpack.c.b16 %v1143, %v1142
      %v1175 = vpack.c.b16 %v1145, %v1144
      %v1176 = vpack.c.b16 %v1147, %v1146
      %v1177 = vpack.c.b16 %v1149, %v1148
      %v1178 = vpack.c.b16 %v1151, %v1150
      %v1179 = vpack.c.b16 %v1153, %v1152
      %v1180 = vpack.c.b16 %v1155, %v1154
      %v1181 = vpack.c.b16 %v1157, %v1156
      %v1182 = vpack.c.b16 %v1159, %v1158
      %v1183 = vpack.c.b16 %v1161, %v1160
      %v1184 = vpack.c.b16 %v1163, %v1162
      %v1185 = vpack.c.b16 %v1165, %v1164
      %v1186 = vpack.c.b16 %v1167, %v1166
      %v1187 = vpack.c.b16 %v1169, %v1168
      %v1188 = vpack.c.b16 %v1171, %v1170
      %v1189 = vpack.c.b16 %v1173, %v1172
      %vm1190 = vcmask 64512
      %v1192 = vsel %vm1190, %v1174, 0
      %v1195 = vsel %vm1190, %v1175, 0
      %v1198 = vsel %vm1190, %v1176, 0
      %v1201 = vsel %vm1190, %v1177, 0
      %v1204 = vsel %vm1190, %v1178, 0
      %v1207 = vsel %vm1190, %v1179, 0
      %v1210 = vsel %vm1190, %v1180, 0
      %v1213 = vsel %vm1190, %v1181, 0
      %v1216 = vsel %vm1190, %v1182, 0
      %v1219 = vsel %vm1190, %v1183, 0
      %v1222 = vsel %vm1190, %v1184, 0
      %v1225 = vsel %vm1190, %v1185, 0
      %v1228 = vsel %vm1190, %v1186, 0
      %v1231 = vsel %vm1190, %v1187, 0
      %v1234 = vsel %vm1190, %v1188, 0
      %v1237 = vsel %vm1190, %v1189, 0
      %vm1239 = vcmask 1043456
      %v1241 = vsel %vm1239, %v1141, 0
      %1243 = vmatpush.bf16.msra.mxu0 0
      %1244 = vmatpush.bf16.msra.mxu0 0
      %1245 = vmatpush.bf16.msra.mxu0 0
      %1246 = vmatpush.bf16.msra.mxu0 0
      %1247 = vmatpush.bf16.msra.mxu0 0
      %1248 = vmatpush.bf16.msra.mxu0 0
      %1249 = vmatpush.bf16.msra.mxu0 0
      %1250 = vmatpush.bf16.msra.mxu0 %v1241
      %1251 = vmatmul.bf16.gmra.mxu0 %v1192
      %v1252 = vpop.f32.mrf.mxu0
      %v1253 = vadd.f32 0.0, %v1252
      %v1254 = vpop.f32.mrf.mxu0
      %v1255 = vadd.f32 0.0, %v1254
      %1256 = vmatmul.bf16.gmra.mxu0 %v1195
      %v1257 = vpop.f32.mrf.mxu0
      %v1258 = vadd.f32 0.0, %v1257
      %v1259 = vpop.f32.mrf.mxu0
      %v1260 = vadd.f32 0.0, %v1259
      %1261 = vmatmul.bf16.gmra.mxu0 %v1198
      %v1262 = vpop.f32.mrf.mxu0
      %v1263 = vadd.f32 0.0, %v1262
      %v1264 = vpop.f32.mrf.mxu0
      %v1265 = vadd.f32 0.0, %v1264
      %1266 = vmatmul.bf16.gmra.mxu0 %v1201
      %v1267 = vpop.f32.mrf.mxu0
      %v1268 = vadd.f32 0.0, %v1267
      %v1269 = vpop.f32.mrf.mxu0
      %v1270 = vadd.f32 0.0, %v1269
      %1271 = vmatmul.bf16.gmra.mxu0 %v1204
      %v1272 = vpop.f32.mrf.mxu0
      %v1273 = vadd.f32 0.0, %v1272
      %v1274 = vpop.f32.mrf.mxu0
      %v1275 = vadd.f32 0.0, %v1274
      %1276 = vmatmul.bf16.gmra.mxu0 %v1207
      %v1277 = vpop.f32.mrf.mxu0
      %v1278 = vadd.f32 0.0, %v1277
      %v1279 = vpop.f32.mrf.mxu0
      %v1280 = vadd.f32 0.0, %v1279
      %1281 = vmatmul.bf16.gmra.mxu0 %v1210
      %v1282 = vpop.f32.mrf.mxu0
      %v1283 = vadd.f32 0.0, %v1282
      %v1284 = vpop.f32.mrf.mxu0
      %v1285 = vadd.f32 0.0, %v1284
      %1286 = vmatmul.bf16.gmra.mxu0 %v1213
      %v1287 = vpop.f32.mrf.mxu0
      %v1288 = vadd.f32 0.0, %v1287
      %v1289 = vpop.f32.mrf.mxu0
      %v1290 = vadd.f32 0.0, %v1289
      %1291 = vmatmul.bf16.gmra.mxu0 %v1216
      %v1292 = vpop.f32.mrf.mxu0
      %v1293 = vadd.f32 0.0, %v1292
      %v1294 = vpop.f32.mrf.mxu0
      %v1295 = vadd.f32 0.0, %v1294
      %1296 = vmatmul.bf16.gmra.mxu0 %v1219
      %v1297 = vpop.f32.mrf.mxu0
      %v1298 = vadd.f32 0.0, %v1297
      %v1299 = vpop.f32.mrf.mxu0
      %v1300 = vadd.f32 0.0, %v1299
      %1301 = vmatmul.bf16.gmra.mxu0 %v1222
      %v1302 = vpop.f32.mrf.mxu0
      %v1303 = vadd.f32 0.0, %v1302
      %v1304 = vpop.f32.mrf.mxu0
      %v1305 = vadd.f32 0.0, %v1304
      %1306 = vmatmul.bf16.gmra.mxu0 %v1225
      %v1307 = vpop.f32.mrf.mxu0
      %v1308 = vadd.f32 0.0, %v1307
      %v1309 = vpop.f32.mrf.mxu0
      %v1310 = vadd.f32 0.0, %v1309
      %1311 = vmatmul.bf16.gmra.mxu0 %v1228
      %v1312 = vpop.f32.mrf.mxu0
      %v1313 = vadd.f32 0.0, %v1312
      %v1314 = vpop.f32.mrf.mxu0
      %v1315 = vadd.f32 0.0, %v1314
      %1316 = vmatmul.bf16.gmra.mxu0 %v1231
      %v1317 = vpop.f32.mrf.mxu0
      %v1318 = vadd.f32 0.0, %v1317
      %v1319 = vpop.f32.mrf.mxu0
      %v1320 = vadd.f32 0.0, %v1319
      %1321 = vmatmul.bf16.gmra.mxu0 %v1234
      %v1322 = vpop.f32.mrf.mxu0
      %v1323 = vadd.f32 0.0, %v1322
      %v1324 = vpop.f32.mrf.mxu0
      %v1325 = vadd.f32 0.0, %v1324
      %1326 = vmatmul.bf16.gmra.mxu0 %v1237
      %v1327 = vpop.f32.mrf.mxu0
      %v1328 = vadd.f32 0.0, %v1327
      %v1329 = vpop.f32.mrf.mxu0
      %v1330 = vadd.f32 0.0, %v1329
      %1331 = vdwg.mxu0
      %v1364 = vunpack.c.l.b16 %v698
      %v1365 = vunpack.c.l.b16 %v699
      %v1366 = vunpack.c.l.b16 %v701
      %v1367 = vunpack.c.l.b16 %v702
      %v1368 = vunpack.c.l.b16 %v704
      %v1369 = vunpack.c.l.b16 %v705
      %v1370 = vunpack.c.l.b16 %v707
      %v1371 = vunpack.c.l.b16 %v708
      %v1372 = vunpack.c.l.b16 %v710
      %v1373 = vunpack.c.l.b16 %v711
      %v1374 = vunpack.c.l.b16 %v713
      %v1375 = vunpack.c.l.b16 %v714
      %v1376 = vunpack.c.l.b16 %v716
      %v1377 = vunpack.c.l.b16 %v717
      %v1378 = vunpack.c.l.b16 %v719
      %v1379 = vunpack.c.l.b16 %v720
      %v1380 = vunpack.c.l.b16 %v722
      %v1381 = vunpack.c.l.b16 %v723
      %v1382 = vunpack.c.l.b16 %v725
      %v1383 = vunpack.c.l.b16 %v726
      %v1384 = vunpack.c.l.b16 %v728
      %v1385 = vunpack.c.l.b16 %v729
      %v1386 = vunpack.c.l.b16 %v731
      %v1387 = vunpack.c.l.b16 %v732
      %v1388 = vunpack.c.l.b16 %v734
      %v1389 = vunpack.c.l.b16 %v735
      %v1390 = vunpack.c.l.b16 %v737
      %v1391 = vunpack.c.l.b16 %v738
      %v1392 = vunpack.c.l.b16 %v740
      %v1393 = vunpack.c.l.b16 %v741
      %v1394 = vunpack.c.l.b16 %v743
      %v1395 = vunpack.c.l.b16 %v744
      %v1396 = vpack.c.b16 %v1365, %v1364
      %v1397 = vpack.c.b16 %v1367, %v1366
      %v1398 = vpack.c.b16 %v1369, %v1368
      %v1399 = vpack.c.b16 %v1371, %v1370
      %v1400 = vpack.c.b16 %v1373, %v1372
      %v1401 = vpack.c.b16 %v1375, %v1374
      %v1402 = vpack.c.b16 %v1377, %v1376
      %v1403 = vpack.c.b16 %v1379, %v1378
      %v1404 = vpack.c.b16 %v1381, %v1380
      %v1405 = vpack.c.b16 %v1383, %v1382
      %v1406 = vpack.c.b16 %v1385, %v1384
      %v1407 = vpack.c.b16 %v1387, %v1386
      %v1408 = vpack.c.b16 %v1389, %v1388
      %v1409 = vpack.c.b16 %v1391, %v1390
      %v1410 = vpack.c.b16 %v1393, %v1392
      %v1411 = vpack.c.b16 %v1395, %v1394
      %v1413 = vsel %vm1190, %v1396, 0
      %v1416 = vsel %vm1190, %v1397, 0
      %v1419 = vsel %vm1190, %v1398, 0
      %v1422 = vsel %vm1190, %v1399, 0
      %v1425 = vsel %vm1190, %v1400, 0
      %v1428 = vsel %vm1190, %v1401, 0
      %v1431 = vsel %vm1190, %v1402, 0
      %v1434 = vsel %vm1190, %v1403, 0
      %v1437 = vsel %vm1190, %v1404, 0
      %v1440 = vsel %vm1190, %v1405, 0
      %v1443 = vsel %vm1190, %v1406, 0
      %v1446 = vsel %vm1190, %v1407, 0
      %v1449 = vsel %vm1190, %v1408, 0
      %v1452 = vsel %vm1190, %v1409, 0
      %v1455 = vsel %vm1190, %v1410, 0
      %v1458 = vsel %vm1190, %v1411, 0
      %v1461 = vsel %vm1239, %v752, 0
      %1463 = vmatpush.bf16.msra.mxu0 0
      %1464 = vmatpush.bf16.msra.mxu0 0
      %1465 = vmatpush.bf16.msra.mxu0 0
      %1466 = vmatpush.bf16.msra.mxu0 0
      %1467 = vmatpush.bf16.msra.mxu0 0
      %1468 = vmatpush.bf16.msra.mxu0 0
      %1469 = vmatpush.bf16.msra.mxu0 0
      %1470 = vmatpush.bf16.msra.mxu0 %v1461
      %1471 = vmatmul.bf16.gmra.mxu0 %v1413
      %v1472 = vpop.f32.mrf.mxu0
      %v1473 = vadd.f32 %v1253, %v1472
      %v1474 = vpop.f32.mrf.mxu0
      %v1475 = vadd.f32 %v1255, %v1474
      %1476 = vmatmul.bf16.gmra.mxu0 %v1416
      %v1477 = vpop.f32.mrf.mxu0
      %v1478 = vadd.f32 %v1258, %v1477
      %v1479 = vpop.f32.mrf.mxu0
      %v1480 = vadd.f32 %v1260, %v1479
      %1481 = vmatmul.bf16.gmra.mxu0 %v1419
      %v1482 = vpop.f32.mrf.mxu0
      %v1483 = vadd.f32 %v1263, %v1482
      %v1484 = vpop.f32.mrf.mxu0
      %v1485 = vadd.f32 %v1265, %v1484
      %1486 = vmatmul.bf16.gmra.mxu0 %v1422
      %v1487 = vpop.f32.mrf.mxu0
      %v1488 = vadd.f32 %v1268, %v1487
      %v1489 = vpop.f32.mrf.mxu0
      %v1490 = vadd.f32 %v1270, %v1489
      %1491 = vmatmul.bf16.gmra.mxu0 %v1425
      %v1492 = vpop.f32.mrf.mxu0
      %v1493 = vadd.f32 %v1273, %v1492
      %v1494 = vpop.f32.mrf.mxu0
      %v1495 = vadd.f32 %v1275, %v1494
      %1496 = vmatmul.bf16.gmra.mxu0 %v1428
      %v1497 = vpop.f32.mrf.mxu0
      %v1498 = vadd.f32 %v1278, %v1497
      %v1499 = vpop.f32.mrf.mxu0
      %v1500 = vadd.f32 %v1280, %v1499
      %1501 = vmatmul.bf16.gmra.mxu0 %v1431
      %v1502 = vpop.f32.mrf.mxu0
      %v1503 = vadd.f32 %v1283, %v1502
      %v1504 = vpop.f32.mrf.mxu0
      %v1505 = vadd.f32 %v1285, %v1504
      %1506 = vmatmul.bf16.gmra.mxu0 %v1434
      %v1507 = vpop.f32.mrf.mxu0
      %v1508 = vadd.f32 %v1288, %v1507
      %v1509 = vpop.f32.mrf.mxu0
      %v1510 = vadd.f32 %v1290, %v1509
      %1511 = vmatmul.bf16.gmra.mxu0 %v1437
      %v1512 = vpop.f32.mrf.mxu0
      %v1513 = vadd.f32 %v1293, %v1512
      %v1514 = vpop.f32.mrf.mxu0
      %v1515 = vadd.f32 %v1295, %v1514
      %1516 = vmatmul.bf16.gmra.mxu0 %v1440
      %v1517 = vpop.f32.mrf.mxu0
      %v1518 = vadd.f32 %v1298, %v1517
      %v1519 = vpop.f32.mrf.mxu0
      %v1520 = vadd.f32 %v1300, %v1519
      %1521 = vmatmul.bf16.gmra.mxu0 %v1443
      %v1522 = vpop.f32.mrf.mxu0
      %v1523 = vadd.f32 %v1303, %v1522
      %v1524 = vpop.f32.mrf.mxu0
      %v1525 = vadd.f32 %v1305, %v1524
      %1526 = vmatmul.bf16.gmra.mxu0 %v1446
      %v1527 = vpop.f32.mrf.mxu0
      %v1528 = vadd.f32 %v1308, %v1527
      %v1529 = vpop.f32.mrf.mxu0
      %v1530 = vadd.f32 %v1310, %v1529
      %1531 = vmatmul.bf16.gmra.mxu0 %v1449
      %v1532 = vpop.f32.mrf.mxu0
      %v1533 = vadd.f32 %v1313, %v1532
      %v1534 = vpop.f32.mrf.mxu0
      %v1535 = vadd.f32 %v1315, %v1534
      %1536 = vmatmul.bf16.gmra.mxu0 %v1452
      %v1537 = vpop.f32.mrf.mxu0
      %v1538 = vadd.f32 %v1318, %v1537
      %v1539 = vpop.f32.mrf.mxu0
      %v1540 = vadd.f32 %v1320, %v1539
      %1541 = vmatmul.bf16.gmra.mxu0 %v1455
      %v1542 = vpop.f32.mrf.mxu0
      %v1543 = vadd.f32 %v1323, %v1542
      %v1544 = vpop.f32.mrf.mxu0
      %v1545 = vadd.f32 %v1325, %v1544
      %1546 = vmatmul.bf16.gmra.mxu0 %v1458
      %v1547 = vpop.f32.mrf.mxu0
      %v1548 = vadd.f32 %v1328, %v1547
      %v1549 = vpop.f32.mrf.mxu0
      %v1550 = vadd.f32 %v1330, %v1549
      %1551 = vdwg.mxu0
      %vm1568 = vcmask 1042432
      %vm1569 = vcmask 1046532
      %vm1570 = vmor %vm1568, %vm1569
      %v1571 = vrot.slane %v698, 5
      %v1572 = vrot.slane %v1571, 4
      %v1573 = vrot.slane %v699, 5
      %v1574 = vsel %vm1570, %v1572, %v1573
      %v1575 = vrot.slane %v1573, 4
      %v1576 = vrot.slane %v700, 5
      %v1577 = vsel %vm1570, %v1575, %v1576
      %v1578 = vrot.slane %v701, 5
      %v1579 = vrot.slane %v1578, 4
      %v1580 = vrot.slane %v702, 5
      %v1581 = vsel %vm1570, %v1579, %v1580
      %v1582 = vrot.slane %v1580, 4
      %v1583 = vrot.slane %v703, 5
      %v1584 = vsel %vm1570, %v1582, %v1583
      %v1585 = vrot.slane %v704, 5
      %v1586 = vrot.slane %v1585, 4
      %v1587 = vrot.slane %v705, 5
      %v1588 = vsel %vm1570, %v1586, %v1587
      %v1589 = vrot.slane %v1587, 4
      %v1590 = vrot.slane %v706, 5
      %v1591 = vsel %vm1570, %v1589, %v1590
      %v1592 = vrot.slane %v707, 5
      %v1593 = vrot.slane %v1592, 4
      %v1594 = vrot.slane %v708, 5
      %v1595 = vsel %vm1570, %v1593, %v1594
      %v1596 = vrot.slane %v1594, 4
      %v1597 = vrot.slane %v709, 5
      %v1598 = vsel %vm1570, %v1596, %v1597
      %v1599 = vrot.slane %v710, 5
      %v1600 = vrot.slane %v1599, 4
      %v1601 = vrot.slane %v711, 5
      %v1602 = vsel %vm1570, %v1600, %v1601
      %v1603 = vrot.slane %v1601, 4
      %v1604 = vrot.slane %v712, 5
      %v1605 = vsel %vm1570, %v1603, %v1604
      %v1606 = vrot.slane %v713, 5
      %v1607 = vrot.slane %v1606, 4
      %v1608 = vrot.slane %v714, 5
      %v1609 = vsel %vm1570, %v1607, %v1608
      %v1610 = vrot.slane %v1608, 4
      %v1611 = vrot.slane %v715, 5
      %v1612 = vsel %vm1570, %v1610, %v1611
      %v1613 = vrot.slane %v716, 5
      %v1614 = vrot.slane %v1613, 4
      %v1615 = vrot.slane %v717, 5
      %v1616 = vsel %vm1570, %v1614, %v1615
      %v1617 = vrot.slane %v1615, 4
      %v1618 = vrot.slane %v718, 5
      %v1619 = vsel %vm1570, %v1617, %v1618
      %v1620 = vrot.slane %v719, 5
      %v1621 = vrot.slane %v1620, 4
      %v1622 = vrot.slane %v720, 5
      %v1623 = vsel %vm1570, %v1621, %v1622
      %v1624 = vrot.slane %v1622, 4
      %v1625 = vrot.slane %v721, 5
      %v1626 = vsel %vm1570, %v1624, %v1625
      %v1627 = vrot.slane %v722, 5
      %v1628 = vrot.slane %v1627, 4
      %v1629 = vrot.slane %v723, 5
      %v1630 = vsel %vm1570, %v1628, %v1629
      %v1631 = vrot.slane %v1629, 4
      %v1632 = vrot.slane %v724, 5
      %v1633 = vsel %vm1570, %v1631, %v1632
      %v1634 = vrot.slane %v725, 5
      %v1635 = vrot.slane %v1634, 4
      %v1636 = vrot.slane %v726, 5
      %v1637 = vsel %vm1570, %v1635, %v1636
      %v1638 = vrot.slane %v1636, 4
      %v1639 = vrot.slane %v727, 5
      %v1640 = vsel %vm1570, %v1638, %v1639
      %v1641 = vrot.slane %v728, 5
      %v1642 = vrot.slane %v1641, 4
      %v1643 = vrot.slane %v729, 5
      %v1644 = vsel %vm1570, %v1642, %v1643
      %v1645 = vrot.slane %v1643, 4
      %v1646 = vrot.slane %v730, 5
      %v1647 = vsel %vm1570, %v1645, %v1646
      %v1648 = vrot.slane %v731, 5
      %v1649 = vrot.slane %v1648, 4
      %v1650 = vrot.slane %v732, 5
      %v1651 = vsel %vm1570, %v1649, %v1650
      %v1652 = vrot.slane %v1650, 4
      %v1653 = vrot.slane %v733, 5
      %v1654 = vsel %vm1570, %v1652, %v1653
      %v1655 = vrot.slane %v734, 5
      %v1656 = vrot.slane %v1655, 4
      %v1657 = vrot.slane %v735, 5
      %v1658 = vsel %vm1570, %v1656, %v1657
      %v1659 = vrot.slane %v1657, 4
      %v1660 = vrot.slane %v736, 5
      %v1661 = vsel %vm1570, %v1659, %v1660
      %v1662 = vrot.slane %v737, 5
      %v1663 = vrot.slane %v1662, 4
      %v1664 = vrot.slane %v738, 5
      %v1665 = vsel %vm1570, %v1663, %v1664
      %v1666 = vrot.slane %v1664, 4
      %v1667 = vrot.slane %v739, 5
      %v1668 = vsel %vm1570, %v1666, %v1667
      %v1669 = vrot.slane %v740, 5
      %v1670 = vrot.slane %v1669, 4
      %v1671 = vrot.slane %v741, 5
      %v1672 = vsel %vm1570, %v1670, %v1671
      %v1673 = vrot.slane %v1671, 4
      %v1674 = vrot.slane %v742, 5
      %v1675 = vsel %vm1570, %v1673, %v1674
      %v1676 = vrot.slane %v743, 5
      %v1677 = vrot.slane %v1676, 4
      %v1678 = vrot.slane %v744, 5
      %v1679 = vsel %vm1570, %v1677, %v1678
      %v1680 = vrot.slane %v1678, 4
      %v1681 = vrot.slane %v745, 5
      %v1682 = vsel %vm1570, %v1680, %v1681
      %s1683 = scalar_lea.vmem %s301, 8
      %v1684 = vld [vmem:[%s1683] sm:$0xf]
      %v1685 = vunpack.c.l.b16 %v1574
      %v1686 = vunpack.c.l.b16 %v1577
      %v1687 = vunpack.c.l.b16 %v1581
      %v1688 = vunpack.c.l.b16 %v1584
      %v1689 = vunpack.c.l.b16 %v1588
      %v1690 = vunpack.c.l.b16 %v1591
      %v1691 = vunpack.c.l.b16 %v1595
      %v1692 = vunpack.c.l.b16 %v1598
      %v1693 = vunpack.c.l.b16 %v1602
      %v1694 = vunpack.c.l.b16 %v1605
      %v1695 = vunpack.c.l.b16 %v1609
      %v1696 = vunpack.c.l.b16 %v1612
      %v1697 = vunpack.c.l.b16 %v1616
      %v1698 = vunpack.c.l.b16 %v1619
      %v1699 = vunpack.c.l.b16 %v1623
      %v1700 = vunpack.c.l.b16 %v1626
      %v1701 = vunpack.c.l.b16 %v1630
      %v1702 = vunpack.c.l.b16 %v1633
      %v1703 = vunpack.c.l.b16 %v1637
      %v1704 = vunpack.c.l.b16 %v1640
      %v1705 = vunpack.c.l.b16 %v1644
      %v1706 = vunpack.c.l.b16 %v1647
      %v1707 = vunpack.c.l.b16 %v1651
      %v1708 = vunpack.c.l.b16 %v1654
      %v1709 = vunpack.c.l.b16 %v1658
      %v1710 = vunpack.c.l.b16 %v1661
      %v1711 = vunpack.c.l.b16 %v1665
      %v1712 = vunpack.c.l.b16 %v1668
      %v1713 = vunpack.c.l.b16 %v1672
      %v1714 = vunpack.c.l.b16 %v1675
      %v1715 = vunpack.c.l.b16 %v1679
      %v1716 = vunpack.c.l.b16 %v1682
      %v1717 = vpack.c.b16 %v1686, %v1685
      %v1718 = vpack.c.b16 %v1688, %v1687
      %v1719 = vpack.c.b16 %v1690, %v1689
      %v1720 = vpack.c.b16 %v1692, %v1691
      %v1721 = vpack.c.b16 %v1694, %v1693
      %v1722 = vpack.c.b16 %v1696, %v1695
      %v1723 = vpack.c.b16 %v1698, %v1697
      %v1724 = vpack.c.b16 %v1700, %v1699
      %v1725 = vpack.c.b16 %v1702, %v1701
      %v1726 = vpack.c.b16 %v1704, %v1703
      %v1727 = vpack.c.b16 %v1706, %v1705
      %v1728 = vpack.c.b16 %v1708, %v1707
      %v1729 = vpack.c.b16 %v1710, %v1709
      %v1730 = vpack.c.b16 %v1712, %v1711
      %v1731 = vpack.c.b16 %v1714, %v1713
      %v1732 = vpack.c.b16 %v1716, %v1715
      %v1734 = vsel %vm1190, %v1717, 0
      %v1737 = vsel %vm1190, %v1718, 0
      %v1740 = vsel %vm1190, %v1719, 0
      %v1743 = vsel %vm1190, %v1720, 0
      %v1746 = vsel %vm1190, %v1721, 0
      %v1749 = vsel %vm1190, %v1722, 0
      %v1752 = vsel %vm1190, %v1723, 0
      %v1755 = vsel %vm1190, %v1724, 0
      %v1758 = vsel %vm1190, %v1725, 0
      %v1761 = vsel %vm1190, %v1726, 0
      %v1764 = vsel %vm1190, %v1727, 0
      %v1767 = vsel %vm1190, %v1728, 0
      %v1770 = vsel %vm1190, %v1729, 0
      %v1773 = vsel %vm1190, %v1730, 0
      %v1776 = vsel %vm1190, %v1731, 0
      %v1779 = vsel %vm1190, %v1732, 0
      %v1782 = vsel %vm1239, %v1684, 0
      %1784 = vmatpush.bf16.msra.mxu0 0
      %1785 = vmatpush.bf16.msra.mxu0 0
      %1786 = vmatpush.bf16.msra.mxu0 0
      %1787 = vmatpush.bf16.msra.mxu0 0
      %1788 = vmatpush.bf16.msra.mxu0 0
      %1789 = vmatpush.bf16.msra.mxu0 0
      %1790 = vmatpush.bf16.msra.mxu0 0
      %1791 = vmatpush.bf16.msra.mxu0 %v1782
      %1792 = vmatmul.bf16.gmra.mxu0 %v1734
      %v1793 = vpop.f32.mrf.mxu0
      %v1794 = vadd.f32 0.0, %v1793
      %v1795 = vpop.f32.mrf.mxu0
      %v1796 = vadd.f32 0.0, %v1795
      %1797 = vmatmul.bf16.gmra.mxu0 %v1737
      %v1798 = vpop.f32.mrf.mxu0
      %v1799 = vadd.f32 0.0, %v1798
      %v1800 = vpop.f32.mrf.mxu0
      %v1801 = vadd.f32 0.0, %v1800
      %1802 = vmatmul.bf16.gmra.mxu0 %v1740
      %v1803 = vpop.f32.mrf.mxu0
      %v1804 = vadd.f32 0.0, %v1803
      %v1805 = vpop.f32.mrf.mxu0
      %v1806 = vadd.f32 0.0, %v1805
      %1807 = vmatmul.bf16.gmra.mxu0 %v1743
      %v1808 = vpop.f32.mrf.mxu0
      %v1809 = vadd.f32 0.0, %v1808
      %v1810 = vpop.f32.mrf.mxu0
      %v1811 = vadd.f32 0.0, %v1810
      %1812 = vmatmul.bf16.gmra.mxu0 %v1746
      %v1813 = vpop.f32.mrf.mxu0
      %v1814 = vadd.f32 0.0, %v1813
      %v1815 = vpop.f32.mrf.mxu0
      %v1816 = vadd.f32 0.0, %v1815
      %1817 = vmatmul.bf16.gmra.mxu0 %v1749
      %v1818 = vpop.f32.mrf.mxu0
      %v1819 = vadd.f32 0.0, %v1818
      %v1820 = vpop.f32.mrf.mxu0
      %v1821 = vadd.f32 0.0, %v1820
      %1822 = vmatmul.bf16.gmra.mxu0 %v1752
      %v1823 = vpop.f32.mrf.mxu0
      %v1824 = vadd.f32 0.0, %v1823
      %v1825 = vpop.f32.mrf.mxu0
      %v1826 = vadd.f32 0.0, %v1825
      %1827 = vmatmul.bf16.gmra.mxu0 %v1755
      %v1828 = vpop.f32.mrf.mxu0
      %v1829 = vadd.f32 0.0, %v1828
      %v1830 = vpop.f32.mrf.mxu0
      %v1831 = vadd.f32 0.0, %v1830
      %1832 = vmatmul.bf16.gmra.mxu0 %v1758
      %v1833 = vpop.f32.mrf.mxu0
      %v1834 = vadd.f32 0.0, %v1833
      %v1835 = vpop.f32.mrf.mxu0
      %v1836 = vadd.f32 0.0, %v1835
      %1837 = vmatmul.bf16.gmra.mxu0 %v1761
      %v1838 = vpop.f32.mrf.mxu0
      %v1839 = vadd.f32 0.0, %v1838
      %v1840 = vpop.f32.mrf.mxu0
      %v1841 = vadd.f32 0.0, %v1840
      %1842 = vmatmul.bf16.gmra.mxu0 %v1764
      %v1843 = vpop.f32.mrf.mxu0
      %v1844 = vadd.f32 0.0, %v1843
      %v1845 = vpop.f32.mrf.mxu0
      %v1846 = vadd.f32 0.0, %v1845
      %1847 = vmatmul.bf16.gmra.mxu0 %v1767
      %v1848 = vpop.f32.mrf.mxu0
      %v1849 = vadd.f32 0.0, %v1848
      %v1850 = vpop.f32.mrf.mxu0
      %v1851 = vadd.f32 0.0, %v1850
      %1852 = vmatmul.bf16.gmra.mxu0 %v1770
      %v1853 = vpop.f32.mrf.mxu0
      %v1854 = vadd.f32 0.0, %v1853
      %v1855 = vpop.f32.mrf.mxu0
      %v1856 = vadd.f32 0.0, %v1855
      %1857 = vmatmul.bf16.gmra.mxu0 %v1773
      %v1858 = vpop.f32.mrf.mxu0
      %v1859 = vadd.f32 0.0, %v1858
      %v1860 = vpop.f32.mrf.mxu0
      %v1861 = vadd.f32 0.0, %v1860
      %1862 = vmatmul.bf16.gmra.mxu0 %v1776
      %v1863 = vpop.f32.mrf.mxu0
      %v1864 = vadd.f32 0.0, %v1863
      %v1865 = vpop.f32.mrf.mxu0
      %v1866 = vadd.f32 0.0, %v1865
      %1867 = vmatmul.bf16.gmra.mxu0 %v1779
      %v1868 = vpop.f32.mrf.mxu0
      %v1869 = vadd.f32 0.0, %v1868
      %v1870 = vpop.f32.mrf.mxu0
      %v1871 = vadd.f32 0.0, %v1870
      %1872 = vdwg.mxu0
      %v1873 = vadd.f32 %v1473, %v1794
      %v1874 = vadd.f32 %v1475, %v1796
      %v1875 = vadd.f32 %v1478, %v1799
      %v1876 = vadd.f32 %v1480, %v1801
      %v1877 = vadd.f32 %v1483, %v1804
      %v1878 = vadd.f32 %v1485, %v1806
      %v1879 = vadd.f32 %v1488, %v1809
      %v1880 = vadd.f32 %v1490, %v1811
      %v1881 = vadd.f32 %v1493, %v1814
      %v1882 = vadd.f32 %v1495, %v1816
      %v1883 = vadd.f32 %v1498, %v1819
      %v1884 = vadd.f32 %v1500, %v1821
      %v1885 = vadd.f32 %v1503, %v1824
      %v1886 = vadd.f32 %v1505, %v1826
      %v1887 = vadd.f32 %v1508, %v1829
      %v1888 = vadd.f32 %v1510, %v1831
      %v1889 = vadd.f32 %v1513, %v1834
      %v1890 = vadd.f32 %v1515, %v1836
      %v1891 = vadd.f32 %v1518, %v1839
      %v1892 = vadd.f32 %v1520, %v1841
      %v1893 = vadd.f32 %v1523, %v1844
      %v1894 = vadd.f32 %v1525, %v1846
      %v1895 = vadd.f32 %v1528, %v1849
      %v1896 = vadd.f32 %v1530, %v1851
      %v1897 = vadd.f32 %v1533, %v1854
      %v1898 = vadd.f32 %v1535, %v1856
      %v1899 = vadd.f32 %v1538, %v1859
      %v1900 = vadd.f32 %v1540, %v1861
      %v1901 = vadd.f32 %v1543, %v1864
      %v1902 = vadd.f32 %v1545, %v1866
      %v1903 = vadd.f32 %v1548, %v1869
      %v1904 = vadd.f32 %v1550, %v1871
      %s1905 = scalar_lea.vmem %s301, 12
      %v1906 = vld [vmem:[%s1905] sm:$0xf]
      %v1909 = vunpack.c.l.b16 %v746
      %v1910 = vunpack.c.l.b16 %v747
      %v1911 = vpack.c.b16 %v1910, %v1909
      %v1913 = vsel %vm1190, %v1911, 0
      %v1916 = vsel %vm1239, %v1906, 0
      %1918 = vmatpush.bf16.msra.mxu0 0
      %1919 = vmatpush.bf16.msra.mxu0 0
      %1920 = vmatpush.bf16.msra.mxu0 0
      %1921 = vmatpush.bf16.msra.mxu0 0
      %1922 = vmatpush.bf16.msra.mxu0 0
      %1923 = vmatpush.bf16.msra.mxu0 0
      %1924 = vmatpush.bf16.msra.mxu0 0
      %1925 = vmatpush.bf16.msra.mxu0 %v1916
      %1926 = vmatmul.bf16.gmra.mxu0 %v1416
      %v1927 = vpop.f32.mrf.mxu0
      %v1928 = vadd.f32 0.0, %v1927
      %v1929 = vpop.f32.mrf.mxu0
      %v1930 = vadd.f32 0.0, %v1929
      %1931 = vmatmul.bf16.gmra.mxu0 %v1419
      %v1932 = vpop.f32.mrf.mxu0
      %v1933 = vadd.f32 0.0, %v1932
      %v1934 = vpop.f32.mrf.mxu0
      %v1935 = vadd.f32 0.0, %v1934
      %1936 = vmatmul.bf16.gmra.mxu0 %v1422
      %v1937 = vpop.f32.mrf.mxu0
      %v1938 = vadd.f32 0.0, %v1937
      %v1939 = vpop.f32.mrf.mxu0
      %v1940 = vadd.f32 0.0, %v1939
      %1941 = vmatmul.bf16.gmra.mxu0 %v1425
      %v1942 = vpop.f32.mrf.mxu0
      %v1943 = vadd.f32 0.0, %v1942
      %v1944 = vpop.f32.mrf.mxu0
      %v1945 = vadd.f32 0.0, %v1944
      %1946 = vmatmul.bf16.gmra.mxu0 %v1428
      %v1947 = vpop.f32.mrf.mxu0
      %v1948 = vadd.f32 0.0, %v1947
      %v1949 = vpop.f32.mrf.mxu0
      %v1950 = vadd.f32 0.0, %v1949
      %1951 = vmatmul.bf16.gmra.mxu0 %v1431
      %v1952 = vpop.f32.mrf.mxu0
      %v1953 = vadd.f32 0.0, %v1952
      %v1954 = vpop.f32.mrf.mxu0
      %v1955 = vadd.f32 0.0, %v1954
      %1956 = vmatmul.bf16.gmra.mxu0 %v1434
      %v1957 = vpop.f32.mrf.mxu0
      %v1958 = vadd.f32 0.0, %v1957
      %v1959 = vpop.f32.mrf.mxu0
      %v1960 = vadd.f32 0.0, %v1959
      %1961 = vmatmul.bf16.gmra.mxu0 %v1437
      %v1962 = vpop.f32.mrf.mxu0
      %v1963 = vadd.f32 0.0, %v1962
      %v1964 = vpop.f32.mrf.mxu0
      %v1965 = vadd.f32 0.0, %v1964
      %1966 = vmatmul.bf16.gmra.mxu0 %v1440
      %v1967 = vpop.f32.mrf.mxu0
      %v1968 = vadd.f32 0.0, %v1967
      %v1969 = vpop.f32.mrf.mxu0
      %v1970 = vadd.f32 0.0, %v1969
      %1971 = vmatmul.bf16.gmra.mxu0 %v1443
      %v1972 = vpop.f32.mrf.mxu0
      %v1973 = vadd.f32 0.0, %v1972
      %v1974 = vpop.f32.mrf.mxu0
      %v1975 = vadd.f32 0.0, %v1974
      %1976 = vmatmul.bf16.gmra.mxu0 %v1446
      %v1977 = vpop.f32.mrf.mxu0
      %v1978 = vadd.f32 0.0, %v1977
      %v1979 = vpop.f32.mrf.mxu0
      %v1980 = vadd.f32 0.0, %v1979
      %1981 = vmatmul.bf16.gmra.mxu0 %v1449
      %v1982 = vpop.f32.mrf.mxu0
      %v1983 = vadd.f32 0.0, %v1982
      %v1984 = vpop.f32.mrf.mxu0
      %v1985 = vadd.f32 0.0, %v1984
      %1986 = vmatmul.bf16.gmra.mxu0 %v1452
      %v1987 = vpop.f32.mrf.mxu0
      %v1988 = vadd.f32 0.0, %v1987
      %v1989 = vpop.f32.mrf.mxu0
      %v1990 = vadd.f32 0.0, %v1989
      %1991 = vmatmul.bf16.gmra.mxu0 %v1455
      %v1992 = vpop.f32.mrf.mxu0
      %v1993 = vadd.f32 0.0, %v1992
      %v1994 = vpop.f32.mrf.mxu0
      %v1995 = vadd.f32 0.0, %v1994
      %1996 = vmatmul.bf16.gmra.mxu0 %v1458
      %v1997 = vpop.f32.mrf.mxu0
      %v1998 = vadd.f32 0.0, %v1997
      %v1999 = vpop.f32.mrf.mxu0
      %v2000 = vadd.f32 0.0, %v1999
      %2001 = vmatmul.bf16.gmra.mxu0 %v1913
      %v2002 = vpop.f32.mrf.mxu0
      %v2003 = vadd.f32 0.0, %v2002
      %v2004 = vpop.f32.mrf.mxu0
      %v2005 = vadd.f32 0.0, %v2004
      %2006 = vdwg.mxu0
      %v2007 = vadd.f32 %v1873, %v1928
      %v2008 = vadd.f32 %v1874, %v1930
      %v2009 = vadd.f32 %v1875, %v1933
      %v2010 = vadd.f32 %v1876, %v1935
      %v2011 = vadd.f32 %v1877, %v1938
      %v2012 = vadd.f32 %v1878, %v1940
      %v2013 = vadd.f32 %v1879, %v1943
      %v2014 = vadd.f32 %v1880, %v1945
      %v2015 = vadd.f32 %v1881, %v1948
      %v2016 = vadd.f32 %v1882, %v1950
      %v2017 = vadd.f32 %v1883, %v1953
      %v2018 = vadd.f32 %v1884, %v1955
      %v2019 = vadd.f32 %v1885, %v1958
      %v2020 = vadd.f32 %v1886, %v1960
      %v2021 = vadd.f32 %v1887, %v1963
      %v2022 = vadd.f32 %v1888, %v1965
      %v2023 = vadd.f32 %v1889, %v1968
      %v2024 = vadd.f32 %v1890, %v1970
      %v2025 = vadd.f32 %v1891, %v1973
      %v2026 = vadd.f32 %v1892, %v1975
      %v2027 = vadd.f32 %v1893, %v1978
      %v2028 = vadd.f32 %v1894, %v1980
      %v2029 = vadd.f32 %v1895, %v1983
      %v2030 = vadd.f32 %v1896, %v1985
      %v2031 = vadd.f32 %v1897, %v1988
      %v2032 = vadd.f32 %v1898, %v1990
      %v2033 = vadd.f32 %v1899, %v1993
      %v2034 = vadd.f32 %v1900, %v1995
      %v2035 = vadd.f32 %v1901, %v1998
      %v2036 = vadd.f32 %v1902, %v2000
      %v2037 = vadd.f32 %v1903, %v2003
      %v2038 = vadd.f32 %v1904, %v2005
      %v2040 = vshrl.u32 %v746, 16
      %v2042 = vrot.slane %v2040, 4
      %v2043 = vshll.u32 %v746, 16
      %v2045 = vrot.slane %v2043, 5
      %v2046 = vor.u32 %v2042, %v2045
      %v2047 = vrot.slane %v2046, 4
      %v2049 = vshll.u32 %v747, 16
      %v2051 = vrot.slane %v2049, 5
      %v2052 = vsel %vm755, %v2047, %v2051
      %v2053 = vshrl.u32 %v747, 16
      %v2055 = vrot.slane %v2053, 4
      %v2056 = vor.u32 %v2055, %v2051
      %v2057 = vrot.slane %v2056, 4
      %v2059 = vshll.u32 %v748, 16
      %v2061 = vrot.slane %v2059, 5
      %v2062 = vsel %vm755, %v2057, %v2061
      %s2063 = scalar_lea.vmem %s301, 16
      %v2064 = vld [vmem:[%s2063] sm:$0xf]
      %v2065 = vunpack.c.l.b16 %v2052
      %v2066 = vunpack.c.l.b16 %v2062
      %v2067 = vpack.c.b16 %v2066, %v2065
      %v2069 = vsel %vm1190, %v2067, 0
      %v2072 = vsel %vm1239, %v2064, 0
      %2074 = vmatpush.bf16.msra.mxu0 0
      %2075 = vmatpush.bf16.msra.mxu0 0
      %2076 = vmatpush.bf16.msra.mxu0 0
      %2077 = vmatpush.bf16.msra.mxu0 0
      %2078 = vmatpush.bf16.msra.mxu0 0
      %2079 = vmatpush.bf16.msra.mxu0 0
      %2080 = vmatpush.bf16.msra.mxu0 0
      %2081 = vmatpush.bf16.msra.mxu0 %v2072
      %2082 = vmatmul.bf16.gmra.mxu0 %v1195
      %v2083 = vpop.f32.mrf.mxu0
      %v2084 = vadd.f32 0.0, %v2083
      %v2085 = vpop.f32.mrf.mxu0
      %v2086 = vadd.f32 0.0, %v2085
      %2087 = vmatmul.bf16.gmra.mxu0 %v1198
      %v2088 = vpop.f32.mrf.mxu0
      %v2089 = vadd.f32 0.0, %v2088
      %v2090 = vpop.f32.mrf.mxu0
      %v2091 = vadd.f32 0.0, %v2090
      %2092 = vmatmul.bf16.gmra.mxu0 %v1201
      %v2093 = vpop.f32.mrf.mxu0
      %v2094 = vadd.f32 0.0, %v2093
      %v2095 = vpop.f32.mrf.mxu0
      %v2096 = vadd.f32 0.0, %v2095
      %2097 = vmatmul.bf16.gmra.mxu0 %v1204
      %v2098 = vpop.f32.mrf.mxu0
      %v2099 = vadd.f32 0.0, %v2098
      %v2100 = vpop.f32.mrf.mxu0
      %v2101 = vadd.f32 0.0, %v2100
      %2102 = vmatmul.bf16.gmra.mxu0 %v1207
      %v2103 = vpop.f32.mrf.mxu0
      %v2104 = vadd.f32 0.0, %v2103
      %v2105 = vpop.f32.mrf.mxu0
      %v2106 = vadd.f32 0.0, %v2105
      %2107 = vmatmul.bf16.gmra.mxu0 %v1210
      %v2108 = vpop.f32.mrf.mxu0
      %v2109 = vadd.f32 0.0, %v2108
      %v2110 = vpop.f32.mrf.mxu0
      %v2111 = vadd.f32 0.0, %v2110
      %2112 = vmatmul.bf16.gmra.mxu0 %v1213
      %v2113 = vpop.f32.mrf.mxu0
      %v2114 = vadd.f32 0.0, %v2113
      %v2115 = vpop.f32.mrf.mxu0
      %v2116 = vadd.f32 0.0, %v2115
      %2117 = vmatmul.bf16.gmra.mxu0 %v1216
      %v2118 = vpop.f32.mrf.mxu0
      %v2119 = vadd.f32 0.0, %v2118
      %v2120 = vpop.f32.mrf.mxu0
      %v2121 = vadd.f32 0.0, %v2120
      %2122 = vmatmul.bf16.gmra.mxu0 %v1219
      %v2123 = vpop.f32.mrf.mxu0
      %v2124 = vadd.f32 0.0, %v2123
      %v2125 = vpop.f32.mrf.mxu0
      %v2126 = vadd.f32 0.0, %v2125
      %2127 = vmatmul.bf16.gmra.mxu0 %v1222
      %v2128 = vpop.f32.mrf.mxu0
      %v2129 = vadd.f32 0.0, %v2128
      %v2130 = vpop.f32.mrf.mxu0
      %v2131 = vadd.f32 0.0, %v2130
      %2132 = vmatmul.bf16.gmra.mxu0 %v1225
      %v2133 = vpop.f32.mrf.mxu0
      %v2134 = vadd.f32 0.0, %v2133
      %v2135 = vpop.f32.mrf.mxu0
      %v2136 = vadd.f32 0.0, %v2135
      %2137 = vmatmul.bf16.gmra.mxu0 %v1228
      %v2138 = vpop.f32.mrf.mxu0
      %v2139 = vadd.f32 0.0, %v2138
      %v2140 = vpop.f32.mrf.mxu0
      %v2141 = vadd.f32 0.0, %v2140
      %2142 = vmatmul.bf16.gmra.mxu0 %v1231
      %v2143 = vpop.f32.mrf.mxu0
      %v2144 = vadd.f32 0.0, %v2143
      %v2145 = vpop.f32.mrf.mxu0
      %v2146 = vadd.f32 0.0, %v2145
      %2147 = vmatmul.bf16.gmra.mxu0 %v1234
      %v2148 = vpop.f32.mrf.mxu0
      %v2149 = vadd.f32 0.0, %v2148
      %v2150 = vpop.f32.mrf.mxu0
      %v2151 = vadd.f32 0.0, %v2150
      %2152 = vmatmul.bf16.gmra.mxu0 %v1237
      %v2153 = vpop.f32.mrf.mxu0
      %v2154 = vadd.f32 0.0, %v2153
      %v2155 = vpop.f32.mrf.mxu0
      %v2156 = vadd.f32 0.0, %v2155
      %2157 = vmatmul.bf16.gmra.mxu0 %v2069
      %v2158 = vpop.f32.mrf.mxu0
      %v2159 = vadd.f32 0.0, %v2158
      %v2160 = vpop.f32.mrf.mxu0
      %v2161 = vadd.f32 0.0, %v2160
      %2162 = vdwg.mxu0
      %v2163 = vadd.f32 %v2007, %v2084
      %v2164 = vadd.f32 %v2008, %v2086
      %v2165 = vadd.f32 %v2009, %v2089
      %v2166 = vadd.f32 %v2010, %v2091
      %v2167 = vadd.f32 %v2011, %v2094
      %v2168 = vadd.f32 %v2012, %v2096
      %v2169 = vadd.f32 %v2013, %v2099
      %v2170 = vadd.f32 %v2014, %v2101
      %v2171 = vadd.f32 %v2015, %v2104
      %v2172 = vadd.f32 %v2016, %v2106
      %v2173 = vadd.f32 %v2017, %v2109
      %v2174 = vadd.f32 %v2018, %v2111
      %v2175 = vadd.f32 %v2019, %v2114
      %v2176 = vadd.f32 %v2020, %v2116
      %v2177 = vadd.f32 %v2021, %v2119
      %v2178 = vadd.f32 %v2022, %v2121
      %v2179 = vadd.f32 %v2023, %v2124
      %v2180 = vadd.f32 %v2024, %v2126
      %v2181 = vadd.f32 %v2025, %v2129
      %v2182 = vadd.f32 %v2026, %v2131
      %v2183 = vadd.f32 %v2027, %v2134
      %v2184 = vadd.f32 %v2028, %v2136
      %v2185 = vadd.f32 %v2029, %v2139
      %v2186 = vadd.f32 %v2030, %v2141
      %v2187 = vadd.f32 %v2031, %v2144
      %v2188 = vadd.f32 %v2032, %v2146
      %v2189 = vadd.f32 %v2033, %v2149
      %v2190 = vadd.f32 %v2034, %v2151
      %v2191 = vadd.f32 %v2035, %v2154
      %v2192 = vadd.f32 %v2036, %v2156
      %v2193 = vadd.f32 %v2037, %v2159
      %v2194 = vadd.f32 %v2038, %v2161
      %v2196 = vrot.slane %v746, 5
      %v2197 = vrot.slane %v2196, 4
      %v2198 = vrot.slane %v747, 5
      %v2199 = vsel %vm1570, %v2197, %v2198
      %v2200 = vrot.slane %v2198, 4
      %v2201 = vrot.slane %v748, 5
      %v2202 = vsel %vm1570, %v2200, %v2201
      %s2203 = scalar_lea.vmem %s301, 20
      %v2204 = vld [vmem:[%s2203] sm:$0xf]
      %v2205 = vunpack.c.l.b16 %v2199
      %v2206 = vunpack.c.l.b16 %v2202
      %v2207 = vpack.c.b16 %v2206, %v2205
      %v2209 = vsel %vm1190, %v2207, 0
      %v2212 = vsel %vm1239, %v2204, 0
      %2214 = vmatpush.bf16.msra.mxu0 0
      %2215 = vmatpush.bf16.msra.mxu0 0
      %2216 = vmatpush.bf16.msra.mxu0 0
      %2217 = vmatpush.bf16.msra.mxu0 0
      %2218 = vmatpush.bf16.msra.mxu0 0
      %2219 = vmatpush.bf16.msra.mxu0 0
      %2220 = vmatpush.bf16.msra.mxu0 0
      %2221 = vmatpush.bf16.msra.mxu0 %v2212
      %2222 = vmatmul.bf16.gmra.mxu0 %v1737
      %v2223 = vpop.f32.mrf.mxu0
      %v2224 = vadd.f32 0.0, %v2223
      %v2225 = vpop.f32.mrf.mxu0
      %v2226 = vadd.f32 0.0, %v2225
      %2227 = vmatmul.bf16.gmra.mxu0 %v1740
      %v2228 = vpop.f32.mrf.mxu0
      %v2229 = vadd.f32 0.0, %v2228
      %v2230 = vpop.f32.mrf.mxu0
      %v2231 = vadd.f32 0.0, %v2230
      %2232 = vmatmul.bf16.gmra.mxu0 %v1743
      %v2233 = vpop.f32.mrf.mxu0
      %v2234 = vadd.f32 0.0, %v2233
      %v2235 = vpop.f32.mrf.mxu0
      %v2236 = vadd.f32 0.0, %v2235
      %2237 = vmatmul.bf16.gmra.mxu0 %v1746
      %v2238 = vpop.f32.mrf.mxu0
      %v2239 = vadd.f32 0.0, %v2238
      %v2240 = vpop.f32.mrf.mxu0
      %v2241 = vadd.f32 0.0, %v2240
      %2242 = vmatmul.bf16.gmra.mxu0 %v1749
      %v2243 = vpop.f32.mrf.mxu0
      %v2244 = vadd.f32 0.0, %v2243
      %v2245 = vpop.f32.mrf.mxu0
      %v2246 = vadd.f32 0.0, %v2245
      %2247 = vmatmul.bf16.gmra.mxu0 %v1752
      %v2248 = vpop.f32.mrf.mxu0
      %v2249 = vadd.f32 0.0, %v2248
      %v2250 = vpop.f32.mrf.mxu0
      %v2251 = vadd.f32 0.0, %v2250
      %2252 = vmatmul.bf16.gmra.mxu0 %v1755
      %v2253 = vpop.f32.mrf.mxu0
      %v2254 = vadd.f32 0.0, %v2253
      %v2255 = vpop.f32.mrf.mxu0
      %v2256 = vadd.f32 0.0, %v2255
      %2257 = vmatmul.bf16.gmra.mxu0 %v1758
      %v2258 = vpop.f32.mrf.mxu0
      %v2259 = vadd.f32 0.0, %v2258
      %v2260 = vpop.f32.mrf.mxu0
      %v2261 = vadd.f32 0.0, %v2260
      %2262 = vmatmul.bf16.gmra.mxu0 %v1761
      %v2263 = vpop.f32.mrf.mxu0
      %v2264 = vadd.f32 0.0, %v2263
      %v2265 = vpop.f32.mrf.mxu0
      %v2266 = vadd.f32 0.0, %v2265
      %2267 = vmatmul.bf16.gmra.mxu0 %v1764
      %v2268 = vpop.f32.mrf.mxu0
      %v2269 = vadd.f32 0.0, %v2268
      %v2270 = vpop.f32.mrf.mxu0
      %v2271 = vadd.f32 0.0, %v2270
      %2272 = vmatmul.bf16.gmra.mxu0 %v1767
      %v2273 = vpop.f32.mrf.mxu0
      %v2274 = vadd.f32 0.0, %v2273
      %v2275 = vpop.f32.mrf.mxu0
      %v2276 = vadd.f32 0.0, %v2275
      %2277 = vmatmul.bf16.gmra.mxu0 %v1770
      %v2278 = vpop.f32.mrf.mxu0
      %v2279 = vadd.f32 0.0, %v2278
      %v2280 = vpop.f32.mrf.mxu0
      %v2281 = vadd.f32 0.0, %v2280
      %2282 = vmatmul.bf16.gmra.mxu0 %v1773
      %v2283 = vpop.f32.mrf.mxu0
      %v2284 = vadd.f32 0.0, %v2283
      %v2285 = vpop.f32.mrf.mxu0
      %v2286 = vadd.f32 0.0, %v2285
      %2287 = vmatmul.bf16.gmra.mxu0 %v1776
      %v2288 = vpop.f32.mrf.mxu0
      %v2289 = vadd.f32 0.0, %v2288
      %v2290 = vpop.f32.mrf.mxu0
      %v2291 = vadd.f32 0.0, %v2290
      %2292 = vmatmul.bf16.gmra.mxu0 %v1779
      %v2293 = vpop.f32.mrf.mxu0
      %v2294 = vadd.f32 0.0, %v2293
      %v2295 = vpop.f32.mrf.mxu0
      %v2296 = vadd.f32 0.0, %v2295
      %2297 = vmatmul.bf16.gmra.mxu0 %v2209
      %v2298 = vpop.f32.mrf.mxu0
      %v2299 = vadd.f32 0.0, %v2298
      %v2300 = vpop.f32.mrf.mxu0
      %v2301 = vadd.f32 0.0, %v2300
      %2302 = vdwg.mxu0
      %v2303 = vadd.f32 %v2163, %v2224
      %v2304 = vadd.f32 %v2164, %v2226
      %v2305 = vadd.f32 %v2165, %v2229
      %v2306 = vadd.f32 %v2166, %v2231
      %v2307 = vadd.f32 %v2167, %v2234
      %v2308 = vadd.f32 %v2168, %v2236
      %v2309 = vadd.f32 %v2169, %v2239
      %v2310 = vadd.f32 %v2170, %v2241
      %v2311 = vadd.f32 %v2171, %v2244
      %v2312 = vadd.f32 %v2172, %v2246
      %v2313 = vadd.f32 %v2173, %v2249
      %v2314 = vadd.f32 %v2174, %v2251
      %v2315 = vadd.f32 %v2175, %v2254
      %v2316 = vadd.f32 %v2176, %v2256
      %v2317 = vadd.f32 %v2177, %v2259
      %v2318 = vadd.f32 %v2178, %v2261
      %v2319 = vadd.f32 %v2179, %v2264
      %v2320 = vadd.f32 %v2180, %v2266
      %v2321 = vadd.f32 %v2181, %v2269
      %v2322 = vadd.f32 %v2182, %v2271
      %v2323 = vadd.f32 %v2183, %v2274
      %v2324 = vadd.f32 %v2184, %v2276
      %v2325 = vadd.f32 %v2185, %v2279
      %v2326 = vadd.f32 %v2186, %v2281
      %v2327 = vadd.f32 %v2187, %v2284
      %v2328 = vadd.f32 %v2188, %v2286
      %v2329 = vadd.f32 %v2189, %v2289
      %v2330 = vadd.f32 %v2190, %v2291
      %v2331 = vadd.f32 %v2191, %v2294
      %v2332 = vadd.f32 %v2192, %v2296
      %v2333 = vadd.f32 %v2193, %v2299
      %v2334 = vadd.f32 %v2194, %v2301
      %s2335 = scalar_lea.vmem %s301, 24
      %v2336 = vld [vmem:[%s2335] sm:$0xf]
      %v2339 = vunpack.c.l.b16 %v749
      %v2340 = vunpack.c.l.b16 %v750
      %v2341 = vpack.c.b16 %v2340, %v2339
      %v2343 = vsel %vm1190, %v2341, 0
      %v2346 = vsel %vm1239, %v2336, 0
      %2348 = vmatpush.bf16.msra.mxu0 0
      %2349 = vmatpush.bf16.msra.mxu0 0
      %2350 = vmatpush.bf16.msra.mxu0 0
      %2351 = vmatpush.bf16.msra.mxu0 0
      %2352 = vmatpush.bf16.msra.mxu0 0
      %2353 = vmatpush.bf16.msra.mxu0 0
      %2354 = vmatpush.bf16.msra.mxu0 0
      %2355 = vmatpush.bf16.msra.mxu0 %v2346
      %2356 = vmatmul.bf16.gmra.mxu0 %v1419
      %v2357 = vpop.f32.mrf.mxu0
      %v2358 = vadd.f32 0.0, %v2357
      %v2359 = vpop.f32.mrf.mxu0
      %v2360 = vadd.f32 0.0, %v2359
      %2361 = vmatmul.bf16.gmra.mxu0 %v1422
      %v2362 = vpop.f32.mrf.mxu0
      %v2363 = vadd.f32 0.0, %v2362
      %v2364 = vpop.f32.mrf.mxu0
      %v2365 = vadd.f32 0.0, %v2364
      %2366 = vmatmul.bf16.gmra.mxu0 %v1425
      %v2367 = vpop.f32.mrf.mxu0
      %v2368 = vadd.f32 0.0, %v2367
      %v2369 = vpop.f32.mrf.mxu0
      %v2370 = vadd.f32 0.0, %v2369
      %2371 = vmatmul.bf16.gmra.mxu0 %v1428
      %v2372 = vpop.f32.mrf.mxu0
      %v2373 = vadd.f32 0.0, %v2372
      %v2374 = vpop.f32.mrf.mxu0
      %v2375 = vadd.f32 0.0, %v2374
      %2376 = vmatmul.bf16.gmra.mxu0 %v1431
      %v2377 = vpop.f32.mrf.mxu0
      %v2378 = vadd.f32 0.0, %v2377
      %v2379 = vpop.f32.mrf.mxu0
      %v2380 = vadd.f32 0.0, %v2379
      %2381 = vmatmul.bf16.gmra.mxu0 %v1434
      %v2382 = vpop.f32.mrf.mxu0
      %v2383 = vadd.f32 0.0, %v2382
      %v2384 = vpop.f32.mrf.mxu0
      %v2385 = vadd.f32 0.0, %v2384
      %2386 = vmatmul.bf16.gmra.mxu0 %v1437
      %v2387 = vpop.f32.mrf.mxu0
      %v2388 = vadd.f32 0.0, %v2387
      %v2389 = vpop.f32.mrf.mxu0
      %v2390 = vadd.f32 0.0, %v2389
      %2391 = vmatmul.bf16.gmra.mxu0 %v1440
      %v2392 = vpop.f32.mrf.mxu0
      %v2393 = vadd.f32 0.0, %v2392
      %v2394 = vpop.f32.mrf.mxu0
      %v2395 = vadd.f32 0.0, %v2394
      %2396 = vmatmul.bf16.gmra.mxu0 %v1443
      %v2397 = vpop.f32.mrf.mxu0
      %v2398 = vadd.f32 0.0, %v2397
      %v2399 = vpop.f32.mrf.mxu0
      %v2400 = vadd.f32 0.0, %v2399
      %2401 = vmatmul.bf16.gmra.mxu0 %v1446
      %v2402 = vpop.f32.mrf.mxu0
      %v2403 = vadd.f32 0.0, %v2402
      %v2404 = vpop.f32.mrf.mxu0
      %v2405 = vadd.f32 0.0, %v2404
      %2406 = vmatmul.bf16.gmra.mxu0 %v1449
      %v2407 = vpop.f32.mrf.mxu0
      %v2408 = vadd.f32 0.0, %v2407
      %v2409 = vpop.f32.mrf.mxu0
      %v2410 = vadd.f32 0.0, %v2409
      %2411 = vmatmul.bf16.gmra.mxu0 %v1452
      %v2412 = vpop.f32.mrf.mxu0
      %v2413 = vadd.f32 0.0, %v2412
      %v2414 = vpop.f32.mrf.mxu0
      %v2415 = vadd.f32 0.0, %v2414
      %2416 = vmatmul.bf16.gmra.mxu0 %v1455
      %v2417 = vpop.f32.mrf.mxu0
      %v2418 = vadd.f32 0.0, %v2417
      %v2419 = vpop.f32.mrf.mxu0
      %v2420 = vadd.f32 0.0, %v2419
      %2421 = vmatmul.bf16.gmra.mxu0 %v1458
      %v2422 = vpop.f32.mrf.mxu0
      %v2423 = vadd.f32 0.0, %v2422
      %v2424 = vpop.f32.mrf.mxu0
      %v2425 = vadd.f32 0.0, %v2424
      %2426 = vmatmul.bf16.gmra.mxu0 %v1913
      %v2427 = vpop.f32.mrf.mxu0
      %v2428 = vadd.f32 0.0, %v2427
      %v2429 = vpop.f32.mrf.mxu0
      %v2430 = vadd.f32 0.0, %v2429
      %2431 = vmatmul.bf16.gmra.mxu0 %v2343
      %v2432 = vpop.f32.mrf.mxu0
      %v2433 = vadd.f32 0.0, %v2432
      %v2434 = vpop.f32.mrf.mxu0
      %v2435 = vadd.f32 0.0, %v2434
      %2436 = vdwg.mxu0
      %v2437 = vadd.f32 %v2303, %v2358
      %v2438 = vadd.f32 %v2304, %v2360
      %v2439 = vadd.f32 %v2305, %v2363
      %v2440 = vadd.f32 %v2306, %v2365
      %v2441 = vadd.f32 %v2307, %v2368
      %v2442 = vadd.f32 %v2308, %v2370
      %v2443 = vadd.f32 %v2309, %v2373
      %v2444 = vadd.f32 %v2310, %v2375
      %v2445 = vadd.f32 %v2311, %v2378
      %v2446 = vadd.f32 %v2312, %v2380
      %v2447 = vadd.f32 %v2313, %v2383
      %v2448 = vadd.f32 %v2314, %v2385
      %v2449 = vadd.f32 %v2315, %v2388
      %v2450 = vadd.f32 %v2316, %v2390
      %v2451 = vadd.f32 %v2317, %v2393
      %v2452 = vadd.f32 %v2318, %v2395
      %v2453 = vadd.f32 %v2319, %v2398
      %v2454 = vadd.f32 %v2320, %v2400
      %v2455 = vadd.f32 %v2321, %v2403
      %v2456 = vadd.f32 %v2322, %v2405
      %v2457 = vadd.f32 %v2323, %v2408
      %v2458 = vadd.f32 %v2324, %v2410
      %v2459 = vadd.f32 %v2325, %v2413
      %v2460 = vadd.f32 %v2326, %v2415
      %v2461 = vadd.f32 %v2327, %v2418
      %v2462 = vadd.f32 %v2328, %v2420
      %v2463 = vadd.f32 %v2329, %v2423
      %v2464 = vadd.f32 %v2330, %v2425
      %v2465 = vadd.f32 %v2331, %v2428
      %v2466 = vadd.f32 %v2332, %v2430
      %v2467 = vadd.f32 %v2333, %v2433
      %v2468 = vadd.f32 %v2334, %v2435
      %v2470 = vshrl.u32 %v749, 16
      %v2472 = vrot.slane %v2470, 4
      %v2473 = vshll.u32 %v749, 16
      %v2475 = vrot.slane %v2473, 5
      %v2476 = vor.u32 %v2472, %v2475
      %v2477 = vrot.slane %v2476, 4
      %v2479 = vshll.u32 %v750, 16
      %v2481 = vrot.slane %v2479, 5
      %v2482 = vsel %vm755, %v2477, %v2481
      %v2483 = vshrl.u32 %v750, 16
      %v2485 = vrot.slane %v2483, 4
      %v2486 = vor.u32 %v2485, %v2481
      %v2487 = vrot.slane %v2486, 4
      %v2489 = vshll.u32 %v751, 16
      %v2491 = vrot.slane %v2489, 5
      %v2492 = vsel %vm755, %v2487, %v2491
      %s2493 = scalar_lea.vmem %s301, 28
      %v2494 = vld [vmem:[%s2493] sm:$0xf]
      %v2495 = vunpack.c.l.b16 %v2482
      %v2496 = vunpack.c.l.b16 %v2492
      %v2497 = vpack.c.b16 %v2496, %v2495
      %v2499 = vsel %vm1190, %v2497, 0
      %v2502 = vsel %vm1239, %v2494, 0
      %2504 = vmatpush.bf16.msra.mxu0 0
      %2505 = vmatpush.bf16.msra.mxu0 0
      %2506 = vmatpush.bf16.msra.mxu0 0
      %2507 = vmatpush.bf16.msra.mxu0 0
      %2508 = vmatpush.bf16.msra.mxu0 0
      %2509 = vmatpush.bf16.msra.mxu0 0
      %2510 = vmatpush.bf16.msra.mxu0 0
      %2511 = vmatpush.bf16.msra.mxu0 %v2502
      %2512 = vmatmul.bf16.gmra.mxu0 %v1198
      %v2513 = vpop.f32.mrf.mxu0
      %v2514 = vadd.f32 0.0, %v2513
      %v2515 = vpop.f32.mrf.mxu0
      %v2516 = vadd.f32 0.0, %v2515
      %2517 = vmatmul.bf16.gmra.mxu0 %v1201
      %v2518 = vpop.f32.mrf.mxu0
      %v2519 = vadd.f32 0.0, %v2518
      %v2520 = vpop.f32.mrf.mxu0
      %v2521 = vadd.f32 0.0, %v2520
      %2522 = vmatmul.bf16.gmra.mxu0 %v1204
      %v2523 = vpop.f32.mrf.mxu0
      %v2524 = vadd.f32 0.0, %v2523
      %v2525 = vpop.f32.mrf.mxu0
      %v2526 = vadd.f32 0.0, %v2525
      %2527 = vmatmul.bf16.gmra.mxu0 %v1207
      %v2528 = vpop.f32.mrf.mxu0
      %v2529 = vadd.f32 0.0, %v2528
      %v2530 = vpop.f32.mrf.mxu0
      %v2531 = vadd.f32 0.0, %v2530
      %2532 = vmatmul.bf16.gmra.mxu0 %v1210
      %v2533 = vpop.f32.mrf.mxu0
      %v2534 = vadd.f32 0.0, %v2533
      %v2535 = vpop.f32.mrf.mxu0
      %v2536 = vadd.f32 0.0, %v2535
      %2537 = vmatmul.bf16.gmra.mxu0 %v1213
      %v2538 = vpop.f32.mrf.mxu0
      %v2539 = vadd.f32 0.0, %v2538
      %v2540 = vpop.f32.mrf.mxu0
      %v2541 = vadd.f32 0.0, %v2540
      %2542 = vmatmul.bf16.gmra.mxu0 %v1216
      %v2543 = vpop.f32.mrf.mxu0
      %v2544 = vadd.f32 0.0, %v2543
      %v2545 = vpop.f32.mrf.mxu0
      %v2546 = vadd.f32 0.0, %v2545
      %2547 = vmatmul.bf16.gmra.mxu0 %v1219
      %v2548 = vpop.f32.mrf.mxu0
      %v2549 = vadd.f32 0.0, %v2548
      %v2550 = vpop.f32.mrf.mxu0
      %v2551 = vadd.f32 0.0, %v2550
      %2552 = vmatmul.bf16.gmra.mxu0 %v1222
      %v2553 = vpop.f32.mrf.mxu0
      %v2554 = vadd.f32 0.0, %v2553
      %v2555 = vpop.f32.mrf.mxu0
      %v2556 = vadd.f32 0.0, %v2555
      %2557 = vmatmul.bf16.gmra.mxu0 %v1225
      %v2558 = vpop.f32.mrf.mxu0
      %v2559 = vadd.f32 0.0, %v2558
      %v2560 = vpop.f32.mrf.mxu0
      %v2561 = vadd.f32 0.0, %v2560
      %2562 = vmatmul.bf16.gmra.mxu0 %v1228
      %v2563 = vpop.f32.mrf.mxu0
      %v2564 = vadd.f32 0.0, %v2563
      %v2565 = vpop.f32.mrf.mxu0
      %v2566 = vadd.f32 0.0, %v2565
      %2567 = vmatmul.bf16.gmra.mxu0 %v1231
      %v2568 = vpop.f32.mrf.mxu0
      %v2569 = vadd.f32 0.0, %v2568
      %v2570 = vpop.f32.mrf.mxu0
      %v2571 = vadd.f32 0.0, %v2570
      %2572 = vmatmul.bf16.gmra.mxu0 %v1234
      %v2573 = vpop.f32.mrf.mxu0
      %v2574 = vadd.f32 0.0, %v2573
      %v2575 = vpop.f32.mrf.mxu0
      %v2576 = vadd.f32 0.0, %v2575
      %2577 = vmatmul.bf16.gmra.mxu0 %v1237
      %v2578 = vpop.f32.mrf.mxu0
      %v2579 = vadd.f32 0.0, %v2578
      %v2580 = vpop.f32.mrf.mxu0
      %v2581 = vadd.f32 0.0, %v2580
      %2582 = vmatmul.bf16.gmra.mxu0 %v2069
      %v2583 = vpop.f32.mrf.mxu0
      %v2584 = vadd.f32 0.0, %v2583
      %v2585 = vpop.f32.mrf.mxu0
      %v2586 = vadd.f32 0.0, %v2585
      %2587 = vmatmul.bf16.gmra.mxu0 %v2499
      %v2588 = vpop.f32.mrf.mxu0
      %v2589 = vadd.f32 0.0, %v2588
      %v2590 = vpop.f32.mrf.mxu0
      %v2591 = vadd.f32 0.0, %v2590
      %2592 = vdwg.mxu0
      %v2593 = vadd.f32 %v2437, %v2514
      %v2594 = vadd.f32 %v2438, %v2516
      %v2595 = vadd.f32 %v2439, %v2519
      %v2596 = vadd.f32 %v2440, %v2521
      %v2597 = vadd.f32 %v2441, %v2524
      %v2598 = vadd.f32 %v2442, %v2526
      %v2599 = vadd.f32 %v2443, %v2529
      %v2600 = vadd.f32 %v2444, %v2531
      %v2601 = vadd.f32 %v2445, %v2534
      %v2602 = vadd.f32 %v2446, %v2536
      %v2603 = vadd.f32 %v2447, %v2539
      %v2604 = vadd.f32 %v2448, %v2541
      %v2605 = vadd.f32 %v2449, %v2544
      %v2606 = vadd.f32 %v2450, %v2546
      %v2607 = vadd.f32 %v2451, %v2549
      %v2608 = vadd.f32 %v2452, %v2551
      %v2609 = vadd.f32 %v2453, %v2554
      %v2610 = vadd.f32 %v2454, %v2556
      %v2611 = vadd.f32 %v2455, %v2559
      %v2612 = vadd.f32 %v2456, %v2561
      %v2613 = vadd.f32 %v2457, %v2564
      %v2614 = vadd.f32 %v2458, %v2566
      %v2615 = vadd.f32 %v2459, %v2569
      %v2616 = vadd.f32 %v2460, %v2571
      %v2617 = vadd.f32 %v2461, %v2574
      %v2618 = vadd.f32 %v2462, %v2576
      %v2619 = vadd.f32 %v2463, %v2579
      %v2620 = vadd.f32 %v2464, %v2581
      %v2621 = vadd.f32 %v2465, %v2584
      %v2622 = vadd.f32 %v2466, %v2586
      %v2623 = vadd.f32 %v2467, %v2589
      %v2624 = vadd.f32 %v2468, %v2591
      %v2626 = vrot.slane %v749, 5
      %v2627 = vrot.slane %v2626, 4
      %v2628 = vrot.slane %v750, 5
      %v2629 = vsel %vm1570, %v2627, %v2628
      %v2630 = vrot.slane %v2628, 4
      %v2631 = vrot.slane %v751, 5
      %v2632 = vsel %vm1570, %v2630, %v2631
      %s2633 = scalar_lea.vmem %s301, 32
      %v2634 = vld [vmem:[%s2633] sm:$0xf]
      %v2635 = vunpack.c.l.b16 %v2629
      %v2636 = vunpack.c.l.b16 %v2632
      %v2637 = vpack.c.b16 %v2636, %v2635
      %v2639 = vsel %vm1190, %v2637, 0
      %v2642 = vsel %vm1239, %v2634, 0
      %2644 = vmatpush.bf16.msra.mxu0 0
      %2645 = vmatpush.bf16.msra.mxu0 0
      %2646 = vmatpush.bf16.msra.mxu0 0
      %2647 = vmatpush.bf16.msra.mxu0 0
      %2648 = vmatpush.bf16.msra.mxu0 0
      %2649 = vmatpush.bf16.msra.mxu0 0
      %2650 = vmatpush.bf16.msra.mxu0 0
      %2651 = vmatpush.bf16.msra.mxu0 %v2642
      %2652 = vmatmul.bf16.gmra.mxu0 %v1740
      %v2653 = vpop.f32.mrf.mxu0
      %v2654 = vadd.f32 0.0, %v2653
      %v2655 = vpop.f32.mrf.mxu0
      %v2656 = vadd.f32 0.0, %v2655
      %2657 = vmatmul.bf16.gmra.mxu0 %v1743
      %v2658 = vpop.f32.mrf.mxu0
      %v2659 = vadd.f32 0.0, %v2658
      %v2660 = vpop.f32.mrf.mxu0
      %v2661 = vadd.f32 0.0, %v2660
      %2662 = vmatmul.bf16.gmra.mxu0 %v1746
      %v2663 = vpop.f32.mrf.mxu0
      %v2664 = vadd.f32 0.0, %v2663
      %v2665 = vpop.f32.mrf.mxu0
      %v2666 = vadd.f32 0.0, %v2665
      %2667 = vmatmul.bf16.gmra.mxu0 %v1749
      %v2668 = vpop.f32.mrf.mxu0
      %v2669 = vadd.f32 0.0, %v2668
      %v2670 = vpop.f32.mrf.mxu0
      %v2671 = vadd.f32 0.0, %v2670
      %2672 = vmatmul.bf16.gmra.mxu0 %v1752
      %v2673 = vpop.f32.mrf.mxu0
      %v2674 = vadd.f32 0.0, %v2673
      %v2675 = vpop.f32.mrf.mxu0
      %v2676 = vadd.f32 0.0, %v2675
      %2677 = vmatmul.bf16.gmra.mxu0 %v1755
      %v2678 = vpop.f32.mrf.mxu0
      %v2679 = vadd.f32 0.0, %v2678
      %v2680 = vpop.f32.mrf.mxu0
      %v2681 = vadd.f32 0.0, %v2680
      %2682 = vmatmul.bf16.gmra.mxu0 %v1758
      %v2683 = vpop.f32.mrf.mxu0
      %v2684 = vadd.f32 0.0, %v2683
      %v2685 = vpop.f32.mrf.mxu0
      %v2686 = vadd.f32 0.0, %v2685
      %2687 = vmatmul.bf16.gmra.mxu0 %v1761
      %v2688 = vpop.f32.mrf.mxu0
      %v2689 = vadd.f32 0.0, %v2688
      %v2690 = vpop.f32.mrf.mxu0
      %v2691 = vadd.f32 0.0, %v2690
      %2692 = vmatmul.bf16.gmra.mxu0 %v1764
      %v2693 = vpop.f32.mrf.mxu0
      %v2694 = vadd.f32 0.0, %v2693
      %v2695 = vpop.f32.mrf.mxu0
      %v2696 = vadd.f32 0.0, %v2695
      %2697 = vmatmul.bf16.gmra.mxu0 %v1767
      %v2698 = vpop.f32.mrf.mxu0
      %v2699 = vadd.f32 0.0, %v2698
      %v2700 = vpop.f32.mrf.mxu0
      %v2701 = vadd.f32 0.0, %v2700
      %2702 = vmatmul.bf16.gmra.mxu0 %v1770
      %v2703 = vpop.f32.mrf.mxu0
      %v2704 = vadd.f32 0.0, %v2703
      %v2705 = vpop.f32.mrf.mxu0
      %v2706 = vadd.f32 0.0, %v2705
      %2707 = vmatmul.bf16.gmra.mxu0 %v1773
      %v2708 = vpop.f32.mrf.mxu0
      %v2709 = vadd.f32 0.0, %v2708
      %v2710 = vpop.f32.mrf.mxu0
      %v2711 = vadd.f32 0.0, %v2710
      %2712 = vmatmul.bf16.gmra.mxu0 %v1776
      %v2713 = vpop.f32.mrf.mxu0
      %v2714 = vadd.f32 0.0, %v2713
      %v2715 = vpop.f32.mrf.mxu0
      %v2716 = vadd.f32 0.0, %v2715
      %2717 = vmatmul.bf16.gmra.mxu0 %v1779
      %v2718 = vpop.f32.mrf.mxu0
      %v2719 = vadd.f32 0.0, %v2718
      %v2720 = vpop.f32.mrf.mxu0
      %v2721 = vadd.f32 0.0, %v2720
      %2722 = vmatmul.bf16.gmra.mxu0 %v2209
      %v2723 = vpop.f32.mrf.mxu0
      %v2724 = vadd.f32 0.0, %v2723
      %v2725 = vpop.f32.mrf.mxu0
      %v2726 = vadd.f32 0.0, %v2725
      %2727 = vmatmul.bf16.gmra.mxu0 %v2639
      %v2728 = vpop.f32.mrf.mxu0
      %v2729 = vadd.f32 0.0, %v2728
      %v2730 = vpop.f32.mrf.mxu0
      %v2731 = vadd.f32 0.0, %v2730
      %2732 = vdwg.mxu0
      %v2733 = vadd.f32 %v2593, %v2654
      %v2734 = vadd.f32 %v2594, %v2656
      %v2735 = vadd.f32 %v2595, %v2659
      %v2736 = vadd.f32 %v2596, %v2661
      %v2737 = vadd.f32 %v2597, %v2664
      %v2738 = vadd.f32 %v2598, %v2666
      %v2739 = vadd.f32 %v2599, %v2669
      %v2740 = vadd.f32 %v2600, %v2671
      %v2741 = vadd.f32 %v2601, %v2674
      %v2742 = vadd.f32 %v2602, %v2676
      %v2743 = vadd.f32 %v2603, %v2679
      %v2744 = vadd.f32 %v2604, %v2681
      %v2745 = vadd.f32 %v2605, %v2684
      %v2746 = vadd.f32 %v2606, %v2686
      %v2747 = vadd.f32 %v2607, %v2689
      %v2748 = vadd.f32 %v2608, %v2691
      %v2749 = vadd.f32 %v2609, %v2694
      %v2750 = vadd.f32 %v2610, %v2696
      %v2751 = vadd.f32 %v2611, %v2699
      %v2752 = vadd.f32 %v2612, %v2701
      %v2753 = vadd.f32 %v2613, %v2704
      %v2754 = vadd.f32 %v2614, %v2706
      %v2755 = vadd.f32 %v2615, %v2709
      %v2756 = vadd.f32 %v2616, %v2711
      %v2757 = vadd.f32 %v2617, %v2714
      %v2758 = vadd.f32 %v2618, %v2716
      %v2759 = vadd.f32 %v2619, %v2719
      %v2760 = vadd.f32 %v2620, %v2721
      %v2761 = vadd.f32 %v2621, %v2724
      %v2762 = vadd.f32 %v2622, %v2726
      %v2763 = vadd.f32 %v2623, %v2729
      %v2764 = vadd.f32 %v2624, %v2731
      %v2765 = vsel %vm1190, %v2733, 0.0
      %v2766 = vsel %vm1190, %v2734, 0.0
      %v2767 = vadd.f32 %v2765, %v2766
      %v2768 = vsel %vm1190, %v2735, 0.0
      %v2769 = vadd.f32 %v2767, %v2768
      %v2770 = vsel %vm1190, %v2736, 0.0
      %v2771 = vadd.f32 %v2769, %v2770
      %v2772 = vsel %vm1190, %v2737, 0.0
      %v2773 = vadd.f32 %v2771, %v2772
      %v2774 = vsel %vm1190, %v2738, 0.0
      %v2775 = vadd.f32 %v2773, %v2774
      %v2776 = vsel %vm1190, %v2739, 0.0
      %v2777 = vadd.f32 %v2775, %v2776
      %v2778 = vsel %vm1190, %v2740, 0.0
      %v2779 = vadd.f32 %v2777, %v2778
      %v2780 = vsel %vm1190, %v2741, 0.0
      %v2781 = vadd.f32 %v2779, %v2780
      %v2782 = vsel %vm1190, %v2742, 0.0
      %v2783 = vadd.f32 %v2781, %v2782
      %v2784 = vsel %vm1190, %v2743, 0.0
      %v2785 = vadd.f32 %v2783, %v2784
      %v2786 = vsel %vm1190, %v2744, 0.0
      %v2787 = vadd.f32 %v2785, %v2786
      %v2788 = vsel %vm1190, %v2745, 0.0
      %v2789 = vadd.f32 %v2787, %v2788
      %v2790 = vsel %vm1190, %v2746, 0.0
      %v2791 = vadd.f32 %v2789, %v2790
      %v2792 = vsel %vm1190, %v2747, 0.0
      %v2793 = vadd.f32 %v2791, %v2792
      %v2794 = vsel %vm1190, %v2748, 0.0
      %v2795 = vadd.f32 %v2793, %v2794
      %v2796 = vsel %vm1190, %v2749, 0.0
      %v2797 = vadd.f32 %v2795, %v2796
      %v2798 = vsel %vm1190, %v2750, 0.0
      %v2799 = vadd.f32 %v2797, %v2798
      %v2800 = vsel %vm1190, %v2751, 0.0
      %v2801 = vadd.f32 %v2799, %v2800
      %v2802 = vsel %vm1190, %v2752, 0.0
      %v2803 = vadd.f32 %v2801, %v2802
      %v2804 = vsel %vm1190, %v2753, 0.0
      %v2805 = vadd.f32 %v2803, %v2804
      %v2806 = vsel %vm1190, %v2754, 0.0
      %v2807 = vadd.f32 %v2805, %v2806
      %v2808 = vsel %vm1190, %v2755, 0.0
      %v2809 = vadd.f32 %v2807, %v2808
      %v2810 = vsel %vm1190, %v2756, 0.0
      %v2811 = vadd.f32 %v2809, %v2810
      %v2812 = vsel %vm1190, %v2757, 0.0
      %v2813 = vadd.f32 %v2811, %v2812
      %v2814 = vsel %vm1190, %v2758, 0.0
      %v2815 = vadd.f32 %v2813, %v2814
      %v2816 = vsel %vm1190, %v2759, 0.0
      %v2817 = vadd.f32 %v2815, %v2816
      %v2818 = vsel %vm1190, %v2760, 0.0
      %v2819 = vadd.f32 %v2817, %v2818
      %v2820 = vsel %vm1190, %v2761, 0.0
      %v2821 = vadd.f32 %v2819, %v2820
      %v2822 = vsel %vm1190, %v2762, 0.0
      %v2823 = vadd.f32 %v2821, %v2822
      %v2824 = vsel %vm1190, %v2763, 0.0
      %v2825 = vadd.f32 %v2823, %v2824
      %v2826 = vsel %vm1190, %v2764, 0.0
      %v2827 = vadd.f32 %v2825, %v2826
      %v2828 = vrot.slane %v2827, 4
      %v2829 = vadd.f32 %v2827, %v2828
      %v2830 = vrot.slane %v2829, 2
      %v2831 = vadd.f32 %v2829, %v2830
      %v2832 = vrot.slane %v2831, 1
      %v2833 = vadd.f32 %v2831, %v2832
      %v2834 = vadd.f32 %v2833, 0.0
      %v2835 = vmul.f32 %v2733, %v2733
      %v2836 = vmul.f32 %v2734, %v2734
      %v2837 = vmul.f32 %v2735, %v2735
      %v2838 = vmul.f32 %v2736, %v2736
      %v2839 = vmul.f32 %v2737, %v2737
      %v2840 = vmul.f32 %v2738, %v2738
      %v2841 = vmul.f32 %v2739, %v2739
      %v2842 = vmul.f32 %v2740, %v2740
      %v2843 = vmul.f32 %v2741, %v2741
      %v2844 = vmul.f32 %v2742, %v2742
      %v2845 = vmul.f32 %v2743, %v2743
      %v2846 = vmul.f32 %v2744, %v2744
      %v2847 = vmul.f32 %v2745, %v2745
      %v2848 = vmul.f32 %v2746, %v2746
      %v2849 = vmul.f32 %v2747, %v2747
      %v2850 = vmul.f32 %v2748, %v2748
      %v2851 = vmul.f32 %v2749, %v2749
      %v2852 = vmul.f32 %v2750, %v2750
      %v2853 = vmul.f32 %v2751, %v2751
      %v2854 = vmul.f32 %v2752, %v2752
      %v2855 = vmul.f32 %v2753, %v2753
      %v2856 = vmul.f32 %v2754, %v2754
      %v2857 = vmul.f32 %v2755, %v2755
      %v2858 = vmul.f32 %v2756, %v2756
      %v2859 = vmul.f32 %v2757, %v2757
      %v2860 = vmul.f32 %v2758, %v2758
      %v2861 = vmul.f32 %v2759, %v2759
      %v2862 = vmul.f32 %v2760, %v2760
      %v2863 = vmul.f32 %v2761, %v2761
      %v2864 = vmul.f32 %v2762, %v2762
      %v2865 = vmul.f32 %v2763, %v2763
      %v2866 = vmul.f32 %v2764, %v2764
      %v2867 = vsel %vm1190, %v2835, 0.0
      %v2868 = vsel %vm1190, %v2836, 0.0
      %v2869 = vadd.f32 %v2867, %v2868
      %v2870 = vsel %vm1190, %v2837, 0.0
      %v2871 = vadd.f32 %v2869, %v2870
      %v2872 = vsel %vm1190, %v2838, 0.0
      %v2873 = vadd.f32 %v2871, %v2872
      %v2874 = vsel %vm1190, %v2839, 0.0
      %v2875 = vadd.f32 %v2873, %v2874
      %v2876 = vsel %vm1190, %v2840, 0.0
      %v2877 = vadd.f32 %v2875, %v2876
      %v2878 = vsel %vm1190, %v2841, 0.0
      %v2879 = vadd.f32 %v2877, %v2878
      %v2880 = vsel %vm1190, %v2842, 0.0
      %v2881 = vadd.f32 %v2879, %v2880
      %v2882 = vsel %vm1190, %v2843, 0.0
      %v2883 = vadd.f32 %v2881, %v2882
      %v2884 = vsel %vm1190, %v2844, 0.0
      %v2885 = vadd.f32 %v2883, %v2884
      %v2886 = vsel %vm1190, %v2845, 0.0
      %v2887 = vadd.f32 %v2885, %v2886
      %v2888 = vsel %vm1190, %v2846, 0.0
      %v2889 = vadd.f32 %v2887, %v2888
      %v2890 = vsel %vm1190, %v2847, 0.0
      %v2891 = vadd.f32 %v2889, %v2890
      %v2892 = vsel %vm1190, %v2848, 0.0
      %v2893 = vadd.f32 %v2891, %v2892
      %v2894 = vsel %vm1190, %v2849, 0.0
      %v2895 = vadd.f32 %v2893, %v2894
      %v2896 = vsel %vm1190, %v2850, 0.0
      %v2897 = vadd.f32 %v2895, %v2896
      %v2898 = vsel %vm1190, %v2851, 0.0
      %v2899 = vadd.f32 %v2897, %v2898
      %v2900 = vsel %vm1190, %v2852, 0.0
      %v2901 = vadd.f32 %v2899, %v2900
      %v2902 = vsel %vm1190, %v2853, 0.0
      %v2903 = vadd.f32 %v2901, %v2902
      %v2904 = vsel %vm1190, %v2854, 0.0
      %v2905 = vadd.f32 %v2903, %v2904
      %v2906 = vsel %vm1190, %v2855, 0.0
      %v2907 = vadd.f32 %v2905, %v2906
      %v2908 = vsel %vm1190, %v2856, 0.0
      %v2909 = vadd.f32 %v2907, %v2908
      %v2910 = vsel %vm1190, %v2857, 0.0
      %v2911 = vadd.f32 %v2909, %v2910
      %v2912 = vsel %vm1190, %v2858, 0.0
      %v2913 = vadd.f32 %v2911, %v2912
      %v2914 = vsel %vm1190, %v2859, 0.0
      %v2915 = vadd.f32 %v2913, %v2914
      %v2916 = vsel %vm1190, %v2860, 0.0
      %v2917 = vadd.f32 %v2915, %v2916
      %v2918 = vsel %vm1190, %v2861, 0.0
      %v2919 = vadd.f32 %v2917, %v2918
      %v2920 = vsel %vm1190, %v2862, 0.0
      %v2921 = vadd.f32 %v2919, %v2920
      %v2922 = vsel %vm1190, %v2863, 0.0
      %v2923 = vadd.f32 %v2921, %v2922
      %v2924 = vsel %vm1190, %v2864, 0.0
      %v2925 = vadd.f32 %v2923, %v2924
      %v2926 = vsel %vm1190, %v2865, 0.0
      %v2927 = vadd.f32 %v2925, %v2926
      %v2928 = vsel %vm1190, %v2866, 0.0
      %v2929 = vadd.f32 %v2927, %v2928
      %v2930 = vrot.slane %v2929, 4
      %v2931 = vadd.f32 %v2929, %v2930
      %v2932 = vrot.slane %v2931, 2
      %v2933 = vadd.f32 %v2931, %v2932
      %v2934 = vrot.slane %v2933, 1
      %v2935 = vadd.f32 %v2933, %v2934
      %v2936 = vadd.f32 %v2935, 0.0
      %v2937 = vpack.c.bf16 %v2733, %v2733
      %v2938 = vpack.c.bf16 %v2734, %v2734
      %v2939 = vpack.c.bf16 %v2735, %v2735
      %v2940 = vpack.c.bf16 %v2736, %v2736
      %v2941 = vpack.c.bf16 %v2737, %v2737
      %v2942 = vpack.c.bf16 %v2738, %v2738
      %v2943 = vpack.c.bf16 %v2739, %v2739
      %v2944 = vpack.c.bf16 %v2740, %v2740
      %v2945 = vpack.c.bf16 %v2741, %v2741
      %v2946 = vpack.c.bf16 %v2742, %v2742
      %v2947 = vpack.c.bf16 %v2743, %v2743
      %v2948 = vpack.c.bf16 %v2744, %v2744
      %v2949 = vpack.c.bf16 %v2745, %v2745
      %v2950 = vpack.c.bf16 %v2746, %v2746
      %v2951 = vpack.c.bf16 %v2747, %v2747
      %v2952 = vpack.c.bf16 %v2748, %v2748
      %v2953 = vpack.c.bf16 %v2749, %v2749
      %v2954 = vpack.c.bf16 %v2750, %v2750
      %v2955 = vpack.c.bf16 %v2751, %v2751
      %v2956 = vpack.c.bf16 %v2752, %v2752
      %v2957 = vpack.c.bf16 %v2753, %v2753
      %v2958 = vpack.c.bf16 %v2754, %v2754
      %v2959 = vpack.c.bf16 %v2755, %v2755
      %v2960 = vpack.c.bf16 %v2756, %v2756
      %v2961 = vpack.c.bf16 %v2757, %v2757
      %v2962 = vpack.c.bf16 %v2758, %v2758
      %v2963 = vpack.c.bf16 %v2759, %v2759
      %v2964 = vpack.c.bf16 %v2760, %v2760
      %v2965 = vpack.c.bf16 %v2761, %v2761
      %v2966 = vpack.c.bf16 %v2762, %v2762
      %v2967 = vpack.c.bf16 %v2763, %v2763
      %v2968 = vpack.c.bf16 %v2764, %v2764
      %vm2969 = vcmask 60416
      %2970 = vst.msk [vmem:[%s309] sm:$0xf] %vm2969, %v2937
      %2971 = vst.msk [vmem:[%s309 + $0x4] sm:$0xf] %vm2969, %v2938
      %2972 = vst.msk [vmem:[%s309 + $0x8] sm:$0xf] %vm2969, %v2939
      %2973 = vst.msk [vmem:[%s309 + $0xc] sm:$0xf] %vm2969, %v2940
      %2974 = vst.msk [vmem:[%s309 + $0x10] sm:$0xf] %vm2969, %v2941
      %2975 = vst.msk [vmem:[%s309 + $0x14] sm:$0xf] %vm2969, %v2942
      %2976 = vst.msk [vmem:[%s309 + $0x18] sm:$0xf] %vm2969, %v2943
      %2977 = vst.msk [vmem:[%s309 + $0x1c] sm:$0xf] %vm2969, %v2944
      %2978 = vst.msk [vmem:[%s309 + $0x20] sm:$0xf] %vm2969, %v2945
      %2979 = vst.msk [vmem:[%s309 + $0x24] sm:$0xf] %vm2969, %v2946
      %2980 = vst.msk [vmem:[%s309 + $0x28] sm:$0xf] %vm2969, %v2947
      %2981 = vst.msk [vmem:[%s309 + $0x2c] sm:$0xf] %vm2969, %v2948
      %2982 = vst.msk [vmem:[%s309 + $0x30] sm:$0xf] %vm2969, %v2949
      %2983 = vst.msk [vmem:[%s309 + $0x34] sm:$0xf] %vm2969, %v2950
      %2984 = vst.msk [vmem:[%s309 + $0x38] sm:$0xf] %vm2969, %v2951
      %2985 = vst.msk [vmem:[%s309 + $0x3c] sm:$0xf] %vm2969, %v2952
      %2986 = vst.msk [vmem:[%s309 + $0x40] sm:$0xf] %vm2969, %v2953
      %2987 = vst.msk [vmem:[%s309 + $0x44] sm:$0xf] %vm2969, %v2954
      %2988 = vst.msk [vmem:[%s309 + $0x48] sm:$0xf] %vm2969, %v2955
      %2989 = vst.msk [vmem:[%s309 + $0x4c] sm:$0xf] %vm2969, %v2956
      %2990 = vst.msk [vmem:[%s309 + $0x50] sm:$0xf] %vm2969, %v2957
      %2991 = vst.msk [vmem:[%s309 + $0x54] sm:$0xf] %vm2969, %v2958
      %2992 = vst.msk [vmem:[%s309 + $0x58] sm:$0xf] %vm2969, %v2959
      %2993 = vst.msk [vmem:[%s309 + $0x5c] sm:$0xf] %vm2969, %v2960
      %2994 = vst.msk [vmem:[%s309 + $0x60] sm:$0xf] %vm2969, %v2961
      %2995 = vst.msk [vmem:[%s309 + $0x64] sm:$0xf] %vm2969, %v2962
      %2996 = vst.msk [vmem:[%s309 + $0x68] sm:$0xf] %vm2969, %v2963
      %2997 = vst.msk [vmem:[%s309 + $0x6c] sm:$0xf] %vm2969, %v2964
      %2998 = vst.msk [vmem:[%s309 + $0x70] sm:$0xf] %vm2969, %v2965
      %2999 = vst.msk [vmem:[%s309 + $0x74] sm:$0xf] %vm2969, %v2966
      %3000 = vst.msk [vmem:[%s309 + $0x78] sm:$0xf] %vm2969, %v2967
      %3001 = vst.msk [vmem:[%s309 + $0x7c] sm:$0xf] %vm2969, %v2968
      %vm3002 = vcmask 57344
      %3003 = vst.msk [vmem:[%s315] sm:$0x1] %vm3002, %v2834
      %3004 = vst.msk [vmem:[%s321] sm:$0x1] %vm3002, %v2936
      %p3005 = scmp.lt.s32.totalorder %s22, 1
      %s3006 = scalar_select %p3005, %s22, 1
      %p3007 = scmp.lt.s32.totalorder %s23, 0
      %s3008 = scalar_select %p3007, %s23, 0
      %s3009 = smul.addr %s3006, 32
      %s3010 = sadd.s32 %s3008, %s3009
      %s3011 = smul.addr %s3010, 4
      %s3012 = scalar_lea.vmem %s4, %s3011
      %p3013 = scmp.lt.s32.totalorder %s22, 1
      %s3014 = scalar_select %p3013, %s22, 1
      %p3015 = scmp.lt.s32.totalorder %s23, 0
      %s3016 = scalar_select %p3015, %s23, 0
      %s3017 = sadd.s32 %s3016, %s3014
      %s3018 = scalar_lea.vmem %s5, %s3017
      %p3019 = scmp.lt.s32.totalorder %s22, 1
      %s3020 = scalar_select %p3019, %s22, 1
      %p3021 = scmp.lt.s32.totalorder %s23, 0
      %s3022 = scalar_select %p3021, %s23, 0
      %s3023 = sadd.s32 %s3022, %s3020
      %s3024 = scalar_lea.vmem %s6, %s3023
      // Predicated region
      $region37: #{basic_block_forward.4} parent=35 // pred_check
        %p3025 = pneg %p144
      $region38: #{basic_block_forward.4} parent=35 // pred_check_branch
        %3027 = sbr.rel (%p3025) target = $region40
      $region39: #{basic_block_forward.4} parent=35 // pred_region
        _
      $region40: #{basic_block_forward.4} parent=35 // pred_fallthru
        _
      // Predicated region
      $region41: #{basic_block_forward.4} parent=35 // pred_check
        %p3028 = pneg %p172
      $region42: #{basic_block_forward.4} parent=35 // pred_check_branch
        %3030 = sbr.rel (%p3028) target = $region44
      $region43: #{basic_block_forward.4} parent=35 // pred_region
        _
      $region44: #{basic_block_forward.4} parent=35 // pred_fallthru
        _
      // Predicated region
      $region45: #{basic_block_forward.4} parent=35 // pred_check
        %p3031 = pneg %p200
      $region46: #{basic_block_forward.4} parent=35 // pred_check_branch
        %3033 = sbr.rel (%p3031) target = $region48
      $region47: #{basic_block_forward.4} parent=35 // pred_region
        _
      $region48: #{basic_block_forward.4} parent=35 // pred_fallthru
        _
    $region36: #{basic_block_forward.4} parent=5 // pred_fallthru
      _
    %p3034 = scmp.le.s32.totalorder 2, %s13
    // Predicated region
    $region49: #{basic_block_forward.4} parent=5 // pred_check
      %p3035 = pneg %p3034
    $region50: #{basic_block_forward.4} parent=5 // pred_check_branch
      %3037 = sbr.rel (%p3035) target = $region52
    $region51: #{basic_block_forward.4} parent=5 // pred_region
      %s3038 = ssub.s32 %s13, 2
      // Predicated region
      $region53: #{basic_block_forward.4} parent=51 // pred_check
        %p3039 = pneg %p150
      $region54: #{basic_block_forward.4} parent=51 // pred_check_branch
        %3041 = sbr.rel (%p3039) target = $region56
      $region55: #{basic_block_forward.4} parent=51 // pred_region
        %p3042 = scmp.lt.s32.totalorder %s24, 1
        %s3043 = scalar_select %p3042, %s24, 1
        %p3044 = scmp.lt.s32.totalorder %s25, 0
        %s3045 = scalar_select %p3044, %s25, 0
        %s3046 = smul.addr %s3043, 32
        %s3047 = sadd.s32 %s3045, %s3046
        %s3048 = smul.addr %s3047, 4
        %s3049 = scalar_lea.vmem %s4, %s3048
      $region56: #{basic_block_forward.4} parent=51 // pred_fallthru
        _
      // Predicated region
      $region57: #{basic_block_forward.4} parent=51 // pred_check
        %p3050 = pneg %p178
      $region58: #{basic_block_forward.4} parent=51 // pred_check_branch
        %3052 = sbr.rel (%p3050) target = $region60
      $region59: #{basic_block_forward.4} parent=51 // pred_region
        %p3053 = scmp.lt.s32.totalorder %s24, 1
        %s3054 = scalar_select %p3053, %s24, 1
        %p3055 = scmp.lt.s32.totalorder %s25, 0
        %s3056 = scalar_select %p3055, %s25, 0
        %s3057 = sadd.s32 %s3056, %s3054
        %s3058 = scalar_lea.vmem %s5, %s3057
      $region60: #{basic_block_forward.4} parent=51 // pred_fallthru
        _
      // Predicated region
      $region61: #{basic_block_forward.4} parent=51 // pred_check
        %p3059 = pneg %p206
      $region62: #{basic_block_forward.4} parent=51 // pred_check_branch
        %3061 = sbr.rel (%p3059) target = $region64
      $region63: #{basic_block_forward.4} parent=51 // pred_region
        %p3062 = scmp.lt.s32.totalorder %s24, 1
        %s3063 = scalar_select %p3062, %s24, 1
        %p3064 = scmp.lt.s32.totalorder %s25, 0
        %s3065 = scalar_select %p3064, %s25, 0
        %s3066 = sadd.s32 %s3065, %s3063
        %s3067 = scalar_lea.vmem %s6, %s3066
      $region64: #{basic_block_forward.4} parent=51 // pred_fallthru
        _
    $region52: #{basic_block_forward.4} parent=5 // pred_fallthru
      _
  $region6: #{basic_block_forward.4} parent=0 // loop_footer
    %s17 = sadd.s32 1, %s13
  $region7: #{basic_block_forward.4} parent=0 // loop_footer_branch
    %12 = sbr.rel target = $region3
  $region8: #{basic_block_forward.4} parent=0 // loop_exit
    _

// kernel: basic_block_forward.3
$region0: #{basic_block_forward.3}
  #allocation0 [shape = 'u32[]', space=smem, size = 0x4, offset = 0x4, fixed_abs, tag = 'smem constant byte address 0x4 - core index']
  #allocation1 [shape = 'u32[72,128]{1,0:T(1,128)}', space=vmem, size = 0x9000, scoped, tag = 'internal scratch']
  %s0 = inlined_call_operand.vmem [shape: bf16[2,1,18,18,4], index: 0, kind: input, shape index: {}]
  %s1 = inlined_call_operand.vmem [shape: bf16[3,3,4,8], index: 1, kind: input, shape index: {}]
  %s2 = inlined_call_operand.vmem [shape: f32[1,4], index: 2, kind: input, shape index: {}]
  %s3 = inlined_call_operand.vmem [shape: f32[1,4], index: 3, kind: input, shape index: {}]
  %s4 = inlined_call_operand.vmem [shape: bf16[2,18,18,8], index: 4, kind: output, shape index: {0}]
  %s5 = inlined_call_operand.vmem [shape: f32[2,1,8], index: 5, kind: output, shape index: {1}]
  %s6 = inlined_call_operand.vmem [shape: f32[2,1,8], index: 6, kind: output, shape index: {2}]
  %7 = xla_tuple %s4, %s5, %s6
  %s8 = sld [smem:[#allocation0]]
  $region65: #{basic_block_forward.3} parent=0
    _
  %s10 = ssub.s32 1, %s8
  %s11 = scalar_select 0, %s10, %s8
  loop: start=0, step=1, limit=4
  $region2: #{basic_block_forward.3} parent=0 // loop_pre_header
    _
  $region3: #{basic_block_forward.3} parent=0 // loop_header
    %s13 = sphi 0, %s17
    %p14 = scmp.ge.s32.totalorder %s13, 4
    %s20 = sphi 0, %s32
    %s21 = sphi 0, %s28
    %s22 = sphi 0, %s20
    %s23 = sphi 0, %s21
    %s24 = sphi 0, %s22
    %s25 = sphi 0, %s23
    %s35 = sphi 0, %s37
    %s38 = sphi 0, %s35
    %s39 = sphi 0, %s38
    %s55 = sphi 0, %s39
    %s61 = sphi 0, %s63
    %s64 = sphi 0, %s61
    %s65 = sphi 0, %s64
    %s81 = sphi 0, %s65
    %s85 = sphi 0, %s85
    %s87 = sphi 0, %s85
    %s88 = sphi 0, %s87
    %s102 = sphi 0, %s88
    %s106 = sphi 0, %s106
    %s108 = sphi 0, %s106
    %s109 = sphi 0, %s108
    %s123 = sphi 0, %s109
    %s131 = sphi 0, %s133
    %s134 = sphi 0, %s131
    %s135 = sphi 0, %s134
    %s151 = sphi 0, %s135
    %s159 = sphi 0, %s161
    %s162 = sphi 0, %s159
    %s163 = sphi 0, %s162
    %s179 = sphi 0, %s163
    %s187 = sphi 0, %s189
    %s190 = sphi 0, %s187
    %s191 = sphi 0, %s190
    %s207 = sphi 0, %s191
  $region4: #{basic_block_forward.3} parent=0 // loop_header_branch
    %16 = sbr.rel (%p14) target = $region8
  $region5: #{basic_block_forward.3} parent=0 // loop_body
    %s18 = ssub.s32 %s13, 1
    %s19 = ssub.s32 %s13, 2
    %s26 = sadd.s32 1, %s21
    %p27 = scmp.ge.s32.totalorder %s26, 1
    %s28 = scalar_select %p27, 0, %s26
    %s29 = sadd.s32 1, %s20
    %s30 = scalar_select %p27, %s29, %s20
    %p31 = scmp.ge.s32.totalorder %s30, 2
    %s32 = scalar_select %p31, 0, %s30
    %s33 = ssub.s32 %s20, %s32
    %p34 = scmp.eq.s32.totalorder %s33, 0
    %s36 = sadd.s32 %s35, 1
    %s37 = scalar_select %p34, %s35, %s36
    %p40 = pneg %p34
    %p41 = scmp.eq.s32.totalorder %s13, 1
    %p42 = por %p40, %p41
    %p43 = scmp.ne.s32.totalorder %s35, %s38
    %p44 = scmp.eq.s32.totalorder %s13, 0
    %p45 = por %p43, %p44
    %p46 = scmp.ne.s32.totalorder %s35, %s38
    %p47 = scmp.eq.s32.totalorder %s18, 1
    %p48 = por %p46, %p47
    %p49 = scmp.ne.s32.totalorder %s38, %s39
    %p50 = scmp.eq.s32.totalorder %s18, 0
    %p51 = por %p49, %p50
    %p52 = scmp.ne.s32.totalorder %s38, %s39
    %p53 = scmp.eq.s32.totalorder %s19, 1
    %p54 = por %p52, %p53
    %p56 = scmp.ne.s32.totalorder %s39, %s55
    %p57 = scmp.eq.s32.totalorder %s19, 0
    %p58 = por %p56, %p57
    %s59 = ssub.s32 %s21, %s28
    %p60 = scmp.eq.s32.totalorder %s59, 0
    %s62 = sadd.s32 %s61, 1
    %s63 = scalar_select %p60, %s61, %s62
    %p66 = pneg %p60
    %p67 = scmp.eq.s32.totalorder %s13, 1
    %p68 = por %p66, %p67
    %p69 = scmp.ne.s32.totalorder %s61, %s64
    %p70 = scmp.eq.s32.totalorder %s13, 0
    %p71 = por %p69, %p70
    %p72 = scmp.ne.s32.totalorder %s61, %s64
    %p73 = scmp.eq.s32.totalorder %s18, 1
    %p74 = por %p72, %p73
    %p75 = scmp.ne.s32.totalorder %s64, %s65
    %p76 = scmp.eq.s32.totalorder %s18, 0
    %p77 = por %p75, %p76
    %p78 = scmp.ne.s32.totalorder %s64, %s65
    %p79 = scmp.eq.s32.totalorder %s19, 1
    %p80 = por %p78, %p79
    %p82 = scmp.ne.s32.totalorder %s65, %s81
    %p83 = scmp.eq.s32.totalorder %s19, 0
    %p84 = por %p82, %p83
    %s86 = sadd.s32 %s85, 1
    %p89 = scmp.eq.s32.totalorder %s13, 1
    %p90 = scmp.ne.s32.totalorder %s85, %s87
    %p91 = scmp.eq.s32.totalorder %s13, 0
    %p92 = por %p90, %p91
    %p93 = scmp.ne.s32.totalorder %s85, %s87
    %p94 = scmp.eq.s32.totalorder %s18, 1
    %p95 = por %p93, %p94
    %p96 = scmp.ne.s32.totalorder %s87, %s88
    %p97 = scmp.eq.s32.totalorder %s18, 0
    %p98 = por %p96, %p97
    %p99 = scmp.ne.s32.totalorder %s87, %s88
    %p100 = scmp.eq.s32.totalorder %s19, 1
    %p101 = por %p99, %p100
    %p103 = scmp.ne.s32.totalorder %s88, %s102
    %p104 = scmp.eq.s32.totalorder %s19, 0
    %p105 = por %p103, %p104
    %s107 = sadd.s32 %s106, 1
    %p110 = scmp.eq.s32.totalorder %s13, 1
    %p111 = scmp.ne.s32.totalorder %s106, %s108
    %p112 = scmp.eq.s32.totalorder %s13, 0
    %p113 = por %p111, %p112
    %p114 = scmp.ne.s32.totalorder %s106, %s108
    %p115 = scmp.eq.s32.totalorder %s18, 1
    %p116 = por %p114, %p115
    %p117 = scmp.ne.s32.totalorder %s108, %s109
    %p118 = scmp.eq.s32.totalorder %s18, 0
    %p119 = por %p117, %p118
    %p120 = scmp.ne.s32.totalorder %s108, %s109
    %p121 = scmp.eq.s32.totalorder %s19, 1
    %p122 = por %p120, %p121
    %p124 = scmp.ne.s32.totalorder %s109, %s123
    %p125 = scmp.eq.s32.totalorder %s19, 0
    %p126 = por %p124, %p125
    %s127 = ssub.s32 %s20, %s32
    %s128 = ssub.s32 %s21, %s28
    %s129 = sor.u32 %s127, %s128
    %p130 = scmp.eq.s32.totalorder %s129, 0
    %s132 = sadd.s32 %s131, 1
    %s133 = scalar_select %p130, %s131, %s132
    %p136 = pneg %p130
    %p137 = scmp.eq.s32.totalorder %s13, 1
    %p138 = por %p136, %p137
    %p139 = scmp.ne.s32.totalorder %s131, %s134
    %p140 = scmp.eq.s32.totalorder %s13, 0
    %p141 = por %p139, %p140
    %p142 = scmp.ne.s32.totalorder %s131, %s134
    %p143 = scmp.eq.s32.totalorder %s18, 1
    %p144 = por %p142, %p143
    %p145 = scmp.ne.s32.totalorder %s134, %s135
    %p146 = scmp.eq.s32.totalorder %s18, 0
    %p147 = por %p145, %p146
    %p148 = scmp.ne.s32.totalorder %s134, %s135
    %p149 = scmp.eq.s32.totalorder %s19, 1
    %p150 = por %p148, %p149
    %p152 = scmp.ne.s32.totalorder %s135, %s151
    %p153 = scmp.eq.s32.totalorder %s19, 0
    %p154 = por %p152, %p153
    %s155 = ssub.s32 %s20, %s32
    %s156 = ssub.s32 %s21, %s28
    %s157 = sor.u32 %s155, %s156
    %p158 = scmp.eq.s32.totalorder %s157, 0
    %s160 = sadd.s32 %s159, 1
    %s161 = scalar_select %p158, %s159, %s160
    %p164 = pneg %p158
    %p165 = scmp.eq.s32.totalorder %s13, 1
    %p166 = por %p164, %p165
    %p167 = scmp.ne.s32.totalorder %s159, %s162
    %p168 = scmp.eq.s32.totalorder %s13, 0
    %p169 = por %p167, %p168
    %p170 = scmp.ne.s32.totalorder %s159, %s162
    %p171 = scmp.eq.s32.totalorder %s18, 1
    %p172 = por %p170, %p171
    %p173 = scmp.ne.s32.totalorder %s162, %s163
    %p174 = scmp.eq.s32.totalorder %s18, 0
    %p175 = por %p173, %p174
    %p176 = scmp.ne.s32.totalorder %s162, %s163
    %p177 = scmp.eq.s32.totalorder %s19, 1
    %p178 = por %p176, %p177
    %p180 = scmp.ne.s32.totalorder %s163, %s179
    %p181 = scmp.eq.s32.totalorder %s19, 0
    %p182 = por %p180, %p181
    %s183 = ssub.s32 %s20, %s32
    %s184 = ssub.s32 %s21, %s28
    %s185 = sor.u32 %s183, %s184
    %p186 = scmp.eq.s32.totalorder %s185, 0
    %s188 = sadd.s32 %s187, 1
    %s189 = scalar_select %p186, %s187, %s188
    %p192 = pneg %p186
    %p193 = scmp.eq.s32.totalorder %s13, 1
    %p194 = por %p192, %p193
    %p195 = scmp.ne.s32.totalorder %s187, %s190
    %p196 = scmp.eq.s32.totalorder %s13, 0
    %p197 = por %p195, %p196
    %p198 = scmp.ne.s32.totalorder %s187, %s190
    %p199 = scmp.eq.s32.totalorder %s18, 1
    %p200 = por %p198, %p199
    %p201 = scmp.ne.s32.totalorder %s190, %s191
    %p202 = scmp.eq.s32.totalorder %s18, 0
    %p203 = por %p201, %p202
    %p204 = scmp.ne.s32.totalorder %s190, %s191
    %p205 = scmp.eq.s32.totalorder %s19, 1
    %p206 = por %p204, %p205
    %p208 = scmp.ne.s32.totalorder %s191, %s207
    %p209 = scmp.eq.s32.totalorder %s19, 0
    %p210 = por %p208, %p209
    %p211 = scmp.le.s32.totalorder 1, %s13
    %p212 = scmp.lt.s32.totalorder %s13, 3
    %p213 = pnand %p211, %p212
    %p214 = pneg %p213
    // Predicated region
    $region9: #{basic_block_forward.3} parent=5 // pred_check
      _
    $region10: #{basic_block_forward.3} parent=5 // pred_check_branch
      %216 = sbr.rel (%p213) target = $region12
    $region11: #{basic_block_forward.3} parent=5 // pred_region
      %s217 = ssub.s32 %s13, 1
      // Predicated region
      $region13: #{basic_block_forward.3} parent=11 // pred_check
        %p218 = pneg %p77
      $region14: #{basic_block_forward.3} parent=11 // pred_check_branch
        %220 = sbr.rel (%p218) target = $region16
      $region15: #{basic_block_forward.3} parent=11 // pred_region
        %p221 = scmp.lt.s32.totalorder %s23, 0
        %s222 = scalar_select %p221, %s23, 0
        %s223 = smul.addr %s222, 2
        %s224 = scalar_lea.vmem %s1, %s223
      $region16: #{basic_block_forward.3} parent=11 // pred_fallthru
        _
      // Predicated region
      $region17: #{basic_block_forward.3} parent=11 // pred_check
        %p225 = pneg %p98
      $region18: #{basic_block_forward.3} parent=11 // pred_check_branch
        %227 = sbr.rel (%p225) target = $region20
      $region19: #{basic_block_forward.3} parent=11 // pred_region
        _
      $region20: #{basic_block_forward.3} parent=11 // pred_fallthru
        _
      // Predicated region
      $region21: #{basic_block_forward.3} parent=11 // pred_check
        %p228 = pneg %p119
      $region22: #{basic_block_forward.3} parent=11 // pred_check_branch
        %230 = sbr.rel (%p228) target = $region24
      $region23: #{basic_block_forward.3} parent=11 // pred_region
        _
      $region24: #{basic_block_forward.3} parent=11 // pred_fallthru
        _
    $region12: #{basic_block_forward.3} parent=5 // pred_fallthru
      _
    %p231 = scmp.lt.s32.totalorder %s13, 2
    // Predicated region
    $region25: #{basic_block_forward.3} parent=5 // pred_check
      %p232 = pneg %p231
    $region26: #{basic_block_forward.3} parent=5 // pred_check_branch
      %234 = sbr.rel (%p232) target = $region28
    $region27: #{basic_block_forward.3} parent=5 // pred_region
      // Predicated region
      $region29: #{basic_block_forward.3} parent=27 // pred_check
        %p235 = pneg %p45
      $region30: #{basic_block_forward.3} parent=27 // pred_check_branch
        %237 = sbr.rel (%p235) target = $region32
      $region31: #{basic_block_forward.3} parent=27 // pred_region
        %p238 = scmp.lt.s32.totalorder %s20, 1
        %s239 = scalar_select %p238, %s20, 1
        %s240 = smul.addr %s239, 54
        %s241 = smul.addr %s240, 4
        %s242 = scalar_lea.vmem %s0, %s241
      $region32: #{basic_block_forward.3} parent=27 // pred_fallthru
        _
    $region28: #{basic_block_forward.3} parent=5 // pred_fallthru
      _
    %p243 = scmp.le.s32.totalorder 1, %s13
    %p244 = scmp.lt.s32.totalorder %s13, 3
    %p245 = pnand %p243, %p244
    %p246 = pneg %p245
    // Predicated region
    $region33: #{basic_block_forward.3} parent=5 // pred_check
      _
    $region34: #{basic_block_forward.3} parent=5 // pred_check_branch
      %248 = sbr.rel (%p245) target = $region36
    $region35: #{basic_block_forward.3} parent=5 // pred_region
      %s249 = ssub.s32 %s13, 1
      %p250 = scmp.lt.s32.totalorder %s22, 1
      %s251 = scalar_select %p250, %s22, 1
      %s252 = smul.addr %s251, 54
      %s253 = smul.addr %s252, 4
      %s254 = scalar_lea.vmem %s0, %s253
      %p255 = pneg %p51
      %p256 = pneg %p48
      %p257 = scmp.lt.s32.totalorder %s23, 0
      %s258 = scalar_select %p257, %s23, 0
      %s259 = smul.addr %s258, 2
      %s260 = scalar_lea.vmem %s1, %s259
      %p261 = pneg %p77
      %p262 = pneg %p74
      %p263 = pneg %p98
      %p264 = pneg %p95
      %p265 = pneg %p119
      %p266 = pneg %p116
      %p267 = pneg %p147
      %p268 = pneg %p144
      %p269 = scmp.lt.s32.totalorder %s22, 1
      %s270 = scalar_select %p269, %s22, 1
      %p271 = scmp.lt.s32.totalorder %s23, 0
      %s272 = scalar_select %p271, %s23, 0
      %s273 = smul.addr %s270, 54
      %s274 = sadd.s32 %s272, %s273
      %s275 = smul.addr %s274, 4
      %s276 = scalar_lea.vmem %s4, %s275
      %p277 = pneg %p175
      %p278 = pneg %p172
      %p279 = scmp.lt.s32.totalorder %s22, 1
      %s280 = scalar_select %p279, %s22, 1
      %p281 = scmp.lt.s32.totalorder %s23, 0
      %s282 = scalar_select %p281, %s23, 0
      %s283 = sadd.s32 %s282, %s280
      %s284 = scalar_lea.vmem %s5, %s283
      %p285 = pneg %p203
      %p286 = pneg %p200
      %p287 = scmp.lt.s32.totalorder %s22, 1
      %s288 = scalar_select %p287, %s22, 1
      %p289 = scmp.lt.s32.totalorder %s23, 0
      %s290 = scalar_select %p289, %s23, 0
      %s291 = sadd.s32 %s290, %s288
      %s292 = scalar_lea.vmem %s6, %s291
      %p293 = scmp.lt.s32.totalorder %s22, 1
      %s294 = scalar_select %p293, %s22, 1
      %s295 = smul.addr %s294, 54
      %s296 = smul.addr %s295, 4
      %s297 = scalar_lea.vmem %s0, %s296
      %p298 = scmp.lt.s32.totalorder %s23, 0
      %s299 = scalar_select %p298, %s23, 0
      %s300 = smul.addr %s299, 2
      %s301 = scalar_lea.vmem %s1, %s300
      %p302 = scmp.lt.s32.totalorder %s22, 1
      %s303 = scalar_select %p302, %s22, 1
      %p304 = scmp.lt.s32.totalorder %s23, 0
      %s305 = scalar_select %p304, %s23, 0
      %s306 = smul.addr %s303, 54
      %s307 = sadd.s32 %s305, %s306
      %s308 = smul.addr %s307, 4
      %s309 = scalar_lea.vmem %s4, %s308
      %p310 = scmp.lt.s32.totalorder %s22, 1
      %s311 = scalar_select %p310, %s22, 1
      %p312 = scmp.lt.s32.totalorder %s23, 0
      %s313 = scalar_select %p312, %s23, 0
      %s314 = sadd.s32 %s313, %s311
      %s315 = scalar_lea.vmem %s5, %s314
      %p316 = scmp.lt.s32.totalorder %s22, 1
      %s317 = scalar_select %p316, %s22, 1
      %p318 = scmp.lt.s32.totalorder %s23, 0
      %s319 = scalar_select %p318, %s23, 0
      %s320 = sadd.s32 %s319, %s317
      %s321 = scalar_lea.vmem %s6, %s320
      %vm323 = vcmask 60416
      %324 = vst.msk [vmem:[%s309] sm:$0xf] %vm323, 0
      %325 = vst.msk [vmem:[%s309 + $0x4] sm:$0xf] %vm323, 0
      %vm326 = vcmask 57344
      %327 = vst.msk [vmem:[%s309 + $0x8] sm:$0x1] %vm326, 0
      %s328 = scalar_lea.vmem %s309, 204
      %329 = vst.msk [vmem:[%s328] sm:$0xf] %vm323, 0
      %330 = vst.msk [vmem:[%s328 + $0x4] sm:$0xf] %vm323, 0
      %331 = vst.msk [vmem:[%s328 + $0x8] sm:$0x1] %vm326, 0
      %vm332 = vcmask 57344
      %vm333 = vsmask.f32 256
      %vm334 = vmand %vm332, %vm333
      %v335 = vld [vmem:[%s309] sm:$0x1]
      %v336 = vsel %vm334, 0, %v335
      %337 = vst [vmem:[%s309] sm:$0x1] %v336
      %v338 = vld [vmem:[%s309 + $0xc] sm:$0x1]
      %v339 = vsel %vm334, 0, %v338
      %340 = vst [vmem:[%s309 + $0xc] sm:$0x1] %v339
      %v341 = vld [vmem:[%s309 + $0x18] sm:$0x1]
      %v342 = vsel %vm334, 0, %v341
      %343 = vst [vmem:[%s309 + $0x18] sm:$0x1] %v342
      %v344 = vld [vmem:[%s309 + $0x24] sm:$0x1]
      %v345 = vsel %vm334, 0, %v344
      %346 = vst [vmem:[%s309 + $0x24] sm:$0x1] %v345
      %v347 = vld [vmem:[%s309 + $0x30] sm:$0x1]
      %v348 = vsel %vm334, 0, %v347
      %349 = vst [vmem:[%s309 + $0x30] sm:$0x1] %v348
      %v350 = vld [vmem:[%s309 + $0x3c] sm:$0x1]
      %v351 = vsel %vm334, 0, %v350
      %352 = vst [vmem:[%s309 + $0x3c] sm:$0x1] %v351
      %v353 = vld [vmem:[%s309 + $0x48] sm:$0x1]
      %v354 = vsel %vm334, 0, %v353
      %355 = vst [vmem:[%s309 + $0x48] sm:$0x1] %v354
      %v356 = vld [vmem:[%s309 + $0x54] sm:$0x1]
      %v357 = vsel %vm334, 0, %v356
      %358 = vst [vmem:[%s309 + $0x54] sm:$0x1] %v357
      %v359 = vld [vmem:[%s309 + $0x60] sm:$0x1]
      %v360 = vsel %vm334, 0, %v359
      %361 = vst [vmem:[%s309 + $0x60] sm:$0x1] %v360
      %v362 = vld [vmem:[%s309 + $0x6c] sm:$0x1]
      %v363 = vsel %vm334, 0, %v362
      %364 = vst [vmem:[%s309 + $0x6c] sm:$0x1] %v363
      %v365 = vld [vmem:[%s309 + $0x78] sm:$0x1]
      %v366 = vsel %vm334, 0, %v365
      %367 = vst [vmem:[%s309 + $0x78] sm:$0x1] %v366
      %v368 = vld [vmem:[%s309 + $0x84] sm:$0x1]
      %v369 = vsel %vm334, 0, %v368
      %370 = vst [vmem:[%s309 + $0x84] sm:$0x1] %v369
      %v371 = vld [vmem:[%s309 + $0x90] sm:$0x1]
      %v372 = vsel %vm334, 0, %v371
      %373 = vst [vmem:[%s309 + $0x90] sm:$0x1] %v372
      %v374 = vld [vmem:[%s309 + $0x9c] sm:$0x1]
      %v375 = vsel %vm334, 0, %v374
      %376 = vst [vmem:[%s309 + $0x9c] sm:$0x1] %v375
      %v377 = vld [vmem:[%s309 + $0xa8] sm:$0x1]
      %v378 = vsel %vm334, 0, %v377
      %379 = vst [vmem:[%s309 + $0xa8] sm:$0x1] %v378
      %v380 = vld [vmem:[%s309 + $0xb4] sm:$0x1]
      %v381 = vsel %vm334, 0, %v380
      %382 = vst [vmem:[%s309 + $0xb4] sm:$0x1] %v381
      %v383 = vld [vmem:[%s309 + $0xc0] sm:$0x1]
      %v384 = vsel %vm334, 0, %v383
      %385 = vst [vmem:[%s309 + $0xc0] sm:$0x1] %v384
      %v386 = vld [vmem:[%s309 + $0xcc] sm:$0x1]
      %v387 = vsel %vm334, 0, %v386
      %388 = vst [vmem:[%s309 + $0xcc] sm:$0x1] %v387
      %vm389 = vsmask.f32 7938
      %vm390 = vmand %vm332, %vm389
      %v391 = vld [vmem:[%s309 + $0x8] sm:$0x1]
      %v392 = vsel %vm390, 0, %v391
      %393 = vst [vmem:[%s309 + $0x8] sm:$0x1] %v392
      %v394 = vld [vmem:[%s309 + $0x14] sm:$0x1]
      %v395 = vsel %vm390, 0, %v394
      %396 = vst [vmem:[%s309 + $0x14] sm:$0x1] %v395
      %v397 = vld [vmem:[%s309 + $0x20] sm:$0x1]
      %v398 = vsel %vm390, 0, %v397
      %399 = vst [vmem:[%s309 + $0x20] sm:$0x1] %v398
      %v400 = vld [vmem:[%s309 + $0x2c] sm:$0x1]
      %v401 = vsel %vm390, 0, %v400
      %402 = vst [vmem:[%s309 + $0x2c] sm:$0x1] %v401
      %v403 = vld [vmem:[%s309 + $0x38] sm:$0x1]
      %v404 = vsel %vm390, 0, %v403
      %405 = vst [vmem:[%s309 + $0x38] sm:$0x1] %v404
      %v406 = vld [vmem:[%s309 + $0x44] sm:$0x1]
      %v407 = vsel %vm390, 0, %v406
      %408 = vst [vmem:[%s309 + $0x44] sm:$0x1] %v407
      %v409 = vld [vmem:[%s309 + $0x50] sm:$0x1]
      %v410 = vsel %vm390, 0, %v409
      %411 = vst [vmem:[%s309 + $0x50] sm:$0x1] %v410
      %v412 = vld [vmem:[%s309 + $0x5c] sm:$0x1]
      %v413 = vsel %vm390, 0, %v412
      %414 = vst [vmem:[%s309 + $0x5c] sm:$0x1] %v413
      %v415 = vld [vmem:[%s309 + $0x68] sm:$0x1]
      %v416 = vsel %vm390, 0, %v415
      %417 = vst [vmem:[%s309 + $0x68] sm:$0x1] %v416
      %v418 = vld [vmem:[%s309 + $0x74] sm:$0x1]
      %v419 = vsel %vm390, 0, %v418
      %420 = vst [vmem:[%s309 + $0x74] sm:$0x1] %v419
      %v421 = vld [vmem:[%s309 + $0x80] sm:$0x1]
      %v422 = vsel %vm390, 0, %v421
      %423 = vst [vmem:[%s309 + $0x80] sm:$0x1] %v422
      %v424 = vld [vmem:[%s309 + $0x8c] sm:$0x1]
      %v425 = vsel %vm390, 0, %v424
      %426 = vst [vmem:[%s309 + $0x8c] sm:$0x1] %v425
      %v427 = vld [vmem:[%s309 + $0x98] sm:$0x1]
      %v428 = vsel %vm390, 0, %v427
      %429 = vst [vmem:[%s309 + $0x98] sm:$0x1] %v428
      %v430 = vld [vmem:[%s309 + $0xa4] sm:$0x1]
      %v431 = vsel %vm390, 0, %v430
      %432 = vst [vmem:[%s309 + $0xa4] sm:$0x1] %v431
      %v433 = vld [vmem:[%s309 + $0xb0] sm:$0x1]
      %v434 = vsel %vm390, 0, %v433
      %435 = vst [vmem:[%s309 + $0xb0] sm:$0x1] %v434
      %v436 = vld [vmem:[%s309 + $0xbc] sm:$0x1]
      %v437 = vsel %vm390, 0, %v436
      %438 = vst [vmem:[%s309 + $0xbc] sm:$0x1] %v437
      %v439 = vld [vmem:[%s309 + $0xc8] sm:$0x1]
      %v440 = vsel %vm390, 0, %v439
      %441 = vst [vmem:[%s309 + $0xc8] sm:$0x1] %v440
      %v442 = vld [vmem:[%s309 + $0xd4] sm:$0x1]
      %v443 = vsel %vm390, 0, %v442
      %444 = vst [vmem:[%s309 + $0xd4] sm:$0x1] %v443
      %v445 = vld [vmem:[%s297] sm:$0xf]
      %v446 = vld [vmem:[%s297 + $0x4] sm:$0xf]
      %v447 = vld [vmem:[%s297 + $0xc] sm:$0xf]
      %v448 = vld [vmem:[%s297 + $0x10] sm:$0xf]
      %v449 = vld [vmem:[%s297 + $0x18] sm:$0xf]
      %v450 = vld [vmem:[%s297 + $0x1c] sm:$0xf]
      %v451 = vld [vmem:[%s297 + $0x24] sm:$0xf]
      %v452 = vld [vmem:[%s297 + $0x28] sm:$0xf]
      %v453 = vld [vmem:[%s297 + $0x30] sm:$0xf]
      %v454 = vld [vmem:[%s297 + $0x34] sm:$0xf]
      %v455 = vld [vmem:[%s297 + $0x3c] sm:$0xf]
      %v456 = vld [vmem:[%s297 + $0x40] sm:$0xf]
      %v457 = vld [vmem:[%s297 + $0x48] sm:$0xf]
      %v458 = vld [vmem:[%s297 + $0x4c] sm:$0xf]
      %v459 = vld [vmem:[%s297 + $0x54] sm:$0xf]
      %v460 = vld [vmem:[%s297 + $0x58] sm:$0xf]
      %v461 = vld [vmem:[%s297 + $0x60] sm:$0xf]
      %v462 = vld [vmem:[%s297 + $0x64] sm:$0xf]
      %v463 = vld [vmem:[%s297 + $0x6c] sm:$0xf]
      %v464 = vld [vmem:[%s297 + $0x70] sm:$0xf]
      %v465 = vld [vmem:[%s297 + $0x78] sm:$0xf]
      %v466 = vld [vmem:[%s297 + $0x7c] sm:$0xf]
      %v467 = vld [vmem:[%s297 + $0x84] sm:$0xf]
      %v468 = vld [vmem:[%s297 + $0x88] sm:$0xf]
      %v469 = vld [vmem:[%s297 + $0x90] sm:$0xf]
      %v470 = vld [vmem:[%s297 + $0x94] sm:$0xf]
      %v471 = vld [vmem:[%s297 + $0x9c] sm:$0xf]
      %v472 = vld [vmem:[%s297 + $0xa0] sm:$0xf]
      %v473 = vld [vmem:[%s297 + $0xa8] sm:$0xf]
      %v474 = vld [vmem:[%s297 + $0xac] sm:$0xf]
      %v475 = vld [vmem:[%s297 + $0xb4] sm:$0xf]
      %v476 = vld [vmem:[%s297 + $0xb8] sm:$0xf]
      %v477 = vld [vmem:[%s301] sm:$0x3]
      %v478 = vld [vmem:[%s297 + $0x8] sm:$0x1]
      %v479 = vld [vmem:[%s297 + $0x14] sm:$0x1]
      %v480 = vld [vmem:[%s297 + $0x20] sm:$0x1]
      %v481 = vld [vmem:[%s297 + $0x2c] sm:$0x1]
      %v482 = vld [vmem:[%s297 + $0x38] sm:$0x1]
      %v483 = vld [vmem:[%s297 + $0x44] sm:$0x1]
      %v484 = vld [vmem:[%s297 + $0x50] sm:$0x1]
      %v485 = vld [vmem:[%s297 + $0x5c] sm:$0x1]
      %v486 = vld [vmem:[%s297 + $0x68] sm:$0x1]
      %v487 = vld [vmem:[%s297 + $0x74] sm:$0x1]
      %v488 = vld [vmem:[%s297 + $0x80] sm:$0x1]
      %v489 = vld [vmem:[%s297 + $0x8c] sm:$0x1]
      %v490 = vld [vmem:[%s297 + $0x98] sm:$0x1]
      %v491 = vld [vmem:[%s297 + $0xa4] sm:$0x1]
      %v492 = vld [vmem:[%s297 + $0xb0] sm:$0x1]
      %v493 = vld [vmem:[%s297 + $0xbc] sm:$0x1]
      %vm494 = vsmask.f32 3328
      %vm495 = vsmask.f32 7440
      %vm496 = vmor %vm494, %vm495
      %v498 = vshrl.u32 %v445, 16
      %v500 = vrot.slane %v498, 4
      %v501 = vshll.u32 %v445, 16
      %v503 = vrot.slane %v501, 5
      %v504 = vor.u32 %v500, %v503
      %v505 = vrot.slane %v504, 4
      %v507 = vshll.u32 %v446, 16
      %v509 = vrot.slane %v507, 5
      %v510 = vsel %vm496, %v505, %v509
      %v511 = vshrl.u32 %v446, 16
      %v513 = vrot.slane %v511, 4
      %v514 = vor.u32 %v513, %v509
      %v515 = vrot.slane %v514, 4
      %v517 = vshll.u32 %v478, 16
      %v519 = vrot.slane %v517, 5
      %v520 = vsel %vm496, %v515, %v519
      %v522 = vshrl.u32 %v447, 16
      %v524 = vrot.slane %v522, 4
      %v525 = vshll.u32 %v447, 16
      %v527 = vrot.slane %v525, 5
      %v528 = vor.u32 %v524, %v527
      %v529 = vrot.slane %v528, 4
      %v531 = vshll.u32 %v448, 16
      %v533 = vrot.slane %v531, 5
      %v534 = vsel %vm496, %v529, %v533
      %v535 = vshrl.u32 %v448, 16
      %v537 = vrot.slane %v535, 4
      %v538 = vor.u32 %v537, %v533
      %v539 = vrot.slane %v538, 4
      %v541 = vshll.u32 %v479, 16
      %v543 = vrot.slane %v541, 5
      %v544 = vsel %vm496, %v539, %v543
      %v546 = vshrl.u32 %v449, 16
      %v548 = vrot.slane %v546, 4
      %v549 = vshll.u32 %v449, 16
      %v551 = vrot.slane %v549, 5
      %v552 = vor.u32 %v548, %v551
      %v553 = vrot.slane %v552, 4
      %v555 = vshll.u32 %v450, 16
      %v557 = vrot.slane %v555, 5
      %v558 = vsel %vm496, %v553, %v557
      %v559 = vshrl.u32 %v450, 16
      %v561 = vrot.slane %v559, 4
      %v562 = vor.u32 %v561, %v557
      %v563 = vrot.slane %v562, 4
      %v565 = vshll.u32 %v480, 16
      %v567 = vrot.slane %v565, 5
      %v568 = vsel %vm496, %v563, %v567
      %v570 = vshrl.u32 %v451, 16
      %v572 = vrot.slane %v570, 4
      %v573 = vshll.u32 %v451, 16
      %v575 = vrot.slane %v573, 5
      %v576 = vor.u32 %v572, %v575
      %v577 = vrot.slane %v576, 4
      %v579 = vshll.u32 %v452, 16
      %v581 = vrot.slane %v579, 5
      %v582 = vsel %vm496, %v577, %v581
      %v583 = vshrl.u32 %v452, 16
      %v585 = vrot.slane %v583, 4
      %v586 = vor.u32 %v585, %v581
      %v587 = vrot.slane %v586, 4
      %v589 = vshll.u32 %v481, 16
      %v591 = vrot.slane %v589, 5
      %v592 = vsel %vm496, %v587, %v591
      %v594 = vshrl.u32 %v453, 16
      %v596 = vrot.slane %v594, 4
      %v597 = vshll.u32 %v453, 16
      %v599 = vrot.slane %v597, 5
      %v600 = vor.u32 %v596, %v599
      %v601 = vrot.slane %v600, 4
      %v603 = vshll.u32 %v454, 16
      %v605 = vrot.slane %v603, 5
      %v606 = vsel %vm496, %v601, %v605
      %v607 = vshrl.u32 %v454, 16
      %v609 = vrot.slane %v607, 4
      %v610 = vor.u32 %v609, %v605
      %v611 = vrot.slane %v610, 4
      %v613 = vshll.u32 %v482, 16
      %v615 = vrot.slane %v613, 5
      %v616 = vsel %vm496, %v611, %v615
      %v618 = vshrl.u32 %v455, 16
      %v620 = vrot.slane %v618, 4
      %v621 = vshll.u32 %v455, 16
      %v623 = vrot.slane %v621, 5
      %v624 = vor.u32 %v620, %v623
      %v625 = vrot.slane %v624, 4
      %v627 = vshll.u32 %v456, 16
      %v629 = vrot.slane %v627, 5
      %v630 = vsel %vm496, %v625, %v629
      %v631 = vshrl.u32 %v456, 16
      %v633 = vrot.slane %v631, 4
      %v634 = vor.u32 %v633, %v629
      %v635 = vrot.slane %v634, 4
      %v637 = vshll.u32 %v483, 16
      %v639 = vrot.slane %v637, 5
      %v640 = vsel %vm496, %v635, %v639
      %v642 = vshrl.u32 %v457, 16
      %v644 = vrot.slane %v642, 4
      %v645 = vshll.u32 %v457, 16
      %v647 = vrot.slane %v645, 5
      %v648 = vor.u32 %v644, %v647
      %v649 = vrot.slane %v648, 4
      %v651 = vshll.u32 %v458, 16
      %v653 = vrot.slane %v651, 5
      %v654 = vsel %vm496, %v649, %v653
      %v655 = vshrl.u32 %v458, 16
      %v657 = vrot.slane %v655, 4
      %v658 = vor.u32 %v657, %v653
      %v659 = vrot.slane %v658, 4
      %v661 = vshll.u32 %v484, 16
      %v663 = vrot.slane %v661, 5
      %v664 = vsel %vm496, %v659, %v663
      %v666 = vshrl.u32 %v459, 16
      %v668 = vrot.slane %v666, 4
      %v669 = vshll.u32 %v459, 16
      %v671 = vrot.slane %v669, 5
      %v672 = vor.u32 %v668, %v671
      %v673 = vrot.slane %v672, 4
      %v675 = vshll.u32 %v460, 16
      %v677 = vrot.slane %v675, 5
      %v678 = vsel %vm496, %v673, %v677
      %v679 = vshrl.u32 %v460, 16
      %v681 = vrot.slane %v679, 4
      %v682 = vor.u32 %v681, %v677
      %v683 = vrot.slane %v682, 4
      %v685 = vshll.u32 %v485, 16
      %v687 = vrot.slane %v685, 5
      %v688 = vsel %vm496, %v683, %v687
      %v690 = vshrl.u32 %v461, 16
      %v692 = vrot.slane %v690, 4
      %v693 = vshll.u32 %v461, 16
      %v695 = vrot.slane %v693, 5
      %v696 = vor.u32 %v692, %v695
      %v697 = vrot.slane %v696, 4
      %v699 = vshll.u32 %v462, 16
      %v701 = vrot.slane %v699, 5
      %v702 = vsel %vm496, %v697, %v701
      %v703 = vshrl.u32 %v462, 16
      %v705 = vrot.slane %v703, 4
      %v706 = vor.u32 %v705, %v701
      %v707 = vrot.slane %v706, 4
      %v709 = vshll.u32 %v486, 16
      %v711 = vrot.slane %v709, 5
      %v712 = vsel %vm496, %v707, %v711
      %v714 = vshrl.u32 %v463, 16
      %v716 = vrot.slane %v714, 4
      %v717 = vshll.u32 %v463, 16
      %v719 = vrot.slane %v717, 5
      %v720 = vor.u32 %v716, %v719
      %v721 = vrot.slane %v720, 4
      %v723 = vshll.u32 %v464, 16
      %v725 = vrot.slane %v723, 5
      %v726 = vsel %vm496, %v721, %v725
      %v727 = vshrl.u32 %v464, 16
      %v729 = vrot.slane %v727, 4
      %v730 = vor.u32 %v729, %v725
      %v731 = vrot.slane %v730, 4
      %v733 = vshll.u32 %v487, 16
      %v735 = vrot.slane %v733, 5
      %v736 = vsel %vm496, %v731, %v735
      %v738 = vshrl.u32 %v465, 16
      %v740 = vrot.slane %v738, 4
      %v741 = vshll.u32 %v465, 16
      %v743 = vrot.slane %v741, 5
      %v744 = vor.u32 %v740, %v743
      %v745 = vrot.slane %v744, 4
      %v747 = vshll.u32 %v466, 16
      %v749 = vrot.slane %v747, 5
      %v750 = vsel %vm496, %v745, %v749
      %v751 = vshrl.u32 %v466, 16
      %v753 = vrot.slane %v751, 4
      %v754 = vor.u32 %v753, %v749
      %v755 = vrot.slane %v754, 4
      %v757 = vshll.u32 %v488, 16
      %v759 = vrot.slane %v757, 5
      %v760 = vsel %vm496, %v755, %v759
      %v762 = vshrl.u32 %v467, 16
      %v764 = vrot.slane %v762, 4
      %v765 = vshll.u32 %v467, 16
      %v767 = vrot.slane %v765, 5
      %v768 = vor.u32 %v764, %v767
      %v769 = vrot.slane %v768, 4
      %v771 = vshll.u32 %v468, 16
      %v773 = vrot.slane %v771, 5
      %v774 = vsel %vm496, %v769, %v773
      %v775 = vshrl.u32 %v468, 16
      %v777 = vrot.slane %v775, 4
      %v778 = vor.u32 %v777, %v773
      %v779 = vrot.slane %v778, 4
      %v781 = vshll.u32 %v489, 16
      %v783 = vrot.slane %v781, 5
      %v784 = vsel %vm496, %v779, %v783
      %v786 = vshrl.u32 %v469, 16
      %v788 = vrot.slane %v786, 4
      %v789 = vshll.u32 %v469, 16
      %v791 = vrot.slane %v789, 5
      %v792 = vor.u32 %v788, %v791
      %v793 = vrot.slane %v792, 4
      %v795 = vshll.u32 %v470, 16
      %v797 = vrot.slane %v795, 5
      %v798 = vsel %vm496, %v793, %v797
      %v799 = vshrl.u32 %v470, 16
      %v801 = vrot.slane %v799, 4
      %v802 = vor.u32 %v801, %v797
      %v803 = vrot.slane %v802, 4
      %v805 = vshll.u32 %v490, 16
      %v807 = vrot.slane %v805, 5
      %v808 = vsel %vm496, %v803, %v807
      %v810 = vshrl.u32 %v471, 16
      %v812 = vrot.slane %v810, 4
      %v813 = vshll.u32 %v471, 16
      %v815 = vrot.slane %v813, 5
      %v816 = vor.u32 %v812, %v815
      %v817 = vrot.slane %v816, 4
      %v819 = vshll.u32 %v472, 16
      %v821 = vrot.slane %v819, 5
      %v822 = vsel %vm496, %v817, %v821
      %v823 = vshrl.u32 %v472, 16
      %v825 = vrot.slane %v823, 4
      %v826 = vor.u32 %v825, %v821
      %v827 = vrot.slane %v826, 4
      %v829 = vshll.u32 %v491, 16
      %v831 = vrot.slane %v829, 5
      %v832 = vsel %vm496, %v827, %v831
      %v834 = vshrl.u32 %v473, 16
      %v836 = vrot.slane %v834, 4
      %v837 = vshll.u32 %v473, 16
      %v839 = vrot.slane %v837, 5
      %v840 = vor.u32 %v836, %v839
      %v841 = vrot.slane %v840, 4
      %v843 = vshll.u32 %v474, 16
      %v845 = vrot.slane %v843, 5
      %v846 = vsel %vm496, %v841, %v845
      %v847 = vshrl.u32 %v474, 16
      %v849 = vrot.slane %v847, 4
      %v850 = vor.u32 %v849, %v845
      %v851 = vrot.slane %v850, 4
      %v853 = vshll.u32 %v492, 16
      %v855 = vrot.slane %v853, 5
      %v856 = vsel %vm496, %v851, %v855
      %v858 = vshrl.u32 %v475, 16
      %v860 = vrot.slane %v858, 4
      %v861 = vshll.u32 %v475, 16
      %v863 = vrot.slane %v861, 5
      %v864 = vor.u32 %v860, %v863
      %v865 = vrot.slane %v864, 4
      %v867 = vshll.u32 %v476, 16
      %v869 = vrot.slane %v867, 5
      %v870 = vsel %vm496, %v865, %v869
      %v871 = vshrl.u32 %v476, 16
      %v873 = vrot.slane %v871, 4
      %v874 = vor.u32 %v873, %v869
      %v875 = vrot.slane %v874, 4
      %v877 = vshll.u32 %v493, 16
      %v879 = vrot.slane %v877, 5
      %v880 = vsel %vm496, %v875, %v879
      %s881 = scalar_lea.vmem %s301, 2
      %v882 = vld [vmem:[%s881] sm:$0x3]
      %v883 = vunpack.c.l.b16 %v510
      %v884 = vunpack.c.l.b16 %v520
      %v885 = vunpack.c.l.b16 %v534
      %v886 = vunpack.c.l.b16 %v544
      %v887 = vunpack.c.l.b16 %v558
      %v888 = vunpack.c.l.b16 %v568
      %v889 = vunpack.c.l.b16 %v582
      %v890 = vunpack.c.l.b16 %v592
      %v891 = vunpack.c.l.b16 %v606
      %v892 = vunpack.c.l.b16 %v616
      %v893 = vunpack.c.l.b16 %v630
      %v894 = vunpack.c.l.b16 %v640
      %v895 = vunpack.c.l.b16 %v654
      %v896 = vunpack.c.l.b16 %v664
      %v897 = vunpack.c.l.b16 %v678
      %v898 = vunpack.c.l.b16 %v688
      %v899 = vunpack.c.l.b16 %v702
      %v900 = vunpack.c.l.b16 %v712
      %v901 = vunpack.c.l.b16 %v726
      %v902 = vunpack.c.l.b16 %v736
      %v903 = vunpack.c.l.b16 %v750
      %v904 = vunpack.c.l.b16 %v760
      %v905 = vunpack.c.l.b16 %v774
      %v906 = vunpack.c.l.b16 %v784
      %v907 = vunpack.c.l.b16 %v798
      %v908 = vunpack.c.l.b16 %v808
      %v909 = vunpack.c.l.b16 %v822
      %v910 = vunpack.c.l.b16 %v832
      %v911 = vunpack.c.l.b16 %v846
      %v912 = vunpack.c.l.b16 %v856
      %v913 = vunpack.c.l.b16 %v870
      %v914 = vunpack.c.l.b16 %v880
      %v915 = vpack.c.b16 %v884, %v883
      %v916 = vpack.c.b16 %v886, %v885
      %v917 = vpack.c.b16 %v888, %v887
      %v918 = vpack.c.b16 %v890, %v889
      %v919 = vpack.c.b16 %v892, %v891
      %v920 = vpack.c.b16 %v894, %v893
      %v921 = vpack.c.b16 %v896, %v895
      %v922 = vpack.c.b16 %v898, %v897
      %v923 = vpack.c.b16 %v900, %v899
      %v924 = vpack.c.b16 %v902, %v901
      %v925 = vpack.c.b16 %v904, %v903
      %v926 = vpack.c.b16 %v906, %v905
      %v927 = vpack.c.b16 %v908, %v907
      %v928 = vpack.c.b16 %v910, %v909
      %v929 = vpack.c.b16 %v912, %v911
      %v930 = vpack.c.b16 %v914, %v913
      %vm931 = vcmask 31744
      %v933 = vsel %vm931, %v915, 0
      %v936 = vsel %vm931, %v916, 0
      %v939 = vsel %vm931, %v917, 0
      %v942 = vsel %vm931, %v918, 0
      %v945 = vsel %vm931, %v919, 0
      %v948 = vsel %vm931, %v920, 0
      %v951 = vsel %vm931, %v921, 0
      %v954 = vsel %vm931, %v922, 0
      %v957 = vsel %vm931, %v923, 0
      %v960 = vsel %vm931, %v924, 0
      %v963 = vsel %vm931, %v925, 0
      %v966 = vsel %vm931, %v926, 0
      %v969 = vsel %vm931, %v927, 0
      %v972 = vsel %vm931, %v928, 0
      %v975 = vsel %vm931, %v929, 0
      %v978 = vsel %vm931, %v930, 0
      %vm980 = vcmask 1041408
      %v982 = vsel %vm980, %v882, 0
      %984 = vmatpush.bf16.msra.mxu0 0
      %985 = vmatpush.bf16.msra.mxu0 0
      %986 = vmatpush.bf16.msra.mxu0 0
      %987 = vmatpush.bf16.msra.mxu0 0
      %988 = vmatpush.bf16.msra.mxu0 0
      %989 = vmatpush.bf16.msra.mxu0 0
      %990 = vmatpush.bf16.msra.mxu0 0
      %991 = vmatpush.bf16.msra.mxu0 %v982
      %992 = vmatmul.bf16.gmra.mxu0 %v933
      %v993 = vpop.f32.mrf.mxu0
      %v994 = vadd.f32 0.0, %v993
      %v995 = vpop.f32.mrf.mxu0
      %v996 = vadd.f32 0.0, %v995
      %997 = vmatmul.bf16.gmra.mxu0 %v936
      %v998 = vpop.f32.mrf.mxu0
      %v999 = vadd.f32 0.0, %v998
      %v1000 = vpop.f32.mrf.mxu0
      %v1001 = vadd.f32 0.0, %v1000
      %1002 = vmatmul.bf16.gmra.mxu0 %v939
      %v1003 = vpop.f32.mrf.mxu0
      %v1004 = vadd.f32 0.0, %v1003
      %v1005 = vpop.f32.mrf.mxu0
      %v1006 = vadd.f32 0.0, %v1005
      %1007 = vmatmul.bf16.gmra.mxu0 %v942
      %v1008 = vpop.f32.mrf.mxu0
      %v1009 = vadd.f32 0.0, %v1008
      %v1010 = vpop.f32.mrf.mxu0
      %v1011 = vadd.f32 0.0, %v1010
      %1012 = vmatmul.bf16.gmra.mxu0 %v945
      %v1013 = vpop.f32.mrf.mxu0
      %v1014 = vadd.f32 0.0, %v1013
      %v1015 = vpop.f32.mrf.mxu0
      %v1016 = vadd.f32 0.0, %v1015
      %1017 = vmatmul.bf16.gmra.mxu0 %v948
      %v1018 = vpop.f32.mrf.mxu0
      %v1019 = vadd.f32 0.0, %v1018
      %v1020 = vpop.f32.mrf.mxu0
      %v1021 = vadd.f32 0.0, %v1020
      %1022 = vmatmul.bf16.gmra.mxu0 %v951
      %v1023 = vpop.f32.mrf.mxu0
      %v1024 = vadd.f32 0.0, %v1023
      %v1025 = vpop.f32.mrf.mxu0
      %v1026 = vadd.f32 0.0, %v1025
      %1027 = vmatmul.bf16.gmra.mxu0 %v954
      %v1028 = vpop.f32.mrf.mxu0
      %v1029 = vadd.f32 0.0, %v1028
      %v1030 = vpop.f32.mrf.mxu0
      %v1031 = vadd.f32 0.0, %v1030
      %1032 = vmatmul.bf16.gmra.mxu0 %v957
      %v1033 = vpop.f32.mrf.mxu0
      %v1034 = vadd.f32 0.0, %v1033
      %v1035 = vpop.f32.mrf.mxu0
      %v1036 = vadd.f32 0.0, %v1035
      %1037 = vmatmul.bf16.gmra.mxu0 %v960
      %v1038 = vpop.f32.mrf.mxu0
      %v1039 = vadd.f32 0.0, %v1038
      %v1040 = vpop.f32.mrf.mxu0
      %v1041 = vadd.f32 0.0, %v1040
      %1042 = vmatmul.bf16.gmra.mxu0 %v963
      %v1043 = vpop.f32.mrf.mxu0
      %v1044 = vadd.f32 0.0, %v1043
      %v1045 = vpop.f32.mrf.mxu0
      %v1046 = vadd.f32 0.0, %v1045
      %1047 = vmatmul.bf16.gmra.mxu0 %v966
      %v1048 = vpop.f32.mrf.mxu0
      %v1049 = vadd.f32 0.0, %v1048
      %v1050 = vpop.f32.mrf.mxu0
      %v1051 = vadd.f32 0.0, %v1050
      %1052 = vmatmul.bf16.gmra.mxu0 %v969
      %v1053 = vpop.f32.mrf.mxu0
      %v1054 = vadd.f32 0.0, %v1053
      %v1055 = vpop.f32.mrf.mxu0
      %v1056 = vadd.f32 0.0, %v1055
      %1057 = vmatmul.bf16.gmra.mxu0 %v972
      %v1058 = vpop.f32.mrf.mxu0
      %v1059 = vadd.f32 0.0, %v1058
      %v1060 = vpop.f32.mrf.mxu0
      %v1061 = vadd.f32 0.0, %v1060
      %1062 = vmatmul.bf16.gmra.mxu0 %v975
      %v1063 = vpop.f32.mrf.mxu0
      %v1064 = vadd.f32 0.0, %v1063
      %v1065 = vpop.f32.mrf.mxu0
      %v1066 = vadd.f32 0.0, %v1065
      %1067 = vmatmul.bf16.gmra.mxu0 %v978
      %v1068 = vpop.f32.mrf.mxu0
      %v1069 = vadd.f32 0.0, %v1068
      %v1070 = vpop.f32.mrf.mxu0
      %v1071 = vadd.f32 0.0, %v1070
      %1072 = vdwg.mxu0
      %v1105 = vunpack.c.l.b16 %v445
      %v1106 = vunpack.c.l.b16 %v446
      %v1107 = vunpack.c.l.b16 %v447
      %v1108 = vunpack.c.l.b16 %v448
      %v1109 = vunpack.c.l.b16 %v449
      %v1110 = vunpack.c.l.b16 %v450
      %v1111 = vunpack.c.l.b16 %v451
      %v1112 = vunpack.c.l.b16 %v452
      %v1113 = vunpack.c.l.b16 %v453
      %v1114 = vunpack.c.l.b16 %v454
      %v1115 = vunpack.c.l.b16 %v455
      %v1116 = vunpack.c.l.b16 %v456
      %v1117 = vunpack.c.l.b16 %v457
      %v1118 = vunpack.c.l.b16 %v458
      %v1119 = vunpack.c.l.b16 %v459
      %v1120 = vunpack.c.l.b16 %v460
      %v1121 = vunpack.c.l.b16 %v461
      %v1122 = vunpack.c.l.b16 %v462
      %v1123 = vunpack.c.l.b16 %v463
      %v1124 = vunpack.c.l.b16 %v464
      %v1125 = vunpack.c.l.b16 %v465
      %v1126 = vunpack.c.l.b16 %v466
      %v1127 = vunpack.c.l.b16 %v467
      %v1128 = vunpack.c.l.b16 %v468
      %v1129 = vunpack.c.l.b16 %v469
      %v1130 = vunpack.c.l.b16 %v470
      %v1131 = vunpack.c.l.b16 %v471
      %v1132 = vunpack.c.l.b16 %v472
      %v1133 = vunpack.c.l.b16 %v473
      %v1134 = vunpack.c.l.b16 %v474
      %v1135 = vunpack.c.l.b16 %v475
      %v1136 = vunpack.c.l.b16 %v476
      %v1137 = vpack.c.b16 %v1106, %v1105
      %v1138 = vpack.c.b16 %v1108, %v1107
      %v1139 = vpack.c.b16 %v1110, %v1109
      %v1140 = vpack.c.b16 %v1112, %v1111
      %v1141 = vpack.c.b16 %v1114, %v1113
      %v1142 = vpack.c.b16 %v1116, %v1115
      %v1143 = vpack.c.b16 %v1118, %v1117
      %v1144 = vpack.c.b16 %v1120, %v1119
      %v1145 = vpack.c.b16 %v1122, %v1121
      %v1146 = vpack.c.b16 %v1124, %v1123
      %v1147 = vpack.c.b16 %v1126, %v1125
      %v1148 = vpack.c.b16 %v1128, %v1127
      %v1149 = vpack.c.b16 %v1130, %v1129
      %v1150 = vpack.c.b16 %v1132, %v1131
      %v1151 = vpack.c.b16 %v1134, %v1133
      %v1152 = vpack.c.b16 %v1136, %v1135
      %v1154 = vsel %vm931, %v1137, 0
      %v1157 = vsel %vm931, %v1138, 0
      %v1160 = vsel %vm931, %v1139, 0
      %v1163 = vsel %vm931, %v1140, 0
      %v1166 = vsel %vm931, %v1141, 0
      %v1169 = vsel %vm931, %v1142, 0
      %v1172 = vsel %vm931, %v1143, 0
      %v1175 = vsel %vm931, %v1144, 0
      %v1178 = vsel %vm931, %v1145, 0
      %v1181 = vsel %vm931, %v1146, 0
      %v1184 = vsel %vm931, %v1147, 0
      %v1187 = vsel %vm931, %v1148, 0
      %v1190 = vsel %vm931, %v1149, 0
      %v1193 = vsel %vm931, %v1150, 0
      %v1196 = vsel %vm931, %v1151, 0
      %v1199 = vsel %vm931, %v1152, 0
      %v1202 = vsel %vm980, %v477, 0
      %1204 = vmatpush.bf16.msra.mxu0 0
      %1205 = vmatpush.bf16.msra.mxu0 0
      %1206 = vmatpush.bf16.msra.mxu0 0
      %1207 = vmatpush.bf16.msra.mxu0 0
      %1208 = vmatpush.bf16.msra.mxu0 0
      %1209 = vmatpush.bf16.msra.mxu0 0
      %1210 = vmatpush.bf16.msra.mxu0 0
      %1211 = vmatpush.bf16.msra.mxu0 %v1202
      %1212 = vmatmul.bf16.gmra.mxu0 %v1154
      %v1213 = vpop.f32.mrf.mxu0
      %v1214 = vadd.f32 %v994, %v1213
      %v1215 = vpop.f32.mrf.mxu0
      %v1216 = vadd.f32 %v996, %v1215
      %1217 = vmatmul.bf16.gmra.mxu0 %v1157
      %v1218 = vpop.f32.mrf.mxu0
      %v1219 = vadd.f32 %v999, %v1218
      %v1220 = vpop.f32.mrf.mxu0
      %v1221 = vadd.f32 %v1001, %v1220
      %1222 = vmatmul.bf16.gmra.mxu0 %v1160
      %v1223 = vpop.f32.mrf.mxu0
      %v1224 = vadd.f32 %v1004, %v1223
      %v1225 = vpop.f32.mrf.mxu0
      %v1226 = vadd.f32 %v1006, %v1225
      %1227 = vmatmul.bf16.gmra.mxu0 %v1163
      %v1228 = vpop.f32.mrf.mxu0
      %v1229 = vadd.f32 %v1009, %v1228
      %v1230 = vpop.f32.mrf.mxu0
      %v1231 = vadd.f32 %v1011, %v1230
      %1232 = vmatmul.bf16.gmra.mxu0 %v1166
      %v1233 = vpop.f32.mrf.mxu0
      %v1234 = vadd.f32 %v1014, %v1233
      %v1235 = vpop.f32.mrf.mxu0
      %v1236 = vadd.f32 %v1016, %v1235
      %1237 = vmatmul.bf16.gmra.mxu0 %v1169
      %v1238 = vpop.f32.mrf.mxu0
      %v1239 = vadd.f32 %v1019, %v1238
      %v1240 = vpop.f32.mrf.mxu0
      %v1241 = vadd.f32 %v1021, %v1240
      %1242 = vmatmul.bf16.gmra.mxu0 %v1172
      %v1243 = vpop.f32.mrf.mxu0
      %v1244 = vadd.f32 %v1024, %v1243
      %v1245 = vpop.f32.mrf.mxu0
      %v1246 = vadd.f32 %v1026, %v1245
      %1247 = vmatmul.bf16.gmra.mxu0 %v1175
      %v1248 = vpop.f32.mrf.mxu0
      %v1249 = vadd.f32 %v1029, %v1248
      %v1250 = vpop.f32.mrf.mxu0
      %v1251 = vadd.f32 %v1031, %v1250
      %1252 = vmatmul.bf16.gmra.mxu0 %v1178
      %v1253 = vpop.f32.mrf.mxu0
      %v1254 = vadd.f32 %v1034, %v1253
      %v1255 = vpop.f32.mrf.mxu0
      %v1256 = vadd.f32 %v1036, %v1255
      %1257 = vmatmul.bf16.gmra.mxu0 %v1181
      %v1258 = vpop.f32.mrf.mxu0
      %v1259 = vadd.f32 %v1039, %v1258
      %v1260 = vpop.f32.mrf.mxu0
      %v1261 = vadd.f32 %v1041, %v1260
      %1262 = vmatmul.bf16.gmra.mxu0 %v1184
      %v1263 = vpop.f32.mrf.mxu0
      %v1264 = vadd.f32 %v1044, %v1263
      %v1265 = vpop.f32.mrf.mxu0
      %v1266 = vadd.f32 %v1046, %v1265
      %1267 = vmatmul.bf16.gmra.mxu0 %v1187
      %v1268 = vpop.f32.mrf.mxu0
      %v1269 = vadd.f32 %v1049, %v1268
      %v1270 = vpop.f32.mrf.mxu0
      %v1271 = vadd.f32 %v1051, %v1270
      %1272 = vmatmul.bf16.gmra.mxu0 %v1190
      %v1273 = vpop.f32.mrf.mxu0
      %v1274 = vadd.f32 %v1054, %v1273
      %v1275 = vpop.f32.mrf.mxu0
      %v1276 = vadd.f32 %v1056, %v1275
      %1277 = vmatmul.bf16.gmra.mxu0 %v1193
      %v1278 = vpop.f32.mrf.mxu0
      %v1279 = vadd.f32 %v1059, %v1278
      %v1280 = vpop.f32.mrf.mxu0
      %v1281 = vadd.f32 %v1061, %v1280
      %1282 = vmatmul.bf16.gmra.mxu0 %v1196
      %v1283 = vpop.f32.mrf.mxu0
      %v1284 = vadd.f32 %v1064, %v1283
      %v1285 = vpop.f32.mrf.mxu0
      %v1286 = vadd.f32 %v1066, %v1285
      %1287 = vmatmul.bf16.gmra.mxu0 %v1199
      %v1288 = vpop.f32.mrf.mxu0
      %v1289 = vadd.f32 %v1069, %v1288
      %v1290 = vpop.f32.mrf.mxu0
      %v1291 = vadd.f32 %v1071, %v1290
      %1292 = vdwg.mxu0
      %v1293 = vld [vmem:[%s297] sm:$0xe]
      %v1294 = vld [vmem:[%s297 + $0xc] sm:$0xe]
      %v1295 = vld [vmem:[%s297 + $0x18] sm:$0xe]
      %v1296 = vld [vmem:[%s297 + $0x24] sm:$0xe]
      %v1297 = vld [vmem:[%s297 + $0x30] sm:$0xe]
      %v1298 = vld [vmem:[%s297 + $0x3c] sm:$0xe]
      %v1299 = vld [vmem:[%s297 + $0x48] sm:$0xe]
      %v1300 = vld [vmem:[%s297 + $0x54] sm:$0xe]
      %v1301 = vld [vmem:[%s297 + $0x60] sm:$0xe]
      %v1302 = vld [vmem:[%s297 + $0x6c] sm:$0xe]
      %v1303 = vld [vmem:[%s297 + $0x78] sm:$0xe]
      %v1304 = vld [vmem:[%s297 + $0x84] sm:$0xe]
      %v1305 = vld [vmem:[%s297 + $0x90] sm:$0xe]
      %v1306 = vld [vmem:[%s297 + $0x9c] sm:$0xe]
      %v1307 = vld [vmem:[%s297 + $0xa8] sm:$0xe]
      %v1308 = vld [vmem:[%s297 + $0xb4] sm:$0xe]
      %vm1341 = vcmask 1042432
      %vm1342 = vcmask 1046532
      %vm1343 = vmor %vm1341, %vm1342
      %v1344 = vrot.slane %v1293, 5
      %v1345 = vrot.slane %v1344, 4
      %v1346 = vrot.slane %v446, 5
      %v1347 = vsel %vm1343, %v1345, %v1346
      %v1348 = vrot.slane %v1346, 4
      %v1349 = vrot.slane %v478, 5
      %v1350 = vsel %vm1343, %v1348, %v1349
      %v1351 = vrot.slane %v1294, 5
      %v1352 = vrot.slane %v1351, 4
      %v1353 = vrot.slane %v448, 5
      %v1354 = vsel %vm1343, %v1352, %v1353
      %v1355 = vrot.slane %v1353, 4
      %v1356 = vrot.slane %v479, 5
      %v1357 = vsel %vm1343, %v1355, %v1356
      %v1358 = vrot.slane %v1295, 5
      %v1359 = vrot.slane %v1358, 4
      %v1360 = vrot.slane %v450, 5
      %v1361 = vsel %vm1343, %v1359, %v1360
      %v1362 = vrot.slane %v1360, 4
      %v1363 = vrot.slane %v480, 5
      %v1364 = vsel %vm1343, %v1362, %v1363
      %v1365 = vrot.slane %v1296, 5
      %v1366 = vrot.slane %v1365, 4
      %v1367 = vrot.slane %v452, 5
      %v1368 = vsel %vm1343, %v1366, %v1367
      %v1369 = vrot.slane %v1367, 4
      %v1370 = vrot.slane %v481, 5
      %v1371 = vsel %vm1343, %v1369, %v1370
      %v1372 = vrot.slane %v1297, 5
      %v1373 = vrot.slane %v1372, 4
      %v1374 = vrot.slane %v454, 5
      %v1375 = vsel %vm1343, %v1373, %v1374
      %v1376 = vrot.slane %v1374, 4
      %v1377 = vrot.slane %v482, 5
      %v1378 = vsel %vm1343, %v1376, %v1377
      %v1379 = vrot.slane %v1298, 5
      %v1380 = vrot.slane %v1379, 4
      %v1381 = vrot.slane %v456, 5
      %v1382 = vsel %vm1343, %v1380, %v1381
      %v1383 = vrot.slane %v1381, 4
      %v1384 = vrot.slane %v483, 5
      %v1385 = vsel %vm1343, %v1383, %v1384
      %v1386 = vrot.slane %v1299, 5
      %v1387 = vrot.slane %v1386, 4
      %v1388 = vrot.slane %v458, 5
      %v1389 = vsel %vm1343, %v1387, %v1388
      %v1390 = vrot.slane %v1388, 4
      %v1391 = vrot.slane %v484, 5
      %v1392 = vsel %vm1343, %v1390, %v1391
      %v1393 = vrot.slane %v1300, 5
      %v1394 = vrot.slane %v1393, 4
      %v1395 = vrot.slane %v460, 5
      %v1396 = vsel %vm1343, %v1394, %v1395
      %v1397 = vrot.slane %v1395, 4
      %v1398 = vrot.slane %v485, 5
      %v1399 = vsel %vm1343, %v1397, %v1398
      %v1400 = vrot.slane %v1301, 5
      %v1401 = vrot.slane %v1400, 4
      %v1402 = vrot.slane %v462, 5
      %v1403 = vsel %vm1343, %v1401, %v1402
      %v1404 = vrot.slane %v1402, 4
      %v1405 = vrot.slane %v486, 5
      %v1406 = vsel %vm1343, %v1404, %v1405
      %v1407 = vrot.slane %v1302, 5
      %v1408 = vrot.slane %v1407, 4
      %v1409 = vrot.slane %v464, 5
      %v1410 = vsel %vm1343, %v1408, %v1409
      %v1411 = vrot.slane %v1409, 4
      %v1412 = vrot.slane %v487, 5
      %v1413 = vsel %vm1343, %v1411, %v1412
      %v1414 = vrot.slane %v1303, 5
      %v1415 = vrot.slane %v1414, 4
      %v1416 = vrot.slane %v466, 5
      %v1417 = vsel %vm1343, %v1415, %v1416
      %v1418 = vrot.slane %v1416, 4
      %v1419 = vrot.slane %v488, 5
      %v1420 = vsel %vm1343, %v1418, %v1419
      %v1421 = vrot.slane %v1304, 5
      %v1422 = vrot.slane %v1421, 4
      %v1423 = vrot.slane %v468, 5
      %v1424 = vsel %vm1343, %v1422, %v1423
      %v1425 = vrot.slane %v1423, 4
      %v1426 = vrot.slane %v489, 5
      %v1427 = vsel %vm1343, %v1425, %v1426
      %v1428 = vrot.slane %v1305, 5
      %v1429 = vrot.slane %v1428, 4
      %v1430 = vrot.slane %v470, 5
      %v1431 = vsel %vm1343, %v1429, %v1430
      %v1432 = vrot.slane %v1430, 4
      %v1433 = vrot.slane %v490, 5
      %v1434 = vsel %vm1343, %v1432, %v1433
      %v1435 = vrot.slane %v1306, 5
      %v1436 = vrot.slane %v1435, 4
      %v1437 = vrot.slane %v472, 5
      %v1438 = vsel %vm1343, %v1436, %v1437
      %v1439 = vrot.slane %v1437, 4
      %v1440 = vrot.slane %v491, 5
      %v1441 = vsel %vm1343, %v1439, %v1440
      %v1442 = vrot.slane %v1307, 5
      %v1443 = vrot.slane %v1442, 4
      %v1444 = vrot.slane %v474, 5
      %v1445 = vsel %vm1343, %v1443, %v1444
      %v1446 = vrot.slane %v1444, 4
      %v1447 = vrot.slane %v492, 5
      %v1448 = vsel %vm1343, %v1446, %v1447
      %v1449 = vrot.slane %v1308, 5
      %v1450 = vrot.slane %v1449, 4
      %v1451 = vrot.slane %v476, 5
      %v1452 = vsel %vm1343, %v1450, %v1451
      %v1453 = vrot.slane %v1451, 4
      %v1454 = vrot.slane %v493, 5
      %v1455 = vsel %vm1343, %v1453, %v1454
      %s1456 = scalar_lea.vmem %s301, 4
      %v1457 = vld [vmem:[%s1456] sm:$0x3]
      %v1458 = vunpack.c.l.b16 %v1347
      %v1459 = vunpack.c.l.b16 %v1350
      %v1460 = vunpack.c.l.b16 %v1354
      %v1461 = vunpack.c.l.b16 %v1357
      %v1462 = vunpack.c.l.b16 %v1361
      %v1463 = vunpack.c.l.b16 %v1364
      %v1464 = vunpack.c.l.b16 %v1368
      %v1465 = vunpack.c.l.b16 %v1371
      %v1466 = vunpack.c.l.b16 %v1375
      %v1467 = vunpack.c.l.b16 %v1378
      %v1468 = vunpack.c.l.b16 %v1382
      %v1469 = vunpack.c.l.b16 %v1385
      %v1470 = vunpack.c.l.b16 %v1389
      %v1471 = vunpack.c.l.b16 %v1392
      %v1472 = vunpack.c.l.b16 %v1396
      %v1473 = vunpack.c.l.b16 %v1399
      %v1474 = vunpack.c.l.b16 %v1403
      %v1475 = vunpack.c.l.b16 %v1406
      %v1476 = vunpack.c.l.b16 %v1410
      %v1477 = vunpack.c.l.b16 %v1413
      %v1478 = vunpack.c.l.b16 %v1417
      %v1479 = vunpack.c.l.b16 %v1420
      %v1480 = vunpack.c.l.b16 %v1424
      %v1481 = vunpack.c.l.b16 %v1427
      %v1482 = vunpack.c.l.b16 %v1431
      %v1483 = vunpack.c.l.b16 %v1434
      %v1484 = vunpack.c.l.b16 %v1438
      %v1485 = vunpack.c.l.b16 %v1441
      %v1486 = vunpack.c.l.b16 %v1445
      %v1487 = vunpack.c.l.b16 %v1448
      %v1488 = vunpack.c.l.b16 %v1452
      %v1489 = vunpack.c.l.b16 %v1455
      %v1490 = vpack.c.b16 %v1459, %v1458
      %v1491 = vpack.c.b16 %v1461, %v1460
      %v1492 = vpack.c.b16 %v1463, %v1462
      %v1493 = vpack.c.b16 %v1465, %v1464
      %v1494 = vpack.c.b16 %v1467, %v1466
      %v1495 = vpack.c.b16 %v1469, %v1468
      %v1496 = vpack.c.b16 %v1471, %v1470
      %v1497 = vpack.c.b16 %v1473, %v1472
      %v1498 = vpack.c.b16 %v1475, %v1474
      %v1499 = vpack.c.b16 %v1477, %v1476
      %v1500 = vpack.c.b16 %v1479, %v1478
      %v1501 = vpack.c.b16 %v1481, %v1480
      %v1502 = vpack.c.b16 %v1483, %v1482
      %v1503 = vpack.c.b16 %v1485, %v1484
      %v1504 = vpack.c.b16 %v1487, %v1486
      %v1505 = vpack.c.b16 %v1489, %v1488
      %v1507 = vsel %vm931, %v1490, 0
      %v1510 = vsel %vm931, %v1491, 0
      %v1513 = vsel %vm931, %v1492, 0
      %v1516 = vsel %vm931, %v1493, 0
      %v1519 = vsel %vm931, %v1494, 0
      %v1522 = vsel %vm931, %v1495, 0
      %v1525 = vsel %vm931, %v1496, 0
      %v1528 = vsel %vm931, %v1497, 0
      %v1531 = vsel %vm931, %v1498, 0
      %v1534 = vsel %vm931, %v1499, 0
      %v1537 = vsel %vm931, %v1500, 0
      %v1540 = vsel %vm931, %v1501, 0
      %v1543 = vsel %vm931, %v1502, 0
      %v1546 = vsel %vm931, %v1503, 0
      %v1549 = vsel %vm931, %v1504, 0
      %v1552 = vsel %vm931, %v1505, 0
      %v1555 = vsel %vm980, %v1457, 0
      %1557 = vmatpush.bf16.msra.mxu0 0
      %1558 = vmatpush.bf16.msra.mxu0 0
      %1559 = vmatpush.bf16.msra.mxu0 0
      %1560 = vmatpush.bf16.msra.mxu0 0
      %1561 = vmatpush.bf16.msra.mxu0 0
      %1562 = vmatpush.bf16.msra.mxu0 0
      %1563 = vmatpush.bf16.msra.mxu0 0
      %1564 = vmatpush.bf16.msra.mxu0 %v1555
      %1565 = vmatmul.bf16.gmra.mxu0 %v1507
      %v1566 = vpop.f32.mrf.mxu0
      %v1567 = vadd.f32 0.0, %v1566
      %v1568 = vpop.f32.mrf.mxu0
      %v1569 = vadd.f32 0.0, %v1568
      %1570 = vmatmul.bf16.gmra.mxu0 %v1510
      %v1571 = vpop.f32.mrf.mxu0
      %v1572 = vadd.f32 0.0, %v1571
      %v1573 = vpop.f32.mrf.mxu0
      %v1574 = vadd.f32 0.0, %v1573
      %1575 = vmatmul.bf16.gmra.mxu0 %v1513
      %v1576 = vpop.f32.mrf.mxu0
      %v1577 = vadd.f32 0.0, %v1576
      %v1578 = vpop.f32.mrf.mxu0
      %v1579 = vadd.f32 0.0, %v1578
      %1580 = vmatmul.bf16.gmra.mxu0 %v1516
      %v1581 = vpop.f32.mrf.mxu0
      %v1582 = vadd.f32 0.0, %v1581
      %v1583 = vpop.f32.mrf.mxu0
      %v1584 = vadd.f32 0.0, %v1583
      %1585 = vmatmul.bf16.gmra.mxu0 %v1519
      %v1586 = vpop.f32.mrf.mxu0
      %v1587 = vadd.f32 0.0, %v1586
      %v1588 = vpop.f32.mrf.mxu0
      %v1589 = vadd.f32 0.0, %v1588
      %1590 = vmatmul.bf16.gmra.mxu0 %v1522
      %v1591 = vpop.f32.mrf.mxu0
      %v1592 = vadd.f32 0.0, %v1591
      %v1593 = vpop.f32.mrf.mxu0
      %v1594 = vadd.f32 0.0, %v1593
      %1595 = vmatmul.bf16.gmra.mxu0 %v1525
      %v1596 = vpop.f32.mrf.mxu0
      %v1597 = vadd.f32 0.0, %v1596
      %v1598 = vpop.f32.mrf.mxu0
      %v1599 = vadd.f32 0.0, %v1598
      %1600 = vmatmul.bf16.gmra.mxu0 %v1528
      %v1601 = vpop.f32.mrf.mxu0
      %v1602 = vadd.f32 0.0, %v1601
      %v1603 = vpop.f32.mrf.mxu0
      %v1604 = vadd.f32 0.0, %v1603
      %1605 = vmatmul.bf16.gmra.mxu0 %v1531
      %v1606 = vpop.f32.mrf.mxu0
      %v1607 = vadd.f32 0.0, %v1606
      %v1608 = vpop.f32.mrf.mxu0
      %v1609 = vadd.f32 0.0, %v1608
      %1610 = vmatmul.bf16.gmra.mxu0 %v1534
      %v1611 = vpop.f32.mrf.mxu0
      %v1612 = vadd.f32 0.0, %v1611
      %v1613 = vpop.f32.mrf.mxu0
      %v1614 = vadd.f32 0.0, %v1613
      %1615 = vmatmul.bf16.gmra.mxu0 %v1537
      %v1616 = vpop.f32.mrf.mxu0
      %v1617 = vadd.f32 0.0, %v1616
      %v1618 = vpop.f32.mrf.mxu0
      %v1619 = vadd.f32 0.0, %v1618
      %1620 = vmatmul.bf16.gmra.mxu0 %v1540
      %v1621 = vpop.f32.mrf.mxu0
      %v1622 = vadd.f32 0.0, %v1621
      %v1623 = vpop.f32.mrf.mxu0
      %v1624 = vadd.f32 0.0, %v1623
      %1625 = vmatmul.bf16.gmra.mxu0 %v1543
      %v1626 = vpop.f32.mrf.mxu0
      %v1627 = vadd.f32 0.0, %v1626
      %v1628 = vpop.f32.mrf.mxu0
      %v1629 = vadd.f32 0.0, %v1628
      %1630 = vmatmul.bf16.gmra.mxu0 %v1546
      %v1631 = vpop.f32.mrf.mxu0
      %v1632 = vadd.f32 0.0, %v1631
      %v1633 = vpop.f32.mrf.mxu0
      %v1634 = vadd.f32 0.0, %v1633
      %1635 = vmatmul.bf16.gmra.mxu0 %v1549
      %v1636 = vpop.f32.mrf.mxu0
      %v1637 = vadd.f32 0.0, %v1636
      %v1638 = vpop.f32.mrf.mxu0
      %v1639 = vadd.f32 0.0, %v1638
      %1640 = vmatmul.bf16.gmra.mxu0 %v1552
      %v1641 = vpop.f32.mrf.mxu0
      %v1642 = vadd.f32 0.0, %v1641
      %v1643 = vpop.f32.mrf.mxu0
      %v1644 = vadd.f32 0.0, %v1643
      %1645 = vdwg.mxu0
      %v1646 = vadd.f32 %v1214, %v1567
      %v1647 = vadd.f32 %v1216, %v1569
      %v1648 = vadd.f32 %v1219, %v1572
      %v1649 = vadd.f32 %v1221, %v1574
      %v1650 = vadd.f32 %v1224, %v1577
      %v1651 = vadd.f32 %v1226, %v1579
      %v1652 = vadd.f32 %v1229, %v1582
      %v1653 = vadd.f32 %v1231, %v1584
      %v1654 = vadd.f32 %v1234, %v1587
      %v1655 = vadd.f32 %v1236, %v1589
      %v1656 = vadd.f32 %v1239, %v1592
      %v1657 = vadd.f32 %v1241, %v1594
      %v1658 = vadd.f32 %v1244, %v1597
      %v1659 = vadd.f32 %v1246, %v1599
      %v1660 = vadd.f32 %v1249, %v1602
      %v1661 = vadd.f32 %v1251, %v1604
      %v1662 = vadd.f32 %v1254, %v1607
      %v1663 = vadd.f32 %v1256, %v1609
      %v1664 = vadd.f32 %v1259, %v1612
      %v1665 = vadd.f32 %v1261, %v1614
      %v1666 = vadd.f32 %v1264, %v1617
      %v1667 = vadd.f32 %v1266, %v1619
      %v1668 = vadd.f32 %v1269, %v1622
      %v1669 = vadd.f32 %v1271, %v1624
      %v1670 = vadd.f32 %v1274, %v1627
      %v1671 = vadd.f32 %v1276, %v1629
      %v1672 = vadd.f32 %v1279, %v1632
      %v1673 = vadd.f32 %v1281, %v1634
      %v1674 = vadd.f32 %v1284, %v1637
      %v1675 = vadd.f32 %v1286, %v1639
      %v1676 = vadd.f32 %v1289, %v1642
      %v1677 = vadd.f32 %v1291, %v1644
      %s1678 = scalar_lea.vmem %s297, 12
      %v1679 = vld [vmem:[%s1678] sm:$0xf]
      %v1680 = vld [vmem:[%s1678 + $0x4] sm:$0xf]
      %v1681 = vld [vmem:[%s1678 + $0xc] sm:$0xf]
      %v1682 = vld [vmem:[%s1678 + $0x10] sm:$0xf]
      %v1683 = vld [vmem:[%s1678 + $0x18] sm:$0xf]
      %v1684 = vld [vmem:[%s1678 + $0x1c] sm:$0xf]
      %v1685 = vld [vmem:[%s1678 + $0x24] sm:$0xf]
      %v1686 = vld [vmem:[%s1678 + $0x28] sm:$0xf]
      %v1687 = vld [vmem:[%s1678 + $0x30] sm:$0xf]
      %v1688 = vld [vmem:[%s1678 + $0x34] sm:$0xf]
      %v1689 = vld [vmem:[%s1678 + $0x3c] sm:$0xf]
      %v1690 = vld [vmem:[%s1678 + $0x40] sm:$0xf]
      %v1691 = vld [vmem:[%s1678 + $0x48] sm:$0xf]
      %v1692 = vld [vmem:[%s1678 + $0x4c] sm:$0xf]
      %v1693 = vld [vmem:[%s1678 + $0x54] sm:$0xf]
      %v1694 = vld [vmem:[%s1678 + $0x58] sm:$0xf]
      %v1695 = vld [vmem:[%s1678 + $0x60] sm:$0xf]
      %v1696 = vld [vmem:[%s1678 + $0x64] sm:$0xf]
      %v1697 = vld [vmem:[%s1678 + $0x6c] sm:$0xf]
      %v1698 = vld [vmem:[%s1678 + $0x70] sm:$0xf]
      %v1699 = vld [vmem:[%s1678 + $0x78] sm:$0xf]
      %v1700 = vld [vmem:[%s1678 + $0x7c] sm:$0xf]
      %v1701 = vld [vmem:[%s1678 + $0x84] sm:$0xf]
      %v1702 = vld [vmem:[%s1678 + $0x88] sm:$0xf]
      %v1703 = vld [vmem:[%s1678 + $0x90] sm:$0xf]
      %v1704 = vld [vmem:[%s1678 + $0x94] sm:$0xf]
      %v1705 = vld [vmem:[%s1678 + $0x9c] sm:$0xf]
      %v1706 = vld [vmem:[%s1678 + $0xa0] sm:$0xf]
      %v1707 = vld [vmem:[%s1678 + $0xa8] sm:$0xf]
      %v1708 = vld [vmem:[%s1678 + $0xac] sm:$0xf]
      %v1709 = vld [vmem:[%s1678 + $0xb4] sm:$0xf]
      %v1710 = vld [vmem:[%s1678 + $0xb8] sm:$0xf]
      %s1711 = scalar_lea.vmem %s301, 6
      %v1712 = vld [vmem:[%s1711] sm:$0x3]
      %v1745 = vunpack.c.l.b16 %v1679
      %v1746 = vunpack.c.l.b16 %v1680
      %v1747 = vunpack.c.l.b16 %v1681
      %v1748 = vunpack.c.l.b16 %v1682
      %v1749 = vunpack.c.l.b16 %v1683
      %v1750 = vunpack.c.l.b16 %v1684
      %v1751 = vunpack.c.l.b16 %v1685
      %v1752 = vunpack.c.l.b16 %v1686
      %v1753 = vunpack.c.l.b16 %v1687
      %v1754 = vunpack.c.l.b16 %v1688
      %v1755 = vunpack.c.l.b16 %v1689
      %v1756 = vunpack.c.l.b16 %v1690
      %v1757 = vunpack.c.l.b16 %v1691
      %v1758 = vunpack.c.l.b16 %v1692
      %v1759 = vunpack.c.l.b16 %v1693
      %v1760 = vunpack.c.l.b16 %v1694
      %v1761 = vunpack.c.l.b16 %v1695
      %v1762 = vunpack.c.l.b16 %v1696
      %v1763 = vunpack.c.l.b16 %v1697
      %v1764 = vunpack.c.l.b16 %v1698
      %v1765 = vunpack.c.l.b16 %v1699
      %v1766 = vunpack.c.l.b16 %v1700
      %v1767 = vunpack.c.l.b16 %v1701
      %v1768 = vunpack.c.l.b16 %v1702
      %v1769 = vunpack.c.l.b16 %v1703
      %v1770 = vunpack.c.l.b16 %v1704
      %v1771 = vunpack.c.l.b16 %v1705
      %v1772 = vunpack.c.l.b16 %v1706
      %v1773 = vunpack.c.l.b16 %v1707
      %v1774 = vunpack.c.l.b16 %v1708
      %v1775 = vunpack.c.l.b16 %v1709
      %v1776 = vunpack.c.l.b16 %v1710
      %v1777 = vpack.c.b16 %v1746, %v1745
      %v1778 = vpack.c.b16 %v1748, %v1747
      %v1779 = vpack.c.b16 %v1750, %v1749
      %v1780 = vpack.c.b16 %v1752, %v1751
      %v1781 = vpack.c.b16 %v1754, %v1753
      %v1782 = vpack.c.b16 %v1756, %v1755
      %v1783 = vpack.c.b16 %v1758, %v1757
      %v1784 = vpack.c.b16 %v1760, %v1759
      %v1785 = vpack.c.b16 %v1762, %v1761
      %v1786 = vpack.c.b16 %v1764, %v1763
      %v1787 = vpack.c.b16 %v1766, %v1765
      %v1788 = vpack.c.b16 %v1768, %v1767
      %v1789 = vpack.c.b16 %v1770, %v1769
      %v1790 = vpack.c.b16 %v1772, %v1771
      %v1791 = vpack.c.b16 %v1774, %v1773
      %v1792 = vpack.c.b16 %v1776, %v1775
      %v1794 = vsel %vm931, %v1777, 0
      %v1797 = vsel %vm931, %v1778, 0
      %v1800 = vsel %vm931, %v1779, 0
      %v1803 = vsel %vm931, %v1780, 0
      %v1806 = vsel %vm931, %v1781, 0
      %v1809 = vsel %vm931, %v1782, 0
      %v1812 = vsel %vm931, %v1783, 0
      %v1815 = vsel %vm931, %v1784, 0
      %v1818 = vsel %vm931, %v1785, 0
      %v1821 = vsel %vm931, %v1786, 0
      %v1824 = vsel %vm931, %v1787, 0
      %v1827 = vsel %vm931, %v1788, 0
      %v1830 = vsel %vm931, %v1789, 0
      %v1833 = vsel %vm931, %v1790, 0
      %v1836 = vsel %vm931, %v1791, 0
      %v1839 = vsel %vm931, %v1792, 0
      %v1842 = vsel %vm980, %v1712, 0
      %1844 = vmatpush.bf16.msra.mxu0 0
      %1845 = vmatpush.bf16.msra.mxu0 0
      %1846 = vmatpush.bf16.msra.mxu0 0
      %1847 = vmatpush.bf16.msra.mxu0 0
      %1848 = vmatpush.bf16.msra.mxu0 0
      %1849 = vmatpush.bf16.msra.mxu0 0
      %1850 = vmatpush.bf16.msra.mxu0 0
      %1851 = vmatpush.bf16.msra.mxu0 %v1842
      %1852 = vmatmul.bf16.gmra.mxu0 %v1794
      %v1853 = vpop.f32.mrf.mxu0
      %v1854 = vadd.f32 0.0, %v1853
      %v1855 = vpop.f32.mrf.mxu0
      %v1856 = vadd.f32 0.0, %v1855
      %1857 = vmatmul.bf16.gmra.mxu0 %v1797
      %v1858 = vpop.f32.mrf.mxu0
      %v1859 = vadd.f32 0.0, %v1858
      %v1860 = vpop.f32.mrf.mxu0
      %v1861 = vadd.f32 0.0, %v1860
      %1862 = vmatmul.bf16.gmra.mxu0 %v1800
      %v1863 = vpop.f32.mrf.mxu0
      %v1864 = vadd.f32 0.0, %v1863
      %v1865 = vpop.f32.mrf.mxu0
      %v1866 = vadd.f32 0.0, %v1865
      %1867 = vmatmul.bf16.gmra.mxu0 %v1803
      %v1868 = vpop.f32.mrf.mxu0
      %v1869 = vadd.f32 0.0, %v1868
      %v1870 = vpop.f32.mrf.mxu0
      %v1871 = vadd.f32 0.0, %v1870
      %1872 = vmatmul.bf16.gmra.mxu0 %v1806
      %v1873 = vpop.f32.mrf.mxu0
      %v1874 = vadd.f32 0.0, %v1873
      %v1875 = vpop.f32.mrf.mxu0
      %v1876 = vadd.f32 0.0, %v1875
      %1877 = vmatmul.bf16.gmra.mxu0 %v1809
      %v1878 = vpop.f32.mrf.mxu0
      %v1879 = vadd.f32 0.0, %v1878
      %v1880 = vpop.f32.mrf.mxu0
      %v1881 = vadd.f32 0.0, %v1880
      %1882 = vmatmul.bf16.gmra.mxu0 %v1812
      %v1883 = vpop.f32.mrf.mxu0
      %v1884 = vadd.f32 0.0, %v1883
      %v1885 = vpop.f32.mrf.mxu0
      %v1886 = vadd.f32 0.0, %v1885
      %1887 = vmatmul.bf16.gmra.mxu0 %v1815
      %v1888 = vpop.f32.mrf.mxu0
      %v1889 = vadd.f32 0.0, %v1888
      %v1890 = vpop.f32.mrf.mxu0
      %v1891 = vadd.f32 0.0, %v1890
      %1892 = vmatmul.bf16.gmra.mxu0 %v1818
      %v1893 = vpop.f32.mrf.mxu0
      %v1894 = vadd.f32 0.0, %v1893
      %v1895 = vpop.f32.mrf.mxu0
      %v1896 = vadd.f32 0.0, %v1895
      %1897 = vmatmul.bf16.gmra.mxu0 %v1821
      %v1898 = vpop.f32.mrf.mxu0
      %v1899 = vadd.f32 0.0, %v1898
      %v1900 = vpop.f32.mrf.mxu0
      %v1901 = vadd.f32 0.0, %v1900
      %1902 = vmatmul.bf16.gmra.mxu0 %v1824
      %v1903 = vpop.f32.mrf.mxu0
      %v1904 = vadd.f32 0.0, %v1903
      %v1905 = vpop.f32.mrf.mxu0
      %v1906 = vadd.f32 0.0, %v1905
      %1907 = vmatmul.bf16.gmra.mxu0 %v1827
      %v1908 = vpop.f32.mrf.mxu0
      %v1909 = vadd.f32 0.0, %v1908
      %v1910 = vpop.f32.mrf.mxu0
      %v1911 = vadd.f32 0.0, %v1910
      %1912 = vmatmul.bf16.gmra.mxu0 %v1830
      %v1913 = vpop.f32.mrf.mxu0
      %v1914 = vadd.f32 0.0, %v1913
      %v1915 = vpop.f32.mrf.mxu0
      %v1916 = vadd.f32 0.0, %v1915
      %1917 = vmatmul.bf16.gmra.mxu0 %v1833
      %v1918 = vpop.f32.mrf.mxu0
      %v1919 = vadd.f32 0.0, %v1918
      %v1920 = vpop.f32.mrf.mxu0
      %v1921 = vadd.f32 0.0, %v1920
      %1922 = vmatmul.bf16.gmra.mxu0 %v1836
      %v1923 = vpop.f32.mrf.mxu0
      %v1924 = vadd.f32 0.0, %v1923
      %v1925 = vpop.f32.mrf.mxu0
      %v1926 = vadd.f32 0.0, %v1925
      %1927 = vmatmul.bf16.gmra.mxu0 %v1839
      %v1928 = vpop.f32.mrf.mxu0
      %v1929 = vadd.f32 0.0, %v1928
      %v1930 = vpop.f32.mrf.mxu0
      %v1931 = vadd.f32 0.0, %v1930
      %1932 = vdwg.mxu0
      %v1933 = vadd.f32 %v1646, %v1854
      %v1934 = vadd.f32 %v1647, %v1856
      %v1935 = vadd.f32 %v1648, %v1859
      %v1936 = vadd.f32 %v1649, %v1861
      %v1937 = vadd.f32 %v1650, %v1864
      %v1938 = vadd.f32 %v1651, %v1866
      %v1939 = vadd.f32 %v1652, %v1869
      %v1940 = vadd.f32 %v1653, %v1871
      %v1941 = vadd.f32 %v1654, %v1874
      %v1942 = vadd.f32 %v1655, %v1876
      %v1943 = vadd.f32 %v1656, %v1879
      %v1944 = vadd.f32 %v1657, %v1881
      %v1945 = vadd.f32 %v1658, %v1884
      %v1946 = vadd.f32 %v1659, %v1886
      %v1947 = vadd.f32 %v1660, %v1889
      %v1948 = vadd.f32 %v1661, %v1891
      %v1949 = vadd.f32 %v1662, %v1894
      %v1950 = vadd.f32 %v1663, %v1896
      %v1951 = vadd.f32 %v1664, %v1899
      %v1952 = vadd.f32 %v1665, %v1901
      %v1953 = vadd.f32 %v1666, %v1904
      %v1954 = vadd.f32 %v1667, %v1906
      %v1955 = vadd.f32 %v1668, %v1909
      %v1956 = vadd.f32 %v1669, %v1911
      %v1957 = vadd.f32 %v1670, %v1914
      %v1958 = vadd.f32 %v1671, %v1916
      %v1959 = vadd.f32 %v1672, %v1919
      %v1960 = vadd.f32 %v1673, %v1921
      %v1961 = vadd.f32 %v1674, %v1924
      %v1962 = vadd.f32 %v1675, %v1926
      %v1963 = vadd.f32 %v1676, %v1929
      %v1964 = vadd.f32 %v1677, %v1931
      %v1965 = vld [vmem:[%s1678] sm:$0xf]
      %v1966 = vld [vmem:[%s1678 + $0x4] sm:$0xf]
      %v1967 = vld [vmem:[%s1678 + $0x8] sm:$0x1]
      %v1968 = vld [vmem:[%s1678 + $0xc] sm:$0xf]
      %v1969 = vld [vmem:[%s1678 + $0x10] sm:$0xf]
      %v1970 = vld [vmem:[%s1678 + $0x14] sm:$0x1]
      %v1971 = vld [vmem:[%s1678 + $0x18] sm:$0xf]
      %v1972 = vld [vmem:[%s1678 + $0x1c] sm:$0xf]
      %v1973 = vld [vmem:[%s1678 + $0x20] sm:$0x1]
      %v1974 = vld [vmem:[%s1678 + $0x24] sm:$0xf]
      %v1975 = vld [vmem:[%s1678 + $0x28] sm:$0xf]
      %v1976 = vld [vmem:[%s1678 + $0x2c] sm:$0x1]
      %v1977 = vld [vmem:[%s1678 + $0x30] sm:$0xf]
      %v1978 = vld [vmem:[%s1678 + $0x34] sm:$0xf]
      %v1979 = vld [vmem:[%s1678 + $0x38] sm:$0x1]
      %v1980 = vld [vmem:[%s1678 + $0x3c] sm:$0xf]
      %v1981 = vld [vmem:[%s1678 + $0x40] sm:$0xf]
      %v1982 = vld [vmem:[%s1678 + $0x44] sm:$0x1]
      %v1983 = vld [vmem:[%s1678 + $0x48] sm:$0xf]
      %v1984 = vld [vmem:[%s1678 + $0x4c] sm:$0xf]
      %v1985 = vld [vmem:[%s1678 + $0x50] sm:$0x1]
      %v1986 = vld [vmem:[%s1678 + $0x54] sm:$0xf]
      %v1987 = vld [vmem:[%s1678 + $0x58] sm:$0xf]
      %v1988 = vld [vmem:[%s1678 + $0x5c] sm:$0x1]
      %v1989 = vld [vmem:[%s1678 + $0x60] sm:$0xf]
      %v1990 = vld [vmem:[%s1678 + $0x64] sm:$0xf]
      %v1991 = vld [vmem:[%s1678 + $0x68] sm:$0x1]
      %v1992 = vld [vmem:[%s1678 + $0x6c] sm:$0xf]
      %v1993 = vld [vmem:[%s1678 + $0x70] sm:$0xf]
      %v1994 = vld [vmem:[%s1678 + $0x74] sm:$0x1]
      %v1995 = vld [vmem:[%s1678 + $0x78] sm:$0xf]
      %v1996 = vld [vmem:[%s1678 + $0x7c] sm:$0xf]
      %v1997 = vld [vmem:[%s1678 + $0x80] sm:$0x1]
      %v1998 = vld [vmem:[%s1678 + $0x84] sm:$0xf]
      %v1999 = vld [vmem:[%s1678 + $0x88] sm:$0xf]
      %v2000 = vld [vmem:[%s1678 + $0x8c] sm:$0x1]
      %v2001 = vld [vmem:[%s1678 + $0x90] sm:$0xf]
      %v2002 = vld [vmem:[%s1678 + $0x94] sm:$0xf]
      %v2003 = vld [vmem:[%s1678 + $0x98] sm:$0x1]
      %v2004 = vld [vmem:[%s1678 + $0x9c] sm:$0xf]
      %v2005 = vld [vmem:[%s1678 + $0xa0] sm:$0xf]
      %v2006 = vld [vmem:[%s1678 + $0xa4] sm:$0x1]
      %v2007 = vld [vmem:[%s1678 + $0xa8] sm:$0xf]
      %v2008 = vld [vmem:[%s1678 + $0xac] sm:$0xf]
      %v2009 = vld [vmem:[%s1678 + $0xb0] sm:$0x1]
      %v2010 = vld [vmem:[%s1678 + $0xb4] sm:$0xf]
      %v2011 = vld [vmem:[%s1678 + $0xb8] sm:$0xf]
      %v2012 = vld [vmem:[%s1678 + $0xbc] sm:$0x1]
      %v2014 = vshrl.u32 %v1965, 16
      %v2016 = vrot.slane %v2014, 4
      %v2017 = vshll.u32 %v1965, 16
      %v2019 = vrot.slane %v2017, 5
      %v2020 = vor.u32 %v2016, %v2019
      %v2021 = vrot.slane %v2020, 4
      %v2023 = vshll.u32 %v1966, 16
      %v2025 = vrot.slane %v2023, 5
      %v2026 = vsel %vm496, %v2021, %v2025
      %v2027 = vshrl.u32 %v1966, 16
      %v2029 = vrot.slane %v2027, 4
      %v2030 = vor.u32 %v2029, %v2025
      %v2031 = vrot.slane %v2030, 4
      %v2033 = vshll.u32 %v1967, 16
      %v2035 = vrot.slane %v2033, 5
      %v2036 = vsel %vm496, %v2031, %v2035
      %v2038 = vshrl.u32 %v1968, 16
      %v2040 = vrot.slane %v2038, 4
      %v2041 = vshll.u32 %v1968, 16
      %v2043 = vrot.slane %v2041, 5
      %v2044 = vor.u32 %v2040, %v2043
      %v2045 = vrot.slane %v2044, 4
      %v2047 = vshll.u32 %v1969, 16
      %v2049 = vrot.slane %v2047, 5
      %v2050 = vsel %vm496, %v2045, %v2049
      %v2051 = vshrl.u32 %v1969, 16
      %v2053 = vrot.slane %v2051, 4
      %v2054 = vor.u32 %v2053, %v2049
      %v2055 = vrot.slane %v2054, 4
      %v2057 = vshll.u32 %v1970, 16
      %v2059 = vrot.slane %v2057, 5
      %v2060 = vsel %vm496, %v2055, %v2059
      %v2062 = vshrl.u32 %v1971, 16
      %v2064 = vrot.slane %v2062, 4
      %v2065 = vshll.u32 %v1971, 16
      %v2067 = vrot.slane %v2065, 5
      %v2068 = vor.u32 %v2064, %v2067
      %v2069 = vrot.slane %v2068, 4
      %v2071 = vshll.u32 %v1972, 16
      %v2073 = vrot.slane %v2071, 5
      %v2074 = vsel %vm496, %v2069, %v2073
      %v2075 = vshrl.u32 %v1972, 16
      %v2077 = vrot.slane %v2075, 4
      %v2078 = vor.u32 %v2077, %v2073
      %v2079 = vrot.slane %v2078, 4
      %v2081 = vshll.u32 %v1973, 16
      %v2083 = vrot.slane %v2081, 5
      %v2084 = vsel %vm496, %v2079, %v2083
      %v2086 = vshrl.u32 %v1974, 16
      %v2088 = vrot.slane %v2086, 4
      %v2089 = vshll.u32 %v1974, 16
      %v2091 = vrot.slane %v2089, 5
      %v2092 = vor.u32 %v2088, %v2091
      %v2093 = vrot.slane %v2092, 4
      %v2095 = vshll.u32 %v1975, 16
      %v2097 = vrot.slane %v2095, 5
      %v2098 = vsel %vm496, %v2093, %v2097
      %v2099 = vshrl.u32 %v1975, 16
      %v2101 = vrot.slane %v2099, 4
      %v2102 = vor.u32 %v2101, %v2097
      %v2103 = vrot.slane %v2102, 4
      %v2105 = vshll.u32 %v1976, 16
      %v2107 = vrot.slane %v2105, 5
      %v2108 = vsel %vm496, %v2103, %v2107
      %v2110 = vshrl.u32 %v1977, 16
      %v2112 = vrot.slane %v2110, 4
      %v2113 = vshll.u32 %v1977, 16
      %v2115 = vrot.slane %v2113, 5
      %v2116 = vor.u32 %v2112, %v2115
      %v2117 = vrot.slane %v2116, 4
      %v2119 = vshll.u32 %v1978, 16
      %v2121 = vrot.slane %v2119, 5
      %v2122 = vsel %vm496, %v2117, %v2121
      %v2123 = vshrl.u32 %v1978, 16
      %v2125 = vrot.slane %v2123, 4
      %v2126 = vor.u32 %v2125, %v2121
      %v2127 = vrot.slane %v2126, 4
      %v2129 = vshll.u32 %v1979, 16
      %v2131 = vrot.slane %v2129, 5
      %v2132 = vsel %vm496, %v2127, %v2131
      %v2134 = vshrl.u32 %v1980, 16
      %v2136 = vrot.slane %v2134, 4
      %v2137 = vshll.u32 %v1980, 16
      %v2139 = vrot.slane %v2137, 5
      %v2140 = vor.u32 %v2136, %v2139
      %v2141 = vrot.slane %v2140, 4
      %v2143 = vshll.u32 %v1981, 16
      %v2145 = vrot.slane %v2143, 5
      %v2146 = vsel %vm496, %v2141, %v2145
      %v2147 = vshrl.u32 %v1981, 16
      %v2149 = vrot.slane %v2147, 4
      %v2150 = vor.u32 %v2149, %v2145
      %v2151 = vrot.slane %v2150, 4
      %v2153 = vshll.u32 %v1982, 16
      %v2155 = vrot.slane %v2153, 5
      %v2156 = vsel %vm496, %v2151, %v2155
      %v2158 = vshrl.u32 %v1983, 16
      %v2160 = vrot.slane %v2158, 4
      %v2161 = vshll.u32 %v1983, 16
      %v2163 = vrot.slane %v2161, 5
      %v2164 = vor.u32 %v2160, %v2163
      %v2165 = vrot.slane %v2164, 4
      %v2167 = vshll.u32 %v1984, 16
      %v2169 = vrot.slane %v2167, 5
      %v2170 = vsel %vm496, %v2165, %v2169
      %v2171 = vshrl.u32 %v1984, 16
      %v2173 = vrot.slane %v2171, 4
      %v2174 = vor.u32 %v2173, %v2169
      %v2175 = vrot.slane %v2174, 4
      %v2177 = vshll.u32 %v1985, 16
      %v2179 = vrot.slane %v2177, 5
      %v2180 = vsel %vm496, %v2175, %v2179
      %v2182 = vshrl.u32 %v1986, 16
      %v2184 = vrot.slane %v2182, 4
      %v2185 = vshll.u32 %v1986, 16
      %v2187 = vrot.slane %v2185, 5
      %v2188 = vor.u32 %v2184, %v2187
      %v2189 = vrot.slane %v2188, 4
      %v2191 = vshll.u32 %v1987, 16
      %v2193 = vrot.slane %v2191, 5
      %v2194 = vsel %vm496, %v2189, %v2193
      %v2195 = vshrl.u32 %v1987, 16
      %v2197 = vrot.slane %v2195, 4
      %v2198 = vor.u32 %v2197, %v2193
      %v2199 = vrot.slane %v2198, 4
      %v2201 = vshll.u32 %v1988, 16
      %v2203 = vrot.slane %v2201, 5
      %v2204 = vsel %vm496, %v2199, %v2203
      %v2206 = vshrl.u32 %v1989, 16
      %v2208 = vrot.slane %v2206, 4
      %v2209 = vshll.u32 %v1989, 16
      %v2211 = vrot.slane %v2209, 5
      %v2212 = vor.u32 %v2208, %v2211
      %v2213 = vrot.slane %v2212, 4
      %v2215 = vshll.u32 %v1990, 16
      %v2217 = vrot.slane %v2215, 5
      %v2218 = vsel %vm496, %v2213, %v2217
      %v2219 = vshrl.u32 %v1990, 16
      %v2221 = vrot.slane %v2219, 4
      %v2222 = vor.u32 %v2221, %v2217
      %v2223 = vrot.slane %v2222, 4
      %v2225 = vshll.u32 %v1991, 16
      %v2227 = vrot.slane %v2225, 5
      %v2228 = vsel %vm496, %v2223, %v2227
      %v2230 = vshrl.u32 %v1992, 16
      %v2232 = vrot.slane %v2230, 4
      %v2233 = vshll.u32 %v1992, 16
      %v2235 = vrot.slane %v2233, 5
      %v2236 = vor.u32 %v2232, %v2235
      %v2237 = vrot.slane %v2236, 4
      %v2239 = vshll.u32 %v1993, 16
      %v2241 = vrot.slane %v2239, 5
      %v2242 = vsel %vm496, %v2237, %v2241
      %v2243 = vshrl.u32 %v1993, 16
      %v2245 = vrot.slane %v2243, 4
      %v2246 = vor.u32 %v2245, %v2241
      %v2247 = vrot.slane %v2246, 4
      %v2249 = vshll.u32 %v1994, 16
      %v2251 = vrot.slane %v2249, 5
      %v2252 = vsel %vm496, %v2247, %v2251
      %v2254 = vshrl.u32 %v1995, 16
      %v2256 = vrot.slane %v2254, 4
      %v2257 = vshll.u32 %v1995, 16
      %v2259 = vrot.slane %v2257, 5
      %v2260 = vor.u32 %v2256, %v2259
      %v2261 = vrot.slane %v2260, 4
      %v2263 = vshll.u32 %v1996, 16
      %v2265 = vrot.slane %v2263, 5
      %v2266 = vsel %vm496, %v2261, %v2265
      %v2267 = vshrl.u32 %v1996, 16
      %v2269 = vrot.slane %v2267, 4
      %v2270 = vor.u32 %v2269, %v2265
      %v2271 = vrot.slane %v2270, 4
      %v2273 = vshll.u32 %v1997, 16
      %v2275 = vrot.slane %v2273, 5
      %v2276 = vsel %vm496, %v2271, %v2275
      %v2278 = vshrl.u32 %v1998, 16
      %v2280 = vrot.slane %v2278, 4
      %v2281 = vshll.u32 %v1998, 16
      %v2283 = vrot.slane %v2281, 5
      %v2284 = vor.u32 %v2280, %v2283
      %v2285 = vrot.slane %v2284, 4
      %v2287 = vshll.u32 %v1999, 16
      %v2289 = vrot.slane %v2287, 5
      %v2290 = vsel %vm496, %v2285, %v2289
      %v2291 = vshrl.u32 %v1999, 16
      %v2293 = vrot.slane %v2291, 4
      %v2294 = vor.u32 %v2293, %v2289
      %v2295 = vrot.slane %v2294, 4
      %v2297 = vshll.u32 %v2000, 16
      %v2299 = vrot.slane %v2297, 5
      %v2300 = vsel %vm496, %v2295, %v2299
      %v2302 = vshrl.u32 %v2001, 16
      %v2304 = vrot.slane %v2302, 4
      %v2305 = vshll.u32 %v2001, 16
      %v2307 = vrot.slane %v2305, 5
      %v2308 = vor.u32 %v2304, %v2307
      %v2309 = vrot.slane %v2308, 4
      %v2311 = vshll.u32 %v2002, 16
      %v2313 = vrot.slane %v2311, 5
      %v2314 = vsel %vm496, %v2309, %v2313
      %v2315 = vshrl.u32 %v2002, 16
      %v2317 = vrot.slane %v2315, 4
      %v2318 = vor.u32 %v2317, %v2313
      %v2319 = vrot.slane %v2318, 4
      %v2321 = vshll.u32 %v2003, 16
      %v2323 = vrot.slane %v2321, 5
      %v2324 = vsel %vm496, %v2319, %v2323
      %v2326 = vshrl.u32 %v2004, 16
      %v2328 = vrot.slane %v2326, 4
      %v2329 = vshll.u32 %v2004, 16
      %v2331 = vrot.slane %v2329, 5
      %v2332 = vor.u32 %v2328, %v2331
      %v2333 = vrot.slane %v2332, 4
      %v2335 = vshll.u32 %v2005, 16
      %v2337 = vrot.slane %v2335, 5
      %v2338 = vsel %vm496, %v2333, %v2337
      %v2339 = vshrl.u32 %v2005, 16
      %v2341 = vrot.slane %v2339, 4
      %v2342 = vor.u32 %v2341, %v2337
      %v2343 = vrot.slane %v2342, 4
      %v2345 = vshll.u32 %v2006, 16
      %v2347 = vrot.slane %v2345, 5
      %v2348 = vsel %vm496, %v2343, %v2347
      %v2350 = vshrl.u32 %v2007, 16
      %v2352 = vrot.slane %v2350, 4
      %v2353 = vshll.u32 %v2007, 16
      %v2355 = vrot.slane %v2353, 5
      %v2356 = vor.u32 %v2352, %v2355
      %v2357 = vrot.slane %v2356, 4
      %v2359 = vshll.u32 %v2008, 16
      %v2361 = vrot.slane %v2359, 5
      %v2362 = vsel %vm496, %v2357, %v2361
      %v2363 = vshrl.u32 %v2008, 16
      %v2365 = vrot.slane %v2363, 4
      %v2366 = vor.u32 %v2365, %v2361
      %v2367 = vrot.slane %v2366, 4
      %v2369 = vshll.u32 %v2009, 16
      %v2371 = vrot.slane %v2369, 5
      %v2372 = vsel %vm496, %v2367, %v2371
      %v2374 = vshrl.u32 %v2010, 16
      %v2376 = vrot.slane %v2374, 4
      %v2377 = vshll.u32 %v2010, 16
      %v2379 = vrot.slane %v2377, 5
      %v2380 = vor.u32 %v2376, %v2379
      %v2381 = vrot.slane %v2380, 4
      %v2383 = vshll.u32 %v2011, 16
      %v2385 = vrot.slane %v2383, 5
      %v2386 = vsel %vm496, %v2381, %v2385
      %v2387 = vshrl.u32 %v2011, 16
      %v2389 = vrot.slane %v2387, 4
      %v2390 = vor.u32 %v2389, %v2385
      %v2391 = vrot.slane %v2390, 4
      %v2393 = vshll.u32 %v2012, 16
      %v2395 = vrot.slane %v2393, 5
      %v2396 = vsel %vm496, %v2391, %v2395
      %s2397 = scalar_lea.vmem %s301, 8
      %v2398 = vld [vmem:[%s2397] sm:$0x3]
      %v2399 = vunpack.c.l.b16 %v2026
      %v2400 = vunpack.c.l.b16 %v2036
      %v2401 = vunpack.c.l.b16 %v2050
      %v2402 = vunpack.c.l.b16 %v2060
      %v2403 = vunpack.c.l.b16 %v2074
      %v2404 = vunpack.c.l.b16 %v2084
      %v2405 = vunpack.c.l.b16 %v2098
      %v2406 = vunpack.c.l.b16 %v2108
      %v2407 = vunpack.c.l.b16 %v2122
      %v2408 = vunpack.c.l.b16 %v2132
      %v2409 = vunpack.c.l.b16 %v2146
      %v2410 = vunpack.c.l.b16 %v2156
      %v2411 = vunpack.c.l.b16 %v2170
      %v2412 = vunpack.c.l.b16 %v2180
      %v2413 = vunpack.c.l.b16 %v2194
      %v2414 = vunpack.c.l.b16 %v2204
      %v2415 = vunpack.c.l.b16 %v2218
      %v2416 = vunpack.c.l.b16 %v2228
      %v2417 = vunpack.c.l.b16 %v2242
      %v2418 = vunpack.c.l.b16 %v2252
      %v2419 = vunpack.c.l.b16 %v2266
      %v2420 = vunpack.c.l.b16 %v2276
      %v2421 = vunpack.c.l.b16 %v2290
      %v2422 = vunpack.c.l.b16 %v2300
      %v2423 = vunpack.c.l.b16 %v2314
      %v2424 = vunpack.c.l.b16 %v2324
      %v2425 = vunpack.c.l.b16 %v2338
      %v2426 = vunpack.c.l.b16 %v2348
      %v2427 = vunpack.c.l.b16 %v2362
      %v2428 = vunpack.c.l.b16 %v2372
      %v2429 = vunpack.c.l.b16 %v2386
      %v2430 = vunpack.c.l.b16 %v2396
      %v2431 = vpack.c.b16 %v2400, %v2399
      %v2432 = vpack.c.b16 %v2402, %v2401
      %v2433 = vpack.c.b16 %v2404, %v2403
      %v2434 = vpack.c.b16 %v2406, %v2405
      %v2435 = vpack.c.b16 %v2408, %v2407
      %v2436 = vpack.c.b16 %v2410, %v2409
      %v2437 = vpack.c.b16 %v2412, %v2411
      %v2438 = vpack.c.b16 %v2414, %v2413
      %v2439 = vpack.c.b16 %v2416, %v2415
      %v2440 = vpack.c.b16 %v2418, %v2417
      %v2441 = vpack.c.b16 %v2420, %v2419
      %v2442 = vpack.c.b16 %v2422, %v2421
      %v2443 = vpack.c.b16 %v2424, %v2423
      %v2444 = vpack.c.b16 %v2426, %v2425
      %v2445 = vpack.c.b16 %v2428, %v2427
      %v2446 = vpack.c.b16 %v2430, %v2429
      %v2448 = vsel %vm931, %v2431, 0
      %v2451 = vsel %vm931, %v2432, 0
      %v2454 = vsel %vm931, %v2433, 0
      %v2457 = vsel %vm931, %v2434, 0
      %v2460 = vsel %vm931, %v2435, 0
      %v2463 = vsel %vm931, %v2436, 0
      %v2466 = vsel %vm931, %v2437, 0
      %v2469 = vsel %vm931, %v2438, 0
      %v2472 = vsel %vm931, %v2439, 0
      %v2475 = vsel %vm931, %v2440, 0
      %v2478 = vsel %vm931, %v2441, 0
      %v2481 = vsel %vm931, %v2442, 0
      %v2484 = vsel %vm931, %v2443, 0
      %v2487 = vsel %vm931, %v2444, 0
      %v2490 = vsel %vm931, %v2445, 0
      %v2493 = vsel %vm931, %v2446, 0
      %v2496 = vsel %vm980, %v2398, 0
      %2498 = vmatpush.bf16.msra.mxu0 0
      %2499 = vmatpush.bf16.msra.mxu0 0
      %2500 = vmatpush.bf16.msra.mxu0 0
      %2501 = vmatpush.bf16.msra.mxu0 0
      %2502 = vmatpush.bf16.msra.mxu0 0
      %2503 = vmatpush.bf16.msra.mxu0 0
      %2504 = vmatpush.bf16.msra.mxu0 0
      %2505 = vmatpush.bf16.msra.mxu0 %v2496
      %2506 = vmatmul.bf16.gmra.mxu0 %v2448
      %v2507 = vpop.f32.mrf.mxu0
      %v2508 = vadd.f32 0.0, %v2507
      %v2509 = vpop.f32.mrf.mxu0
      %v2510 = vadd.f32 0.0, %v2509
      %2511 = vmatmul.bf16.gmra.mxu0 %v2451
      %v2512 = vpop.f32.mrf.mxu0
      %v2513 = vadd.f32 0.0, %v2512
      %v2514 = vpop.f32.mrf.mxu0
      %v2515 = vadd.f32 0.0, %v2514
      %2516 = vmatmul.bf16.gmra.mxu0 %v2454
      %v2517 = vpop.f32.mrf.mxu0
      %v2518 = vadd.f32 0.0, %v2517
      %v2519 = vpop.f32.mrf.mxu0
      %v2520 = vadd.f32 0.0, %v2519
      %2521 = vmatmul.bf16.gmra.mxu0 %v2457
      %v2522 = vpop.f32.mrf.mxu0
      %v2523 = vadd.f32 0.0, %v2522
      %v2524 = vpop.f32.mrf.mxu0
      %v2525 = vadd.f32 0.0, %v2524
      %2526 = vmatmul.bf16.gmra.mxu0 %v2460
      %v2527 = vpop.f32.mrf.mxu0
      %v2528 = vadd.f32 0.0, %v2527
      %v2529 = vpop.f32.mrf.mxu0
      %v2530 = vadd.f32 0.0, %v2529
      %2531 = vmatmul.bf16.gmra.mxu0 %v2463
      %v2532 = vpop.f32.mrf.mxu0
      %v2533 = vadd.f32 0.0, %v2532
      %v2534 = vpop.f32.mrf.mxu0
      %v2535 = vadd.f32 0.0, %v2534
      %2536 = vmatmul.bf16.gmra.mxu0 %v2466
      %v2537 = vpop.f32.mrf.mxu0
      %v2538 = vadd.f32 0.0, %v2537
      %v2539 = vpop.f32.mrf.mxu0
      %v2540 = vadd.f32 0.0, %v2539
      %2541 = vmatmul.bf16.gmra.mxu0 %v2469
      %v2542 = vpop.f32.mrf.mxu0
      %v2543 = vadd.f32 0.0, %v2542
      %v2544 = vpop.f32.mrf.mxu0
      %v2545 = vadd.f32 0.0, %v2544
      %2546 = vmatmul.bf16.gmra.mxu0 %v2472
      %v2547 = vpop.f32.mrf.mxu0
      %v2548 = vadd.f32 0.0, %v2547
      %v2549 = vpop.f32.mrf.mxu0
      %v2550 = vadd.f32 0.0, %v2549
      %2551 = vmatmul.bf16.gmra.mxu0 %v2475
      %v2552 = vpop.f32.mrf.mxu0
      %v2553 = vadd.f32 0.0, %v2552
      %v2554 = vpop.f32.mrf.mxu0
      %v2555 = vadd.f32 0.0, %v2554
      %2556 = vmatmul.bf16.gmra.mxu0 %v2478
      %v2557 = vpop.f32.mrf.mxu0
      %v2558 = vadd.f32 0.0, %v2557
      %v2559 = vpop.f32.mrf.mxu0
      %v2560 = vadd.f32 0.0, %v2559
      %2561 = vmatmul.bf16.gmra.mxu0 %v2481
      %v2562 = vpop.f32.mrf.mxu0
      %v2563 = vadd.f32 0.0, %v2562
      %v2564 = vpop.f32.mrf.mxu0
      %v2565 = vadd.f32 0.0, %v2564
      %2566 = vmatmul.bf16.gmra.mxu0 %v2484
      %v2567 = vpop.f32.mrf.mxu0
      %v2568 = vadd.f32 0.0, %v2567
      %v2569 = vpop.f32.mrf.mxu0
      %v2570 = vadd.f32 0.0, %v2569
      %2571 = vmatmul.bf16.gmra.mxu0 %v2487
      %v2572 = vpop.f32.mrf.mxu0
      %v2573 = vadd.f32 0.0, %v2572
      %v2574 = vpop.f32.mrf.mxu0
      %v2575 = vadd.f32 0.0, %v2574
      %2576 = vmatmul.bf16.gmra.mxu0 %v2490
      %v2577 = vpop.f32.mrf.mxu0
      %v2578 = vadd.f32 0.0, %v2577
      %v2579 = vpop.f32.mrf.mxu0
      %v2580 = vadd.f32 0.0, %v2579
      %2581 = vmatmul.bf16.gmra.mxu0 %v2493
      %v2582 = vpop.f32.mrf.mxu0
      %v2583 = vadd.f32 0.0, %v2582
      %v2584 = vpop.f32.mrf.mxu0
      %v2585 = vadd.f32 0.0, %v2584
      %2586 = vdwg.mxu0
      %v2587 = vadd.f32 %v1933, %v2508
      %v2588 = vadd.f32 %v1934, %v2510
      %v2589 = vadd.f32 %v1935, %v2513
      %v2590 = vadd.f32 %v1936, %v2515
      %v2591 = vadd.f32 %v1937, %v2518
      %v2592 = vadd.f32 %v1938, %v2520
      %v2593 = vadd.f32 %v1939, %v2523
      %v2594 = vadd.f32 %v1940, %v2525
      %v2595 = vadd.f32 %v1941, %v2528
      %v2596 = vadd.f32 %v1942, %v2530
      %v2597 = vadd.f32 %v1943, %v2533
      %v2598 = vadd.f32 %v1944, %v2535
      %v2599 = vadd.f32 %v1945, %v2538
      %v2600 = vadd.f32 %v1946, %v2540
      %v2601 = vadd.f32 %v1947, %v2543
      %v2602 = vadd.f32 %v1948, %v2545
      %v2603 = vadd.f32 %v1949, %v2548
      %v2604 = vadd.f32 %v1950, %v2550
      %v2605 = vadd.f32 %v1951, %v2553
      %v2606 = vadd.f32 %v1952, %v2555
      %v2607 = vadd.f32 %v1953, %v2558
      %v2608 = vadd.f32 %v1954, %v2560
      %v2609 = vadd.f32 %v1955, %v2563
      %v2610 = vadd.f32 %v1956, %v2565
      %v2611 = vadd.f32 %v1957, %v2568
      %v2612 = vadd.f32 %v1958, %v2570
      %v2613 = vadd.f32 %v1959, %v2573
      %v2614 = vadd.f32 %v1960, %v2575
      %v2615 = vadd.f32 %v1961, %v2578
      %v2616 = vadd.f32 %v1962, %v2580
      %v2617 = vadd.f32 %v1963, %v2583
      %v2618 = vadd.f32 %v1964, %v2585
      %v2619 = vld [vmem:[%s1678] sm:$0xe]
      %v2620 = vld [vmem:[%s1678 + $0xc] sm:$0xe]
      %v2621 = vld [vmem:[%s1678 + $0x18] sm:$0xe]
      %v2622 = vld [vmem:[%s1678 + $0x24] sm:$0xe]
      %v2623 = vld [vmem:[%s1678 + $0x30] sm:$0xe]
      %v2624 = vld [vmem:[%s1678 + $0x3c] sm:$0xe]
      %v2625 = vld [vmem:[%s1678 + $0x48] sm:$0xe]
      %v2626 = vld [vmem:[%s1678 + $0x54] sm:$0xe]
      %v2627 = vld [vmem:[%s1678 + $0x60] sm:$0xe]
      %v2628 = vld [vmem:[%s1678 + $0x6c] sm:$0xe]
      %v2629 = vld [vmem:[%s1678 + $0x78] sm:$0xe]
      %v2630 = vld [vmem:[%s1678 + $0x84] sm:$0xe]
      %v2631 = vld [vmem:[%s1678 + $0x90] sm:$0xe]
      %v2632 = vld [vmem:[%s1678 + $0x9c] sm:$0xe]
      %v2633 = vld [vmem:[%s1678 + $0xa8] sm:$0xe]
      %v2634 = vld [vmem:[%s1678 + $0xb4] sm:$0xe]
      %v2683 = vrot.slane %v2619, 5
      %v2684 = vrot.slane %v2683, 4
      %v2685 = vrot.slane %v1966, 5
      %v2686 = vsel %vm1343, %v2684, %v2685
      %v2687 = vrot.slane %v2685, 4
      %v2688 = vrot.slane %v1967, 5
      %v2689 = vsel %vm1343, %v2687, %v2688
      %v2690 = vrot.slane %v2620, 5
      %v2691 = vrot.slane %v2690, 4
      %v2692 = vrot.slane %v1969, 5
      %v2693 = vsel %vm1343, %v2691, %v2692
      %v2694 = vrot.slane %v2692, 4
      %v2695 = vrot.slane %v1970, 5
      %v2696 = vsel %vm1343, %v2694, %v2695
      %v2697 = vrot.slane %v2621, 5
      %v2698 = vrot.slane %v2697, 4
      %v2699 = vrot.slane %v1972, 5
      %v2700 = vsel %vm1343, %v2698, %v2699
      %v2701 = vrot.slane %v2699, 4
      %v2702 = vrot.slane %v1973, 5
      %v2703 = vsel %vm1343, %v2701, %v2702
      %v2704 = vrot.slane %v2622, 5
      %v2705 = vrot.slane %v2704, 4
      %v2706 = vrot.slane %v1975, 5
      %v2707 = vsel %vm1343, %v2705, %v2706
      %v2708 = vrot.slane %v2706, 4
      %v2709 = vrot.slane %v1976, 5
      %v2710 = vsel %vm1343, %v2708, %v2709
      %v2711 = vrot.slane %v2623, 5
      %v2712 = vrot.slane %v2711, 4
      %v2713 = vrot.slane %v1978, 5
      %v2714 = vsel %vm1343, %v2712, %v2713
      %v2715 = vrot.slane %v2713, 4
      %v2716 = vrot.slane %v1979, 5
      %v2717 = vsel %vm1343, %v2715, %v2716
      %v2718 = vrot.slane %v2624, 5
      %v2719 = vrot.slane %v2718, 4
      %v2720 = vrot.slane %v1981, 5
      %v2721 = vsel %vm1343, %v2719, %v2720
      %v2722 = vrot.slane %v2720, 4
      %v2723 = vrot.slane %v1982, 5
      %v2724 = vsel %vm1343, %v2722, %v2723
      %v2725 = vrot.slane %v2625, 5
      %v2726 = vrot.slane %v2725, 4
      %v2727 = vrot.slane %v1984, 5
      %v2728 = vsel %vm1343, %v2726, %v2727
      %v2729 = vrot.slane %v2727, 4
      %v2730 = vrot.slane %v1985, 5
      %v2731 = vsel %vm1343, %v2729, %v2730
      %v2732 = vrot.slane %v2626, 5
      %v2733 = vrot.slane %v2732, 4
      %v2734 = vrot.slane %v1987, 5
      %v2735 = vsel %vm1343, %v2733, %v2734
      %v2736 = vrot.slane %v2734, 4
      %v2737 = vrot.slane %v1988, 5
      %v2738 = vsel %vm1343, %v2736, %v2737
      %v2739 = vrot.slane %v2627, 5
      %v2740 = vrot.slane %v2739, 4
      %v2741 = vrot.slane %v1990, 5
      %v2742 = vsel %vm1343, %v2740, %v2741
      %v2743 = vrot.slane %v2741, 4
      %v2744 = vrot.slane %v1991, 5
      %v2745 = vsel %vm1343, %v2743, %v2744
      %v2746 = vrot.slane %v2628, 5
      %v2747 = vrot.slane %v2746, 4
      %v2748 = vrot.slane %v1993, 5
      %v2749 = vsel %vm1343, %v2747, %v2748
      %v2750 = vrot.slane %v2748, 4
      %v2751 = vrot.slane %v1994, 5
      %v2752 = vsel %vm1343, %v2750, %v2751
      %v2753 = vrot.slane %v2629, 5
      %v2754 = vrot.slane %v2753, 4
      %v2755 = vrot.slane %v1996, 5
      %v2756 = vsel %vm1343, %v2754, %v2755
      %v2757 = vrot.slane %v2755, 4
      %v2758 = vrot.slane %v1997, 5
      %v2759 = vsel %vm1343, %v2757, %v2758
      %v2760 = vrot.slane %v2630, 5
      %v2761 = vrot.slane %v2760, 4
      %v2762 = vrot.slane %v1999, 5
      %v2763 = vsel %vm1343, %v2761, %v2762
      %v2764 = vrot.slane %v2762, 4
      %v2765 = vrot.slane %v2000, 5
      %v2766 = vsel %vm1343, %v2764, %v2765
      %v2767 = vrot.slane %v2631, 5
      %v2768 = vrot.slane %v2767, 4
      %v2769 = vrot.slane %v2002, 5
      %v2770 = vsel %vm1343, %v2768, %v2769
      %v2771 = vrot.slane %v2769, 4
      %v2772 = vrot.slane %v2003, 5
      %v2773 = vsel %vm1343, %v2771, %v2772
      %v2774 = vrot.slane %v2632, 5
      %v2775 = vrot.slane %v2774, 4
      %v2776 = vrot.slane %v2005, 5
      %v2777 = vsel %vm1343, %v2775, %v2776
      %v2778 = vrot.slane %v2776, 4
      %v2779 = vrot.slane %v2006, 5
      %v2780 = vsel %vm1343, %v2778, %v2779
      %v2781 = vrot.slane %v2633, 5
      %v2782 = vrot.slane %v2781, 4
      %v2783 = vrot.slane %v2008, 5
      %v2784 = vsel %vm1343, %v2782, %v2783
      %v2785 = vrot.slane %v2783, 4
      %v2786 = vrot.slane %v2009, 5
      %v2787 = vsel %vm1343, %v2785, %v2786
      %v2788 = vrot.slane %v2634, 5
      %v2789 = vrot.slane %v2788, 4
      %v2790 = vrot.slane %v2011, 5
      %v2791 = vsel %vm1343, %v2789, %v2790
      %v2792 = vrot.slane %v2790, 4
      %v2793 = vrot.slane %v2012, 5
      %v2794 = vsel %vm1343, %v2792, %v2793
      %s2795 = scalar_lea.vmem %s301, 10
      %v2796 = vld [vmem:[%s2795] sm:$0x3]
      %v2797 = vunpack.c.l.b16 %v2686
      %v2798 = vunpack.c.l.b16 %v2689
      %v2799 = vunpack.c.l.b16 %v2693
      %v2800 = vunpack.c.l.b16 %v2696
      %v2801 = vunpack.c.l.b16 %v2700
      %v2802 = vunpack.c.l.b16 %v2703
      %v2803 = vunpack.c.l.b16 %v2707
      %v2804 = vunpack.c.l.b16 %v2710
      %v2805 = vunpack.c.l.b16 %v2714
      %v2806 = vunpack.c.l.b16 %v2717
      %v2807 = vunpack.c.l.b16 %v2721
      %v2808 = vunpack.c.l.b16 %v2724
      %v2809 = vunpack.c.l.b16 %v2728
      %v2810 = vunpack.c.l.b16 %v2731
      %v2811 = vunpack.c.l.b16 %v2735
      %v2812 = vunpack.c.l.b16 %v2738
      %v2813 = vunpack.c.l.b16 %v2742
      %v2814 = vunpack.c.l.b16 %v2745
      %v2815 = vunpack.c.l.b16 %v2749
      %v2816 = vunpack.c.l.b16 %v2752
      %v2817 = vunpack.c.l.b16 %v2756
      %v2818 = vunpack.c.l.b16 %v2759
      %v2819 = vunpack.c.l.b16 %v2763
      %v2820 = vunpack.c.l.b16 %v2766
      %v2821 = vunpack.c.l.b16 %v2770
      %v2822 = vunpack.c.l.b16 %v2773
      %v2823 = vunpack.c.l.b16 %v2777
      %v2824 = vunpack.c.l.b16 %v2780
      %v2825 = vunpack.c.l.b16 %v2784
      %v2826 = vunpack.c.l.b16 %v2787
      %v2827 = vunpack.c.l.b16 %v2791
      %v2828 = vunpack.c.l.b16 %v2794
      %v2829 = vpack.c.b16 %v2798, %v2797
      %v2830 = vpack.c.b16 %v2800, %v2799
      %v2831 = vpack.c.b16 %v2802, %v2801
      %v2832 = vpack.c.b16 %v2804, %v2803
      %v2833 = vpack.c.b16 %v2806, %v2805
      %v2834 = vpack.c.b16 %v2808, %v2807
      %v2835 = vpack.c.b16 %v2810, %v2809
      %v2836 = vpack.c.b16 %v2812, %v2811
      %v2837 = vpack.c.b16 %v2814, %v2813
      %v2838 = vpack.c.b16 %v2816, %v2815
      %v2839 = vpack.c.b16 %v2818, %v2817
      %v2840 = vpack.c.b16 %v2820, %v2819
      %v2841 = vpack.c.b16 %v2822, %v2821
      %v2842 = vpack.c.b16 %v2824, %v2823
      %v2843 = vpack.c.b16 %v2826, %v2825
      %v2844 = vpack.c.b16 %v2828, %v2827
      %v2846 = vsel %vm931, %v2829, 0
      %v2849 = vsel %vm931, %v2830, 0
      %v2852 = vsel %vm931, %v2831, 0
      %v2855 = vsel %vm931, %v2832, 0
      %v2858 = vsel %vm931, %v2833, 0
      %v2861 = vsel %vm931, %v2834, 0
      %v2864 = vsel %vm931, %v2835, 0
      %v2867 = vsel %vm931, %v2836, 0
      %v2870 = vsel %vm931, %v2837, 0
      %v2873 = vsel %vm931, %v2838, 0
      %v2876 = vsel %vm931, %v2839, 0
      %v2879 = vsel %vm931, %v2840, 0
      %v2882 = vsel %vm931, %v2841, 0
      %v2885 = vsel %vm931, %v2842, 0
      %v2888 = vsel %vm931, %v2843, 0
      %v2891 = vsel %vm931, %v2844, 0
      %v2894 = vsel %vm980, %v2796, 0
      %2896 = vmatpush.bf16.msra.mxu0 0
      %2897 = vmatpush.bf16.msra.mxu0 0
      %2898 = vmatpush.bf16.msra.mxu0 0
      %2899 = vmatpush.bf16.msra.mxu0 0
      %2900 = vmatpush.bf16.msra.mxu0 0
      %2901 = vmatpush.bf16.msra.mxu0 0
      %2902 = vmatpush.bf16.msra.mxu0 0
      %2903 = vmatpush.bf16.msra.mxu0 %v2894
      %2904 = vmatmul.bf16.gmra.mxu0 %v2846
      %v2905 = vpop.f32.mrf.mxu0
      %v2906 = vadd.f32 0.0, %v2905
      %v2907 = vpop.f32.mrf.mxu0
      %v2908 = vadd.f32 0.0, %v2907
      %2909 = vmatmul.bf16.gmra.mxu0 %v2849
      %v2910 = vpop.f32.mrf.mxu0
      %v2911 = vadd.f32 0.0, %v2910
      %v2912 = vpop.f32.mrf.mxu0
      %v2913 = vadd.f32 0.0, %v2912
      %2914 = vmatmul.bf16.gmra.mxu0 %v2852
      %v2915 = vpop.f32.mrf.mxu0
      %v2916 = vadd.f32 0.0, %v2915
      %v2917 = vpop.f32.mrf.mxu0
      %v2918 = vadd.f32 0.0, %v2917
      %2919 = vmatmul.bf16.gmra.mxu0 %v2855
      %v2920 = vpop.f32.mrf.mxu0
      %v2921 = vadd.f32 0.0, %v2920
      %v2922 = vpop.f32.mrf.mxu0
      %v2923 = vadd.f32 0.0, %v2922
      %2924 = vmatmul.bf16.gmra.mxu0 %v2858
      %v2925 = vpop.f32.mrf.mxu0
      %v2926 = vadd.f32 0.0, %v2925
      %v2927 = vpop.f32.mrf.mxu0
      %v2928 = vadd.f32 0.0, %v2927
      %2929 = vmatmul.bf16.gmra.mxu0 %v2861
      %v2930 = vpop.f32.mrf.mxu0
      %v2931 = vadd.f32 0.0, %v2930
      %v2932 = vpop.f32.mrf.mxu0
      %v2933 = vadd.f32 0.0, %v2932
      %2934 = vmatmul.bf16.gmra.mxu0 %v2864
      %v2935 = vpop.f32.mrf.mxu0
      %v2936 = vadd.f32 0.0, %v2935
      %v2937 = vpop.f32.mrf.mxu0
      %v2938 = vadd.f32 0.0, %v2937
      %2939 = vmatmul.bf16.gmra.mxu0 %v2867
      %v2940 = vpop.f32.mrf.mxu0
      %v2941 = vadd.f32 0.0, %v2940
      %v2942 = vpop.f32.mrf.mxu0
      %v2943 = vadd.f32 0.0, %v2942
      %2944 = vmatmul.bf16.gmra.mxu0 %v2870
      %v2945 = vpop.f32.mrf.mxu0
      %v2946 = vadd.f32 0.0, %v2945
      %v2947 = vpop.f32.mrf.mxu0
      %v2948 = vadd.f32 0.0, %v2947
      %2949 = vmatmul.bf16.gmra.mxu0 %v2873
      %v2950 = vpop.f32.mrf.mxu0
      %v2951 = vadd.f32 0.0, %v2950
      %v2952 = vpop.f32.mrf.mxu0
      %v2953 = vadd.f32 0.0, %v2952
      %2954 = vmatmul.bf16.gmra.mxu0 %v2876
      %v2955 = vpop.f32.mrf.mxu0
      %v2956 = vadd.f32 0.0, %v2955
      %v2957 = vpop.f32.mrf.mxu0
      %v2958 = vadd.f32 0.0, %v2957
      %2959 = vmatmul.bf16.gmra.mxu0 %v2879
      %v2960 = vpop.f32.mrf.mxu0
      %v2961 = vadd.f32 0.0, %v2960
      %v2962 = vpop.f32.mrf.mxu0
      %v2963 = vadd.f32 0.0, %v2962
      %2964 = vmatmul.bf16.gmra.mxu0 %v2882
      %v2965 = vpop.f32.mrf.mxu0
      %v2966 = vadd.f32 0.0, %v2965
      %v2967 = vpop.f32.mrf.mxu0
      %v2968 = vadd.f32 0.0, %v2967
      %2969 = vmatmul.bf16.gmra.mxu0 %v2885
      %v2970 = vpop.f32.mrf.mxu0
      %v2971 = vadd.f32 0.0, %v2970
      %v2972 = vpop.f32.mrf.mxu0
      %v2973 = vadd.f32 0.0, %v2972
      %2974 = vmatmul.bf16.gmra.mxu0 %v2888
      %v2975 = vpop.f32.mrf.mxu0
      %v2976 = vadd.f32 0.0, %v2975
      %v2977 = vpop.f32.mrf.mxu0
      %v2978 = vadd.f32 0.0, %v2977
      %2979 = vmatmul.bf16.gmra.mxu0 %v2891
      %v2980 = vpop.f32.mrf.mxu0
      %v2981 = vadd.f32 0.0, %v2980
      %v2982 = vpop.f32.mrf.mxu0
      %v2983 = vadd.f32 0.0, %v2982
      %2984 = vdwg.mxu0
      %v2985 = vadd.f32 %v2587, %v2906
      %v2986 = vadd.f32 %v2588, %v2908
      %v2987 = vadd.f32 %v2589, %v2911
      %v2988 = vadd.f32 %v2590, %v2913
      %v2989 = vadd.f32 %v2591, %v2916
      %v2990 = vadd.f32 %v2592, %v2918
      %v2991 = vadd.f32 %v2593, %v2921
      %v2992 = vadd.f32 %v2594, %v2923
      %v2993 = vadd.f32 %v2595, %v2926
      %v2994 = vadd.f32 %v2596, %v2928
      %v2995 = vadd.f32 %v2597, %v2931
      %v2996 = vadd.f32 %v2598, %v2933
      %v2997 = vadd.f32 %v2599, %v2936
      %v2998 = vadd.f32 %v2600, %v2938
      %v2999 = vadd.f32 %v2601, %v2941
      %v3000 = vadd.f32 %v2602, %v2943
      %v3001 = vadd.f32 %v2603, %v2946
      %v3002 = vadd.f32 %v2604, %v2948
      %v3003 = vadd.f32 %v2605, %v2951
      %v3004 = vadd.f32 %v2606, %v2953
      %v3005 = vadd.f32 %v2607, %v2956
      %v3006 = vadd.f32 %v2608, %v2958
      %v3007 = vadd.f32 %v2609, %v2961
      %v3008 = vadd.f32 %v2610, %v2963
      %v3009 = vadd.f32 %v2611, %v2966
      %v3010 = vadd.f32 %v2612, %v2968
      %v3011 = vadd.f32 %v2613, %v2971
      %v3012 = vadd.f32 %v2614, %v2973
      %v3013 = vadd.f32 %v2615, %v2976
      %v3014 = vadd.f32 %v2616, %v2978
      %v3015 = vadd.f32 %v2617, %v2981
      %v3016 = vadd.f32 %v2618, %v2983
      %s3017 = scalar_lea.vmem %s297, 24
      %v3018 = vld [vmem:[%s3017] sm:$0xf]
      %v3019 = vld [vmem:[%s3017 + $0x4] sm:$0xf]
      %v3020 = vld [vmem:[%s3017 + $0xc] sm:$0xf]
      %v3021 = vld [vmem:[%s3017 + $0x10] sm:$0xf]
      %v3022 = vld [vmem:[%s3017 + $0x18] sm:$0xf]
      %v3023 = vld [vmem:[%s3017 + $0x1c] sm:$0xf]
      %v3024 = vld [vmem:[%s3017 + $0x24] sm:$0xf]
      %v3025 = vld [vmem:[%s3017 + $0x28] sm:$0xf]
      %v3026 = vld [vmem:[%s3017 + $0x30] sm:$0xf]
      %v3027 = vld [vmem:[%s3017 + $0x34] sm:$0xf]
      %v3028 = vld [vmem:[%s3017 + $0x3c] sm:$0xf]
      %v3029 = vld [vmem:[%s3017 + $0x40] sm:$0xf]
      %v3030 = vld [vmem:[%s3017 + $0x48] sm:$0xf]
      %v3031 = vld [vmem:[%s3017 + $0x4c] sm:$0xf]
      %v3032 = vld [vmem:[%s3017 + $0x54] sm:$0xf]
      %v3033 = vld [vmem:[%s3017 + $0x58] sm:$0xf]
      %v3034 = vld [vmem:[%s3017 + $0x60] sm:$0xf]
      %v3035 = vld [vmem:[%s3017 + $0x64] sm:$0xf]
      %v3036 = vld [vmem:[%s3017 + $0x6c] sm:$0xf]
      %v3037 = vld [vmem:[%s3017 + $0x70] sm:$0xf]
      %v3038 = vld [vmem:[%s3017 + $0x78] sm:$0xf]
      %v3039 = vld [vmem:[%s3017 + $0x7c] sm:$0xf]
      %v3040 = vld [vmem:[%s3017 + $0x84] sm:$0xf]
      %v3041 = vld [vmem:[%s3017 + $0x88] sm:$0xf]
      %v3042 = vld [vmem:[%s3017 + $0x90] sm:$0xf]
      %v3043 = vld [vmem:[%s3017 + $0x94] sm:$0xf]
      %v3044 = vld [vmem:[%s3017 + $0x9c] sm:$0xf]
      %v3045 = vld [vmem:[%s3017 + $0xa0] sm:$0xf]
      %v3046 = vld [vmem:[%s3017 + $0xa8] sm:$0xf]
      %v3047 = vld [vmem:[%s3017 + $0xac] sm:$0xf]
      %v3048 = vld [vmem:[%s3017 + $0xb4] sm:$0xf]
      %v3049 = vld [vmem:[%s3017 + $0xb8] sm:$0xf]
      %s3050 = scalar_lea.vmem %s301, 12
      %v3051 = vld [vmem:[%s3050] sm:$0x3]
      %v3084 = vunpack.c.l.b16 %v3018
      %v3085 = vunpack.c.l.b16 %v3019
      %v3086 = vunpack.c.l.b16 %v3020
      %v3087 = vunpack.c.l.b16 %v3021
      %v3088 = vunpack.c.l.b16 %v3022
      %v3089 = vunpack.c.l.b16 %v3023
      %v3090 = vunpack.c.l.b16 %v3024
      %v3091 = vunpack.c.l.b16 %v3025
      %v3092 = vunpack.c.l.b16 %v3026
      %v3093 = vunpack.c.l.b16 %v3027
      %v3094 = vunpack.c.l.b16 %v3028
      %v3095 = vunpack.c.l.b16 %v3029
      %v3096 = vunpack.c.l.b16 %v3030
      %v3097 = vunpack.c.l.b16 %v3031
      %v3098 = vunpack.c.l.b16 %v3032
      %v3099 = vunpack.c.l.b16 %v3033
      %v3100 = vunpack.c.l.b16 %v3034
      %v3101 = vunpack.c.l.b16 %v3035
      %v3102 = vunpack.c.l.b16 %v3036
      %v3103 = vunpack.c.l.b16 %v3037
      %v3104 = vunpack.c.l.b16 %v3038
      %v3105 = vunpack.c.l.b16 %v3039
      %v3106 = vunpack.c.l.b16 %v3040
      %v3107 = vunpack.c.l.b16 %v3041
      %v3108 = vunpack.c.l.b16 %v3042
      %v3109 = vunpack.c.l.b16 %v3043
      %v3110 = vunpack.c.l.b16 %v3044
      %v3111 = vunpack.c.l.b16 %v3045
      %v3112 = vunpack.c.l.b16 %v3046
      %v3113 = vunpack.c.l.b16 %v3047
      %v3114 = vunpack.c.l.b16 %v3048
      %v3115 = vunpack.c.l.b16 %v3049
      %v3116 = vpack.c.b16 %v3085, %v3084
      %v3117 = vpack.c.b16 %v3087, %v3086
      %v3118 = vpack.c.b16 %v3089, %v3088
      %v3119 = vpack.c.b16 %v3091, %v3090
      %v3120 = vpack.c.b16 %v3093, %v3092
      %v3121 = vpack.c.b16 %v3095, %v3094
      %v3122 = vpack.c.b16 %v3097, %v3096
      %v3123 = vpack.c.b16 %v3099, %v3098
      %v3124 = vpack.c.b16 %v3101, %v3100
      %v3125 = vpack.c.b16 %v3103, %v3102
      %v3126 = vpack.c.b16 %v3105, %v3104
      %v3127 = vpack.c.b16 %v3107, %v3106
      %v3128 = vpack.c.b16 %v3109, %v3108
      %v3129 = vpack.c.b16 %v3111, %v3110
      %v3130 = vpack.c.b16 %v3113, %v3112
      %v3131 = vpack.c.b16 %v3115, %v3114
      %v3133 = vsel %vm931, %v3116, 0
      %v3136 = vsel %vm931, %v3117, 0
      %v3139 = vsel %vm931, %v3118, 0
      %v3142 = vsel %vm931, %v3119, 0
      %v3145 = vsel %vm931, %v3120, 0
      %v3148 = vsel %vm931, %v3121, 0
      %v3151 = vsel %vm931, %v3122, 0
      %v3154 = vsel %vm931, %v3123, 0
      %v3157 = vsel %vm931, %v3124, 0
      %v3160 = vsel %vm931, %v3125, 0
      %v3163 = vsel %vm931, %v3126, 0
      %v3166 = vsel %vm931, %v3127, 0
      %v3169 = vsel %vm931, %v3128, 0
      %v3172 = vsel %vm931, %v3129, 0
      %v3175 = vsel %vm931, %v3130, 0
      %v3178 = vsel %vm931, %v3131, 0
      %v3181 = vsel %vm980, %v3051, 0
      %3183 = vmatpush.bf16.msra.mxu0 0
      %3184 = vmatpush.bf16.msra.mxu0 0
      %3185 = vmatpush.bf16.msra.mxu0 0
      %3186 = vmatpush.bf16.msra.mxu0 0
      %3187 = vmatpush.bf16.msra.mxu0 0
      %3188 = vmatpush.bf16.msra.mxu0 0
      %3189 = vmatpush.bf16.msra.mxu0 0
      %3190 = vmatpush.bf16.msra.mxu0 %v3181
      %3191 = vmatmul.bf16.gmra.mxu0 %v3133
      %v3192 = vpop.f32.mrf.mxu0
      %v3193 = vadd.f32 0.0, %v3192
      %v3194 = vpop.f32.mrf.mxu0
      %v3195 = vadd.f32 0.0, %v3194
      %3196 = vmatmul.bf16.gmra.mxu0 %v3136
      %v3197 = vpop.f32.mrf.mxu0
      %v3198 = vadd.f32 0.0, %v3197
      %v3199 = vpop.f32.mrf.mxu0
      %v3200 = vadd.f32 0.0, %v3199
      %3201 = vmatmul.bf16.gmra.mxu0 %v3139
      %v3202 = vpop.f32.mrf.mxu0
      %v3203 = vadd.f32 0.0, %v3202
      %v3204 = vpop.f32.mrf.mxu0
      %v3205 = vadd.f32 0.0, %v3204
      %3206 = vmatmul.bf16.gmra.mxu0 %v3142
      %v3207 = vpop.f32.mrf.mxu0
      %v3208 = vadd.f32 0.0, %v3207
      %v3209 = vpop.f32.mrf.mxu0
      %v3210 = vadd.f32 0.0, %v3209
      %3211 = vmatmul.bf16.gmra.mxu0 %v3145
      %v3212 = vpop.f32.mrf.mxu0
      %v3213 = vadd.f32 0.0, %v3212
      %v3214 = vpop.f32.mrf.mxu0
      %v3215 = vadd.f32 0.0, %v3214
      %3216 = vmatmul.bf16.gmra.mxu0 %v3148
      %v3217 = vpop.f32.mrf.mxu0
      %v3218 = vadd.f32 0.0, %v3217
      %v3219 = vpop.f32.mrf.mxu0
      %v3220 = vadd.f32 0.0, %v3219
      %3221 = vmatmul.bf16.gmra.mxu0 %v3151
      %v3222 = vpop.f32.mrf.mxu0
      %v3223 = vadd.f32 0.0, %v3222
      %v3224 = vpop.f32.mrf.mxu0
      %v3225 = vadd.f32 0.0, %v3224
      %3226 = vmatmul.bf16.gmra.mxu0 %v3154
      %v3227 = vpop.f32.mrf.mxu0
      %v3228 = vadd.f32 0.0, %v3227
      %v3229 = vpop.f32.mrf.mxu0
      %v3230 = vadd.f32 0.0, %v3229
      %3231 = vmatmul.bf16.gmra.mxu0 %v3157
      %v3232 = vpop.f32.mrf.mxu0
      %v3233 = vadd.f32 0.0, %v3232
      %v3234 = vpop.f32.mrf.mxu0
      %v3235 = vadd.f32 0.0, %v3234
      %3236 = vmatmul.bf16.gmra.mxu0 %v3160
      %v3237 = vpop.f32.mrf.mxu0
      %v3238 = vadd.f32 0.0, %v3237
      %v3239 = vpop.f32.mrf.mxu0
      %v3240 = vadd.f32 0.0, %v3239
      %3241 = vmatmul.bf16.gmra.mxu0 %v3163
      %v3242 = vpop.f32.mrf.mxu0
      %v3243 = vadd.f32 0.0, %v3242
      %v3244 = vpop.f32.mrf.mxu0
      %v3245 = vadd.f32 0.0, %v3244
      %3246 = vmatmul.bf16.gmra.mxu0 %v3166
      %v3247 = vpop.f32.mrf.mxu0
      %v3248 = vadd.f32 0.0, %v3247
      %v3249 = vpop.f32.mrf.mxu0
      %v3250 = vadd.f32 0.0, %v3249
      %3251 = vmatmul.bf16.gmra.mxu0 %v3169
      %v3252 = vpop.f32.mrf.mxu0
      %v3253 = vadd.f32 0.0, %v3252
      %v3254 = vpop.f32.mrf.mxu0
      %v3255 = vadd.f32 0.0, %v3254
      %3256 = vmatmul.bf16.gmra.mxu0 %v3172
      %v3257 = vpop.f32.mrf.mxu0
      %v3258 = vadd.f32 0.0, %v3257
      %v3259 = vpop.f32.mrf.mxu0
      %v3260 = vadd.f32 0.0, %v3259
      %3261 = vmatmul.bf16.gmra.mxu0 %v3175
      %v3262 = vpop.f32.mrf.mxu0
      %v3263 = vadd.f32 0.0, %v3262
      %v3264 = vpop.f32.mrf.mxu0
      %v3265 = vadd.f32 0.0, %v3264
      %3266 = vmatmul.bf16.gmra.mxu0 %v3178
      %v3267 = vpop.f32.mrf.mxu0
      %v3268 = vadd.f32 0.0, %v3267
      %v3269 = vpop.f32.mrf.mxu0
      %v3270 = vadd.f32 0.0, %v3269
      %3271 = vdwg.mxu0
      %v3272 = vadd.f32 %v2985, %v3193
      %v3273 = vadd.f32 %v2986, %v3195
      %v3274 = vadd.f32 %v2987, %v3198
      %v3275 = vadd.f32 %v2988, %v3200
      %v3276 = vadd.f32 %v2989, %v3203
      %v3277 = vadd.f32 %v2990, %v3205
      %v3278 = vadd.f32 %v2991, %v3208
      %v3279 = vadd.f32 %v2992, %v3210
      %v3280 = vadd.f32 %v2993, %v3213
      %v3281 = vadd.f32 %v2994, %v3215
      %v3282 = vadd.f32 %v2995, %v3218
      %v3283 = vadd.f32 %v2996, %v3220
      %v3284 = vadd.f32 %v2997, %v3223
      %v3285 = vadd.f32 %v2998, %v3225
      %v3286 = vadd.f32 %v2999, %v3228
      %v3287 = vadd.f32 %v3000, %v3230
      %v3288 = vadd.f32 %v3001, %v3233
      %v3289 = vadd.f32 %v3002, %v3235
      %v3290 = vadd.f32 %v3003, %v3238
      %v3291 = vadd.f32 %v3004, %v3240
      %v3292 = vadd.f32 %v3005, %v3243
      %v3293 = vadd.f32 %v3006, %v3245
      %v3294 = vadd.f32 %v3007, %v3248
      %v3295 = vadd.f32 %v3008, %v3250
      %v3296 = vadd.f32 %v3009, %v3253
      %v3297 = vadd.f32 %v3010, %v3255
      %v3298 = vadd.f32 %v3011, %v3258
      %v3299 = vadd.f32 %v3012, %v3260
      %v3300 = vadd.f32 %v3013, %v3263
      %v3301 = vadd.f32 %v3014, %v3265
      %v3302 = vadd.f32 %v3015, %v3268
      %v3303 = vadd.f32 %v3016, %v3270
      %v3304 = vld [vmem:[%s3017] sm:$0xf]
      %v3305 = vld [vmem:[%s3017 + $0x4] sm:$0xf]
      %v3306 = vld [vmem:[%s3017 + $0x8] sm:$0x1]
      %v3307 = vld [vmem:[%s3017 + $0xc] sm:$0xf]
      %v3308 = vld [vmem:[%s3017 + $0x10] sm:$0xf]
      %v3309 = vld [vmem:[%s3017 + $0x14] sm:$0x1]
      %v3310 = vld [vmem:[%s3017 + $0x18] sm:$0xf]
      %v3311 = vld [vmem:[%s3017 + $0x1c] sm:$0xf]
      %v3312 = vld [vmem:[%s3017 + $0x20] sm:$0x1]
      %v3313 = vld [vmem:[%s3017 + $0x24] sm:$0xf]
      %v3314 = vld [vmem:[%s3017 + $0x28] sm:$0xf]
      %v3315 = vld [vmem:[%s3017 + $0x2c] sm:$0x1]
      %v3316 = vld [vmem:[%s3017 + $0x30] sm:$0xf]
      %v3317 = vld [vmem:[%s3017 + $0x34] sm:$0xf]
      %v3318 = vld [vmem:[%s3017 + $0x38] sm:$0x1]
      %v3319 = vld [vmem:[%s3017 + $0x3c] sm:$0xf]
      %v3320 = vld [vmem:[%s3017 + $0x40] sm:$0xf]
      %v3321 = vld [vmem:[%s3017 + $0x44] sm:$0x1]
      %v3322 = vld [vmem:[%s3017 + $0x48] sm:$0xf]
      %v3323 = vld [vmem:[%s3017 + $0x4c] sm:$0xf]
      %v3324 = vld [vmem:[%s3017 + $0x50] sm:$0x1]
      %v3325 = vld [vmem:[%s3017 + $0x54] sm:$0xf]
      %v3326 = vld [vmem:[%s3017 + $0x58] sm:$0xf]
      %v3327 = vld [vmem:[%s3017 + $0x5c] sm:$0x1]
      %v3328 = vld [vmem:[%s3017 + $0x60] sm:$0xf]
      %v3329 = vld [vmem:[%s3017 + $0x64] sm:$0xf]
      %v3330 = vld [vmem:[%s3017 + $0x68] sm:$0x1]
      %v3331 = vld [vmem:[%s3017 + $0x6c] sm:$0xf]
      %v3332 = vld [vmem:[%s3017 + $0x70] sm:$0xf]
      %v3333 = vld [vmem:[%s3017 + $0x74] sm:$0x1]
      %v3334 = vld [vmem:[%s3017 + $0x78] sm:$0xf]
      %v3335 = vld [vmem:[%s3017 + $0x7c] sm:$0xf]
      %v3336 = vld [vmem:[%s3017 + $0x80] sm:$0x1]
      %v3337 = vld [vmem:[%s3017 + $0x84] sm:$0xf]
      %v3338 = vld [vmem:[%s3017 + $0x88] sm:$0xf]
      %v3339 = vld [vmem:[%s3017 + $0x8c] sm:$0x1]
      %v3340 = vld [vmem:[%s3017 + $0x90] sm:$0xf]
      %v3341 = vld [vmem:[%s3017 + $0x94] sm:$0xf]
      %v3342 = vld [vmem:[%s3017 + $0x98] sm:$0x1]
      %v3343 = vld [vmem:[%s3017 + $0x9c] sm:$0xf]
      %v3344 = vld [vmem:[%s3017 + $0xa0] sm:$0xf]
      %v3345 = vld [vmem:[%s3017 + $0xa4] sm:$0x1]
      %v3346 = vld [vmem:[%s3017 + $0xa8] sm:$0xf]
      %v3347 = vld [vmem:[%s3017 + $0xac] sm:$0xf]
      %v3348 = vld [vmem:[%s3017 + $0xb0] sm:$0x1]
      %v3349 = vld [vmem:[%s3017 + $0xb4] sm:$0xf]
      %v3350 = vld [vmem:[%s3017 + $0xb8] sm:$0xf]
      %v3351 = vld [vmem:[%s3017 + $0xbc] sm:$0x1]
      %v3353 = vshrl.u32 %v3304, 16
      %v3355 = vrot.slane %v3353, 4
      %v3356 = vshll.u32 %v3304, 16
      %v3358 = vrot.slane %v3356, 5
      %v3359 = vor.u32 %v3355, %v3358
      %v3360 = vrot.slane %v3359, 4
      %v3362 = vshll.u32 %v3305, 16
      %v3364 = vrot.slane %v3362, 5
      %v3365 = vsel %vm496, %v3360, %v3364
      %v3366 = vshrl.u32 %v3305, 16
      %v3368 = vrot.slane %v3366, 4
      %v3369 = vor.u32 %v3368, %v3364
      %v3370 = vrot.slane %v3369, 4
      %v3372 = vshll.u32 %v3306, 16
      %v3374 = vrot.slane %v3372, 5
      %v3375 = vsel %vm496, %v3370, %v3374
      %v3377 = vshrl.u32 %v3307, 16
      %v3379 = vrot.slane %v3377, 4
      %v3380 = vshll.u32 %v3307, 16
      %v3382 = vrot.slane %v3380, 5
      %v3383 = vor.u32 %v3379, %v3382
      %v3384 = vrot.slane %v3383, 4
      %v3386 = vshll.u32 %v3308, 16
      %v3388 = vrot.slane %v3386, 5
      %v3389 = vsel %vm496, %v3384, %v3388
      %v3390 = vshrl.u32 %v3308, 16
      %v3392 = vrot.slane %v3390, 4
      %v3393 = vor.u32 %v3392, %v3388
      %v3394 = vrot.slane %v3393, 4
      %v3396 = vshll.u32 %v3309, 16
      %v3398 = vrot.slane %v3396, 5
      %v3399 = vsel %vm496, %v3394, %v3398
      %v3401 = vshrl.u32 %v3310, 16
      %v3403 = vrot.slane %v3401, 4
      %v3404 = vshll.u32 %v3310, 16
      %v3406 = vrot.slane %v3404, 5
      %v3407 = vor.u32 %v3403, %v3406
      %v3408 = vrot.slane %v3407, 4
      %v3410 = vshll.u32 %v3311, 16
      %v3412 = vrot.slane %v3410, 5
      %v3413 = vsel %vm496, %v3408, %v3412
      %v3414 = vshrl.u32 %v3311, 16
      %v3416 = vrot.slane %v3414, 4
      %v3417 = vor.u32 %v3416, %v3412
      %v3418 = vrot.slane %v3417, 4
      %v3420 = vshll.u32 %v3312, 16
      %v3422 = vrot.slane %v3420, 5
      %v3423 = vsel %vm496, %v3418, %v3422
      %v3425 = vshrl.u32 %v3313, 16
      %v3427 = vrot.slane %v3425, 4
      %v3428 = vshll.u32 %v3313, 16
      %v3430 = vrot.slane %v3428, 5
      %v3431 = vor.u32 %v3427, %v3430
      %v3432 = vrot.slane %v3431, 4
      %v3434 = vshll.u32 %v3314, 16
      %v3436 = vrot.slane %v3434, 5
      %v3437 = vsel %vm496, %v3432, %v3436
      %v3438 = vshrl.u32 %v3314, 16
      %v3440 = vrot.slane %v3438, 4
      %v3441 = vor.u32 %v3440, %v3436
      %v3442 = vrot.slane %v3441, 4
      %v3444 = vshll.u32 %v3315, 16
      %v3446 = vrot.slane %v3444, 5
      %v3447 = vsel %vm496, %v3442, %v3446
      %v3449 = vshrl.u32 %v3316, 16
      %v3451 = vrot.slane %v3449, 4
      %v3452 = vshll.u32 %v3316, 16
      %v3454 = vrot.slane %v3452, 5
      %v3455 = vor.u32 %v3451, %v3454
      %v3456 = vrot.slane %v3455, 4
      %v3458 = vshll.u32 %v3317, 16
      %v3460 = vrot.slane %v3458, 5
      %v3461 = vsel %vm496, %v3456, %v3460
      %v3462 = vshrl.u32 %v3317, 16
      %v3464 = vrot.slane %v3462, 4
      %v3465 = vor.u32 %v3464, %v3460
      %v3466 = vrot.slane %v3465, 4
      %v3468 = vshll.u32 %v3318, 16
      %v3470 = vrot.slane %v3468, 5
      %v3471 = vsel %vm496, %v3466, %v3470
      %v3473 = vshrl.u32 %v3319, 16
      %v3475 = vrot.slane %v3473, 4
      %v3476 = vshll.u32 %v3319, 16
      %v3478 = vrot.slane %v3476, 5
      %v3479 = vor.u32 %v3475, %v3478
      %v3480 = vrot.slane %v3479, 4
      %v3482 = vshll.u32 %v3320, 16
      %v3484 = vrot.slane %v3482, 5
      %v3485 = vsel %vm496, %v3480, %v3484
      %v3486 = vshrl.u32 %v3320, 16
      %v3488 = vrot.slane %v3486, 4
      %v3489 = vor.u32 %v3488, %v3484
      %v3490 = vrot.slane %v3489, 4
      %v3492 = vshll.u32 %v3321, 16
      %v3494 = vrot.slane %v3492, 5
      %v3495 = vsel %vm496, %v3490, %v3494
      %v3497 = vshrl.u32 %v3322, 16
      %v3499 = vrot.slane %v3497, 4
      %v3500 = vshll.u32 %v3322, 16
      %v3502 = vrot.slane %v3500, 5
      %v3503 = vor.u32 %v3499, %v3502
      %v3504 = vrot.slane %v3503, 4
      %v3506 = vshll.u32 %v3323, 16
      %v3508 = vrot.slane %v3506, 5
      %v3509 = vsel %vm496, %v3504, %v3508
      %v3510 = vshrl.u32 %v3323, 16
      %v3512 = vrot.slane %v3510, 4
      %v3513 = vor.u32 %v3512, %v3508
      %v3514 = vrot.slane %v3513, 4
      %v3516 = vshll.u32 %v3324, 16
      %v3518 = vrot.slane %v3516, 5
      %v3519 = vsel %vm496, %v3514, %v3518
      %v3521 = vshrl.u32 %v3325, 16
      %v3523 = vrot.slane %v3521, 4
      %v3524 = vshll.u32 %v3325, 16
      %v3526 = vrot.slane %v3524, 5
      %v3527 = vor.u32 %v3523, %v3526
      %v3528 = vrot.slane %v3527, 4
      %v3530 = vshll.u32 %v3326, 16
      %v3532 = vrot.slane %v3530, 5
      %v3533 = vsel %vm496, %v3528, %v3532
      %v3534 = vshrl.u32 %v3326, 16
      %v3536 = vrot.slane %v3534, 4
      %v3537 = vor.u32 %v3536, %v3532
      %v3538 = vrot.slane %v3537, 4
      %v3540 = vshll.u32 %v3327, 16
      %v3542 = vrot.slane %v3540, 5
      %v3543 = vsel %vm496, %v3538, %v3542
      %v3545 = vshrl.u32 %v3328, 16
      %v3547 = vrot.slane %v3545, 4
      %v3548 = vshll.u32 %v3328, 16
      %v3550 = vrot.slane %v3548, 5
      %v3551 = vor.u32 %v3547, %v3550
      %v3552 = vrot.slane %v3551, 4
      %v3554 = vshll.u32 %v3329, 16
      %v3556 = vrot.slane %v3554, 5
      %v3557 = vsel %vm496, %v3552, %v3556
      %v3558 = vshrl.u32 %v3329, 16
      %v3560 = vrot.slane %v3558, 4
      %v3561 = vor.u32 %v3560, %v3556
      %v3562 = vrot.slane %v3561, 4
      %v3564 = vshll.u32 %v3330, 16
      %v3566 = vrot.slane %v3564, 5
      %v3567 = vsel %vm496, %v3562, %v3566
      %v3569 = vshrl.u32 %v3331, 16
      %v3571 = vrot.slane %v3569, 4
      %v3572 = vshll.u32 %v3331, 16
      %v3574 = vrot.slane %v3572, 5
      %v3575 = vor.u32 %v3571, %v3574
      %v3576 = vrot.slane %v3575, 4
      %v3578 = vshll.u32 %v3332, 16
      %v3580 = vrot.slane %v3578, 5
      %v3581 = vsel %vm496, %v3576, %v3580
      %v3582 = vshrl.u32 %v3332, 16
      %v3584 = vrot.slane %v3582, 4
      %v3585 = vor.u32 %v3584, %v3580
      %v3586 = vrot.slane %v3585, 4
      %v3588 = vshll.u32 %v3333, 16
      %v3590 = vrot.slane %v3588, 5
      %v3591 = vsel %vm496, %v3586, %v3590
      %v3593 = vshrl.u32 %v3334, 16
      %v3595 = vrot.slane %v3593, 4
      %v3596 = vshll.u32 %v3334, 16
      %v3598 = vrot.slane %v3596, 5
      %v3599 = vor.u32 %v3595, %v3598
      %v3600 = vrot.slane %v3599, 4
      %v3602 = vshll.u32 %v3335, 16
      %v3604 = vrot.slane %v3602, 5
      %v3605 = vsel %vm496, %v3600, %v3604
      %v3606 = vshrl.u32 %v3335, 16
      %v3608 = vrot.slane %v3606, 4
      %v3609 = vor.u32 %v3608, %v3604
      %v3610 = vrot.slane %v3609, 4
      %v3612 = vshll.u32 %v3336, 16
      %v3614 = vrot.slane %v3612, 5
      %v3615 = vsel %vm496, %v3610, %v3614
      %v3617 = vshrl.u32 %v3337, 16
      %v3619 = vrot.slane %v3617, 4
      %v3620 = vshll.u32 %v3337, 16
      %v3622 = vrot.slane %v3620, 5
      %v3623 = vor.u32 %v3619, %v3622
      %v3624 = vrot.slane %v3623, 4
      %v3626 = vshll.u32 %v3338, 16
      %v3628 = vrot.slane %v3626, 5
      %v3629 = vsel %vm496, %v3624, %v3628
      %v3630 = vshrl.u32 %v3338, 16
      %v3632 = vrot.slane %v3630, 4
      %v3633 = vor.u32 %v3632, %v3628
      %v3634 = vrot.slane %v3633, 4
      %v3636 = vshll.u32 %v3339, 16
      %v3638 = vrot.slane %v3636, 5
      %v3639 = vsel %vm496, %v3634, %v3638
      %v3641 = vshrl.u32 %v3340, 16
      %v3643 = vrot.slane %v3641, 4
      %v3644 = vshll.u32 %v3340, 16
      %v3646 = vrot.slane %v3644, 5
      %v3647 = vor.u32 %v3643, %v3646
      %v3648 = vrot.slane %v3647, 4
      %v3650 = vshll.u32 %v3341, 16
      %v3652 = vrot.slane %v3650, 5
      %v3653 = vsel %vm496, %v3648, %v3652
      %v3654 = vshrl.u32 %v3341, 16
      %v3656 = vrot.slane %v3654, 4
      %v3657 = vor.u32 %v3656, %v3652
      %v3658 = vrot.slane %v3657, 4
      %v3660 = vshll.u32 %v3342, 16
      %v3662 = vrot.slane %v3660, 5
      %v3663 = vsel %vm496, %v3658, %v3662
      %v3665 = vshrl.u32 %v3343, 16
      %v3667 = vrot.slane %v3665, 4
      %v3668 = vshll.u32 %v3343, 16
      %v3670 = vrot.slane %v3668, 5
      %v3671 = vor.u32 %v3667, %v3670
      %v3672 = vrot.slane %v3671, 4
      %v3674 = vshll.u32 %v3344, 16
      %v3676 = vrot.slane %v3674, 5
      %v3677 = vsel %vm496, %v3672, %v3676
      %v3678 = vshrl.u32 %v3344, 16
      %v3680 = vrot.slane %v3678, 4
      %v3681 = vor.u32 %v3680, %v3676
      %v3682 = vrot.slane %v3681, 4
      %v3684 = vshll.u32 %v3345, 16
      %v3686 = vrot.slane %v3684, 5
      %v3687 = vsel %vm496, %v3682, %v3686
      %v3689 = vshrl.u32 %v3346, 16
      %v3691 = vrot.slane %v3689, 4
      %v3692 = vshll.u32 %v3346, 16
      %v3694 = vrot.slane %v3692, 5
      %v3695 = vor.u32 %v3691, %v3694
      %v3696 = vrot.slane %v3695, 4
      %v3698 = vshll.u32 %v3347, 16
      %v3700 = vrot.slane %v3698, 5
      %v3701 = vsel %vm496, %v3696, %v3700
      %v3702 = vshrl.u32 %v3347, 16
      %v3704 = vrot.slane %v3702, 4
      %v3705 = vor.u32 %v3704, %v3700
      %v3706 = vrot.slane %v3705, 4
      %v3708 = vshll.u32 %v3348, 16
      %v3710 = vrot.slane %v3708, 5
      %v3711 = vsel %vm496, %v3706, %v3710
      %v3713 = vshrl.u32 %v3349, 16
      %v3715 = vrot.slane %v3713, 4
      %v3716 = vshll.u32 %v3349, 16
      %v3718 = vrot.slane %v3716, 5
      %v3719 = vor.u32 %v3715, %v3718
      %v3720 = vrot.slane %v3719, 4
      %v3722 = vshll.u32 %v3350, 16
      %v3724 = vrot.slane %v3722, 5
      %v3725 = vsel %vm496, %v3720, %v3724
      %v3726 = vshrl.u32 %v3350, 16
      %v3728 = vrot.slane %v3726, 4
      %v3729 = vor.u32 %v3728, %v3724
      %v3730 = vrot.slane %v3729, 4
      %v3732 = vshll.u32 %v3351, 16
      %v3734 = vrot.slane %v3732, 5
      %v3735 = vsel %vm496, %v3730, %v3734
      %s3736 = scalar_lea.vmem %s301, 14
      %v3737 = vld [vmem:[%s3736] sm:$0x3]
      %v3738 = vunpack.c.l.b16 %v3365
      %v3739 = vunpack.c.l.b16 %v3375
      %v3740 = vunpack.c.l.b16 %v3389
      %v3741 = vunpack.c.l.b16 %v3399
      %v3742 = vunpack.c.l.b16 %v3413
      %v3743 = vunpack.c.l.b16 %v3423
      %v3744 = vunpack.c.l.b16 %v3437
      %v3745 = vunpack.c.l.b16 %v3447
      %v3746 = vunpack.c.l.b16 %v3461
      %v3747 = vunpack.c.l.b16 %v3471
      %v3748 = vunpack.c.l.b16 %v3485
      %v3749 = vunpack.c.l.b16 %v3495
      %v3750 = vunpack.c.l.b16 %v3509
      %v3751 = vunpack.c.l.b16 %v3519
      %v3752 = vunpack.c.l.b16 %v3533
      %v3753 = vunpack.c.l.b16 %v3543
      %v3754 = vunpack.c.l.b16 %v3557
      %v3755 = vunpack.c.l.b16 %v3567
      %v3756 = vunpack.c.l.b16 %v3581
      %v3757 = vunpack.c.l.b16 %v3591
      %v3758 = vunpack.c.l.b16 %v3605
      %v3759 = vunpack.c.l.b16 %v3615
      %v3760 = vunpack.c.l.b16 %v3629
      %v3761 = vunpack.c.l.b16 %v3639
      %v3762 = vunpack.c.l.b16 %v3653
      %v3763 = vunpack.c.l.b16 %v3663
      %v3764 = vunpack.c.l.b16 %v3677
      %v3765 = vunpack.c.l.b16 %v3687
      %v3766 = vunpack.c.l.b16 %v3701
      %v3767 = vunpack.c.l.b16 %v3711
      %v3768 = vunpack.c.l.b16 %v3725
      %v3769 = vunpack.c.l.b16 %v3735
      %v3770 = vpack.c.b16 %v3739, %v3738
      %v3771 = vpack.c.b16 %v3741, %v3740
      %v3772 = vpack.c.b16 %v3743, %v3742
      %v3773 = vpack.c.b16 %v3745, %v3744
      %v3774 = vpack.c.b16 %v3747, %v3746
      %v3775 = vpack.c.b16 %v3749, %v3748
      %v3776 = vpack.c.b16 %v3751, %v3750
      %v3777 = vpack.c.b16 %v3753, %v3752
      %v3778 = vpack.c.b16 %v3755, %v3754
      %v3779 = vpack.c.b16 %v3757, %v3756
      %v3780 = vpack.c.b16 %v3759, %v3758
      %v3781 = vpack.c.b16 %v3761, %v3760
      %v3782 = vpack.c.b16 %v3763, %v3762
      %v3783 = vpack.c.b16 %v3765, %v3764
      %v3784 = vpack.c.b16 %v3767, %v3766
      %v3785 = vpack.c.b16 %v3769, %v3768
      %v3787 = vsel %vm931, %v3770, 0
      %v3790 = vsel %vm931, %v3771, 0
      %v3793 = vsel %vm931, %v3772, 0
      %v3796 = vsel %vm931, %v3773, 0
      %v3799 = vsel %vm931, %v3774, 0
      %v3802 = vsel %vm931, %v3775, 0
      %v3805 = vsel %vm931, %v3776, 0
      %v3808 = vsel %vm931, %v3777, 0
      %v3811 = vsel %vm931, %v3778, 0
      %v3814 = vsel %vm931, %v3779, 0
      %v3817 = vsel %vm931, %v3780, 0
      %v3820 = vsel %vm931, %v3781, 0
      %v3823 = vsel %vm931, %v3782, 0
      %v3826 = vsel %vm931, %v3783, 0
      %v3829 = vsel %vm931, %v3784, 0
      %v3832 = vsel %vm931, %v3785, 0
      %v3835 = vsel %vm980, %v3737, 0
      %3837 = vmatpush.bf16.msra.mxu0 0
      %3838 = vmatpush.bf16.msra.mxu0 0
      %3839 = vmatpush.bf16.msra.mxu0 0
      %3840 = vmatpush.bf16.msra.mxu0 0
      %3841 = vmatpush.bf16.msra.mxu0 0
      %3842 = vmatpush.bf16.msra.mxu0 0
      %3843 = vmatpush.bf16.msra.mxu0 0
      %3844 = vmatpush.bf16.msra.mxu0 %v3835
      %3845 = vmatmul.bf16.gmra.mxu0 %v3787
      %v3846 = vpop.f32.mrf.mxu0
      %v3847 = vadd.f32 0.0, %v3846
      %v3848 = vpop.f32.mrf.mxu0
      %v3849 = vadd.f32 0.0, %v3848
      %3850 = vmatmul.bf16.gmra.mxu0 %v3790
      %v3851 = vpop.f32.mrf.mxu0
      %v3852 = vadd.f32 0.0, %v3851
      %v3853 = vpop.f32.mrf.mxu0
      %v3854 = vadd.f32 0.0, %v3853
      %3855 = vmatmul.bf16.gmra.mxu0 %v3793
      %v3856 = vpop.f32.mrf.mxu0
      %v3857 = vadd.f32 0.0, %v3856
      %v3858 = vpop.f32.mrf.mxu0
      %v3859 = vadd.f32 0.0, %v3858
      %3860 = vmatmul.bf16.gmra.mxu0 %v3796
      %v3861 = vpop.f32.mrf.mxu0
      %v3862 = vadd.f32 0.0, %v3861
      %v3863 = vpop.f32.mrf.mxu0
      %v3864 = vadd.f32 0.0, %v3863
      %3865 = vmatmul.bf16.gmra.mxu0 %v3799
      %v3866 = vpop.f32.mrf.mxu0
      %v3867 = vadd.f32 0.0, %v3866
      %v3868 = vpop.f32.mrf.mxu0
      %v3869 = vadd.f32 0.0, %v3868
      %3870 = vmatmul.bf16.gmra.mxu0 %v3802
      %v3871 = vpop.f32.mrf.mxu0
      %v3872 = vadd.f32 0.0, %v3871
      %v3873 = vpop.f32.mrf.mxu0
      %v3874 = vadd.f32 0.0, %v3873
      %3875 = vmatmul.bf16.gmra.mxu0 %v3805
      %v3876 = vpop.f32.mrf.mxu0
      %v3877 = vadd.f32 0.0, %v3876
      %v3878 = vpop.f32.mrf.mxu0
      %v3879 = vadd.f32 0.0, %v3878
      %3880 = vmatmul.bf16.gmra.mxu0 %v3808
      %v3881 = vpop.f32.mrf.mxu0
      %v3882 = vadd.f32 0.0, %v3881
      %v3883 = vpop.f32.mrf.mxu0
      %v3884 = vadd.f32 0.0, %v3883
      %3885 = vmatmul.bf16.gmra.mxu0 %v3811
      %v3886 = vpop.f32.mrf.mxu0
      %v3887 = vadd.f32 0.0, %v3886
      %v3888 = vpop.f32.mrf.mxu0
      %v3889 = vadd.f32 0.0, %v3888
      %3890 = vmatmul.bf16.gmra.mxu0 %v3814
      %v3891 = vpop.f32.mrf.mxu0
      %v3892 = vadd.f32 0.0, %v3891
      %v3893 = vpop.f32.mrf.mxu0
      %v3894 = vadd.f32 0.0, %v3893
      %3895 = vmatmul.bf16.gmra.mxu0 %v3817
      %v3896 = vpop.f32.mrf.mxu0
      %v3897 = vadd.f32 0.0, %v3896
      %v3898 = vpop.f32.mrf.mxu0
      %v3899 = vadd.f32 0.0, %v3898
      %3900 = vmatmul.bf16.gmra.mxu0 %v3820
      %v3901 = vpop.f32.mrf.mxu0
      %v3902 = vadd.f32 0.0, %v3901
      %v3903 = vpop.f32.mrf.mxu0
      %v3904 = vadd.f32 0.0, %v3903
      %3905 = vmatmul.bf16.gmra.mxu0 %v3823
      %v3906 = vpop.f32.mrf.mxu0
      %v3907 = vadd.f32 0.0, %v3906
      %v3908 = vpop.f32.mrf.mxu0
      %v3909 = vadd.f32 0.0, %v3908
      %3910 = vmatmul.bf16.gmra.mxu0 %v3826
      %v3911 = vpop.f32.mrf.mxu0
      %v3912 = vadd.f32 0.0, %v3911
      %v3913 = vpop.f32.mrf.mxu0
      %v3914 = vadd.f32 0.0, %v3913
      %3915 = vmatmul.bf16.gmra.mxu0 %v3829
      %v3916 = vpop.f32.mrf.mxu0
      %v3917 = vadd.f32 0.0, %v3916
      %v3918 = vpop.f32.mrf.mxu0
      %v3919 = vadd.f32 0.0, %v3918
      %3920 = vmatmul.bf16.gmra.mxu0 %v3832
      %v3921 = vpop.f32.mrf.mxu0
      %v3922 = vadd.f32 0.0, %v3921
      %v3923 = vpop.f32.mrf.mxu0
      %v3924 = vadd.f32 0.0, %v3923
      %3925 = vdwg.mxu0
      %v3926 = vadd.f32 %v3272, %v3847
      %v3927 = vadd.f32 %v3273, %v3849
      %v3928 = vadd.f32 %v3274, %v3852
      %v3929 = vadd.f32 %v3275, %v3854
      %v3930 = vadd.f32 %v3276, %v3857
      %v3931 = vadd.f32 %v3277, %v3859
      %v3932 = vadd.f32 %v3278, %v3862
      %v3933 = vadd.f32 %v3279, %v3864
      %v3934 = vadd.f32 %v3280, %v3867
      %v3935 = vadd.f32 %v3281, %v3869
      %v3936 = vadd.f32 %v3282, %v3872
      %v3937 = vadd.f32 %v3283, %v3874
      %v3938 = vadd.f32 %v3284, %v3877
      %v3939 = vadd.f32 %v3285, %v3879
      %v3940 = vadd.f32 %v3286, %v3882
      %v3941 = vadd.f32 %v3287, %v3884
      %v3942 = vadd.f32 %v3288, %v3887
      %v3943 = vadd.f32 %v3289, %v3889
      %v3944 = vadd.f32 %v3290, %v3892
      %v3945 = vadd.f32 %v3291, %v3894
      %v3946 = vadd.f32 %v3292, %v3897
      %v3947 = vadd.f32 %v3293, %v3899
      %v3948 = vadd.f32 %v3294, %v3902
      %v3949 = vadd.f32 %v3295, %v3904
      %v3950 = vadd.f32 %v3296, %v3907
      %v3951 = vadd.f32 %v3297, %v3909
      %v3952 = vadd.f32 %v3298, %v3912
      %v3953 = vadd.f32 %v3299, %v3914
      %v3954 = vadd.f32 %v3300, %v3917
      %v3955 = vadd.f32 %v3301, %v3919
      %v3956 = vadd.f32 %v3302, %v3922
      %v3957 = vadd.f32 %v3303, %v3924
      %v3958 = vld [vmem:[%s3017] sm:$0xe]
      %v3959 = vld [vmem:[%s3017 + $0xc] sm:$0xe]
      %v3960 = vld [vmem:[%s3017 + $0x18] sm:$0xe]
      %v3961 = vld [vmem:[%s3017 + $0x24] sm:$0xe]
      %v3962 = vld [vmem:[%s3017 + $0x30] sm:$0xe]
      %v3963 = vld [vmem:[%s3017 + $0x3c] sm:$0xe]
      %v3964 = vld [vmem:[%s3017 + $0x48] sm:$0xe]
      %v3965 = vld [vmem:[%s3017 + $0x54] sm:$0xe]
      %v3966 = vld [vmem:[%s3017 + $0x60] sm:$0xe]
      %v3967 = vld [vmem:[%s3017 + $0x6c] sm:$0xe]
      %v3968 = vld [vmem:[%s3017 + $0x78] sm:$0xe]
      %v3969 = vld [vmem:[%s3017 + $0x84] sm:$0xe]
      %v3970 = vld [vmem:[%s3017 + $0x90] sm:$0xe]
      %v3971 = vld [vmem:[%s3017 + $0x9c] sm:$0xe]
      %v3972 = vld [vmem:[%s3017 + $0xa8] sm:$0xe]
      %v3973 = vld [vmem:[%s3017 + $0xb4] sm:$0xe]
      %v4022 = vrot.slane %v3958, 5
      %v4023 = vrot.slane %v4022, 4
      %v4024 = vrot.slane %v3305, 5
      %v4025 = vsel %vm1343, %v4023, %v4024
      %v4026 = vrot.slane %v4024, 4
      %v4027 = vrot.slane %v3306, 5
      %v4028 = vsel %vm1343, %v4026, %v4027
      %v4029 = vrot.slane %v3959, 5
      %v4030 = vrot.slane %v4029, 4
      %v4031 = vrot.slane %v3308, 5
      %v4032 = vsel %vm1343, %v4030, %v4031
      %v4033 = vrot.slane %v4031, 4
      %v4034 = vrot.slane %v3309, 5
      %v4035 = vsel %vm1343, %v4033, %v4034
      %v4036 = vrot.slane %v3960, 5
      %v4037 = vrot.slane %v4036, 4
      %v4038 = vrot.slane %v3311, 5
      %v4039 = vsel %vm1343, %v4037, %v4038
      %v4040 = vrot.slane %v4038, 4
      %v4041 = vrot.slane %v3312, 5
      %v4042 = vsel %vm1343, %v4040, %v4041
      %v4043 = vrot.slane %v3961, 5
      %v4044 = vrot.slane %v4043, 4
      %v4045 = vrot.slane %v3314, 5
      %v4046 = vsel %vm1343, %v4044, %v4045
      %v4047 = vrot.slane %v4045, 4
      %v4048 = vrot.slane %v3315, 5
      %v4049 = vsel %vm1343, %v4047, %v4048
      %v4050 = vrot.slane %v3962, 5
      %v4051 = vrot.slane %v4050, 4
      %v4052 = vrot.slane %v3317, 5
      %v4053 = vsel %vm1343, %v4051, %v4052
      %v4054 = vrot.slane %v4052, 4
      %v4055 = vrot.slane %v3318, 5
      %v4056 = vsel %vm1343, %v4054, %v4055
      %v4057 = vrot.slane %v3963, 5
      %v4058 = vrot.slane %v4057, 4
      %v4059 = vrot.slane %v3320, 5
      %v4060 = vsel %vm1343, %v4058, %v4059
      %v4061 = vrot.slane %v4059, 4
      %v4062 = vrot.slane %v3321, 5
      %v4063 = vsel %vm1343, %v4061, %v4062
      %v4064 = vrot.slane %v3964, 5
      %v4065 = vrot.slane %v4064, 4
      %v4066 = vrot.slane %v3323, 5
      %v4067 = vsel %vm1343, %v4065, %v4066
      %v4068 = vrot.slane %v4066, 4
      %v4069 = vrot.slane %v3324, 5
      %v4070 = vsel %vm1343, %v4068, %v4069
      %v4071 = vrot.slane %v3965, 5
      %v4072 = vrot.slane %v4071, 4
      %v4073 = vrot.slane %v3326, 5
      %v4074 = vsel %vm1343, %v4072, %v4073
      %v4075 = vrot.slane %v4073, 4
      %v4076 = vrot.slane %v3327, 5
      %v4077 = vsel %vm1343, %v4075, %v4076
      %v4078 = vrot.slane %v3966, 5
      %v4079 = vrot.slane %v4078, 4
      %v4080 = vrot.slane %v3329, 5
      %v4081 = vsel %vm1343, %v4079, %v4080
      %v4082 = vrot.slane %v4080, 4
      %v4083 = vrot.slane %v3330, 5
      %v4084 = vsel %vm1343, %v4082, %v4083
      %v4085 = vrot.slane %v3967, 5
      %v4086 = vrot.slane %v4085, 4
      %v4087 = vrot.slane %v3332, 5
      %v4088 = vsel %vm1343, %v4086, %v4087
      %v4089 = vrot.slane %v4087, 4
      %v4090 = vrot.slane %v3333, 5
      %v4091 = vsel %vm1343, %v4089, %v4090
      %v4092 = vrot.slane %v3968, 5
      %v4093 = vrot.slane %v4092, 4
      %v4094 = vrot.slane %v3335, 5
      %v4095 = vsel %vm1343, %v4093, %v4094
      %v4096 = vrot.slane %v4094, 4
      %v4097 = vrot.slane %v3336, 5
      %v4098 = vsel %vm1343, %v4096, %v4097
      %v4099 = vrot.slane %v3969, 5
      %v4100 = vrot.slane %v4099, 4
      %v4101 = vrot.slane %v3338, 5
      %v4102 = vsel %vm1343, %v4100, %v4101
      %v4103 = vrot.slane %v4101, 4
      %v4104 = vrot.slane %v3339, 5
      %v4105 = vsel %vm1343, %v4103, %v4104
      %v4106 = vrot.slane %v3970, 5
      %v4107 = vrot.slane %v4106, 4
      %v4108 = vrot.slane %v3341, 5
      %v4109 = vsel %vm1343, %v4107, %v4108
      %v4110 = vrot.slane %v4108, 4
      %v4111 = vrot.slane %v3342, 5
      %v4112 = vsel %vm1343, %v4110, %v4111
      %v4113 = vrot.slane %v3971, 5
      %v4114 = vrot.slane %v4113, 4
      %v4115 = vrot.slane %v3344, 5
      %v4116 = vsel %vm1343, %v4114, %v4115
      %v4117 = vrot.slane %v4115, 4
      %v4118 = vrot.slane %v3345, 5
      %v4119 = vsel %vm1343, %v4117, %v4118
      %v4120 = vrot.slane %v3972, 5
      %v4121 = vrot.slane %v4120, 4
      %v4122 = vrot.slane %v3347, 5
      %v4123 = vsel %vm1343, %v4121, %v4122
      %v4124 = vrot.slane %v4122, 4
      %v4125 = vrot.slane %v3348, 5
      %v4126 = vsel %vm1343, %v4124, %v4125
      %v4127 = vrot.slane %v3973, 5
      %v4128 = vrot.slane %v4127, 4
      %v4129 = vrot.slane %v3350, 5
      %v4130 = vsel %vm1343, %v4128, %v4129
      %v4131 = vrot.slane %v4129, 4
      %v4132 = vrot.slane %v3351, 5
      %v4133 = vsel %vm1343, %v4131, %v4132
      %s4134 = scalar_lea.vmem %s301, 16
      %v4135 = vld [vmem:[%s4134] sm:$0x3]
      %v4136 = vunpack.c.l.b16 %v4025
      %v4137 = vunpack.c.l.b16 %v4028
      %v4138 = vunpack.c.l.b16 %v4032
      %v4139 = vunpack.c.l.b16 %v4035
      %v4140 = vunpack.c.l.b16 %v4039
      %v4141 = vunpack.c.l.b16 %v4042
      %v4142 = vunpack.c.l.b16 %v4046
      %v4143 = vunpack.c.l.b16 %v4049
      %v4144 = vunpack.c.l.b16 %v4053
      %v4145 = vunpack.c.l.b16 %v4056
      %v4146 = vunpack.c.l.b16 %v4060
      %v4147 = vunpack.c.l.b16 %v4063
      %v4148 = vunpack.c.l.b16 %v4067
      %v4149 = vunpack.c.l.b16 %v4070
      %v4150 = vunpack.c.l.b16 %v4074
      %v4151 = vunpack.c.l.b16 %v4077
      %v4152 = vunpack.c.l.b16 %v4081
      %v4153 = vunpack.c.l.b16 %v4084
      %v4154 = vunpack.c.l.b16 %v4088
      %v4155 = vunpack.c.l.b16 %v4091
      %v4156 = vunpack.c.l.b16 %v4095
      %v4157 = vunpack.c.l.b16 %v4098
      %v4158 = vunpack.c.l.b16 %v4102
      %v4159 = vunpack.c.l.b16 %v4105
      %v4160 = vunpack.c.l.b16 %v4109
      %v4161 = vunpack.c.l.b16 %v4112
      %v4162 = vunpack.c.l.b16 %v4116
      %v4163 = vunpack.c.l.b16 %v4119
      %v4164 = vunpack.c.l.b16 %v4123
      %v4165 = vunpack.c.l.b16 %v4126
      %v4166 = vunpack.c.l.b16 %v4130
      %v4167 = vunpack.c.l.b16 %v4133
      %v4168 = vpack.c.b16 %v4137, %v4136
      %v4169 = vpack.c.b16 %v4139, %v4138
      %v4170 = vpack.c.b16 %v4141, %v4140
      %v4171 = vpack.c.b16 %v4143, %v4142
      %v4172 = vpack.c.b16 %v4145, %v4144
      %v4173 = vpack.c.b16 %v4147, %v4146
      %v4174 = vpack.c.b16 %v4149, %v4148
      %v4175 = vpack.c.b16 %v4151, %v4150
      %v4176 = vpack.c.b16 %v4153, %v4152
      %v4177 = vpack.c.b16 %v4155, %v4154
      %v4178 = vpack.c.b16 %v4157, %v4156
      %v4179 = vpack.c.b16 %v4159, %v4158
      %v4180 = vpack.c.b16 %v4161, %v4160
      %v4181 = vpack.c.b16 %v4163, %v4162
      %v4182 = vpack.c.b16 %v4165, %v4164
      %v4183 = vpack.c.b16 %v4167, %v4166
      %v4185 = vsel %vm931, %v4168, 0
      %v4188 = vsel %vm931, %v4169, 0
      %v4191 = vsel %vm931, %v4170, 0
      %v4194 = vsel %vm931, %v4171, 0
      %v4197 = vsel %vm931, %v4172, 0
      %v4200 = vsel %vm931, %v4173, 0
      %v4203 = vsel %vm931, %v4174, 0
      %v4206 = vsel %vm931, %v4175, 0
      %v4209 = vsel %vm931, %v4176, 0
      %v4212 = vsel %vm931, %v4177, 0
      %v4215 = vsel %vm931, %v4178, 0
      %v4218 = vsel %vm931, %v4179, 0
      %v4221 = vsel %vm931, %v4180, 0
      %v4224 = vsel %vm931, %v4181, 0
      %v4227 = vsel %vm931, %v4182, 0
      %v4230 = vsel %vm931, %v4183, 0
      %v4233 = vsel %vm980, %v4135, 0
      %4235 = vmatpush.bf16.msra.mxu0 0
      %4236 = vmatpush.bf16.msra.mxu0 0
      %4237 = vmatpush.bf16.msra.mxu0 0
      %4238 = vmatpush.bf16.msra.mxu0 0
      %4239 = vmatpush.bf16.msra.mxu0 0
      %4240 = vmatpush.bf16.msra.mxu0 0
      %4241 = vmatpush.bf16.msra.mxu0 0
      %4242 = vmatpush.bf16.msra.mxu0 %v4233
      %4243 = vmatmul.bf16.gmra.mxu0 %v4185
      %v4244 = vpop.f32.mrf.mxu0
      %v4245 = vadd.f32 0.0, %v4244
      %v4246 = vpop.f32.mrf.mxu0
      %v4247 = vadd.f32 0.0, %v4246
      %4248 = vmatmul.bf16.gmra.mxu0 %v4188
      %v4249 = vpop.f32.mrf.mxu0
      %v4250 = vadd.f32 0.0, %v4249
      %v4251 = vpop.f32.mrf.mxu0
      %v4252 = vadd.f32 0.0, %v4251
      %4253 = vmatmul.bf16.gmra.mxu0 %v4191
      %v4254 = vpop.f32.mrf.mxu0
      %v4255 = vadd.f32 0.0, %v4254
      %v4256 = vpop.f32.mrf.mxu0
      %v4257 = vadd.f32 0.0, %v4256
      %4258 = vmatmul.bf16.gmra.mxu0 %v4194
      %v4259 = vpop.f32.mrf.mxu0
      %v4260 = vadd.f32 0.0, %v4259
      %v4261 = vpop.f32.mrf.mxu0
      %v4262 = vadd.f32 0.0, %v4261
      %4263 = vmatmul.bf16.gmra.mxu0 %v4197
      %v4264 = vpop.f32.mrf.mxu0
      %v4265 = vadd.f32 0.0, %v4264
      %v4266 = vpop.f32.mrf.mxu0
      %v4267 = vadd.f32 0.0, %v4266
      %4268 = vmatmul.bf16.gmra.mxu0 %v4200
      %v4269 = vpop.f32.mrf.mxu0
      %v4270 = vadd.f32 0.0, %v4269
      %v4271 = vpop.f32.mrf.mxu0
      %v4272 = vadd.f32 0.0, %v4271
      %4273 = vmatmul.bf16.gmra.mxu0 %v4203
      %v4274 = vpop.f32.mrf.mxu0
      %v4275 = vadd.f32 0.0, %v4274
      %v4276 = vpop.f32.mrf.mxu0
      %v4277 = vadd.f32 0.0, %v4276
      %4278 = vmatmul.bf16.gmra.mxu0 %v4206
      %v4279 = vpop.f32.mrf.mxu0
      %v4280 = vadd.f32 0.0, %v4279
      %v4281 = vpop.f32.mrf.mxu0
      %v4282 = vadd.f32 0.0, %v4281
      %4283 = vmatmul.bf16.gmra.mxu0 %v4209
      %v4284 = vpop.f32.mrf.mxu0
      %v4285 = vadd.f32 0.0, %v4284
      %v4286 = vpop.f32.mrf.mxu0
      %v4287 = vadd.f32 0.0, %v4286
      %4288 = vmatmul.bf16.gmra.mxu0 %v4212
      %v4289 = vpop.f32.mrf.mxu0
      %v4290 = vadd.f32 0.0, %v4289
      %v4291 = vpop.f32.mrf.mxu0
      %v4292 = vadd.f32 0.0, %v4291
      %4293 = vmatmul.bf16.gmra.mxu0 %v4215
      %v4294 = vpop.f32.mrf.mxu0
      %v4295 = vadd.f32 0.0, %v4294
      %v4296 = vpop.f32.mrf.mxu0
      %v4297 = vadd.f32 0.0, %v4296
      %4298 = vmatmul.bf16.gmra.mxu0 %v4218
      %v4299 = vpop.f32.mrf.mxu0
      %v4300 = vadd.f32 0.0, %v4299
      %v4301 = vpop.f32.mrf.mxu0
      %v4302 = vadd.f32 0.0, %v4301
      %4303 = vmatmul.bf16.gmra.mxu0 %v4221
      %v4304 = vpop.f32.mrf.mxu0
      %v4305 = vadd.f32 0.0, %v4304
      %v4306 = vpop.f32.mrf.mxu0
      %v4307 = vadd.f32 0.0, %v4306
      %4308 = vmatmul.bf16.gmra.mxu0 %v4224
      %v4309 = vpop.f32.mrf.mxu0
      %v4310 = vadd.f32 0.0, %v4309
      %v4311 = vpop.f32.mrf.mxu0
      %v4312 = vadd.f32 0.0, %v4311
      %4313 = vmatmul.bf16.gmra.mxu0 %v4227
      %v4314 = vpop.f32.mrf.mxu0
      %v4315 = vadd.f32 0.0, %v4314
      %v4316 = vpop.f32.mrf.mxu0
      %v4317 = vadd.f32 0.0, %v4316
      %4318 = vmatmul.bf16.gmra.mxu0 %v4230
      %v4319 = vpop.f32.mrf.mxu0
      %v4320 = vadd.f32 0.0, %v4319
      %v4321 = vpop.f32.mrf.mxu0
      %v4322 = vadd.f32 0.0, %v4321
      %4323 = vdwg.mxu0
      %v4324 = vadd.f32 %v3926, %v4245
      %v4325 = vadd.f32 %v3927, %v4247
      %v4326 = vadd.f32 %v3928, %v4250
      %v4327 = vadd.f32 %v3929, %v4252
      %v4328 = vadd.f32 %v3930, %v4255
      %v4329 = vadd.f32 %v3931, %v4257
      %v4330 = vadd.f32 %v3932, %v4260
      %v4331 = vadd.f32 %v3933, %v4262
      %v4332 = vadd.f32 %v3934, %v4265
      %v4333 = vadd.f32 %v3935, %v4267
      %v4334 = vadd.f32 %v3936, %v4270
      %v4335 = vadd.f32 %v3937, %v4272
      %v4336 = vadd.f32 %v3938, %v4275
      %v4337 = vadd.f32 %v3939, %v4277
      %v4338 = vadd.f32 %v3940, %v4280
      %v4339 = vadd.f32 %v3941, %v4282
      %v4340 = vadd.f32 %v3942, %v4285
      %v4341 = vadd.f32 %v3943, %v4287
      %v4342 = vadd.f32 %v3944, %v4290
      %v4343 = vadd.f32 %v3945, %v4292
      %v4344 = vadd.f32 %v3946, %v4295
      %v4345 = vadd.f32 %v3947, %v4297
      %v4346 = vadd.f32 %v3948, %v4300
      %v4347 = vadd.f32 %v3949, %v4302
      %v4348 = vadd.f32 %v3950, %v4305
      %v4349 = vadd.f32 %v3951, %v4307
      %v4350 = vadd.f32 %v3952, %v4310
      %v4351 = vadd.f32 %v3953, %v4312
      %v4352 = vadd.f32 %v3954, %v4315
      %v4353 = vadd.f32 %v3955, %v4317
      %v4354 = vadd.f32 %v3956, %v4320
      %v4355 = vadd.f32 %v3957, %v4322
      %vm4356 = vcmask 64512
      %v4357 = vsel %vm4356, %v4324, 0.0
      %v4358 = vsel %vm4356, %v4325, 0.0
      %v4359 = vadd.f32 %v4357, %v4358
      %v4360 = vsel %vm4356, %v4326, 0.0
      %v4361 = vadd.f32 %v4359, %v4360
      %v4362 = vsel %vm4356, %v4327, 0.0
      %v4363 = vadd.f32 %v4361, %v4362
      %v4364 = vsel %vm4356, %v4328, 0.0
      %v4365 = vadd.f32 %v4363, %v4364
      %v4366 = vsel %vm4356, %v4329, 0.0
      %v4367 = vadd.f32 %v4365, %v4366
      %v4368 = vsel %vm4356, %v4330, 0.0
      %v4369 = vadd.f32 %v4367, %v4368
      %v4370 = vsel %vm4356, %v4331, 0.0
      %v4371 = vadd.f32 %v4369, %v4370
      %v4372 = vsel %vm4356, %v4332, 0.0
      %v4373 = vadd.f32 %v4371, %v4372
      %v4374 = vsel %vm4356, %v4333, 0.0
      %v4375 = vadd.f32 %v4373, %v4374
      %v4376 = vsel %vm4356, %v4334, 0.0
      %v4377 = vadd.f32 %v4375, %v4376
      %v4378 = vsel %vm4356, %v4335, 0.0
      %v4379 = vadd.f32 %v4377, %v4378
      %v4380 = vsel %vm4356, %v4336, 0.0
      %v4381 = vadd.f32 %v4379, %v4380
      %v4382 = vsel %vm4356, %v4337, 0.0
      %v4383 = vadd.f32 %v4381, %v4382
      %v4384 = vsel %vm4356, %v4338, 0.0
      %v4385 = vadd.f32 %v4383, %v4384
      %v4386 = vsel %vm4356, %v4339, 0.0
      %v4387 = vadd.f32 %v4385, %v4386
      %v4388 = vsel %vm4356, %v4340, 0.0
      %v4389 = vadd.f32 %v4387, %v4388
      %v4390 = vsel %vm4356, %v4341, 0.0
      %v4391 = vadd.f32 %v4389, %v4390
      %v4392 = vsel %vm4356, %v4342, 0.0
      %v4393 = vadd.f32 %v4391, %v4392
      %v4394 = vsel %vm4356, %v4343, 0.0
      %v4395 = vadd.f32 %v4393, %v4394
      %v4396 = vsel %vm4356, %v4344, 0.0
      %v4397 = vadd.f32 %v4395, %v4396
      %v4398 = vsel %vm4356, %v4345, 0.0
      %v4399 = vadd.f32 %v4397, %v4398
      %v4400 = vsel %vm4356, %v4346, 0.0
      %v4401 = vadd.f32 %v4399, %v4400
      %v4402 = vsel %vm4356, %v4347, 0.0
      %v4403 = vadd.f32 %v4401, %v4402
      %v4404 = vsel %vm4356, %v4348, 0.0
      %v4405 = vadd.f32 %v4403, %v4404
      %v4406 = vsel %vm4356, %v4349, 0.0
      %v4407 = vadd.f32 %v4405, %v4406
      %v4408 = vsel %vm4356, %v4350, 0.0
      %v4409 = vadd.f32 %v4407, %v4408
      %v4410 = vsel %vm4356, %v4351, 0.0
      %v4411 = vadd.f32 %v4409, %v4410
      %v4412 = vsel %vm4356, %v4352, 0.0
      %v4413 = vadd.f32 %v4411, %v4412
      %v4414 = vsel %vm4356, %v4353, 0.0
      %v4415 = vadd.f32 %v4413, %v4414
      %v4416 = vsel %vm4356, %v4354, 0.0
      %v4417 = vadd.f32 %v4415, %v4416
      %v4418 = vsel %vm4356, %v4355, 0.0
      %v4419 = vadd.f32 %v4417, %v4418
      %v4420 = vrot.slane %v4419, 4
      %v4421 = vadd.f32 %v4419, %v4420
      %v4422 = vrot.slane %v4421, 2
      %v4423 = vadd.f32 %v4421, %v4422
      %v4424 = vrot.slane %v4423, 1
      %v4425 = vadd.f32 %v4423, %v4424
      %v4426 = vadd.f32 %v4425, 0.0
      %v4427 = vmul.f32 %v4324, %v4324
      %v4428 = vmul.f32 %v4325, %v4325
      %v4429 = vmul.f32 %v4326, %v4326
      %v4430 = vmul.f32 %v4327, %v4327
      %v4431 = vmul.f32 %v4328, %v4328
      %v4432 = vmul.f32 %v4329, %v4329
      %v4433 = vmul.f32 %v4330, %v4330
      %v4434 = vmul.f32 %v4331, %v4331
      %v4435 = vmul.f32 %v4332, %v4332
      %v4436 = vmul.f32 %v4333, %v4333
      %v4437 = vmul.f32 %v4334, %v4334
      %v4438 = vmul.f32 %v4335, %v4335
      %v4439 = vmul.f32 %v4336, %v4336
      %v4440 = vmul.f32 %v4337, %v4337
      %v4441 = vmul.f32 %v4338, %v4338
      %v4442 = vmul.f32 %v4339, %v4339
      %v4443 = vmul.f32 %v4340, %v4340
      %v4444 = vmul.f32 %v4341, %v4341
      %v4445 = vmul.f32 %v4342, %v4342
      %v4446 = vmul.f32 %v4343, %v4343
      %v4447 = vmul.f32 %v4344, %v4344
      %v4448 = vmul.f32 %v4345, %v4345
      %v4449 = vmul.f32 %v4346, %v4346
      %v4450 = vmul.f32 %v4347, %v4347
      %v4451 = vmul.f32 %v4348, %v4348
      %v4452 = vmul.f32 %v4349, %v4349
      %v4453 = vmul.f32 %v4350, %v4350
      %v4454 = vmul.f32 %v4351, %v4351
      %v4455 = vmul.f32 %v4352, %v4352
      %v4456 = vmul.f32 %v4353, %v4353
      %v4457 = vmul.f32 %v4354, %v4354
      %v4458 = vmul.f32 %v4355, %v4355
      %v4459 = vsel %vm4356, %v4427, 0.0
      %v4460 = vsel %vm4356, %v4428, 0.0
      %v4461 = vadd.f32 %v4459, %v4460
      %v4462 = vsel %vm4356, %v4429, 0.0
      %v4463 = vadd.f32 %v4461, %v4462
      %v4464 = vsel %vm4356, %v4430, 0.0
      %v4465 = vadd.f32 %v4463, %v4464
      %v4466 = vsel %vm4356, %v4431, 0.0
      %v4467 = vadd.f32 %v4465, %v4466
      %v4468 = vsel %vm4356, %v4432, 0.0
      %v4469 = vadd.f32 %v4467, %v4468
      %v4470 = vsel %vm4356, %v4433, 0.0
      %v4471 = vadd.f32 %v4469, %v4470
      %v4472 = vsel %vm4356, %v4434, 0.0
      %v4473 = vadd.f32 %v4471, %v4472
      %v4474 = vsel %vm4356, %v4435, 0.0
      %v4475 = vadd.f32 %v4473, %v4474
      %v4476 = vsel %vm4356, %v4436, 0.0
      %v4477 = vadd.f32 %v4475, %v4476
      %v4478 = vsel %vm4356, %v4437, 0.0
      %v4479 = vadd.f32 %v4477, %v4478
      %v4480 = vsel %vm4356, %v4438, 0.0
      %v4481 = vadd.f32 %v4479, %v4480
      %v4482 = vsel %vm4356, %v4439, 0.0
      %v4483 = vadd.f32 %v4481, %v4482
      %v4484 = vsel %vm4356, %v4440, 0.0
      %v4485 = vadd.f32 %v4483, %v4484
      %v4486 = vsel %vm4356, %v4441, 0.0
      %v4487 = vadd.f32 %v4485, %v4486
      %v4488 = vsel %vm4356, %v4442, 0.0
      %v4489 = vadd.f32 %v4487, %v4488
      %v4490 = vsel %vm4356, %v4443, 0.0
      %v4491 = vadd.f32 %v4489, %v4490
      %v4492 = vsel %vm4356, %v4444, 0.0
      %v4493 = vadd.f32 %v4491, %v4492
      %v4494 = vsel %vm4356, %v4445, 0.0
      %v4495 = vadd.f32 %v4493, %v4494
      %v4496 = vsel %vm4356, %v4446, 0.0
      %v4497 = vadd.f32 %v4495, %v4496
      %v4498 = vsel %vm4356, %v4447, 0.0
      %v4499 = vadd.f32 %v4497, %v4498
      %v4500 = vsel %vm4356, %v4448, 0.0
      %v4501 = vadd.f32 %v4499, %v4500
      %v4502 = vsel %vm4356, %v4449, 0.0
      %v4503 = vadd.f32 %v4501, %v4502
      %v4504 = vsel %vm4356, %v4450, 0.0
      %v4505 = vadd.f32 %v4503, %v4504
      %v4506 = vsel %vm4356, %v4451, 0.0
      %v4507 = vadd.f32 %v4505, %v4506
      %v4508 = vsel %vm4356, %v4452, 0.0
      %v4509 = vadd.f32 %v4507, %v4508
      %v4510 = vsel %vm4356, %v4453, 0.0
      %v4511 = vadd.f32 %v4509, %v4510
      %v4512 = vsel %vm4356, %v4454, 0.0
      %v4513 = vadd.f32 %v4511, %v4512
      %v4514 = vsel %vm4356, %v4455, 0.0
      %v4515 = vadd.f32 %v4513, %v4514
      %v4516 = vsel %vm4356, %v4456, 0.0
      %v4517 = vadd.f32 %v4515, %v4516
      %v4518 = vsel %vm4356, %v4457, 0.0
      %v4519 = vadd.f32 %v4517, %v4518
      %v4520 = vsel %vm4356, %v4458, 0.0
      %v4521 = vadd.f32 %v4519, %v4520
      %v4522 = vrot.slane %v4521, 4
      %v4523 = vadd.f32 %v4521, %v4522
      %v4524 = vrot.slane %v4523, 2
      %v4525 = vadd.f32 %v4523, %v4524
      %v4526 = vrot.slane %v4525, 1
      %v4527 = vadd.f32 %v4525, %v4526
      %v4528 = vadd.f32 %v4527, 0.0
      %v4529 = vpack.c.bf16 %v4324, %v4324
      %v4530 = vpack.c.bf16 %v4325, %v4325
      %v4531 = vpack.c.bf16 %v4326, %v4326
      %v4532 = vpack.c.bf16 %v4327, %v4327
      %v4533 = vpack.c.bf16 %v4328, %v4328
      %v4534 = vpack.c.bf16 %v4329, %v4329
      %v4535 = vpack.c.bf16 %v4330, %v4330
      %v4536 = vpack.c.bf16 %v4331, %v4331
      %v4537 = vpack.c.bf16 %v4332, %v4332
      %v4538 = vpack.c.bf16 %v4333, %v4333
      %v4539 = vpack.c.bf16 %v4334, %v4334
      %v4540 = vpack.c.bf16 %v4335, %v4335
      %v4541 = vpack.c.bf16 %v4336, %v4336
      %v4542 = vpack.c.bf16 %v4337, %v4337
      %v4543 = vpack.c.bf16 %v4338, %v4338
      %v4544 = vpack.c.bf16 %v4339, %v4339
      %v4545 = vpack.c.bf16 %v4340, %v4340
      %v4546 = vpack.c.bf16 %v4341, %v4341
      %v4547 = vpack.c.bf16 %v4342, %v4342
      %v4548 = vpack.c.bf16 %v4343, %v4343
      %v4549 = vpack.c.bf16 %v4344, %v4344
      %v4550 = vpack.c.bf16 %v4345, %v4345
      %v4551 = vpack.c.bf16 %v4346, %v4346
      %v4552 = vpack.c.bf16 %v4347, %v4347
      %v4553 = vpack.c.bf16 %v4348, %v4348
      %v4554 = vpack.c.bf16 %v4349, %v4349
      %v4555 = vpack.c.bf16 %v4350, %v4350
      %v4556 = vpack.c.bf16 %v4351, %v4351
      %v4557 = vpack.c.bf16 %v4352, %v4352
      %v4558 = vpack.c.bf16 %v4353, %v4353
      %v4559 = vpack.c.bf16 %v4354, %v4354
      %v4560 = vpack.c.bf16 %v4355, %v4355
      %vm4561 = vsmask.f32 4368
      %vm4562 = vmor %vm333, %vm4561
      %v4564 = vshrl.u32 %v4529, 16
      %v4566 = vrot.slane %v4564, 7
      %v4567 = vshll.u32 %v4529, 16
      %v4569 = vor.u32 %v4566, %v4567
      %v4570 = vrot.slane %v4566, 4
      %v4572 = vshrl.u32 %v4530, 16
      %v4574 = vrot.slane %v4572, 7
      %v4575 = vshll.u32 %v4530, 16
      %v4577 = vor.u32 %v4574, %v4575
      %v4578 = vsel %vm4562, %v4570, %v4577
      %v4579 = vrot.slane %v4574, 4
      %v4581 = vshrl.u32 %v4531, 16
      %v4583 = vrot.slane %v4581, 7
      %v4584 = vshll.u32 %v4531, 16
      %v4586 = vor.u32 %v4583, %v4584
      %v4587 = vrot.slane %v4583, 4
      %v4589 = vshrl.u32 %v4532, 16
      %v4591 = vrot.slane %v4589, 7
      %v4592 = vshll.u32 %v4532, 16
      %v4594 = vor.u32 %v4591, %v4592
      %v4595 = vsel %vm4562, %v4587, %v4594
      %v4596 = vrot.slane %v4591, 4
      %v4598 = vshrl.u32 %v4533, 16
      %v4600 = vrot.slane %v4598, 7
      %v4601 = vshll.u32 %v4533, 16
      %v4603 = vor.u32 %v4600, %v4601
      %v4604 = vrot.slane %v4600, 4
      %v4606 = vshrl.u32 %v4534, 16
      %v4608 = vrot.slane %v4606, 7
      %v4609 = vshll.u32 %v4534, 16
      %v4611 = vor.u32 %v4608, %v4609
      %v4612 = vsel %vm4562, %v4604, %v4611
      %v4613 = vrot.slane %v4608, 4
      %v4615 = vshrl.u32 %v4535, 16
      %v4617 = vrot.slane %v4615, 7
      %v4618 = vshll.u32 %v4535, 16
      %v4620 = vor.u32 %v4617, %v4618
      %v4621 = vrot.slane %v4617, 4
      %v4623 = vshrl.u32 %v4536, 16
      %v4625 = vrot.slane %v4623, 7
      %v4626 = vshll.u32 %v4536, 16
      %v4628 = vor.u32 %v4625, %v4626
      %v4629 = vsel %vm4562, %v4621, %v4628
      %v4630 = vrot.slane %v4625, 4
      %v4632 = vshrl.u32 %v4537, 16
      %v4634 = vrot.slane %v4632, 7
      %v4635 = vshll.u32 %v4537, 16
      %v4637 = vor.u32 %v4634, %v4635
      %v4638 = vrot.slane %v4634, 4
      %v4640 = vshrl.u32 %v4538, 16
      %v4642 = vrot.slane %v4640, 7
      %v4643 = vshll.u32 %v4538, 16
      %v4645 = vor.u32 %v4642, %v4643
      %v4646 = vsel %vm4562, %v4638, %v4645
      %v4647 = vrot.slane %v4642, 4
      %v4649 = vshrl.u32 %v4539, 16
      %v4651 = vrot.slane %v4649, 7
      %v4652 = vshll.u32 %v4539, 16
      %v4654 = vor.u32 %v4651, %v4652
      %v4655 = vrot.slane %v4651, 4
      %v4657 = vshrl.u32 %v4540, 16
      %v4659 = vrot.slane %v4657, 7
      %v4660 = vshll.u32 %v4540, 16
      %v4662 = vor.u32 %v4659, %v4660
      %v4663 = vsel %vm4562, %v4655, %v4662
      %v4664 = vrot.slane %v4659, 4
      %v4666 = vshrl.u32 %v4541, 16
      %v4668 = vrot.slane %v4666, 7
      %v4669 = vshll.u32 %v4541, 16
      %v4671 = vor.u32 %v4668, %v4669
      %v4672 = vrot.slane %v4668, 4
      %v4674 = vshrl.u32 %v4542, 16
      %v4676 = vrot.slane %v4674, 7
      %v4677 = vshll.u32 %v4542, 16
      %v4679 = vor.u32 %v4676, %v4677
      %v4680 = vsel %vm4562, %v4672, %v4679
      %v4681 = vrot.slane %v4676, 4
      %v4683 = vshrl.u32 %v4543, 16
      %v4685 = vrot.slane %v4683, 7
      %v4686 = vshll.u32 %v4543, 16
      %v4688 = vor.u32 %v4685, %v4686
      %v4689 = vrot.slane %v4685, 4
      %v4691 = vshrl.u32 %v4544, 16
      %v4693 = vrot.slane %v4691, 7
      %v4694 = vshll.u32 %v4544, 16
      %v4696 = vor.u32 %v4693, %v4694
      %v4697 = vsel %vm4562, %v4689, %v4696
      %v4698 = vrot.slane %v4693, 4
      %v4700 = vshrl.u32 %v4545, 16
      %v4702 = vrot.slane %v4700, 7
      %v4703 = vshll.u32 %v4545, 16
      %v4705 = vor.u32 %v4702, %v4703
      %v4706 = vrot.slane %v4702, 4
      %v4708 = vshrl.u32 %v4546, 16
      %v4710 = vrot.slane %v4708, 7
      %v4711 = vshll.u32 %v4546, 16
      %v4713 = vor.u32 %v4710, %v4711
      %v4714 = vsel %vm4562, %v4706, %v4713
      %v4715 = vrot.slane %v4710, 4
      %v4717 = vshrl.u32 %v4547, 16
      %v4719 = vrot.slane %v4717, 7
      %v4720 = vshll.u32 %v4547, 16
      %v4722 = vor.u32 %v4719, %v4720
      %v4723 = vrot.slane %v4719, 4
      %v4725 = vshrl.u32 %v4548, 16
      %v4727 = vrot.slane %v4725, 7
      %v4728 = vshll.u32 %v4548, 16
      %v4730 = vor.u32 %v4727, %v4728
      %v4731 = vsel %vm4562, %v4723, %v4730
      %v4732 = vrot.slane %v4727, 4
      %v4734 = vshrl.u32 %v4549, 16
      %v4736 = vrot.slane %v4734, 7
      %v4737 = vshll.u32 %v4549, 16
      %v4739 = vor.u32 %v4736, %v4737
      %v4740 = vrot.slane %v4736, 4
      %v4742 = vshrl.u32 %v4550, 16
      %v4744 = vrot.slane %v4742, 7
      %v4745 = vshll.u32 %v4550, 16
      %v4747 = vor.u32 %v4744, %v4745
      %v4748 = vsel %vm4562, %v4740, %v4747
      %v4749 = vrot.slane %v4744, 4
      %v4751 = vshrl.u32 %v4551, 16
      %v4753 = vrot.slane %v4751, 7
      %v4754 = vshll.u32 %v4551, 16
      %v4756 = vor.u32 %v4753, %v4754
      %v4757 = vrot.slane %v4753, 4
      %v4759 = vshrl.u32 %v4552, 16
      %v4761 = vrot.slane %v4759, 7
      %v4762 = vshll.u32 %v4552, 16
      %v4764 = vor.u32 %v4761, %v4762
      %v4765 = vsel %vm4562, %v4757, %v4764
      %v4766 = vrot.slane %v4761, 4
      %v4768 = vshrl.u32 %v4553, 16
      %v4770 = vrot.slane %v4768, 7
      %v4771 = vshll.u32 %v4553, 16
      %v4773 = vor.u32 %v4770, %v4771
      %v4774 = vrot.slane %v4770, 4
      %v4776 = vshrl.u32 %v4554, 16
      %v4778 = vrot.slane %v4776, 7
      %v4779 = vshll.u32 %v4554, 16
      %v4781 = vor.u32 %v4778, %v4779
      %v4782 = vsel %vm4562, %v4774, %v4781
      %v4783 = vrot.slane %v4778, 4
      %v4785 = vshrl.u32 %v4555, 16
      %v4787 = vrot.slane %v4785, 7
      %v4788 = vshll.u32 %v4555, 16
      %v4790 = vor.u32 %v4787, %v4788
      %v4791 = vrot.slane %v4787, 4
      %v4793 = vshrl.u32 %v4556, 16
      %v4795 = vrot.slane %v4793, 7
      %v4796 = vshll.u32 %v4556, 16
      %v4798 = vor.u32 %v4795, %v4796
      %v4799 = vsel %vm4562, %v4791, %v4798
      %v4800 = vrot.slane %v4795, 4
      %v4802 = vshrl.u32 %v4557, 16
      %v4804 = vrot.slane %v4802, 7
      %v4805 = vshll.u32 %v4557, 16
      %v4807 = vor.u32 %v4804, %v4805
      %v4808 = vrot.slane %v4804, 4
      %v4810 = vshrl.u32 %v4558, 16
      %v4812 = vrot.slane %v4810, 7
      %v4813 = vshll.u32 %v4558, 16
      %v4815 = vor.u32 %v4812, %v4813
      %v4816 = vsel %vm4562, %v4808, %v4815
      %v4817 = vrot.slane %v4812, 4
      %v4819 = vshrl.u32 %v4559, 16
      %v4821 = vrot.slane %v4819, 7
      %v4822 = vshll.u32 %v4559, 16
      %v4824 = vor.u32 %v4821, %v4822
      %v4825 = vrot.slane %v4821, 4
      %v4827 = vshrl.u32 %v4560, 16
      %v4829 = vrot.slane %v4827, 7
      %v4830 = vshll.u32 %v4560, 16
      %v4832 = vor.u32 %v4829, %v4830
      %v4833 = vsel %vm4562, %v4825, %v4832
      %v4834 = vrot.slane %v4829, 4
      %s4883 = scalar_lea.vmem %s309, 12
      %vm4884 = vcmask 60416
      %vm4885 = vmand %vm4884, %vm389
      %v4886 = vld [vmem:[%s4883] sm:$0xf]
      %v4887 = vsel %vm4885, %v4569, %v4886
      %4888 = vst [vmem:[%s4883] sm:$0xf] %v4887
      %4889 = vst.msk [vmem:[%s4883 + $0x4] sm:$0xf] %vm323, %v4578
      %v4890 = vld [vmem:[%s4883 + $0x8] sm:$0x1]
      %v4891 = vsel %vm334, %v4579, %v4890
      %4892 = vst [vmem:[%s4883 + $0x8] sm:$0x1] %v4891
      %v4893 = vld [vmem:[%s4883 + $0xc] sm:$0xf]
      %v4894 = vsel %vm4885, %v4586, %v4893
      %4895 = vst [vmem:[%s4883 + $0xc] sm:$0xf] %v4894
      %4896 = vst.msk [vmem:[%s4883 + $0x10] sm:$0xf] %vm323, %v4595
      %v4897 = vld [vmem:[%s4883 + $0x14] sm:$0x1]
      %v4898 = vsel %vm334, %v4596, %v4897
      %4899 = vst [vmem:[%s4883 + $0x14] sm:$0x1] %v4898
      %v4900 = vld [vmem:[%s4883 + $0x18] sm:$0xf]
      %v4901 = vsel %vm4885, %v4603, %v4900
      %4902 = vst [vmem:[%s4883 + $0x18] sm:$0xf] %v4901
      %4903 = vst.msk [vmem:[%s4883 + $0x1c] sm:$0xf] %vm323, %v4612
      %v4904 = vld [vmem:[%s4883 + $0x20] sm:$0x1]
      %v4905 = vsel %vm334, %v4613, %v4904
      %4906 = vst [vmem:[%s4883 + $0x20] sm:$0x1] %v4905
      %v4907 = vld [vmem:[%s4883 + $0x24] sm:$0xf]
      %v4908 = vsel %vm4885, %v4620, %v4907
      %4909 = vst [vmem:[%s4883 + $0x24] sm:$0xf] %v4908
      %4910 = vst.msk [vmem:[%s4883 + $0x28] sm:$0xf] %vm323, %v4629
      %v4911 = vld [vmem:[%s4883 + $0x2c] sm:$0x1]
      %v4912 = vsel %vm334, %v4630, %v4911
      %4913 = vst [vmem:[%s4883 + $0x2c] sm:$0x1] %v4912
      %v4914 = vld [vmem:[%s4883 + $0x30] sm:$0xf]
      %v4915 = vsel %vm4885, %v4637, %v4914
      %4916 = vst [vmem:[%s4883 + $0x30] sm:$0xf] %v4915
      %4917 = vst.msk [vmem:[%s4883 + $0x34] sm:$0xf] %vm323, %v4646
      %v4918 = vld [vmem:[%s4883 + $0x38] sm:$0x1]
      %v4919 = vsel %vm334, %v4647, %v4918
      %4920 = vst [vmem:[%s4883 + $0x38] sm:$0x1] %v4919
      %v4921 = vld [vmem:[%s4883 + $0x3c] sm:$0xf]
      %v4922 = vsel %vm4885, %v4654, %v4921
      %4923 = vst [vmem:[%s4883 + $0x3c] sm:$0xf] %v4922
      %4924 = vst.msk [vmem:[%s4883 + $0x40] sm:$0xf] %vm323, %v4663
      %v4925 = vld [vmem:[%s4883 + $0x44] sm:$0x1]
      %v4926 = vsel %vm334, %v4664, %v4925
      %4927 = vst [vmem:[%s4883 + $0x44] sm:$0x1] %v4926
      %v4928 = vld [vmem:[%s4883 + $0x48] sm:$0xf]
      %v4929 = vsel %vm4885, %v4671, %v4928
      %4930 = vst [vmem:[%s4883 + $0x48] sm:$0xf] %v4929
      %4931 = vst.msk [vmem:[%s4883 + $0x4c] sm:$0xf] %vm323, %v4680
      %v4932 = vld [vmem:[%s4883 + $0x50] sm:$0x1]
      %v4933 = vsel %vm334, %v4681, %v4932
      %4934 = vst [vmem:[%s4883 + $0x50] sm:$0x1] %v4933
      %v4935 = vld [vmem:[%s4883 + $0x54] sm:$0xf]
      %v4936 = vsel %vm4885, %v4688, %v4935
      %4937 = vst [vmem:[%s4883 + $0x54] sm:$0xf] %v4936
      %4938 = vst.msk [vmem:[%s4883 + $0x58] sm:$0xf] %vm323, %v4697
      %v4939 = vld [vmem:[%s4883 + $0x5c] sm:$0x1]
      %v4940 = vsel %vm334, %v4698, %v4939
      %4941 = vst [vmem:[%s4883 + $0x5c] sm:$0x1] %v4940
      %v4942 = vld [vmem:[%s4883 + $0x60] sm:$0xf]
      %v4943 = vsel %vm4885, %v4705, %v4942
      %4944 = vst [vmem:[%s4883 + $0x60] sm:$0xf] %v4943
      %4945 = vst.msk [vmem:[%s4883 + $0x64] sm:$0xf] %vm323, %v4714
      %v4946 = vld [vmem:[%s4883 + $0x68] sm:$0x1]
      %v4947 = vsel %vm334, %v4715, %v4946
      %4948 = vst [vmem:[%s4883 + $0x68] sm:$0x1] %v4947
      %v4949 = vld [vmem:[%s4883 + $0x6c] sm:$0xf]
      %v4950 = vsel %vm4885, %v4722, %v4949
      %4951 = vst [vmem:[%s4883 + $0x6c] sm:$0xf] %v4950
      %4952 = vst.msk [vmem:[%s4883 + $0x70] sm:$0xf] %vm323, %v4731
      %v4953 = vld [vmem:[%s4883 + $0x74] sm:$0x1]
      %v4954 = vsel %vm334, %v4732, %v4953
      %4955 = vst [vmem:[%s4883 + $0x74] sm:$0x1] %v4954
      %v4956 = vld [vmem:[%s4883 + $0x78] sm:$0xf]
      %v4957 = vsel %vm4885, %v4739, %v4956
      %4958 = vst [vmem:[%s4883 + $0x78] sm:$0xf] %v4957
      %4959 = vst.msk [vmem:[%s4883 + $0x7c] sm:$0xf] %vm323, %v4748
      %v4960 = vld [vmem:[%s4883 + $0x80] sm:$0x1]
      %v4961 = vsel %vm334, %v4749, %v4960
      %4962 = vst [vmem:[%s4883 + $0x80] sm:$0x1] %v4961
      %v4963 = vld [vmem:[%s4883 + $0x84] sm:$0xf]
      %v4964 = vsel %vm4885, %v4756, %v4963
      %4965 = vst [vmem:[%s4883 + $0x84] sm:$0xf] %v4964
      %4966 = vst.msk [vmem:[%s4883 + $0x88] sm:$0xf] %vm323, %v4765
      %v4967 = vld [vmem:[%s4883 + $0x8c] sm:$0x1]
      %v4968 = vsel %vm334, %v4766, %v4967
      %4969 = vst [vmem:[%s4883 + $0x8c] sm:$0x1] %v4968
      %v4970 = vld [vmem:[%s4883 + $0x90] sm:$0xf]
      %v4971 = vsel %vm4885, %v4773, %v4970
      %4972 = vst [vmem:[%s4883 + $0x90] sm:$0xf] %v4971
      %4973 = vst.msk [vmem:[%s4883 + $0x94] sm:$0xf] %vm323, %v4782
      %v4974 = vld [vmem:[%s4883 + $0x98] sm:$0x1]
      %v4975 = vsel %vm334, %v4783, %v4974
      %4976 = vst [vmem:[%s4883 + $0x98] sm:$0x1] %v4975
      %v4977 = vld [vmem:[%s4883 + $0x9c] sm:$0xf]
      %v4978 = vsel %vm4885, %v4790, %v4977
      %4979 = vst [vmem:[%s4883 + $0x9c] sm:$0xf] %v4978
      %4980 = vst.msk [vmem:[%s4883 + $0xa0] sm:$0xf] %vm323, %v4799
      %v4981 = vld [vmem:[%s4883 + $0xa4] sm:$0x1]
      %v4982 = vsel %vm334, %v4800, %v4981
      %4983 = vst [vmem:[%s4883 + $0xa4] sm:$0x1] %v4982
      %v4984 = vld [vmem:[%s4883 + $0xa8] sm:$0xf]
      %v4985 = vsel %vm4885, %v4807, %v4984
      %4986 = vst [vmem:[%s4883 + $0xa8] sm:$0xf] %v4985
      %4987 = vst.msk [vmem:[%s4883 + $0xac] sm:$0xf] %vm323, %v4816
      %v4988 = vld [vmem:[%s4883 + $0xb0] sm:$0x1]
      %v4989 = vsel %vm334, %v4817, %v4988
      %4990 = vst [vmem:[%s4883 + $0xb0] sm:$0x1] %v4989
      %v4991 = vld [vmem:[%s4883 + $0xb4] sm:$0xf]
      %v4992 = vsel %vm4885, %v4824, %v4991
      %4993 = vst [vmem:[%s4883 + $0xb4] sm:$0xf] %v4992
      %4994 = vst.msk [vmem:[%s4883 + $0xb8] sm:$0xf] %vm323, %v4833
      %v4995 = vld [vmem:[%s4883 + $0xbc] sm:$0x1]
      %v4996 = vsel %vm334, %v4834, %v4995
      %4997 = vst [vmem:[%s4883 + $0xbc] sm:$0x1] %v4996
      %4998 = vst.msk [vmem:[%s315] sm:$0x1] %vm326, %v4426
      %4999 = vst.msk [vmem:[%s321] sm:$0x1] %vm326, %v4528
      %p5000 = scmp.lt.s32.totalorder %s22, 1
      %s5001 = scalar_select %p5000, %s22, 1
      %p5002 = scmp.lt.s32.totalorder %s23, 0
      %s5003 = scalar_select %p5002, %s23, 0
      %s5004 = smul.addr %s5001, 54
      %s5005 = sadd.s32 %s5003, %s5004
      %s5006 = smul.addr %s5005, 4
      %s5007 = scalar_lea.vmem %s4, %s5006
      %p5008 = scmp.lt.s32.totalorder %s22, 1
      %s5009 = scalar_select %p5008, %s22, 1
      %p5010 = scmp.lt.s32.totalorder %s23, 0
      %s5011 = scalar_select %p5010, %s23, 0
      %s5012 = sadd.s32 %s5011, %s5009
      %s5013 = scalar_lea.vmem %s5, %s5012
      %p5014 = scmp.lt.s32.totalorder %s22, 1
      %s5015 = scalar_select %p5014, %s22, 1
      %p5016 = scmp.lt.s32.totalorder %s23, 0
      %s5017 = scalar_select %p5016, %s23, 0
      %s5018 = sadd.s32 %s5017, %s5015
      %s5019 = scalar_lea.vmem %s6, %s5018
      // Predicated region
      $region37: #{basic_block_forward.3} parent=35 // pred_check
        %p5020 = pneg %p144
      $region38: #{basic_block_forward.3} parent=35 // pred_check_branch
        %5022 = sbr.rel (%p5020) target = $region40
      $region39: #{basic_block_forward.3} parent=35 // pred_region
        _
      $region40: #{basic_block_forward.3} parent=35 // pred_fallthru
        _
      // Predicated region
      $region41: #{basic_block_forward.3} parent=35 // pred_check
        %p5023 = pneg %p172
      $region42: #{basic_block_forward.3} parent=35 // pred_check_branch
        %5025 = sbr.rel (%p5023) target = $region44
      $region43: #{basic_block_forward.3} parent=35 // pred_region
        _
      $region44: #{basic_block_forward.3} parent=35 // pred_fallthru
        _
      // Predicated region
      $region45: #{basic_block_forward.3} parent=35 // pred_check
        %p5026 = pneg %p200
      $region46: #{basic_block_forward.3} parent=35 // pred_check_branch
        %5028 = sbr.rel (%p5026) target = $region48
      $region47: #{basic_block_forward.3} parent=35 // pred_region
        _
      $region48: #{basic_block_forward.3} parent=35 // pred_fallthru
        _
    $region36: #{basic_block_forward.3} parent=5 // pred_fallthru
      _
    %p5029 = scmp.le.s32.totalorder 2, %s13
    // Predicated region
    $region49: #{basic_block_forward.3} parent=5 // pred_check
      %p5030 = pneg %p5029
    $region50: #{basic_block_forward.3} parent=5 // pred_check_branch
      %5032 = sbr.rel (%p5030) target = $region52
    $region51: #{basic_block_forward.3} parent=5 // pred_region
      %s5033 = ssub.s32 %s13, 2
      // Predicated region
      $region53: #{basic_block_forward.3} parent=51 // pred_check
        %p5034 = pneg %p150
      $region54: #{basic_block_forward.3} parent=51 // pred_check_branch
        %5036 = sbr.rel (%p5034) target = $region56
      $region55: #{basic_block_forward.3} parent=51 // pred_region
        %p5037 = scmp.lt.s32.totalorder %s24, 1
        %s5038 = scalar_select %p5037, %s24, 1
        %p5039 = scmp.lt.s32.totalorder %s25, 0
        %s5040 = scalar_select %p5039, %s25, 0
        %s5041 = smul.addr %s5038, 54
        %s5042 = sadd.s32 %s5040, %s5041
        %s5043 = smul.addr %s5042, 4
        %s5044 = scalar_lea.vmem %s4, %s5043
      $region56: #{basic_block_forward.3} parent=51 // pred_fallthru
        _
      // Predicated region
      $region57: #{basic_block_forward.3} parent=51 // pred_check
        %p5045 = pneg %p178
      $region58: #{basic_block_forward.3} parent=51 // pred_check_branch
        %5047 = sbr.rel (%p5045) target = $region60
      $region59: #{basic_block_forward.3} parent=51 // pred_region
        %p5048 = scmp.lt.s32.totalorder %s24, 1
        %s5049 = scalar_select %p5048, %s24, 1
        %p5050 = scmp.lt.s32.totalorder %s25, 0
        %s5051 = scalar_select %p5050, %s25, 0
        %s5052 = sadd.s32 %s5051, %s5049
        %s5053 = scalar_lea.vmem %s5, %s5052
      $region60: #{basic_block_forward.3} parent=51 // pred_fallthru
        _
      // Predicated region
      $region61: #{basic_block_forward.3} parent=51 // pred_check
        %p5054 = pneg %p206
      $region62: #{basic_block_forward.3} parent=51 // pred_check_branch
        %5056 = sbr.rel (%p5054) target = $region64
      $region63: #{basic_block_forward.3} parent=51 // pred_region
        %p5057 = scmp.lt.s32.totalorder %s24, 1
        %s5058 = scalar_select %p5057, %s24, 1
        %p5059 = scmp.lt.s32.totalorder %s25, 0
        %s5060 = scalar_select %p5059, %s25, 0
        %s5061 = sadd.s32 %s5060, %s5058
        %s5062 = scalar_lea.vmem %s6, %s5061
      $region64: #{basic_block_forward.3} parent=51 // pred_fallthru
        _
    $region52: #{basic_block_forward.3} parent=5 // pred_fallthru
      _
  $region6: #{basic_block_forward.3} parent=0 // loop_footer
    %s17 = sadd.s32 1, %s13
  $region7: #{basic_block_forward.3} parent=0 // loop_footer_branch
    %12 = sbr.rel target = $region3
  $region8: #{basic_block_forward.3} parent=0 // loop_exit
    _

</llo_original>
